<compile_context>
chip_gen: v7x
topology: tpu7x:2x2x1
jax: 0.10.0
libtpu: 0.0.40
codegen_flags: <defaults>
</compile_context>

<pallas_src>
import jax
import jax.numpy as jnp
from jax.experimental import pallas as pl
from jax.experimental.pallas import tpu as pltpu


def _round_up(x, m):
    return ((x + m - 1) // m) * m


def _pick_block(dim, target, align=128):
    """Block size for `dim`: the full dim if it fits in `target`; otherwise the
    largest multiple of `align` <= target that divides `dim` (-> no padding);
    otherwise `target` (padding required)."""
    if dim <= target:
        return dim
    d = (target // align) * align
    while d >= align:
        if dim % d == 0:
            return d
        d -= align
    return target


# ---------------------------------------------------------------------------
# Pallas kernel 1: fused, K-tiled  out = relu(x @ w + b)   (bf16 in, f32 acc)
# ---------------------------------------------------------------------------
def _matmul_bias_relu_kernel(x_ref, w_ref, b_ref, o_ref, acc_ref):
    @pl.when(pl.program_id(2) == 0)
    def _():
        acc_ref[...] = jnp.zeros_like(acc_ref)

    # Operands are already bf16 (prepared offline); f32 accumulation on MXU.
    acc_ref[...] += jnp.dot(x_ref[...], w_ref[...],
                            preferred_element_type=jnp.float32)

    @pl.when(pl.program_id(2) == pl.num_programs(2) - 1)
    def _():
        # Bias add + ReLU only in the finalize step (bias spec indexed (0, j)).
        o_ref[...] = jnp.maximum(acc_ref[...] + b_ref[...], 0.0).astype(o_ref.dtype)


def matmul_bias_relu(x, layer, *, out_dtype=jnp.bfloat16, tm=512):
    """x: (M, K) bf16.  layer: offline-prepared dict with padded bf16 weight."""
    w, b = layer["w"], layer["b"]              # (Kp, Np) bf16, (1, Np) f32
    K, N, bk, bn = layer["K"], layer["N"], layer["bk"], layer["bn"]
    Kp, Np = w.shape
    M = x.shape[0]
    assert x.shape[1] == K, (x.shape, K)

    bm = M if M <= tm else tm
    Mp = _round_up(M, bm)
    if Mp != M or Kp != K:                     # only if block sizes don't divide
        x = jnp.pad(x, ((0, Mp - M), (0, Kp - K)))

    grid = (Mp // bm, Np // bn, Kp // bk)
    out = pl.pallas_call(
        _matmul_bias_relu_kernel,
        out_shape=jax.ShapeDtypeStruct((Mp, Np), out_dtype),
        grid_spec=pltpu.PrefetchScalarGridSpec(
            num_scalar_prefetch=0,
            grid=grid,
            in_specs=[
                pl.BlockSpec((bm, bk), lambda i, j, k: (i, k)),
                pl.BlockSpec((bk, bn), lambda i, j, k: (k, j)),
                pl.BlockSpec((1, bn), lambda i, j, k: (0, j)),
            ],
            out_specs=pl.BlockSpec((bm, bn), lambda i, j, k: (i, j)),
            scratch_shapes=[pltpu.VMEM((bm, bn), jnp.float32)],
        ),
        compiler_params=pltpu.CompilerParams(
            dimension_semantics=("parallel", "parallel", "arbitrary")),
    )(x, w, b)
    if Mp != M or Np != N:
        out = out[:M, :N]
    return out


# ---------------------------------------------------------------------------
# Pallas kernel 2: fused 3x3 conv (pad=1) + bias + ReLU, NHWC
#   - halo built in VMEM scratch (no HBM pad copy)
#   - kw taps folded into contraction dim (K = 3*Cin), 3 MXU dots per tile
#   - f32 VMEM scratch accumulator
# ---------------------------------------------------------------------------
def _conv3x3_bias_relu_kernel(x_ref, w_ref, b_ref, o_ref, xh_ref, acc_ref):
    # x_ref : (nb, H, W, Cin)      bf16 input tile (no halo)
    # w_ref : (3, 3*Cin, Cout)     bf16 weight slab (kw folded offline)
    # b_ref : (1, Cout)            f32 bias
    # o_ref : (nb, H, W, Cout)     bf16 output tile
    # xh_ref: (nb, H+2, W+2, Cin)  bf16 scratch: haloed tile
    # acc_ref: (nb*H*W, Cout)      f32 scratch accumulator
    nb, H, W, cout = o_ref.shape
    cin = x_ref.shape[-1]

    # Build the pad=1 halo in VMEM (replaces a full HBM read+write jnp.pad).
    xh_ref[...] = jnp.zeros_like(xh_ref)
    xh_ref[:, 1:H + 1, 1:W + 1, :] = x_ref[...]

    for kh in range(3):                                   # static unroll, 3 dots
        band = xh_ref[:, kh:kh + H, :, :]                 # (nb, H, W+2, Cin)
        patch = jnp.concatenate(
            [band[:, :, 0:W, :], band[:, :, 1:W + 1, :], band[:, :, 2:W + 2, :]],
            axis=-1).reshape(nb * H * W, 3 * cin)         # (nb*H*W, 3*Cin)
        part = jnp.dot(patch, w_ref[kh], preferred_element_type=jnp.float32)
        if kh == 0:
            acc_ref[...] = part
        else:
            acc_ref[...] += part

    out = jnp.maximum(acc_ref[...] + b_ref[...], 0.0)
    o_ref[...] = out.reshape(nb, H, W, cout).astype(o_ref.dtype)


def conv3x3_bias_relu(x_nhwc, layer, *, nb_target=8):
    """Fused Conv2d(k=3, pad=1, bias) + ReLU.  x: NHWC bf16."""
    w, b = layer["w"], layer["b"]              # (3, 3*Cin, Cout) bf16, (1, Cout) f32
    N, H, W, Cin = x_nhwc.shape
    Cout = w.shape[-1]
    nb = N if N <= nb_target else nb_target
    Nb = _round_up(N, nb)
    xp = x_nhwc if Nb == N else jnp.pad(x_nhwc, ((0, Nb - N), (0, 0), (0, 0), (0, 0)))

    out = pl.pallas_call(
        _conv3x3_bias_relu_kernel,
        out_shape=jax.ShapeDtypeStruct((Nb, H, W, Cout), jnp.bfloat16),
        grid_spec=pltpu.PrefetchScalarGridSpec(
            num_scalar_prefetch=0,
            grid=(Nb // nb,),
            in_specs=[
                pl.BlockSpec((nb, H, W, Cin), lambda i: (i, 0, 0, 0)),
                pl.BlockSpec((3, 3 * Cin, Cout), lambda i: (0, 0, 0)),
                pl.BlockSpec((1, Cout), lambda i: (0, 0)),
            ],
            out_specs=pl.BlockSpec((nb, H, W, Cout), lambda i: (i, 0, 0, 0)),
            scratch_shapes=[
                pltpu.VMEM((nb, H + 2, W + 2, Cin), jnp.bfloat16),
                pltpu.VMEM((nb * H * W, Cout), jnp.float32),
            ],
        ),
        compiler_params=pltpu.CompilerParams(dimension_semantics=("parallel",)),
    )(xp, w, b)
    return out if Nb == N else out[:N]


# ---------------------------------------------------------------------------
# Parameters: synthetic PyTorch-layout init + one-time "offline" preparation
# ---------------------------------------------------------------------------
def init_torch_params(key, in_channels, H, W, conv_dims, fc_dims):
    """Synthetic deterministic params in PyTorch layouts (OIHW conv, (out,in) fc).
    Biases are made slightly nonzero to exercise the fused bias-add path
    (detectron2's c2 fills would set them to 0)."""
    params = {"convs": [], "fcs": []}
    c = in_channels
    for cd in conv_dims:
        key, kw_, kb_ = jax.random.split(key, 3)
        std = (2.0 / (cd * 9)) ** 0.5                       # ~c2_msra_fill
        w = std * jax.random.normal(kw_, (cd, c, 3, 3), dtype=jnp.float32)
        b = 0.01 * jax.random.normal(kb_, (cd,), dtype=jnp.float32)
        params["convs"].append((w, b))
        c = cd
    d = c * H * W
    for fd in fc_dims:
        key, kw_, kb_ = jax.random.split(key, 3)
        bound = (6.0 / d) ** 0.5                            # ~c2_xavier_fill
        w = jax.random.uniform(kw_, (fd, d), jnp.float32, -bound, bound)
        b = 0.01 * jax.random.normal(kb_, (fd,), dtype=jnp.float32)
        params["fcs"].append((w, b))
        d = fd
    return params


def prepare_params(torch_params, in_channels, H, W, conv_dims, *,
                   fc_tn=256, fc_tk=1024):
    """One-time conversion to kernel-internal layouts (done 'offline'):
    bf16 cast, conv kw-fold, FC transpose + NHWC permutation + tile padding."""
    params = {"convs": [], "fcs": []}
    for (w_oihw, b) in torch_params["convs"]:
        cout, cin = int(w_oihw.shape[0]), int(w_oihw.shape[1])
        # OIHW -> HWIO -> fold kw into rows: (3, 3*Cin, Cout)
        w_slab = jnp.transpose(w_oihw, (2, 3, 1, 0)).reshape(3, 3 * cin, cout)
        params["convs"].append({"w": w_slab.astype(jnp.bfloat16),
                                "b": b.reshape(1, cout).astype(jnp.float32)})

    c_flat = conv_dims[-1] if conv_dims else in_channels
    for idx, (w_out_in, b) in enumerate(torch_params["fcs"]):
        N, K = int(w_out_in.shape[0]), int(w_out_in.shape[1])
        w_in_out = w_out_in.T                               # (K, N)
        if idx == 0 and params["convs"]:
            # Internal activations are NHWC: permute rows so the NHWC flatten
            # reproduces PyTorch's NCHW flatten ordering exactly.
            assert K == c_flat * H * W, (K, c_flat, H, W)
            perm = (jnp.arange(c_flat * H * W)
                    .reshape(c_flat, H, W).transpose(1, 2, 0).reshape(-1))
            w_in_out = w_in_out[perm, :]
        bk = _pick_block(K, fc_tk, 128)
        bn = _pick_block(N, fc_tn, 128)
        Kp, Np = _round_up(K, bk), _round_up(N, bn)
        if Kp != K or Np != N:
            w_in_out = jnp.pad(w_in_out, ((0, Kp - K), (0, Np - N)))
        bp = (b if Np == N else jnp.pad(b, ((0, Np - N),))).reshape(1, Np)
        params["fcs"].append({"w": w_in_out.astype(jnp.bfloat16),
                              "b": bp.astype(jnp.float32),
                              "K": K, "N": N, "bk": bk, "bn": bn})
    return params


# ---------------------------------------------------------------------------
# Module forward
# ---------------------------------------------------------------------------
def dropout_fastrcnn_convfc_head(x_nchw, params):
    x = x_nchw
    if params["convs"]:
        # NCHW -> NHWC once; bf16 activations throughout (MXU consumes bf16).
        x = jnp.transpose(x, (0, 2, 3, 1)).astype(jnp.bfloat16)
        for layer in params["convs"]:
            x = conv3x3_bias_relu(x, layer)
        if not params["fcs"]:
            return jnp.transpose(x, (0, 3, 1, 2)).astype(jnp.float32)
    if params["fcs"]:
        if x.ndim > 2:
            x = x.reshape(x.shape[0], -1)    # NHWC flatten (FC1 rows permuted offline)
        x = x.astype(jnp.bfloat16)
        n_fc = len(params["fcs"])
        for idx, layer in enumerate(params["fcs"]):
            # TODO(synk): dropout is inference-mode identity; training RNG not modeled.
            out_dtype = jnp.float32 if idx == n_fc - 1 else jnp.bfloat16
            x = matmul_bias_relu(x, layer, out_dtype=out_dtype)
    return x


# ---------------------------------------------------------------------------
# Pure-JAX f32 reference (PyTorch semantics) for validation
# ---------------------------------------------------------------------------
def reference_head(x_nchw, torch_params):
    x = x_nchw
    for (w, b) in torch_params["convs"]:
        x = jax.lax.conv_general_dilated(
            x, w, window_strides=(1, 1), padding=((1, 1), (1, 1)),
            dimension_numbers=("NCHW", "OIHW", "NCHW"))
        x = jax.nn.relu(x + b.reshape(1, -1, 1, 1))
    if torch_params["fcs"]:
        if x.ndim > 2:
            x = x.reshape(x.shape[0], -1)
        for (w_out_in, b) in torch_params["fcs"]:
            x = jax.nn.relu(x @ w_out_in.T + b)
    return x


if __name__ == "__main__":
    key = jax.random.PRNGKey(0)
    # Small shapes consistent with a ROI box head: 2 ROIs, 4 channels, 16x16 pooled.
    N, C, H, W = 2, 4, 16, 16
    conv_dims = [16, 16]
    fc_dims = [32, 32]

    key, kx = jax.random.split(key)
    x = jax.random.normal(kx, (N, C, H, W), dtype=jnp.float32)

    torch_params = init_torch_params(key, C, H, W, conv_dims, fc_dims)
    params = prepare_params(torch_params, C, H, W, conv_dims)

    # Params captured by closure: arrays become jit constants, tiling metadata
    # (Python ints) stays static.
    fwd = jax.jit(lambda inp: dropout_fastrcnn_convfc_head(inp, params))
    out = jax.block_until_ready(fwd(x))

    ref = reference_head(x, torch_params)
    assert out.shape == (N, fc_dims[-1]), out.shape
    assert bool(jnp.all(out >= 0.0))                      # ReLU output
    # bf16 weights/activations with f32 accumulation: loose tolerance vs f32 ref.
    err = float(jnp.max(jnp.abs(out - ref)))
    assert bool(jnp.allclose(out, ref, atol=5e-2, rtol=5e-2)), err
    print("KERNEL_OK")
</pallas_src>

<mosaic_0001>
module attributes {stable_mosaic.version = 11 : i64} {
  func.func @_conv3x3_bias_relu_kernel(%arg0: i32, %arg1: memref<2x16x16x16xbf16, #tpu.memory_space<vmem>>, %arg2: memref<3x48x16xbf16, #tpu.memory_space<vmem>>, %arg3: memref<1x16xf32, #tpu.memory_space<vmem>>, %arg4: memref<2x16x16x16xbf16, #tpu.memory_space<vmem>>, %arg5: memref<2x18x18x16xbf16, #tpu.memory_space<vmem>>, %arg6: memref<512x16xf32, #tpu.memory_space<vmem>>) attributes {dimension_semantics = [#tpu.dimension_semantics<parallel>], iteration_bounds = array<i64: 1>, scalar_prefetch = 0 : i64, scratch_operands = 2 : i64, tpu.core_type = #tpu.core_type<tc>, window_params = [{transform_indices = @transform_0, window_bounds = array<i64: 2, 16, 16, 16>}, {pipeline_mode = #tpu.pipeline_mode<synchronous>, transform_indices = @transform_1, window_bounds = array<i64: 3, 48, 16>}, {pipeline_mode = #tpu.pipeline_mode<synchronous>, transform_indices = @transform_2, window_bounds = array<i64: 1, 16>}, {transform_indices = @transform_3, window_bounds = array<i64: 2, 16, 16, 16>}]} {
    %cst = arith.constant 0.000000e+00 : bf16
    %0 = vector.broadcast %cst : bf16 to vector<2x18x18x16xbf16>
    %c0 = arith.constant 0 : index
    %c0_0 = arith.constant 0 : index
    %c0_1 = arith.constant 0 : index
    %c0_2 = arith.constant 0 : index
    %1 = vector.load %arg5[%c0, %c0_0, %c0_1, %c0_2] : memref<2x18x18x16xbf16, #tpu.memory_space<vmem>>, vector<2x18x18x16xbf16>
    tpu.vector_store %arg5[%c0, %c0_0, %c0_1, %c0_2], %0 {strides = array<i32>} : memref<2x18x18x16xbf16, #tpu.memory_space<vmem>>, vector<2x18x18x16xbf16>,
    %c0_3 = arith.constant 0 : index
    %c0_4 = arith.constant 0 : index
    %c0_5 = arith.constant 0 : index
    %c0_6 = arith.constant 0 : index
    %2 = vector.load %arg1[%c0_3, %c0_4, %c0_5, %c0_6] : memref<2x16x16x16xbf16, #tpu.memory_space<vmem>>, vector<2x16x16x16xbf16>
    %c0_7 = arith.constant 0 : index
    %c1 = arith.constant 1 : index
    %c1_8 = arith.constant 1 : index
    %c0_9 = arith.constant 0 : index
    %3 = vector.load %arg5[%c0_7, %c1, %c1_8, %c0_9] : memref<2x18x18x16xbf16, #tpu.memory_space<vmem>>, vector<2x16x16x16xbf16>
    tpu.vector_store %arg5[%c0_7, %c1, %c1_8, %c0_9], %2 {strides = array<i32>} : memref<2x18x18x16xbf16, #tpu.memory_space<vmem>>, vector<2x16x16x16xbf16>,
    %c0_10 = arith.constant 0 : index
    %c0_11 = arith.constant 0 : index
    %c0_12 = arith.constant 0 : index
    %c0_13 = arith.constant 0 : index
    %4 = vector.load %arg5[%c0_10, %c0_11, %c0_12, %c0_13] : memref<2x18x18x16xbf16, #tpu.memory_space<vmem>>, vector<2x16x18x16xbf16>
    %5 = vector.extract_strided_slice %4 {offsets = [0, 0, 0, 0], sizes = [2, 16, 16, 16], strides = [1, 1, 1, 1]} : vector<2x16x18x16xbf16> to vector<2x16x16x16xbf16>
    %6 = vector.extract_strided_slice %4 {offsets = [0, 0, 1, 0], sizes = [2, 16, 16, 16], strides = [1, 1, 1, 1]} : vector<2x16x18x16xbf16> to vector<2x16x16x16xbf16>
    %7 = vector.extract_strided_slice %4 {offsets = [0, 0, 2, 0], sizes = [2, 16, 16, 16], strides = [1, 1, 1, 1]} : vector<2x16x18x16xbf16> to vector<2x16x16x16xbf16>
    %8 = tpu.concatenate %5, %6, %7 in 3 : vector<2x16x16x16xbf16>, vector<2x16x16x16xbf16>, vector<2x16x16x16xbf16> -> vector<2x16x16x48xbf16>
    %9 = vector.shape_cast %8 : vector<2x16x16x48xbf16> to vector<512x48xbf16>
    %c0_14 = arith.constant 0 : index
    %c0_15 = arith.constant 0 : index
    %c0_16 = arith.constant 0 : index
    %10 = vector.load %arg2[%c0_14, %c0_15, %c0_16] : memref<3x48x16xbf16, #tpu.memory_space<vmem>>, vector<1x48x16xbf16>
    %11 = vector.shape_cast %10 : vector<1x48x16xbf16> to vector<48x16xbf16>
    %cst_17 = arith.constant dense<0.000000e+00> : vector<512x16xf32>
    %12 = tpu.matmul %9, %11, %cst_17 {dimension_numbers = #tpu.dot_dimension_numbers<[1], [0], [0], [1], [0, 0, 1, 1], [], []>} : vector<512x48xbf16>, vector<48x16xbf16>, vector<512x16xf32> -> vector<512x16xf32>
    %c0_18 = arith.constant 0 : index
    %c0_19 = arith.constant 0 : index
    %13 = vector.load %arg6[%c0_18, %c0_19] : memref<512x16xf32, #tpu.memory_space<vmem>>, vector<512x16xf32>
    tpu.vector_store %arg6[%c0_18, %c0_19], %12 {strides = array<i32>} : memref<512x16xf32, #tpu.memory_space<vmem>>, vector<512x16xf32>,
    %c0_20 = arith.constant 0 : index
    %c1_21 = arith.constant 1 : index
    %c0_22 = arith.constant 0 : index
    %c0_23 = arith.constant 0 : index
    %14 = vector.load %arg5[%c0_20, %c1_21, %c0_22, %c0_23] : memref<2x18x18x16xbf16, #tpu.memory_space<vmem>>, vector<2x16x18x16xbf16>
    %15 = vector.extract_strided_slice %14 {offsets = [0, 0, 0, 0], sizes = [2, 16, 16, 16], strides = [1, 1, 1, 1]} : vector<2x16x18x16xbf16> to vector<2x16x16x16xbf16>
    %16 = vector.extract_strided_slice %14 {offsets = [0, 0, 1, 0], sizes = [2, 16, 16, 16], strides = [1, 1, 1, 1]} : vector<2x16x18x16xbf16> to vector<2x16x16x16xbf16>
    %17 = vector.extract_strided_slice %14 {offsets = [0, 0, 2, 0], sizes = [2, 16, 16, 16], strides = [1, 1, 1, 1]} : vector<2x16x18x16xbf16> to vector<2x16x16x16xbf16>
    %18 = tpu.concatenate %15, %16, %17 in 3 : vector<2x16x16x16xbf16>, vector<2x16x16x16xbf16>, vector<2x16x16x16xbf16> -> vector<2x16x16x48xbf16>
    %19 = vector.shape_cast %18 : vector<2x16x16x48xbf16> to vector<512x48xbf16>
    %c1_24 = arith.constant 1 : index
    %c0_25 = arith.constant 0 : index
    %c0_26 = arith.constant 0 : index
    %20 = vector.load %arg2[%c1_24, %c0_25, %c0_26] : memref<3x48x16xbf16, #tpu.memory_space<vmem>>, vector<1x48x16xbf16>
    %21 = vector.shape_cast %20 : vector<1x48x16xbf16> to vector<48x16xbf16>
    %cst_27 = arith.constant dense<0.000000e+00> : vector<512x16xf32>
    %22 = tpu.matmul %19, %21, %cst_27 {dimension_numbers = #tpu.dot_dimension_numbers<[1], [0], [0], [1], [0, 0, 1, 1], [], []>} : vector<512x48xbf16>, vector<48x16xbf16>, vector<512x16xf32> -> vector<512x16xf32>
    %c0_28 = arith.constant 0 : index
    %c0_29 = arith.constant 0 : index
    %23 = vector.load %arg6[%c0_28, %c0_29] : memref<512x16xf32, #tpu.memory_space<vmem>>, vector<512x16xf32>
    %24 = arith.addf %23, %22 : vector<512x16xf32>
    %c0_30 = arith.constant 0 : index
    %c0_31 = arith.constant 0 : index
    %25 = vector.load %arg6[%c0_30, %c0_31] : memref<512x16xf32, #tpu.memory_space<vmem>>, vector<512x16xf32>
    tpu.vector_store %arg6[%c0_30, %c0_31], %24 {strides = array<i32>} : memref<512x16xf32, #tpu.memory_space<vmem>>, vector<512x16xf32>,
    %c0_32 = arith.constant 0 : index
    %c2 = arith.constant 2 : index
    %c0_33 = arith.constant 0 : index
    %c0_34 = arith.constant 0 : index
    %26 = vector.load %arg5[%c0_32, %c2, %c0_33, %c0_34] : memref<2x18x18x16xbf16, #tpu.memory_space<vmem>>, vector<2x16x18x16xbf16>
    %27 = vector.extract_strided_slice %26 {offsets = [0, 0, 0, 0], sizes = [2, 16, 16, 16], strides = [1, 1, 1, 1]} : vector<2x16x18x16xbf16> to vector<2x16x16x16xbf16>
    %28 = vector.extract_strided_slice %26 {offsets = [0, 0, 1, 0], sizes = [2, 16, 16, 16], strides = [1, 1, 1, 1]} : vector<2x16x18x16xbf16> to vector<2x16x16x16xbf16>
    %29 = vector.extract_strided_slice %26 {offsets = [0, 0, 2, 0], sizes = [2, 16, 16, 16], strides = [1, 1, 1, 1]} : vector<2x16x18x16xbf16> to vector<2x16x16x16xbf16>
    %30 = tpu.concatenate %27, %28, %29 in 3 : vector<2x16x16x16xbf16>, vector<2x16x16x16xbf16>, vector<2x16x16x16xbf16> -> vector<2x16x16x48xbf16>
    %31 = vector.shape_cast %30 : vector<2x16x16x48xbf16> to vector<512x48xbf16>
    %c2_35 = arith.constant 2 : index
    %c0_36 = arith.constant 0 : index
    %c0_37 = arith.constant 0 : index
    %32 = vector.load %arg2[%c2_35, %c0_36, %c0_37] : memref<3x48x16xbf16, #tpu.memory_space<vmem>>, vector<1x48x16xbf16>
    %33 = vector.shape_cast %32 : vector<1x48x16xbf16> to vector<48x16xbf16>
    %cst_38 = arith.constant dense<0.000000e+00> : vector<512x16xf32>
    %34 = tpu.matmul %31, %33, %cst_38 {dimension_numbers = #tpu.dot_dimension_numbers<[1], [0], [0], [1], [0, 0, 1, 1], [], []>} : vector<512x48xbf16>, vector<48x16xbf16>, vector<512x16xf32> -> vector<512x16xf32>
    %c0_39 = arith.constant 0 : index
    %c0_40 = arith.constant 0 : index
    %35 = vector.load %arg6[%c0_39, %c0_40] : memref<512x16xf32, #tpu.memory_space<vmem>>, vector<512x16xf32>
    %36 = arith.addf %35, %34 : vector<512x16xf32>
    %c0_41 = arith.constant 0 : index
    %c0_42 = arith.constant 0 : index
    %37 = vector.load %arg6[%c0_41, %c0_42] : memref<512x16xf32, #tpu.memory_space<vmem>>, vector<512x16xf32>
    tpu.vector_store %arg6[%c0_41, %c0_42], %36 {strides = array<i32>} : memref<512x16xf32, #tpu.memory_space<vmem>>, vector<512x16xf32>,
    %c0_43 = arith.constant 0 : index
    %c0_44 = arith.constant 0 : index
    %38 = vector.load %arg6[%c0_43, %c0_44] : memref<512x16xf32, #tpu.memory_space<vmem>>, vector<512x16xf32>
    %c0_45 = arith.constant 0 : index
    %c0_46 = arith.constant 0 : index
    %39 = vector.load %arg3[%c0_45, %c0_46] : memref<1x16xf32, #tpu.memory_space<vmem>>, vector<1x16xf32>
    %40 = vector.broadcast %39 : vector<1x16xf32> to vector<512x16xf32>
    %41 = arith.addf %38, %40 : vector<512x16xf32>
    %cst_47 = arith.constant 0.000000e+00 : f32
    %42 = vector.broadcast %cst_47 : f32 to vector<512x16xf32>
    %43 = arith.maximumf %41, %42 : vector<512x16xf32>
    %44 = vector.shape_cast %43 : vector<512x16xf32> to vector<2x16x16x16xf32>
    %45 = arith.truncf %44 : vector<2x16x16x16xf32> to vector<2x16x16x16xbf16>
    %c0_48 = arith.constant 0 : index
    %c0_49 = arith.constant 0 : index
    %c0_50 = arith.constant 0 : index
    %c0_51 = arith.constant 0 : index
    %46 = vector.load %arg4[%c0_48, %c0_49, %c0_50, %c0_51] : memref<2x16x16x16xbf16, #tpu.memory_space<vmem>>, vector<2x16x16x16xbf16>
    tpu.vector_store %arg4[%c0_48, %c0_49, %c0_50, %c0_51], %45 {strides = array<i32>} : memref<2x16x16x16xbf16, #tpu.memory_space<vmem>>, vector<2x16x16x16xbf16>,
    return
  }
  func.func @transform_0(%arg0: i32) -> (i32, i32, i32, i32) {
    %c0_i32 = arith.constant 0 : i32
    %c0_i32_0 = arith.constant 0 : i32
    %c0_i32_1 = arith.constant 0 : i32
    %c0_i32_2 = arith.constant 0 : i32
    return %arg0, %c0_i32, %c0_i32_0, %c0_i32_1 : i32, i32, i32, i32
  }
  func.func @transform_1(%arg0: i32) -> (i32, i32, i32) {
    %c0_i32 = arith.constant 0 : i32
    %c0_i32_0 = arith.constant 0 : i32
    %c0_i32_1 = arith.constant 0 : i32
    %c0_i32_2 = arith.constant 0 : i32
    return %c0_i32, %c0_i32_0, %c0_i32_1 : i32, i32, i32
  }
  func.func @transform_2(%arg0: i32) -> (i32, i32) {
    %c0_i32 = arith.constant 0 : i32
    %c0_i32_0 = arith.constant 0 : i32
    %c0_i32_1 = arith.constant 0 : i32
    return %c0_i32, %c0_i32_0 : i32, i32
  }
  func.func @transform_3(%arg0: i32) -> (i32, i32, i32, i32) {
    %c0_i32 = arith.constant 0 : i32
    %c0_i32_0 = arith.constant 0 : i32
    %c0_i32_1 = arith.constant 0 : i32
    %c0_i32_2 = arith.constant 0 : i32
    return %arg0, %c0_i32, %c0_i32_0, %c0_i32_1 : i32, i32, i32, i32
  }
}

module attributes {stable_mosaic.version = 11 : i64} {
  func.func @_conv3x3_bias_relu_kernel(%arg0: i32, %arg1: memref<2x16x16x4xbf16, #tpu.memory_space<vmem>>, %arg2: memref<3x12x16xbf16, #tpu.memory_space<vmem>>, %arg3: memref<1x16xf32, #tpu.memory_space<vmem>>, %arg4: memref<2x16x16x16xbf16, #tpu.memory_space<vmem>>, %arg5: memref<2x18x18x4xbf16, #tpu.memory_space<vmem>>, %arg6: memref<512x16xf32, #tpu.memory_space<vmem>>) attributes {dimension_semantics = [#tpu.dimension_semantics<parallel>], iteration_bounds = array<i64: 1>, scalar_prefetch = 0 : i64, scratch_operands = 2 : i64, tpu.core_type = #tpu.core_type<tc>, window_params = [{transform_indices = @transform_0, window_bounds = array<i64: 2, 16, 16, 4>}, {pipeline_mode = #tpu.pipeline_mode<synchronous>, transform_indices = @transform_1, window_bounds = array<i64: 3, 12, 16>}, {pipeline_mode = #tpu.pipeline_mode<synchronous>, transform_indices = @transform_2, window_bounds = array<i64: 1, 16>}, {transform_indices = @transform_3, window_bounds = array<i64: 2, 16, 16, 16>}]} {
    %cst = arith.constant 0.000000e+00 : bf16
    %0 = vector.broadcast %cst : bf16 to vector<2x18x18x4xbf16>
    %c0 = arith.constant 0 : index
    %c0_0 = arith.constant 0 : index
    %c0_1 = arith.constant 0 : index
    %c0_2 = arith.constant 0 : index
    %1 = vector.load %arg5[%c0, %c0_0, %c0_1, %c0_2] : memref<2x18x18x4xbf16, #tpu.memory_space<vmem>>, vector<2x18x18x4xbf16>
    tpu.vector_store %arg5[%c0, %c0_0, %c0_1, %c0_2], %0 {strides = array<i32>} : memref<2x18x18x4xbf16, #tpu.memory_space<vmem>>, vector<2x18x18x4xbf16>,
    %c0_3 = arith.constant 0 : index
    %c0_4 = arith.constant 0 : index
    %c0_5 = arith.constant 0 : index
    %c0_6 = arith.constant 0 : index
    %2 = vector.load %arg1[%c0_3, %c0_4, %c0_5, %c0_6] : memref<2x16x16x4xbf16, #tpu.memory_space<vmem>>, vector<2x16x16x4xbf16>
    %c0_7 = arith.constant 0 : index
    %c1 = arith.constant 1 : index
    %c1_8 = arith.constant 1 : index
    %c0_9 = arith.constant 0 : index
    %3 = vector.load %arg5[%c0_7, %c1, %c1_8, %c0_9] : memref<2x18x18x4xbf16, #tpu.memory_space<vmem>>, vector<2x16x16x4xbf16>
    tpu.vector_store %arg5[%c0_7, %c1, %c1_8, %c0_9], %2 {strides = array<i32>} : memref<2x18x18x4xbf16, #tpu.memory_space<vmem>>, vector<2x16x16x4xbf16>,
    %c0_10 = arith.constant 0 : index
    %c0_11 = arith.constant 0 : index
    %c0_12 = arith.constant 0 : index
    %c0_13 = arith.constant 0 : index
    %4 = vector.load %arg5[%c0_10, %c0_11, %c0_12, %c0_13] : memref<2x18x18x4xbf16, #tpu.memory_space<vmem>>, vector<2x16x18x4xbf16>
    %5 = vector.extract_strided_slice %4 {offsets = [0, 0, 0, 0], sizes = [2, 16, 16, 4], strides = [1, 1, 1, 1]} : vector<2x16x18x4xbf16> to vector<2x16x16x4xbf16>
    %6 = vector.extract_strided_slice %4 {offsets = [0, 0, 1, 0], sizes = [2, 16, 16, 4], strides = [1, 1, 1, 1]} : vector<2x16x18x4xbf16> to vector<2x16x16x4xbf16>
    %7 = vector.extract_strided_slice %4 {offsets = [0, 0, 2, 0], sizes = [2, 16, 16, 4], strides = [1, 1, 1, 1]} : vector<2x16x18x4xbf16> to vector<2x16x16x4xbf16>
    %8 = tpu.concatenate %5, %6, %7 in 3 : vector<2x16x16x4xbf16>, vector<2x16x16x4xbf16>, vector<2x16x16x4xbf16> -> vector<2x16x16x12xbf16>
    %9 = vector.shape_cast %8 : vector<2x16x16x12xbf16> to vector<512x12xbf16>
    %c0_14 = arith.constant 0 : index
    %c0_15 = arith.constant 0 : index
    %c0_16 = arith.constant 0 : index
    %10 = vector.load %arg2[%c0_14, %c0_15, %c0_16] : memref<3x12x16xbf16, #tpu.memory_space<vmem>>, vector<1x12x16xbf16>
    %11 = vector.shape_cast %10 : vector<1x12x16xbf16> to vector<12x16xbf16>
    %cst_17 = arith.constant dense<0.000000e+00> : vector<512x16xf32>
    %12 = tpu.matmul %9, %11, %cst_17 {dimension_numbers = #tpu.dot_dimension_numbers<[1], [0], [0], [1], [0, 0, 1, 1], [], []>} : vector<512x12xbf16>, vector<12x16xbf16>, vector<512x16xf32> -> vector<512x16xf32>
    %c0_18 = arith.constant 0 : index
    %c0_19 = arith.constant 0 : index
    %13 = vector.load %arg6[%c0_18, %c0_19] : memref<512x16xf32, #tpu.memory_space<vmem>>, vector<512x16xf32>
    tpu.vector_store %arg6[%c0_18, %c0_19], %12 {strides = array<i32>} : memref<512x16xf32, #tpu.memory_space<vmem>>, vector<512x16xf32>,
    %c0_20 = arith.constant 0 : index
    %c1_21 = arith.constant 1 : index
    %c0_22 = arith.constant 0 : index
    %c0_23 = arith.constant 0 : index
    %14 = vector.load %arg5[%c0_20, %c1_21, %c0_22, %c0_23] : memref<2x18x18x4xbf16, #tpu.memory_space<vmem>>, vector<2x16x18x4xbf16>
    %15 = vector.extract_strided_slice %14 {offsets = [0, 0, 0, 0], sizes = [2, 16, 16, 4], strides = [1, 1, 1, 1]} : vector<2x16x18x4xbf16> to vector<2x16x16x4xbf16>
    %16 = vector.extract_strided_slice %14 {offsets = [0, 0, 1, 0], sizes = [2, 16, 16, 4], strides = [1, 1, 1, 1]} : vector<2x16x18x4xbf16> to vector<2x16x16x4xbf16>
    %17 = vector.extract_strided_slice %14 {offsets = [0, 0, 2, 0], sizes = [2, 16, 16, 4], strides = [1, 1, 1, 1]} : vector<2x16x18x4xbf16> to vector<2x16x16x4xbf16>
    %18 = tpu.concatenate %15, %16, %17 in 3 : vector<2x16x16x4xbf16>, vector<2x16x16x4xbf16>, vector<2x16x16x4xbf16> -> vector<2x16x16x12xbf16>
    %19 = vector.shape_cast %18 : vector<2x16x16x12xbf16> to vector<512x12xbf16>
    %c1_24 = arith.constant 1 : index
    %c0_25 = arith.constant 0 : index
    %c0_26 = arith.constant 0 : index
    %20 = vector.load %arg2[%c1_24, %c0_25, %c0_26] : memref<3x12x16xbf16, #tpu.memory_space<vmem>>, vector<1x12x16xbf16>
    %21 = vector.shape_cast %20 : vector<1x12x16xbf16> to vector<12x16xbf16>
    %cst_27 = arith.constant dense<0.000000e+00> : vector<512x16xf32>
    %22 = tpu.matmul %19, %21, %cst_27 {dimension_numbers = #tpu.dot_dimension_numbers<[1], [0], [0], [1], [0, 0, 1, 1], [], []>} : vector<512x12xbf16>, vector<12x16xbf16>, vector<512x16xf32> -> vector<512x16xf32>
    %c0_28 = arith.constant 0 : index
    %c0_29 = arith.constant 0 : index
    %23 = vector.load %arg6[%c0_28, %c0_29] : memref<512x16xf32, #tpu.memory_space<vmem>>, vector<512x16xf32>
    %24 = arith.addf %23, %22 : vector<512x16xf32>
    %c0_30 = arith.constant 0 : index
    %c0_31 = arith.constant 0 : index
    %25 = vector.load %arg6[%c0_30, %c0_31] : memref<512x16xf32, #tpu.memory_space<vmem>>, vector<512x16xf32>
    tpu.vector_store %arg6[%c0_30, %c0_31], %24 {strides = array<i32>} : memref<512x16xf32, #tpu.memory_space<vmem>>, vector<512x16xf32>,
    %c0_32 = arith.constant 0 : index
    %c2 = arith.constant 2 : index
    %c0_33 = arith.constant 0 : index
    %c0_34 = arith.constant 0 : index
    %26 = vector.load %arg5[%c0_32, %c2, %c0_33, %c0_34] : memref<2x18x18x4xbf16, #tpu.memory_space<vmem>>, vector<2x16x18x4xbf16>
    %27 = vector.extract_strided_slice %26 {offsets = [0, 0, 0, 0], sizes = [2, 16, 16, 4], strides = [1, 1, 1, 1]} : vector<2x16x18x4xbf16> to vector<2x16x16x4xbf16>
    %28 = vector.extract_strided_slice %26 {offsets = [0, 0, 1, 0], sizes = [2, 16, 16, 4], strides = [1, 1, 1, 1]} : vector<2x16x18x4xbf16> to vector<2x16x16x4xbf16>
    %29 = vector.extract_strided_slice %26 {offsets = [0, 0, 2, 0], sizes = [2, 16, 16, 4], strides = [1, 1, 1, 1]} : vector<2x16x18x4xbf16> to vector<2x16x16x4xbf16>
    %30 = tpu.concatenate %27, %28, %29 in 3 : vector<2x16x16x4xbf16>, vector<2x16x16x4xbf16>, vector<2x16x16x4xbf16> -> vector<2x16x16x12xbf16>
    %31 = vector.shape_cast %30 : vector<2x16x16x12xbf16> to vector<512x12xbf16>
    %c2_35 = arith.constant 2 : index
    %c0_36 = arith.constant 0 : index
    %c0_37 = arith.constant 0 : index
    %32 = vector.load %arg2[%c2_35, %c0_36, %c0_37] : memref<3x12x16xbf16, #tpu.memory_space<vmem>>, vector<1x12x16xbf16>
    %33 = vector.shape_cast %32 : vector<1x12x16xbf16> to vector<12x16xbf16>
    %cst_38 = arith.constant dense<0.000000e+00> : vector<512x16xf32>
    %34 = tpu.matmul %31, %33, %cst_38 {dimension_numbers = #tpu.dot_dimension_numbers<[1], [0], [0], [1], [0, 0, 1, 1], [], []>} : vector<512x12xbf16>, vector<12x16xbf16>, vector<512x16xf32> -> vector<512x16xf32>
    %c0_39 = arith.constant 0 : index
    %c0_40 = arith.constant 0 : index
    %35 = vector.load %arg6[%c0_39, %c0_40] : memref<512x16xf32, #tpu.memory_space<vmem>>, vector<512x16xf32>
    %36 = arith.addf %35, %34 : vector<512x16xf32>
    %c0_41 = arith.constant 0 : index
    %c0_42 = arith.constant 0 : index
    %37 = vector.load %arg6[%c0_41, %c0_42] : memref<512x16xf32, #tpu.memory_space<vmem>>, vector<512x16xf32>
    tpu.vector_store %arg6[%c0_41, %c0_42], %36 {strides = array<i32>} : memref<512x16xf32, #tpu.memory_space<vmem>>, vector<512x16xf32>,
    %c0_43 = arith.constant 0 : index
    %c0_44 = arith.constant 0 : index
    %38 = vector.load %arg6[%c0_43, %c0_44] : memref<512x16xf32, #tpu.memory_space<vmem>>, vector<512x16xf32>
    %c0_45 = arith.constant 0 : index
    %c0_46 = arith.constant 0 : index
    %39 = vector.load %arg3[%c0_45, %c0_46] : memref<1x16xf32, #tpu.memory_space<vmem>>, vector<1x16xf32>
    %40 = vector.broadcast %39 : vector<1x16xf32> to vector<512x16xf32>
    %41 = arith.addf %38, %40 : vector<512x16xf32>
    %cst_47 = arith.constant 0.000000e+00 : f32
    %42 = vector.broadcast %cst_47 : f32 to vector<512x16xf32>
    %43 = arith.maximumf %41, %42 : vector<512x16xf32>
    %44 = vector.shape_cast %43 : vector<512x16xf32> to vector<2x16x16x16xf32>
    %45 = arith.truncf %44 : vector<2x16x16x16xf32> to vector<2x16x16x16xbf16>
    %c0_48 = arith.constant 0 : index
    %c0_49 = arith.constant 0 : index
    %c0_50 = arith.constant 0 : index
    %c0_51 = arith.constant 0 : index
    %46 = vector.load %arg4[%c0_48, %c0_49, %c0_50, %c0_51] : memref<2x16x16x16xbf16, #tpu.memory_space<vmem>>, vector<2x16x16x16xbf16>
    tpu.vector_store %arg4[%c0_48, %c0_49, %c0_50, %c0_51], %45 {strides = array<i32>} : memref<2x16x16x16xbf16, #tpu.memory_space<vmem>>, vector<2x16x16x16xbf16>,
    return
  }
  func.func @transform_0(%arg0: i32) -> (i32, i32, i32, i32) {
    %c0_i32 = arith.constant 0 : i32
    %c0_i32_0 = arith.constant 0 : i32
    %c0_i32_1 = arith.constant 0 : i32
    %c0_i32_2 = arith.constant 0 : i32
    return %arg0, %c0_i32, %c0_i32_0, %c0_i32_1 : i32, i32, i32, i32
  }
  func.func @transform_1(%arg0: i32) -> (i32, i32, i32) {
    %c0_i32 = arith.constant 0 : i32
    %c0_i32_0 = arith.constant 0 : i32
    %c0_i32_1 = arith.constant 0 : i32
    %c0_i32_2 = arith.constant 0 : i32
    return %c0_i32, %c0_i32_0, %c0_i32_1 : i32, i32, i32
  }
  func.func @transform_2(%arg0: i32) -> (i32, i32) {
    %c0_i32 = arith.constant 0 : i32
    %c0_i32_0 = arith.constant 0 : i32
    %c0_i32_1 = arith.constant 0 : i32
    return %c0_i32, %c0_i32_0 : i32, i32
  }
  func.func @transform_3(%arg0: i32) -> (i32, i32, i32, i32) {
    %c0_i32 = arith.constant 0 : i32
    %c0_i32_0 = arith.constant 0 : i32
    %c0_i32_1 = arith.constant 0 : i32
    %c0_i32_2 = arith.constant 0 : i32
    return %arg0, %c0_i32, %c0_i32_0, %c0_i32_1 : i32, i32, i32, i32
  }
}

module attributes {stable_mosaic.version = 11 : i64} {
  func.func @_matmul_bias_relu_kernel(%arg0: i32, %arg1: i32, %arg2: i32, %arg3: memref<2x1024xbf16, #tpu.memory_space<vmem>>, %arg4: memref<1024x32xbf16, #tpu.memory_space<vmem>>, %arg5: memref<1x32xf32, #tpu.memory_space<vmem>>, %arg6: memref<2x32xbf16, #tpu.memory_space<vmem>>, %arg7: memref<2x32xf32, #tpu.memory_space<vmem>>) attributes {dimension_semantics = [#tpu.dimension_semantics<parallel>, #tpu.dimension_semantics<parallel>, #tpu.dimension_semantics<arbitrary>], iteration_bounds = array<i64: 1, 1, 4>, scalar_prefetch = 0 : i64, scratch_operands = 1 : i64, tpu.core_type = #tpu.core_type<tc>, window_params = [{transform_indices = @transform_0, window_bounds = array<i64: 2, 1024>}, {transform_indices = @transform_1, window_bounds = array<i64: 1024, 32>}, {transform_indices = @transform_2, window_bounds = array<i64: 1, 32>}, {transform_indices = @transform_3, window_bounds = array<i64: 2, 32>}]} {
    %c0_i32 = arith.constant 0 : i32
    %0 = arith.cmpi eq, %arg2, %c0_i32 : i32
    %1 = arith.extui %0 : i1 to i32
    %c0_i32_0 = arith.constant 0 : i32
    %2 = arith.cmpi ne, %1, %c0_i32_0 : i32
    scf.if %2 {
      %cst_9 = arith.constant 0.000000e+00 : f32
      %12 = vector.broadcast %cst_9 : f32 to vector<2x32xf32>
      %c0_10 = arith.constant 0 : index
      %c0_11 = arith.constant 0 : index
      %13 = vector.load %arg7[%c0_10, %c0_11] : memref<2x32xf32, #tpu.memory_space<vmem>>, vector<2x32xf32>
      tpu.vector_store %arg7[%c0_10, %c0_11], %12 {strides = array<i32>} : memref<2x32xf32, #tpu.memory_space<vmem>>, vector<2x32xf32>,
    } else {
    }
    %c0 = arith.constant 0 : index
    %c0_1 = arith.constant 0 : index
    %3 = vector.load %arg7[%c0, %c0_1] : memref<2x32xf32, #tpu.memory_space<vmem>>, vector<2x32xf32>
    %c0_2 = arith.constant 0 : index
    %c0_3 = arith.constant 0 : index
    %4 = vector.load %arg3[%c0_2, %c0_3] : memref<2x1024xbf16, #tpu.memory_space<vmem>>, vector<2x1024xbf16>
    %c0_4 = arith.constant 0 : index
    %c0_5 = arith.constant 0 : index
    %5 = vector.load %arg4[%c0_4, %c0_5] : memref<1024x32xbf16, #tpu.memory_space<vmem>>, vector<1024x32xbf16>
    %cst = arith.constant dense<0.000000e+00> : vector<2x32xf32>
    %6 = tpu.matmul %4, %5, %cst {dimension_numbers = #tpu.dot_dimension_numbers<[1], [0], [0], [1], [0, 0, 1, 1], [], []>} : vector<2x1024xbf16>, vector<1024x32xbf16>, vector<2x32xf32> -> vector<2x32xf32>
    %7 = arith.addf %3, %6 : vector<2x32xf32>
    %c0_6 = arith.constant 0 : index
    %c0_7 = arith.constant 0 : index
    %8 = vector.load %arg7[%c0_6, %c0_7] : memref<2x32xf32, #tpu.memory_space<vmem>>, vector<2x32xf32>
    tpu.vector_store %arg7[%c0_6, %c0_7], %7 {strides = array<i32>} : memref<2x32xf32, #tpu.memory_space<vmem>>, vector<2x32xf32>,
    %c3_i32 = arith.constant 3 : i32
    %9 = arith.cmpi eq, %arg2, %c3_i32 : i32
    %10 = arith.extui %9 : i1 to i32
    %c0_i32_8 = arith.constant 0 : i32
    %11 = arith.cmpi ne, %10, %c0_i32_8 : i32
    scf.if %11 {
      %c0_9 = arith.constant 0 : index
      %c0_10 = arith.constant 0 : index
      %12 = vector.load %arg7[%c0_9, %c0_10] : memref<2x32xf32, #tpu.memory_space<vmem>>, vector<2x32xf32>
      %c0_11 = arith.constant 0 : index
      %c0_12 = arith.constant 0 : index
      %13 = vector.load %arg5[%c0_11, %c0_12] : memref<1x32xf32, #tpu.memory_space<vmem>>, vector<1x32xf32>
      %14 = vector.broadcast %13 : vector<1x32xf32> to vector<2x32xf32>
      %15 = arith.addf %12, %14 : vector<2x32xf32>
      %cst_13 = arith.constant 0.000000e+00 : f32
      %16 = vector.broadcast %cst_13 : f32 to vector<2x32xf32>
      %17 = arith.maximumf %15, %16 : vector<2x32xf32>
      %18 = arith.truncf %17 : vector<2x32xf32> to vector<2x32xbf16>
      %c0_14 = arith.constant 0 : index
      %c0_15 = arith.constant 0 : index
      %19 = vector.load %arg6[%c0_14, %c0_15] : memref<2x32xbf16, #tpu.memory_space<vmem>>, vector<2x32xbf16>
      tpu.vector_store %arg6[%c0_14, %c0_15], %18 {strides = array<i32>} : memref<2x32xbf16, #tpu.memory_space<vmem>>, vector<2x32xbf16>,
    } else {
    }
    return
  }
  func.func @transform_0(%arg0: i32, %arg1: i32, %arg2: i32) -> (i32, i32) {
    %c0_i32 = arith.constant 0 : i32
    return %arg0, %arg2 : i32, i32
  }
  func.func @transform_1(%arg0: i32, %arg1: i32, %arg2: i32) -> (i32, i32) {
    %c0_i32 = arith.constant 0 : i32
    return %arg2, %arg1 : i32, i32
  }
  func.func @transform_2(%arg0: i32, %arg1: i32, %arg2: i32) -> (i32, i32) {
    %c0_i32 = arith.constant 0 : i32
    %c0_i32_0 = arith.constant 0 : i32
    return %c0_i32, %arg1 : i32, i32
  }
  func.func @transform_3(%arg0: i32, %arg1: i32, %arg2: i32) -> (i32, i32) {
    %c0_i32 = arith.constant 0 : i32
    return %arg0, %arg1 : i32, i32
  }
}

module attributes {stable_mosaic.version = 11 : i64} {
  func.func @_matmul_bias_relu_kernel(%arg0: i32, %arg1: i32, %arg2: i32, %arg3: memref<2x32xbf16, #tpu.memory_space<vmem>>, %arg4: memref<32x32xbf16, #tpu.memory_space<vmem>>, %arg5: memref<1x32xf32, #tpu.memory_space<vmem>>, %arg6: memref<2x32xf32, #tpu.memory_space<vmem>>, %arg7: memref<2x32xf32, #tpu.memory_space<vmem>>) attributes {dimension_semantics = [#tpu.dimension_semantics<parallel>, #tpu.dimension_semantics<parallel>, #tpu.dimension_semantics<arbitrary>], iteration_bounds = array<i64: 1, 1, 1>, scalar_prefetch = 0 : i64, scratch_operands = 1 : i64, tpu.core_type = #tpu.core_type<tc>, window_params = [{transform_indices = @transform_0, window_bounds = array<i64: 2, 32>}, {transform_indices = @transform_1, window_bounds = array<i64: 32, 32>}, {transform_indices = @transform_2, window_bounds = array<i64: 1, 32>}, {transform_indices = @transform_3, window_bounds = array<i64: 2, 32>}]} {
    %c0_i32 = arith.constant 0 : i32
    %0 = arith.cmpi eq, %arg2, %c0_i32 : i32
    %1 = arith.extui %0 : i1 to i32
    %c0_i32_0 = arith.constant 0 : i32
    %2 = arith.cmpi ne, %1, %c0_i32_0 : i32
    scf.if %2 {
      %cst_10 = arith.constant 0.000000e+00 : f32
      %12 = vector.broadcast %cst_10 : f32 to vector<2x32xf32>
      %c0_11 = arith.constant 0 : index
      %c0_12 = arith.constant 0 : index
      %13 = vector.load %arg7[%c0_11, %c0_12] : memref<2x32xf32, #tpu.memory_space<vmem>>, vector<2x32xf32>
      tpu.vector_store %arg7[%c0_11, %c0_12], %12 {strides = array<i32>} : memref<2x32xf32, #tpu.memory_space<vmem>>, vector<2x32xf32>,
    } else {
    }
    %c0 = arith.constant 0 : index
    %c0_1 = arith.constant 0 : index
    %3 = vector.load %arg7[%c0, %c0_1] : memref<2x32xf32, #tpu.memory_space<vmem>>, vector<2x32xf32>
    %c0_2 = arith.constant 0 : index
    %c0_3 = arith.constant 0 : index
    %4 = vector.load %arg3[%c0_2, %c0_3] : memref<2x32xbf16, #tpu.memory_space<vmem>>, vector<2x32xbf16>
    %c0_4 = arith.constant 0 : index
    %c0_5 = arith.constant 0 : index
    %5 = vector.load %arg4[%c0_4, %c0_5] : memref<32x32xbf16, #tpu.memory_space<vmem>>, vector<32x32xbf16>
    %cst = arith.constant dense<0.000000e+00> : vector<2x32xf32>
    %6 = tpu.matmul %4, %5, %cst {dimension_numbers = #tpu.dot_dimension_numbers<[1], [0], [0], [1], [0, 0, 1, 1], [], []>} : vector<2x32xbf16>, vector<32x32xbf16>, vector<2x32xf32> -> vector<2x32xf32>
    %7 = arith.addf %3, %6 : vector<2x32xf32>
    %c0_6 = arith.constant 0 : index
    %c0_7 = arith.constant 0 : index
    %8 = vector.load %arg7[%c0_6, %c0_7] : memref<2x32xf32, #tpu.memory_space<vmem>>, vector<2x32xf32>
    tpu.vector_store %arg7[%c0_6, %c0_7], %7 {strides = array<i32>} : memref<2x32xf32, #tpu.memory_space<vmem>>, vector<2x32xf32>,
    %c0_i32_8 = arith.constant 0 : i32
    %9 = arith.cmpi eq, %arg2, %c0_i32_8 : i32
    %10 = arith.extui %9 : i1 to i32
    %c0_i32_9 = arith.constant 0 : i32
    %11 = arith.cmpi ne, %10, %c0_i32_9 : i32
    scf.if %11 {
      %c0_10 = arith.constant 0 : index
      %c0_11 = arith.constant 0 : index
      %12 = vector.load %arg7[%c0_10, %c0_11] : memref<2x32xf32, #tpu.memory_space<vmem>>, vector<2x32xf32>
      %c0_12 = arith.constant 0 : index
      %c0_13 = arith.constant 0 : index
      %13 = vector.load %arg5[%c0_12, %c0_13] : memref<1x32xf32, #tpu.memory_space<vmem>>, vector<1x32xf32>
      %14 = vector.broadcast %13 : vector<1x32xf32> to vector<2x32xf32>
      %15 = arith.addf %12, %14 : vector<2x32xf32>
      %cst_14 = arith.constant 0.000000e+00 : f32
      %16 = vector.broadcast %cst_14 : f32 to vector<2x32xf32>
      %17 = arith.maximumf %15, %16 : vector<2x32xf32>
      %c0_15 = arith.constant 0 : index
      %c0_16 = arith.constant 0 : index
      %18 = vector.load %arg6[%c0_15, %c0_16] : memref<2x32xf32, #tpu.memory_space<vmem>>, vector<2x32xf32>
      tpu.vector_store %arg6[%c0_15, %c0_16], %17 {strides = array<i32>} : memref<2x32xf32, #tpu.memory_space<vmem>>, vector<2x32xf32>,
    } else {
    }
    return
  }
  func.func @transform_0(%arg0: i32, %arg1: i32, %arg2: i32) -> (i32, i32) {
    %c0_i32 = arith.constant 0 : i32
    return %arg0, %arg2 : i32, i32
  }
  func.func @transform_1(%arg0: i32, %arg1: i32, %arg2: i32) -> (i32, i32) {
    %c0_i32 = arith.constant 0 : i32
    return %arg2, %arg1 : i32, i32
  }
  func.func @transform_2(%arg0: i32, %arg1: i32, %arg2: i32) -> (i32, i32) {
    %c0_i32 = arith.constant 0 : i32
    %c0_i32_0 = arith.constant 0 : i32
    return %c0_i32, %arg1 : i32, i32
  }
  func.func @transform_3(%arg0: i32, %arg1: i32, %arg2: i32) -> (i32, i32) {
    %c0_i32 = arith.constant 0 : i32
    return %arg0, %arg1 : i32, i32
  }
}

</mosaic_0001>

<llo_original>
// kernel: _lambda_.6
$region0: #{_lambda_.6}
  #allocation0 [shape = 'u32[]', space=smem, size = 0x4, offset = 0x4, fixed_abs, tag = 'smem constant byte address 0x4 - core index']
  #allocation1 [shape = 'u32[144,128]{1,0:T(1,128)}', space=vmem, size = 0x12000, scoped, tag = 'internal scratch']
  #allocation2 [shape = 'f32[2,32]{1,0:T(2,128)}', space=vmem, size = 0x400, scoped, tag = 'scratch operand']
  %s0 = inlined_call_operand.vmem [shape: bf16[2,4096], index: 0, kind: input, shape index: {}]
  %s1 = inlined_call_operand.hbm [shape: bf16[4096,32], index: 1, kind: input, shape index: {}]
  %s2 = inlined_call_operand.vmem [shape: f32[1,32], index: 2, kind: input, shape index: {}]
  %s3 = inlined_call_operand.vmem [shape: bf16[2,32], index: 3, kind: output, shape index: {}]
  %s4 = sld [smem:[#allocation0]]
  $region57: #{_lambda_.6} parent=0
    _
  %s6 = ssub.s32 1, %s4
  %s7 = scalar_select 0, %s6, %s4
  $region1: #{_lambda_.6} parent=0
    #allocation3 [shape = 'u8[524288]{0}', space=vmem, size = 0x80000, scoped, tag = 'input window, operand 1']
    #allocation4 [shape = 's32[2]{0}', space=sflag, size = 0x8, scoped, tag = 'scoped memory for _lambda_.6']
    %8 = vsyncpa [#allocation4], 0
    %s9 = scalar_lea.sflag [#allocation4], 1
    %10 = vsyncpa %s9, 0
    loop: start=0, step=1, limit=6
    $region2: #{_lambda_.6} parent=1 // loop_pre_header
      _
    $region3: #{_lambda_.6} parent=1 // loop_header
      %s12 = sphi 0, %s16
      %p13 = scmp.ge.s32.totalorder %s12, 6
      %s19 = sphi 0, %s38
      %s20 = sphi 0, %s34
      %s21 = sphi 0, %s30
      %s22 = sphi 0, %s19
      %s23 = sphi 0, %s20
      %s24 = sphi 0, %s21
      %s25 = sphi 0, %s22
      %s26 = sphi 0, %s23
      %s27 = sphi 0, %s24
      %s43 = sphi 0, %s45
      %s46 = sphi 0, %s43
      %s47 = sphi 0, %s46
      %s63 = sphi 0, %s47
      %s71 = sphi 0, %s73
      %s74 = sphi 0, %s71
      %s75 = sphi 0, %s74
      %s91 = sphi 0, %s75
      %s97 = sphi 0, %s99
      %s100 = sphi 0, %s97
      %s101 = sphi 0, %s100
      %s117 = sphi 0, %s101
      %s125 = sphi 0, %s127
      %s128 = sphi 0, %s125
      %s129 = sphi 0, %s128
      %s145 = sphi 0, %s129
    $region4: #{_lambda_.6} parent=1 // loop_header_branch
      %15 = sbr.rel (%p13) target = $region8
    $region5: #{_lambda_.6} parent=1 // loop_body
      %s17 = ssub.s32 %s12, 1
      %s18 = ssub.s32 %s12, 2
      %s28 = sadd.s32 1, %s21
      %p29 = scmp.ge.s32.totalorder %s28, 4
      %s30 = scalar_select %p29, 0, %s28
      %s31 = sadd.s32 1, %s20
      %s32 = scalar_select %p29, %s31, %s20
      %p33 = scmp.ge.s32.totalorder %s32, 1
      %s34 = scalar_select %p33, 0, %s32
      %s35 = sadd.s32 1, %s19
      %s36 = scalar_select %p33, %s35, %s19
      %p37 = scmp.ge.s32.totalorder %s36, 1
      %s38 = scalar_select %p37, 0, %s36
      %s39 = ssub.s32 %s19, %s38
      %s40 = ssub.s32 %s21, %s30
      %s41 = sor.u32 %s39, %s40
      %p42 = scmp.eq.s32.totalorder %s41, 0
      %s44 = sadd.s32 %s43, 1
      %s45 = scalar_select %p42, %s43, %s44
      %p48 = pneg %p42
      %p49 = scmp.eq.s32.totalorder %s12, 3
      %p50 = por %p48, %p49
      %p51 = scmp.ne.s32.totalorder %s43, %s46
      %p52 = scmp.eq.s32.totalorder %s12, 0
      %p53 = por %p51, %p52
      %p54 = scmp.ne.s32.totalorder %s43, %s46
      %p55 = scmp.eq.s32.totalorder %s17, 3
      %p56 = por %p54, %p55
      %p57 = scmp.ne.s32.totalorder %s46, %s47
      %p58 = scmp.eq.s32.totalorder %s17, 0
      %p59 = por %p57, %p58
      %p60 = scmp.ne.s32.totalorder %s46, %s47
      %p61 = scmp.eq.s32.totalorder %s18, 3
      %p62 = por %p60, %p61
      %p64 = scmp.ne.s32.totalorder %s47, %s63
      %p65 = scmp.eq.s32.totalorder %s18, 0
      %p66 = por %p64, %p65
      %s67 = ssub.s32 %s21, %s30
      %s68 = ssub.s32 %s20, %s34
      %s69 = sor.u32 %s67, %s68
      %p70 = scmp.eq.s32.totalorder %s69, 0
      %s72 = sadd.s32 %s71, 1
      %s73 = scalar_select %p70, %s71, %s72
      %p76 = pneg %p70
      %p77 = scmp.eq.s32.totalorder %s12, 3
      %p78 = por %p76, %p77
      %p79 = scmp.ne.s32.totalorder %s71, %s74
      %p80 = scmp.eq.s32.totalorder %s12, 0
      %p81 = por %p79, %p80
      %p82 = scmp.ne.s32.totalorder %s71, %s74
      %p83 = scmp.eq.s32.totalorder %s17, 3
      %p84 = por %p82, %p83
      %p85 = scmp.ne.s32.totalorder %s74, %s75
      %p86 = scmp.eq.s32.totalorder %s17, 0
      %p87 = por %p85, %p86
      %p88 = scmp.ne.s32.totalorder %s74, %s75
      %p89 = scmp.eq.s32.totalorder %s18, 3
      %p90 = por %p88, %p89
      %p92 = scmp.ne.s32.totalorder %s75, %s91
      %p93 = scmp.eq.s32.totalorder %s18, 0
      %p94 = por %p92, %p93
      %s95 = ssub.s32 %s20, %s34
      %p96 = scmp.eq.s32.totalorder %s95, 0
      %s98 = sadd.s32 %s97, 1
      %s99 = scalar_select %p96, %s97, %s98
      %p102 = pneg %p96
      %p103 = scmp.eq.s32.totalorder %s12, 3
      %p104 = por %p102, %p103
      %p105 = scmp.ne.s32.totalorder %s97, %s100
      %p106 = scmp.eq.s32.totalorder %s12, 0
      %p107 = por %p105, %p106
      %p108 = scmp.ne.s32.totalorder %s97, %s100
      %p109 = scmp.eq.s32.totalorder %s17, 3
      %p110 = por %p108, %p109
      %p111 = scmp.ne.s32.totalorder %s100, %s101
      %p112 = scmp.eq.s32.totalorder %s17, 0
      %p113 = por %p111, %p112
      %p114 = scmp.ne.s32.totalorder %s100, %s101
      %p115 = scmp.eq.s32.totalorder %s18, 3
      %p116 = por %p114, %p115
      %p118 = scmp.ne.s32.totalorder %s101, %s117
      %p119 = scmp.eq.s32.totalorder %s18, 0
      %p120 = por %p118, %p119
      %s121 = ssub.s32 %s19, %s38
      %s122 = ssub.s32 %s20, %s34
      %s123 = sor.u32 %s121, %s122
      %p124 = scmp.eq.s32.totalorder %s123, 0
      %s126 = sadd.s32 %s125, 1
      %s127 = scalar_select %p124, %s125, %s126
      %p130 = pneg %p124
      %p131 = scmp.eq.s32.totalorder %s12, 3
      %p132 = por %p130, %p131
      %p133 = scmp.ne.s32.totalorder %s125, %s128
      %p134 = scmp.eq.s32.totalorder %s12, 0
      %p135 = por %p133, %p134
      %p136 = scmp.ne.s32.totalorder %s125, %s128
      %p137 = scmp.eq.s32.totalorder %s17, 3
      %p138 = por %p136, %p137
      %p139 = scmp.ne.s32.totalorder %s128, %s129
      %p140 = scmp.eq.s32.totalorder %s17, 0
      %p141 = por %p139, %p140
      %p142 = scmp.ne.s32.totalorder %s128, %s129
      %p143 = scmp.eq.s32.totalorder %s18, 3
      %p144 = por %p142, %p143
      %p146 = scmp.ne.s32.totalorder %s129, %s145
      %p147 = scmp.eq.s32.totalorder %s18, 0
      %p148 = por %p146, %p147
      %p149 = scmp.le.s32.totalorder 1, %s12
      %p150 = scmp.lt.s32.totalorder %s12, 5
      %p151 = pnand %p149, %p150
      %p152 = pneg %p151
      // Predicated region
      $region9: #{_lambda_.6} parent=5 // pred_check
        _
      $region10: #{_lambda_.6} parent=5 // pred_check_branch
        %154 = sbr.rel (%p151) target = $region12
      $region11: #{_lambda_.6} parent=5 // pred_region
        %s155 = ssub.s32 %s12, 1
        // Predicated region
        $region13: #{_lambda_.6} parent=11 // pred_check
          %p156 = pneg %p113
        $region14: #{_lambda_.6} parent=11 // pred_check_branch
          %158 = sbr.rel (%p156) target = $region16
        $region15: #{_lambda_.6} parent=11 // pred_region
          %p159 = scmp.lt.s32.totalorder %s23, 0
          %s160 = scalar_select %p159, %s23, 0
          %s161 = scalar_lea.vmem %s2, %s160
        $region16: #{_lambda_.6} parent=11 // pred_fallthru
          _
      $region12: #{_lambda_.6} parent=5 // pred_fallthru
        _
      %p162 = scmp.lt.s32.totalorder %s12, 4
      // Predicated region
      $region17: #{_lambda_.6} parent=5 // pred_check
        %p163 = pneg %p162
      $region18: #{_lambda_.6} parent=5 // pred_check_branch
        %165 = sbr.rel (%p163) target = $region20
      $region19: #{_lambda_.6} parent=5 // pred_region
        // Predicated region
        $region21: #{_lambda_.6} parent=19 // pred_check
          %p166 = pneg %p53
        $region22: #{_lambda_.6} parent=19 // pred_check_branch
          %168 = sbr.rel (%p166) target = $region24
        $region23: #{_lambda_.6} parent=19 // pred_region
          %s169 = smul.u32 8, %s21
          %p170 = scmp.lt.s32.totalorder %s19, 0
          %s171 = scalar_select %p170, %s19, 0
          %p172 = scmp.lt.s32.totalorder %s169, 31
          %s173 = scalar_select %p172, %s169, 31
          %s174 = smul.addr %s171, 32
          %s175 = sadd.s32 %s173, %s174
          %s176 = scalar_lea.vmem %s0, %s175
          %s177 = smul.u32 8, %s21
        $region24: #{_lambda_.6} parent=19 // pred_fallthru
          _
        // Predicated region
        $region25: #{_lambda_.6} parent=19 // pred_check
          %p178 = pneg %p81
        $region26: #{_lambda_.6} parent=19 // pred_check_branch
          %180 = sbr.rel (%p178) target = $region28
        $region27: #{_lambda_.6} parent=19 // pred_region
          %s181 = sand.u32 %s71, 1
          %s182 = scalar_lea.sflag [#allocation4], %s181
          %s183 = sand.u32 %s71, 1
          %s184 = smul.addr %s183, 512
          %s185 = scalar_lea.vmem [#allocation3], %s184
          %s186 = smul.u32 128, %s21
          %s188 = ssub.s32 8192, 8192
          %189 = vsyncadd %s182, %s188
          %s190 = sadd.s32 %s20, %s186
          %s191 = smul.addr %s190, 64
          %s192 = scalar_lea.hbm %s1, %s191
          %s193 = sshll.u32 %s185, 4
          %s194 = int_to_ptr.vmem [resolvable:$true] %s193
          %199 = dma.hbm_to_vmem [thread:$0]  %s192, 8192, %s194, %s182, 64, 64, 4
        $region28: #{_lambda_.6} parent=19 // pred_fallthru
          _
      $region20: #{_lambda_.6} parent=5 // pred_fallthru
        _
      %p200 = scmp.le.s32.totalorder 1, %s12
      %p201 = scmp.lt.s32.totalorder %s12, 5
      %p202 = pnand %p200, %p201
      %p203 = pneg %p202
      // Predicated region
      $region29: #{_lambda_.6} parent=5 // pred_check
        _
      $region30: #{_lambda_.6} parent=5 // pred_check_branch
        %205 = sbr.rel (%p202) target = $region32
      $region31: #{_lambda_.6} parent=5 // pred_region
        %s206 = ssub.s32 %s12, 1
        %s207 = sand.u32 %s74, 1
        %s208 = scalar_lea.sflag [#allocation4], %s207
        %s209 = sand.u32 %s74, 1
        %s210 = smul.addr %s209, 512
        %s211 = scalar_lea.vmem [#allocation3], %s210
        // Predicated region
        $region33: #{_lambda_.6} parent=31 // pred_check
          %p212 = pneg %p87
        $region34: #{_lambda_.6} parent=31 // pred_check_branch
          %214 = sbr.rel (%p212) target = $region36
        $region35: #{_lambda_.6} parent=31 // pred_region
          %215 = dma.done %s208, 8192
        $region36: #{_lambda_.6} parent=31 // pred_fallthru
          _
        %s216 = smul.u32 8, %s24
        %p217 = scmp.lt.s32.totalorder %s22, 0
        %s218 = scalar_select %p217, %s22, 0
        %p219 = scmp.lt.s32.totalorder %s216, 31
        %s220 = scalar_select %p219, %s216, 31
        %s221 = smul.addr %s218, 32
        %s222 = sadd.s32 %s220, %s221
        %s223 = scalar_lea.vmem %s0, %s222
        %p224 = pneg %p59
        %p225 = pneg %p56
        %s226 = sand.u32 %s74, 1
        %s227 = scalar_lea.sflag [#allocation4], %s226
        %s228 = sand.u32 %s74, 1
        %s229 = smul.addr %s228, 512
        %s230 = scalar_lea.vmem [#allocation3], %s229
        %p231 = pneg %p87
        %p232 = pneg %p84
        %p233 = scmp.lt.s32.totalorder %s23, 0
        %s234 = scalar_select %p233, %s23, 0
        %s235 = scalar_lea.vmem %s2, %s234
        %p236 = pneg %p113
        %p237 = pneg %p110
        %p238 = pneg %p141
        %p239 = pneg %p138
        %p240 = scmp.lt.s32.totalorder %s22, 0
        %s241 = scalar_select %p240, %s22, 0
        %p242 = scmp.lt.s32.totalorder %s23, 0
        %s243 = scalar_select %p242, %s23, 0
        %s244 = sadd.s32 %s243, %s241
        %s245 = scalar_lea.vmem %s3, %s244
        %s246 = smul.u32 8, %s24
        %p247 = scmp.lt.s32.totalorder %s22, 0
        %s248 = scalar_select %p247, %s22, 0
        %p249 = scmp.lt.s32.totalorder %s246, 31
        %s250 = scalar_select %p249, %s246, 31
        %s251 = smul.addr %s248, 32
        %s252 = sadd.s32 %s250, %s251
        %s253 = scalar_lea.vmem %s0, %s252
        %s254 = smul.u32 8, %s24
        %s255 = smul.u32 128, %s24
        %p256 = scmp.lt.s32.totalorder %s23, 0
        %s257 = scalar_select %p256, %s23, 0
        %s258 = scalar_lea.vmem %s2, %s257
        %p259 = scmp.lt.s32.totalorder %s22, 0
        %s260 = scalar_select %p259, %s22, 0
        %p261 = scmp.lt.s32.totalorder %s23, 0
        %s262 = scalar_select %p261, %s23, 0
        %s263 = sadd.s32 %s262, %s260
        %s264 = scalar_lea.vmem %s3, %s263
        %p266 = scmp.eq.s32.totalorder %s24, 0
        // Predicated region
        $region37: #{_lambda_.6} parent=31 // pred_check
          %p267 = pneg %p266
        $region38: #{_lambda_.6} parent=31 // pred_check_branch
          %269 = sbr.rel (%p267) target = $region40
        $region39: #{_lambda_.6} parent=31 // pred_region
          %vm270 = vcmask 254976
          %271 = vst.msk [vmem:[#allocation2] sm:$0x3] %vm270, 0.0
        $region40: #{_lambda_.6} parent=31 // pred_fallthru
          _
        %v272 = vld [vmem:[#allocation2] sm:$0x3]
        %v273 = vld [vmem:[%s253] sm:$0xff]
        %v274 = vld [vmem:[%s211] sm:$0xf]
        %v275 = vld [vmem:[%s211 + $0x4] sm:$0xf]
        %v276 = vld [vmem:[%s211 + $0x8] sm:$0xf]
        %v277 = vld [vmem:[%s211 + $0xc] sm:$0xf]
        %v278 = vld [vmem:[%s211 + $0x10] sm:$0xf]
        %v279 = vld [vmem:[%s211 + $0x14] sm:$0xf]
        %v280 = vld [vmem:[%s211 + $0x18] sm:$0xf]
        %v281 = vld [vmem:[%s211 + $0x1c] sm:$0xf]
        %v282 = vld [vmem:[%s211 + $0x20] sm:$0xf]
        %v283 = vld [vmem:[%s211 + $0x24] sm:$0xf]
        %v284 = vld [vmem:[%s211 + $0x28] sm:$0xf]
        %v285 = vld [vmem:[%s211 + $0x2c] sm:$0xf]
        %v286 = vld [vmem:[%s211 + $0x30] sm:$0xf]
        %v287 = vld [vmem:[%s211 + $0x34] sm:$0xf]
        %v288 = vld [vmem:[%s211 + $0x38] sm:$0xf]
        %v289 = vld [vmem:[%s211 + $0x3c] sm:$0xf]
        %v290 = vld [vmem:[%s211 + $0x40] sm:$0xf]
        %v291 = vld [vmem:[%s211 + $0x44] sm:$0xf]
        %v292 = vld [vmem:[%s211 + $0x48] sm:$0xf]
        %v293 = vld [vmem:[%s211 + $0x4c] sm:$0xf]
        %v294 = vld [vmem:[%s211 + $0x50] sm:$0xf]
        %v295 = vld [vmem:[%s211 + $0x54] sm:$0xf]
        %v296 = vld [vmem:[%s211 + $0x58] sm:$0xf]
        %v297 = vld [vmem:[%s211 + $0x5c] sm:$0xf]
        %v298 = vld [vmem:[%s211 + $0x60] sm:$0xf]
        %v299 = vld [vmem:[%s211 + $0x64] sm:$0xf]
        %v300 = vld [vmem:[%s211 + $0x68] sm:$0xf]
        %v301 = vld [vmem:[%s211 + $0x6c] sm:$0xf]
        %v302 = vld [vmem:[%s211 + $0x70] sm:$0xf]
        %v303 = vld [vmem:[%s211 + $0x74] sm:$0xf]
        %v304 = vld [vmem:[%s211 + $0x78] sm:$0xf]
        %v305 = vld [vmem:[%s211 + $0x7c] sm:$0xf]
        %v306 = vld [vmem:[%s211 + $0x80] sm:$0xf]
        %v307 = vld [vmem:[%s211 + $0x84] sm:$0xf]
        %v308 = vld [vmem:[%s211 + $0x88] sm:$0xf]
        %v309 = vld [vmem:[%s211 + $0x8c] sm:$0xf]
        %v310 = vld [vmem:[%s211 + $0x90] sm:$0xf]
        %v311 = vld [vmem:[%s211 + $0x94] sm:$0xf]
        %v312 = vld [vmem:[%s211 + $0x98] sm:$0xf]
        %v313 = vld [vmem:[%s211 + $0x9c] sm:$0xf]
        %v314 = vld [vmem:[%s211 + $0xa0] sm:$0xf]
        %v315 = vld [vmem:[%s211 + $0xa4] sm:$0xf]
        %v316 = vld [vmem:[%s211 + $0xa8] sm:$0xf]
        %v317 = vld [vmem:[%s211 + $0xac] sm:$0xf]
        %v318 = vld [vmem:[%s211 + $0xb0] sm:$0xf]
        %v319 = vld [vmem:[%s211 + $0xb4] sm:$0xf]
        %v320 = vld [vmem:[%s211 + $0xb8] sm:$0xf]
        %v321 = vld [vmem:[%s211 + $0xbc] sm:$0xf]
        %v322 = vld [vmem:[%s211 + $0xc0] sm:$0xf]
        %v323 = vld [vmem:[%s211 + $0xc4] sm:$0xf]
        %v324 = vld [vmem:[%s211 + $0xc8] sm:$0xf]
        %v325 = vld [vmem:[%s211 + $0xcc] sm:$0xf]
        %v326 = vld [vmem:[%s211 + $0xd0] sm:$0xf]
        %v327 = vld [vmem:[%s211 + $0xd4] sm:$0xf]
        %v328 = vld [vmem:[%s211 + $0xd8] sm:$0xf]
        %v329 = vld [vmem:[%s211 + $0xdc] sm:$0xf]
        %v330 = vld [vmem:[%s211 + $0xe0] sm:$0xf]
        %v331 = vld [vmem:[%s211 + $0xe4] sm:$0xf]
        %v332 = vld [vmem:[%s211 + $0xe8] sm:$0xf]
        %v333 = vld [vmem:[%s211 + $0xec] sm:$0xf]
        %v334 = vld [vmem:[%s211 + $0xf0] sm:$0xf]
        %v335 = vld [vmem:[%s211 + $0xf4] sm:$0xf]
        %v336 = vld [vmem:[%s211 + $0xf8] sm:$0xf]
        %v337 = vld [vmem:[%s211 + $0xfc] sm:$0xf]
        %v338 = vld [vmem:[%s211 + $0x100] sm:$0xf]
        %v339 = vld [vmem:[%s211 + $0x104] sm:$0xf]
        %v340 = vld [vmem:[%s211 + $0x108] sm:$0xf]
        %v341 = vld [vmem:[%s211 + $0x10c] sm:$0xf]
        %v342 = vld [vmem:[%s211 + $0x110] sm:$0xf]
        %v343 = vld [vmem:[%s211 + $0x114] sm:$0xf]
        %v344 = vld [vmem:[%s211 + $0x118] sm:$0xf]
        %v345 = vld [vmem:[%s211 + $0x11c] sm:$0xf]
        %v346 = vld [vmem:[%s211 + $0x120] sm:$0xf]
        %v347 = vld [vmem:[%s211 + $0x124] sm:$0xf]
        %v348 = vld [vmem:[%s211 + $0x128] sm:$0xf]
        %v349 = vld [vmem:[%s211 + $0x12c] sm:$0xf]
        %v350 = vld [vmem:[%s211 + $0x130] sm:$0xf]
        %v351 = vld [vmem:[%s211 + $0x134] sm:$0xf]
        %v352 = vld [vmem:[%s211 + $0x138] sm:$0xf]
        %v353 = vld [vmem:[%s211 + $0x13c] sm:$0xf]
        %v354 = vld [vmem:[%s211 + $0x140] sm:$0xf]
        %v355 = vld [vmem:[%s211 + $0x144] sm:$0xf]
        %v356 = vld [vmem:[%s211 + $0x148] sm:$0xf]
        %v357 = vld [vmem:[%s211 + $0x14c] sm:$0xf]
        %v358 = vld [vmem:[%s211 + $0x150] sm:$0xf]
        %v359 = vld [vmem:[%s211 + $0x154] sm:$0xf]
        %v360 = vld [vmem:[%s211 + $0x158] sm:$0xf]
        %v361 = vld [vmem:[%s211 + $0x15c] sm:$0xf]
        %v362 = vld [vmem:[%s211 + $0x160] sm:$0xf]
        %v363 = vld [vmem:[%s211 + $0x164] sm:$0xf]
        %v364 = vld [vmem:[%s211 + $0x168] sm:$0xf]
        %v365 = vld [vmem:[%s211 + $0x16c] sm:$0xf]
        %v366 = vld [vmem:[%s211 + $0x170] sm:$0xf]
        %v367 = vld [vmem:[%s211 + $0x174] sm:$0xf]
        %v368 = vld [vmem:[%s211 + $0x178] sm:$0xf]
        %v369 = vld [vmem:[%s211 + $0x17c] sm:$0xf]
        %v370 = vld [vmem:[%s211 + $0x180] sm:$0xf]
        %v371 = vld [vmem:[%s211 + $0x184] sm:$0xf]
        %v372 = vld [vmem:[%s211 + $0x188] sm:$0xf]
        %v373 = vld [vmem:[%s211 + $0x18c] sm:$0xf]
        %v374 = vld [vmem:[%s211 + $0x190] sm:$0xf]
        %v375 = vld [vmem:[%s211 + $0x194] sm:$0xf]
        %v376 = vld [vmem:[%s211 + $0x198] sm:$0xf]
        %v377 = vld [vmem:[%s211 + $0x19c] sm:$0xf]
        %v378 = vld [vmem:[%s211 + $0x1a0] sm:$0xf]
        %v379 = vld [vmem:[%s211 + $0x1a4] sm:$0xf]
        %v380 = vld [vmem:[%s211 + $0x1a8] sm:$0xf]
        %v381 = vld [vmem:[%s211 + $0x1ac] sm:$0xf]
        %v382 = vld [vmem:[%s211 + $0x1b0] sm:$0xf]
        %v383 = vld [vmem:[%s211 + $0x1b4] sm:$0xf]
        %v384 = vld [vmem:[%s211 + $0x1b8] sm:$0xf]
        %v385 = vld [vmem:[%s211 + $0x1bc] sm:$0xf]
        %v386 = vld [vmem:[%s211 + $0x1c0] sm:$0xf]
        %v387 = vld [vmem:[%s211 + $0x1c4] sm:$0xf]
        %v388 = vld [vmem:[%s211 + $0x1c8] sm:$0xf]
        %v389 = vld [vmem:[%s211 + $0x1cc] sm:$0xf]
        %v390 = vld [vmem:[%s211 + $0x1d0] sm:$0xf]
        %v391 = vld [vmem:[%s211 + $0x1d4] sm:$0xf]
        %v392 = vld [vmem:[%s211 + $0x1d8] sm:$0xf]
        %v393 = vld [vmem:[%s211 + $0x1dc] sm:$0xf]
        %v394 = vld [vmem:[%s211 + $0x1e0] sm:$0xf]
        %v395 = vld [vmem:[%s211 + $0x1e4] sm:$0xf]
        %v396 = vld [vmem:[%s211 + $0x1e8] sm:$0xf]
        %v397 = vld [vmem:[%s211 + $0x1ec] sm:$0xf]
        %v398 = vld [vmem:[%s211 + $0x1f0] sm:$0xf]
        %v399 = vld [vmem:[%s211 + $0x1f4] sm:$0xf]
        %v400 = vld [vmem:[%s211 + $0x1f8] sm:$0xf]
        %v401 = vld [vmem:[%s211 + $0x1fc] sm:$0xf]
        %v403 = vcombine.high %v273, %v273
        %v405 = vunpack.c.l.s4 1966171168
        %v406 = vunpack.c.0.s8 %v405
        %v407 = vlaneseq
        %v408 = vshrl.u32 %v407, 7
        %v409 = vsub.s32 %v406, %v408
        %v410 = vrot.slane %v273, %v409
        %v412 = vunpack.c.l.s4 1966171168
        %v413 = vunpack.c.0.s8 %v412
        %v414 = vlaneseq
        %v415 = vshrl.u32 %v414, 7
        %v416 = vsub.s32 %v413, %v415
        %v417 = vrot.slane %v403, %v416
        %v418 = vcombine.high %v410, %v410
        %v419 = vcombine.high %v417, %v417
        %v421 = vunpack.c.l.s4 1966171168
        %v422 = vunpack.c.0.s8 %v421
        %v423 = vlaneseq
        %v424 = vshrl.u32 %v423, 7
        %v425 = vsub.s32 %v422, %v424
        %v426 = vrot.slane %v410, %v425
        %v428 = vunpack.c.l.s4 1966171168
        %v429 = vunpack.c.0.s8 %v428
        %v430 = vlaneseq
        %v431 = vshrl.u32 %v430, 7
        %v432 = vsub.s32 %v429, %v431
        %v433 = vrot.slane %v417, %v432
        %v435 = vunpack.c.l.s4 1966171168
        %v436 = vunpack.c.0.s8 %v435
        %v437 = vlaneseq
        %v438 = vshrl.u32 %v437, 7
        %v439 = vsub.s32 %v436, %v438
        %v440 = vrot.slane %v418, %v439
        %v442 = vunpack.c.l.s4 1966171168
        %v443 = vunpack.c.0.s8 %v442
        %v444 = vlaneseq
        %v445 = vshrl.u32 %v444, 7
        %v446 = vsub.s32 %v443, %v445
        %v447 = vrot.slane %v419, %v446
        %v448 = vcombine.high %v426, %v426
        %v449 = vcombine.high %v433, %v433
        %v450 = vcombine.high %v440, %v440
        %v451 = vcombine.high %v447, %v447
        %v588 = vunpack.c.l.b16 %v274
        %v589 = vunpack.c.l.b16 %v275
        %v590 = vunpack.c.l.b16 %v276
        %v591 = vunpack.c.l.b16 %v277
        %v592 = vunpack.c.l.b16 %v278
        %v593 = vunpack.c.l.b16 %v279
        %v594 = vunpack.c.l.b16 %v280
        %v595 = vunpack.c.l.b16 %v281
        %v596 = vunpack.c.l.b16 %v282
        %v597 = vunpack.c.l.b16 %v283
        %v598 = vunpack.c.l.b16 %v284
        %v599 = vunpack.c.l.b16 %v285
        %v600 = vunpack.c.l.b16 %v286
        %v601 = vunpack.c.l.b16 %v287
        %v602 = vunpack.c.l.b16 %v288
        %v603 = vunpack.c.l.b16 %v289
        %v604 = vunpack.c.l.b16 %v290
        %v605 = vunpack.c.l.b16 %v291
        %v606 = vunpack.c.l.b16 %v292
        %v607 = vunpack.c.l.b16 %v293
        %v608 = vunpack.c.l.b16 %v294
        %v609 = vunpack.c.l.b16 %v295
        %v610 = vunpack.c.l.b16 %v296
        %v611 = vunpack.c.l.b16 %v297
        %v612 = vunpack.c.l.b16 %v298
        %v613 = vunpack.c.l.b16 %v299
        %v614 = vunpack.c.l.b16 %v300
        %v615 = vunpack.c.l.b16 %v301
        %v616 = vunpack.c.l.b16 %v302
        %v617 = vunpack.c.l.b16 %v303
        %v618 = vunpack.c.l.b16 %v304
        %v619 = vunpack.c.l.b16 %v305
        %v620 = vunpack.c.l.b16 %v306
        %v621 = vunpack.c.l.b16 %v307
        %v622 = vunpack.c.l.b16 %v308
        %v623 = vunpack.c.l.b16 %v309
        %v624 = vunpack.c.l.b16 %v310
        %v625 = vunpack.c.l.b16 %v311
        %v626 = vunpack.c.l.b16 %v312
        %v627 = vunpack.c.l.b16 %v313
        %v628 = vunpack.c.l.b16 %v314
        %v629 = vunpack.c.l.b16 %v315
        %v630 = vunpack.c.l.b16 %v316
        %v631 = vunpack.c.l.b16 %v317
        %v632 = vunpack.c.l.b16 %v318
        %v633 = vunpack.c.l.b16 %v319
        %v634 = vunpack.c.l.b16 %v320
        %v635 = vunpack.c.l.b16 %v321
        %v636 = vunpack.c.l.b16 %v322
        %v637 = vunpack.c.l.b16 %v323
        %v638 = vunpack.c.l.b16 %v324
        %v639 = vunpack.c.l.b16 %v325
        %v640 = vunpack.c.l.b16 %v326
        %v641 = vunpack.c.l.b16 %v327
        %v642 = vunpack.c.l.b16 %v328
        %v643 = vunpack.c.l.b16 %v329
        %v644 = vunpack.c.l.b16 %v330
        %v645 = vunpack.c.l.b16 %v331
        %v646 = vunpack.c.l.b16 %v332
        %v647 = vunpack.c.l.b16 %v333
        %v648 = vunpack.c.l.b16 %v334
        %v649 = vunpack.c.l.b16 %v335
        %v650 = vunpack.c.l.b16 %v336
        %v651 = vunpack.c.l.b16 %v337
        %v652 = vunpack.c.l.b16 %v338
        %v653 = vunpack.c.l.b16 %v339
        %v654 = vunpack.c.l.b16 %v340
        %v655 = vunpack.c.l.b16 %v341
        %v656 = vunpack.c.l.b16 %v342
        %v657 = vunpack.c.l.b16 %v343
        %v658 = vunpack.c.l.b16 %v344
        %v659 = vunpack.c.l.b16 %v345
        %v660 = vunpack.c.l.b16 %v346
        %v661 = vunpack.c.l.b16 %v347
        %v662 = vunpack.c.l.b16 %v348
        %v663 = vunpack.c.l.b16 %v349
        %v664 = vunpack.c.l.b16 %v350
        %v665 = vunpack.c.l.b16 %v351
        %v666 = vunpack.c.l.b16 %v352
        %v667 = vunpack.c.l.b16 %v353
        %v668 = vunpack.c.l.b16 %v354
        %v669 = vunpack.c.l.b16 %v355
        %v670 = vunpack.c.l.b16 %v356
        %v671 = vunpack.c.l.b16 %v357
        %v672 = vunpack.c.l.b16 %v358
        %v673 = vunpack.c.l.b16 %v359
        %v674 = vunpack.c.l.b16 %v360
        %v675 = vunpack.c.l.b16 %v361
        %v676 = vunpack.c.l.b16 %v362
        %v677 = vunpack.c.l.b16 %v363
        %v678 = vunpack.c.l.b16 %v364
        %v679 = vunpack.c.l.b16 %v365
        %v680 = vunpack.c.l.b16 %v366
        %v681 = vunpack.c.l.b16 %v367
        %v682 = vunpack.c.l.b16 %v368
        %v683 = vunpack.c.l.b16 %v369
        %v684 = vunpack.c.l.b16 %v370
        %v685 = vunpack.c.l.b16 %v371
        %v686 = vunpack.c.l.b16 %v372
        %v687 = vunpack.c.l.b16 %v373
        %v688 = vunpack.c.l.b16 %v374
        %v689 = vunpack.c.l.b16 %v375
        %v690 = vunpack.c.l.b16 %v376
        %v691 = vunpack.c.l.b16 %v377
        %v692 = vunpack.c.l.b16 %v378
        %v693 = vunpack.c.l.b16 %v379
        %v694 = vunpack.c.l.b16 %v380
        %v695 = vunpack.c.l.b16 %v381
        %v696 = vunpack.c.l.b16 %v382
        %v697 = vunpack.c.l.b16 %v383
        %v698 = vunpack.c.l.b16 %v384
        %v699 = vunpack.c.l.b16 %v385
        %v700 = vunpack.c.l.b16 %v386
        %v701 = vunpack.c.l.b16 %v387
        %v702 = vunpack.c.l.b16 %v388
        %v703 = vunpack.c.l.b16 %v389
        %v704 = vunpack.c.l.b16 %v390
        %v705 = vunpack.c.l.b16 %v391
        %v706 = vunpack.c.l.b16 %v392
        %v707 = vunpack.c.l.b16 %v393
        %v708 = vunpack.c.l.b16 %v394
        %v709 = vunpack.c.l.b16 %v395
        %v710 = vunpack.c.l.b16 %v396
        %v711 = vunpack.c.l.b16 %v397
        %v712 = vunpack.c.l.b16 %v398
        %v713 = vunpack.c.l.b16 %v399
        %v714 = vunpack.c.l.b16 %v400
        %v715 = vunpack.c.l.b16 %v401
        %v716 = vpack.c.b16 %v589, %v588
        %v717 = vpack.c.b16 %v591, %v590
        %v718 = vpack.c.b16 %v593, %v592
        %v719 = vpack.c.b16 %v595, %v594
        %v720 = vpack.c.b16 %v597, %v596
        %v721 = vpack.c.b16 %v599, %v598
        %v722 = vpack.c.b16 %v601, %v600
        %v723 = vpack.c.b16 %v603, %v602
        %v724 = vpack.c.b16 %v605, %v604
        %v725 = vpack.c.b16 %v607, %v606
        %v726 = vpack.c.b16 %v609, %v608
        %v727 = vpack.c.b16 %v611, %v610
        %v728 = vpack.c.b16 %v613, %v612
        %v729 = vpack.c.b16 %v615, %v614
        %v730 = vpack.c.b16 %v617, %v616
        %v731 = vpack.c.b16 %v619, %v618
        %v732 = vpack.c.b16 %v621, %v620
        %v733 = vpack.c.b16 %v623, %v622
        %v734 = vpack.c.b16 %v625, %v624
        %v735 = vpack.c.b16 %v627, %v626
        %v736 = vpack.c.b16 %v629, %v628
        %v737 = vpack.c.b16 %v631, %v630
        %v738 = vpack.c.b16 %v633, %v632
        %v739 = vpack.c.b16 %v635, %v634
        %v740 = vpack.c.b16 %v637, %v636
        %v741 = vpack.c.b16 %v639, %v638
        %v742 = vpack.c.b16 %v641, %v640
        %v743 = vpack.c.b16 %v643, %v642
        %v744 = vpack.c.b16 %v645, %v644
        %v745 = vpack.c.b16 %v647, %v646
        %v746 = vpack.c.b16 %v649, %v648
        %v747 = vpack.c.b16 %v651, %v650
        %v748 = vpack.c.b16 %v653, %v652
        %v749 = vpack.c.b16 %v655, %v654
        %v750 = vpack.c.b16 %v657, %v656
        %v751 = vpack.c.b16 %v659, %v658
        %v752 = vpack.c.b16 %v661, %v660
        %v753 = vpack.c.b16 %v663, %v662
        %v754 = vpack.c.b16 %v665, %v664
        %v755 = vpack.c.b16 %v667, %v666
        %v756 = vpack.c.b16 %v669, %v668
        %v757 = vpack.c.b16 %v671, %v670
        %v758 = vpack.c.b16 %v673, %v672
        %v759 = vpack.c.b16 %v675, %v674
        %v760 = vpack.c.b16 %v677, %v676
        %v761 = vpack.c.b16 %v679, %v678
        %v762 = vpack.c.b16 %v681, %v680
        %v763 = vpack.c.b16 %v683, %v682
        %v764 = vpack.c.b16 %v685, %v684
        %v765 = vpack.c.b16 %v687, %v686
        %v766 = vpack.c.b16 %v689, %v688
        %v767 = vpack.c.b16 %v691, %v690
        %v768 = vpack.c.b16 %v693, %v692
        %v769 = vpack.c.b16 %v695, %v694
        %v770 = vpack.c.b16 %v697, %v696
        %v771 = vpack.c.b16 %v699, %v698
        %v772 = vpack.c.b16 %v701, %v700
        %v773 = vpack.c.b16 %v703, %v702
        %v774 = vpack.c.b16 %v705, %v704
        %v775 = vpack.c.b16 %v707, %v706
        %v776 = vpack.c.b16 %v709, %v708
        %v777 = vpack.c.b16 %v711, %v710
        %v778 = vpack.c.b16 %v713, %v712
        %v779 = vpack.c.b16 %v715, %v714
        %844 = vmatprep.subr.bf16.mxu0 0
        %845 = vmatpush1.bf16.msra.mxu0 %v716
        %846 = vmatprep.subr.bf16.mxu0 0
        %847 = vmatpush1.bf16.msra.mxu0 %v717
        %848 = vmatprep.subr.bf16.mxu0 0
        %849 = vmatpush1.bf16.msra.mxu0 %v718
        %850 = vmatprep.subr.bf16.mxu0 0
        %851 = vmatpush1.bf16.msra.mxu0 %v719
        %852 = vmatprep.subr.bf16.mxu0 0
        %853 = vmatpush1.bf16.msra.mxu0 %v720
        %854 = vmatprep.subr.bf16.mxu0 0
        %855 = vmatpush1.bf16.msra.mxu0 %v721
        %856 = vmatprep.subr.bf16.mxu0 0
        %857 = vmatpush1.bf16.msra.mxu0 %v722
        %858 = vmatprep.subr.bf16.mxu0 0
        %859 = vmatpush1.bf16.msra.mxu0 %v723
        %860 = vmatprep.subr.bf16.mxu0 0
        %861 = vmatpush1.bf16.msra.mxu0 %v724
        %862 = vmatprep.subr.bf16.mxu0 0
        %863 = vmatpush1.bf16.msra.mxu0 %v725
        %864 = vmatprep.subr.bf16.mxu0 0
        %865 = vmatpush1.bf16.msra.mxu0 %v726
        %866 = vmatprep.subr.bf16.mxu0 0
        %867 = vmatpush1.bf16.msra.mxu0 %v727
        %868 = vmatprep.subr.bf16.mxu0 0
        %869 = vmatpush1.bf16.msra.mxu0 %v728
        %870 = vmatprep.subr.bf16.mxu0 0
        %871 = vmatpush1.bf16.msra.mxu0 %v729
        %872 = vmatprep.subr.bf16.mxu0 0
        %873 = vmatpush1.bf16.msra.mxu0 %v730
        %874 = vmatprep.subr.bf16.mxu0 0
        %875 = vmatpush1.bf16.msra.mxu0 %v731
        %876 = vmatprep.mubr.bf16.mxu0 %v440
        %877 = vmatmul.mubr.bf16.gmra.mrb[0].mxu0 %v426
        %v878 = vpop.f32.mrb[0].mxu0
        %v879 = vadd.f32 0.0, %v878
        %v880 = vpop.f32.mrb[0].mxu0
        %v881 = vpop.f32.mrb[0].mxu0
        %v882 = vpop.f32.mrb[0].mxu0
        %883 = vdwg.mxu0
        %884 = vmatprep.subr.bf16.mxu0 0
        %885 = vmatpush1.bf16.msra.mxu0 %v732
        %886 = vmatprep.subr.bf16.mxu0 0
        %887 = vmatpush1.bf16.msra.mxu0 %v733
        %888 = vmatprep.subr.bf16.mxu0 0
        %889 = vmatpush1.bf16.msra.mxu0 %v734
        %890 = vmatprep.subr.bf16.mxu0 0
        %891 = vmatpush1.bf16.msra.mxu0 %v735
        %892 = vmatprep.subr.bf16.mxu0 0
        %893 = vmatpush1.bf16.msra.mxu0 %v736
        %894 = vmatprep.subr.bf16.mxu0 0
        %895 = vmatpush1.bf16.msra.mxu0 %v737
        %896 = vmatprep.subr.bf16.mxu0 0
        %897 = vmatpush1.bf16.msra.mxu0 %v738
        %898 = vmatprep.subr.bf16.mxu0 0
        %899 = vmatpush1.bf16.msra.mxu0 %v739
        %900 = vmatprep.subr.bf16.mxu0 0
        %901 = vmatpush1.bf16.msra.mxu0 %v740
        %902 = vmatprep.subr.bf16.mxu0 0
        %903 = vmatpush1.bf16.msra.mxu0 %v741
        %904 = vmatprep.subr.bf16.mxu0 0
        %905 = vmatpush1.bf16.msra.mxu0 %v742
        %906 = vmatprep.subr.bf16.mxu0 0
        %907 = vmatpush1.bf16.msra.mxu0 %v743
        %908 = vmatprep.subr.bf16.mxu0 0
        %909 = vmatpush1.bf16.msra.mxu0 %v744
        %910 = vmatprep.subr.bf16.mxu0 0
        %911 = vmatpush1.bf16.msra.mxu0 %v745
        %912 = vmatprep.subr.bf16.mxu0 0
        %913 = vmatpush1.bf16.msra.mxu0 %v746
        %914 = vmatprep.subr.bf16.mxu0 0
        %915 = vmatpush1.bf16.msra.mxu0 %v747
        %916 = vmatprep.mubr.bf16.mxu0 %v450
        %917 = vmatmul.mubr.bf16.gmra.mrb[0].mxu0 %v448
        %v918 = vpop.f32.mrb[0].mxu0
        %v919 = vadd.f32 %v879, %v918
        %v920 = vpop.f32.mrb[0].mxu0
        %v921 = vpop.f32.mrb[0].mxu0
        %v922 = vpop.f32.mrb[0].mxu0
        %923 = vdwg.mxu0
        %924 = vmatprep.subr.bf16.mxu0 0
        %925 = vmatpush1.bf16.msra.mxu0 %v748
        %926 = vmatprep.subr.bf16.mxu0 0
        %927 = vmatpush1.bf16.msra.mxu0 %v749
        %928 = vmatprep.subr.bf16.mxu0 0
        %929 = vmatpush1.bf16.msra.mxu0 %v750
        %930 = vmatprep.subr.bf16.mxu0 0
        %931 = vmatpush1.bf16.msra.mxu0 %v751
        %932 = vmatprep.subr.bf16.mxu0 0
        %933 = vmatpush1.bf16.msra.mxu0 %v752
        %934 = vmatprep.subr.bf16.mxu0 0
        %935 = vmatpush1.bf16.msra.mxu0 %v753
        %936 = vmatprep.subr.bf16.mxu0 0
        %937 = vmatpush1.bf16.msra.mxu0 %v754
        %938 = vmatprep.subr.bf16.mxu0 0
        %939 = vmatpush1.bf16.msra.mxu0 %v755
        %940 = vmatprep.subr.bf16.mxu0 0
        %941 = vmatpush1.bf16.msra.mxu0 %v756
        %942 = vmatprep.subr.bf16.mxu0 0
        %943 = vmatpush1.bf16.msra.mxu0 %v757
        %944 = vmatprep.subr.bf16.mxu0 0
        %945 = vmatpush1.bf16.msra.mxu0 %v758
        %946 = vmatprep.subr.bf16.mxu0 0
        %947 = vmatpush1.bf16.msra.mxu0 %v759
        %948 = vmatprep.subr.bf16.mxu0 0
        %949 = vmatpush1.bf16.msra.mxu0 %v760
        %950 = vmatprep.subr.bf16.mxu0 0
        %951 = vmatpush1.bf16.msra.mxu0 %v761
        %952 = vmatprep.subr.bf16.mxu0 0
        %953 = vmatpush1.bf16.msra.mxu0 %v762
        %954 = vmatprep.subr.bf16.mxu0 0
        %955 = vmatpush1.bf16.msra.mxu0 %v763
        %956 = vmatprep.mubr.bf16.mxu0 %v447
        %957 = vmatmul.mubr.bf16.gmra.mrb[0].mxu0 %v433
        %v958 = vpop.f32.mrb[0].mxu0
        %v959 = vadd.f32 %v919, %v958
        %v960 = vpop.f32.mrb[0].mxu0
        %v961 = vpop.f32.mrb[0].mxu0
        %v962 = vpop.f32.mrb[0].mxu0
        %963 = vdwg.mxu0
        %964 = vmatprep.subr.bf16.mxu0 0
        %965 = vmatpush1.bf16.msra.mxu0 %v764
        %966 = vmatprep.subr.bf16.mxu0 0
        %967 = vmatpush1.bf16.msra.mxu0 %v765
        %968 = vmatprep.subr.bf16.mxu0 0
        %969 = vmatpush1.bf16.msra.mxu0 %v766
        %970 = vmatprep.subr.bf16.mxu0 0
        %971 = vmatpush1.bf16.msra.mxu0 %v767
        %972 = vmatprep.subr.bf16.mxu0 0
        %973 = vmatpush1.bf16.msra.mxu0 %v768
        %974 = vmatprep.subr.bf16.mxu0 0
        %975 = vmatpush1.bf16.msra.mxu0 %v769
        %976 = vmatprep.subr.bf16.mxu0 0
        %977 = vmatpush1.bf16.msra.mxu0 %v770
        %978 = vmatprep.subr.bf16.mxu0 0
        %979 = vmatpush1.bf16.msra.mxu0 %v771
        %980 = vmatprep.subr.bf16.mxu0 0
        %981 = vmatpush1.bf16.msra.mxu0 %v772
        %982 = vmatprep.subr.bf16.mxu0 0
        %983 = vmatpush1.bf16.msra.mxu0 %v773
        %984 = vmatprep.subr.bf16.mxu0 0
        %985 = vmatpush1.bf16.msra.mxu0 %v774
        %986 = vmatprep.subr.bf16.mxu0 0
        %987 = vmatpush1.bf16.msra.mxu0 %v775
        %988 = vmatprep.subr.bf16.mxu0 0
        %989 = vmatpush1.bf16.msra.mxu0 %v776
        %990 = vmatprep.subr.bf16.mxu0 0
        %991 = vmatpush1.bf16.msra.mxu0 %v777
        %992 = vmatprep.subr.bf16.mxu0 0
        %993 = vmatpush1.bf16.msra.mxu0 %v778
        %994 = vmatprep.subr.bf16.mxu0 0
        %995 = vmatpush1.bf16.msra.mxu0 %v779
        %996 = vmatprep.mubr.bf16.mxu0 %v451
        %997 = vmatmul.mubr.bf16.gmra.mrb[0].mxu0 %v449
        %v998 = vpop.f32.mrb[0].mxu0
        %v999 = vadd.f32 %v959, %v998
        %v1000 = vpop.f32.mrb[0].mxu0
        %v1001 = vpop.f32.mrb[0].mxu0
        %v1002 = vpop.f32.mrb[0].mxu0
        %1003 = vdwg.mxu0
        %v1004 = vadd.f32 %v272, %v999
        %vm1005 = vcmask 254976
        %1006 = vst.msk [vmem:[#allocation2] sm:$0x3] %vm1005, %v1004
        %p1007 = scmp.eq.s32.totalorder %s24, 3
        // Predicated region
        $region41: #{_lambda_.6} parent=31 // pred_check
          %p1008 = pneg %p1007
        $region42: #{_lambda_.6} parent=31 // pred_check_branch
          %1010 = sbr.rel (%p1008) target = $region44
        $region43: #{_lambda_.6} parent=31 // pred_region
          %v1011 = vld [vmem:[#allocation2] sm:$0x3]
          %v1012 = vld [vmem:[%s258] sm:$0x1]
          %v1014 = vlaneseq
          %v1015 = vshrl.u32 %v1014, 7
          %v1016 = vsub.s32 0, %v1015
          %v1017 = vrot.slane %v1012, %v1016
          %v1019 = vadd.f32 %v1011, %v1017
          %v1020 = vmax.f32 %v1019, 0.0
          %v1021 = vpack.c.bf16 %v1020, %v1020
          %vm1022 = vcmask 253952
          %1023 = vst.msk [vmem:[%s264] sm:$0x1] %vm1022, %v1021
        $region44: #{_lambda_.6} parent=31 // pred_fallthru
          _
        %p1024 = scmp.lt.s32.totalorder %s22, 0
        %s1025 = scalar_select %p1024, %s22, 0
        %p1026 = scmp.lt.s32.totalorder %s23, 0
        %s1027 = scalar_select %p1026, %s23, 0
        %s1028 = sadd.s32 %s1027, %s1025
        %s1029 = scalar_lea.vmem %s3, %s1028
        // Predicated region
        $region45: #{_lambda_.6} parent=31 // pred_check
          %p1030 = pneg %p138
        $region46: #{_lambda_.6} parent=31 // pred_check_branch
          %1032 = sbr.rel (%p1030) target = $region48
        $region47: #{_lambda_.6} parent=31 // pred_region
          _
        $region48: #{_lambda_.6} parent=31 // pred_fallthru
          _
        // Predicated region
        $region49: #{_lambda_.6} parent=31 // pred_check
          %p1033 = pneg %p138
        $region50: #{_lambda_.6} parent=31 // pred_check_branch
          %1035 = sbr.rel (%p1033) target = $region52
        $region51: #{_lambda_.6} parent=31 // pred_region
          %p1036 = scmp.lt.s32.totalorder %s22, 0
          %s1037 = scalar_select %p1036, %s22, 0
          %p1038 = scmp.lt.s32.totalorder %s23, 0
          %s1039 = scalar_select %p1038, %s23, 0
          %s1040 = sadd.s32 %s1039, %s1037
          %s1041 = scalar_lea.vmem %s3, %s1040
        $region52: #{_lambda_.6} parent=31 // pred_fallthru
          _
      $region32: #{_lambda_.6} parent=5 // pred_fallthru
        _
      %p1042 = scmp.le.s32.totalorder 2, %s12
      // Predicated region
      $region53: #{_lambda_.6} parent=5 // pred_check
        %p1043 = pneg %p1042
      $region54: #{_lambda_.6} parent=5 // pred_check_branch
        %1045 = sbr.rel (%p1043) target = $region56
      $region55: #{_lambda_.6} parent=5 // pred_region
        %s1046 = ssub.s32 %s12, 2
      $region56: #{_lambda_.6} parent=5 // pred_fallthru
        _
    $region6: #{_lambda_.6} parent=1 // loop_footer
      %s16 = sadd.s32 1, %s12
    $region7: #{_lambda_.6} parent=1 // loop_footer_branch
      %11 = sbr.rel target = $region3
    $region8: #{_lambda_.6} parent=1 // loop_exit
      _
    %1047 = vsyncpa [#allocation4], 1
    %s1048 = scalar_lea.sflag [#allocation4], 1
    %1049 = vsyncpa %s1048, 1

// kernel: _lambda_.7
$region0: #{_lambda_.7}
  #allocation0 [shape = 'u32[]', space=smem, size = 0x4, offset = 0x4, fixed_abs, tag = 'smem constant byte address 0x4 - core index']
  #allocation1 [shape = 'u32[144,128]{1,0:T(1,128)}', space=vmem, size = 0x12000, scoped, tag = 'internal scratch']
  #allocation2 [shape = 'f32[2,32]{1,0:T(2,128)}', space=vmem, size = 0x400, scoped, tag = 'scratch operand']
  %s0 = inlined_call_operand.vmem [shape: bf16[2,32], index: 0, kind: input, shape index: {}]
  %s1 = inlined_call_operand.vmem [shape: bf16[32,32], index: 1, kind: input, shape index: {}]
  %s2 = inlined_call_operand.vmem [shape: f32[1,32], index: 2, kind: input, shape index: {}]
  %s3 = inlined_call_operand.hbm [shape: f32[2,32], index: 3, kind: output, shape index: {}]
  %s4 = sld [smem:[#allocation0]]
  $region30: #{_lambda_.7} parent=0
    _
  %s6 = ssub.s32 1, %s4
  %s7 = scalar_select 0, %s6, %s4
  $region1: #{_lambda_.7} parent=0
    #allocation3 [shape = 'u8[1024]{0}', space=vmem, size = 0x400, scoped, tag = 'output window, operand 0, single buffered']
    #allocation4 [shape = 's32[1]{0}', space=sflag, size = 0x4, scoped, tag = 'scoped memory for _lambda_.7']
    %8 = vsyncpa [#allocation4], 0
    // Predicated region
    $region2: #{_lambda_.7} parent=1 // pred_check
      _
    $region3: #{_lambda_.7} parent=1 // pred_check_branch
      %10 = sbr.rel (0) target = $region5
    $region4: #{_lambda_.7} parent=1 // pred_region
      _
    $region5: #{_lambda_.7} parent=1 // pred_fallthru
      _
    // Predicated region
    $region6: #{_lambda_.7} parent=1 // pred_check
      _
    $region7: #{_lambda_.7} parent=1 // pred_check_branch
      %12 = sbr.rel (0) target = $region9
    $region8: #{_lambda_.7} parent=1 // pred_region
      _
    $region9: #{_lambda_.7} parent=1 // pred_fallthru
      _
    // Predicated region
    $region10: #{_lambda_.7} parent=1 // pred_check
      _
    $region11: #{_lambda_.7} parent=1 // pred_check_branch
      %14 = sbr.rel (0) target = $region13
    $region12: #{_lambda_.7} parent=1 // pred_region
      _
    $region13: #{_lambda_.7} parent=1 // pred_fallthru
      _
    %p16 = scmp.eq.s32.totalorder 0, 0
    // Predicated region
    $region14: #{_lambda_.7} parent=1 // pred_check
      %p17 = pneg %p16
    $region15: #{_lambda_.7} parent=1 // pred_check_branch
      %19 = sbr.rel (%p17) target = $region17
    $region16: #{_lambda_.7} parent=1 // pred_region
      %vm20 = vcmask 254976
      %21 = vst.msk [vmem:[#allocation2] sm:$0x3] %vm20, 0.0
    $region17: #{_lambda_.7} parent=1 // pred_fallthru
      _
    %v22 = vld [vmem:[#allocation2] sm:$0x3]
    %v23 = vld [vmem:[%s0] sm:$0x1]
    %v24 = vld [vmem:[%s1] sm:$0xf]
    %v25 = vld [vmem:[%s1 + $0x4] sm:$0xf]
    %v26 = vld [vmem:[%s1 + $0x8] sm:$0xf]
    %v27 = vld [vmem:[%s1 + $0xc] sm:$0xf]
    %v32 = vunpack.c.l.b16 %v24
    %v33 = vunpack.c.l.b16 %v25
    %v34 = vunpack.c.l.b16 %v26
    %v35 = vunpack.c.l.b16 %v27
    %v36 = vpack.c.b16 %v33, %v32
    %v37 = vpack.c.b16 %v35, %v34
    %vm40 = vcmask 261120
    %v42 = vsel %vm40, %v23, 0
    %44 = vmatprep.subr.bf16.mxu0 0
    %45 = vmatpush1.bf16.msra.mxu0 %v36
    %46 = vmatprep.subr.bf16.mxu0 0
    %47 = vmatpush1.bf16.msra.mxu0 %v37
    %48 = vmatprep.subr.bf16.mxu0 0
    %49 = vmatpush1.bf16.msra.mxu0 0
    %50 = vmatprep.subr.bf16.mxu0 0
    %51 = vmatpush1.bf16.msra.mxu0 0
    %52 = vmatprep.subr.bf16.mxu0 0
    %53 = vmatpush1.bf16.msra.mxu0 0
    %54 = vmatprep.subr.bf16.mxu0 0
    %55 = vmatpush1.bf16.msra.mxu0 0
    %56 = vmatprep.subr.bf16.mxu0 0
    %57 = vmatpush1.bf16.msra.mxu0 0
    %58 = vmatprep.subr.bf16.mxu0 0
    %59 = vmatpush1.bf16.msra.mxu0 0
    %60 = vmatprep.subr.bf16.mxu0 0
    %61 = vmatpush1.bf16.msra.mxu0 0
    %62 = vmatprep.subr.bf16.mxu0 0
    %63 = vmatpush1.bf16.msra.mxu0 0
    %64 = vmatprep.subr.bf16.mxu0 0
    %65 = vmatpush1.bf16.msra.mxu0 0
    %66 = vmatprep.subr.bf16.mxu0 0
    %67 = vmatpush1.bf16.msra.mxu0 0
    %68 = vmatprep.subr.bf16.mxu0 0
    %69 = vmatpush1.bf16.msra.mxu0 0
    %70 = vmatprep.subr.bf16.mxu0 0
    %71 = vmatpush1.bf16.msra.mxu0 0
    %72 = vmatprep.subr.bf16.mxu0 0
    %73 = vmatpush1.bf16.msra.mxu0 0
    %74 = vmatprep.subr.bf16.mxu0 0
    %75 = vmatpush1.bf16.msra.mxu0 0
    %76 = vmatprep.mubr.bf16.mxu0 0
    %77 = vmatmul.mubr.bf16.gmra.mrb[0].mxu0 %v42
    %v78 = vpop.f32.mrb[0].mxu0
    %v79 = vadd.f32 0.0, %v78
    %v80 = vpop.f32.mrb[0].mxu0
    %v81 = vpop.f32.mrb[0].mxu0
    %v82 = vpop.f32.mrb[0].mxu0
    %83 = vdwg.mxu0
    %v84 = vadd.f32 %v22, %v79
    %vm85 = vcmask 254976
    %86 = vst.msk [vmem:[#allocation2] sm:$0x3] %vm85, %v84
    // Predicated region
    $region18: #{_lambda_.7} parent=1 // pred_check
      %p87 = pneg %p16
    $region19: #{_lambda_.7} parent=1 // pred_check_branch
      %89 = sbr.rel (%p87) target = $region21
    $region20: #{_lambda_.7} parent=1 // pred_region
      %v90 = vld [vmem:[#allocation2] sm:$0x3]
      %v91 = vld [vmem:[%s2] sm:$0x1]
      %v93 = vlaneseq
      %v94 = vshrl.u32 %v93, 7
      %v95 = vsub.s32 0, %v94
      %v96 = vrot.slane %v91, %v95
      %v98 = vadd.f32 %v90, %v96
      %v99 = vmax.f32 %v98, 0.0
      %100 = vst.msk [vmem:[#allocation3] sm:$0x3] %vm85, %v99
    $region21: #{_lambda_.7} parent=1 // pred_fallthru
      _
    // Predicated region
    $region22: #{_lambda_.7} parent=1 // pred_check
      _
    $region23: #{_lambda_.7} parent=1 // pred_check_branch
      %102 = sbr.rel (0) target = $region25
    $region24: #{_lambda_.7} parent=1 // pred_region
      %s104 = ssub.s32 32, 32
      %105 = vsyncadd [#allocation4], %s104
      %s107 = sshll.u32 [#allocation3], 4
      %s108 = int_to_ptr.vmem [resolvable:$true] %s107
      %110 = dma.vmem_to_hbm [thread:$0]  %s108, 32, %s3, [#allocation4]
    $region25: #{_lambda_.7} parent=1 // pred_fallthru
      _
    // Predicated region
    $region26: #{_lambda_.7} parent=1 // pred_check
      _
    $region27: #{_lambda_.7} parent=1 // pred_check_branch
      %112 = sbr.rel (0) target = $region29
    $region28: #{_lambda_.7} parent=1 // pred_region
      %113 = dma.done [#allocation4], 32
    $region29: #{_lambda_.7} parent=1 // pred_fallthru
      _
    %114 = vsyncpa [#allocation4], 1

// kernel: _lambda_.5
$region0: #{_lambda_.5}
  #allocation0 [shape = 'u32[]', space=smem, size = 0x4, offset = 0x4, fixed_abs, tag = 'smem constant byte address 0x4 - core index']
  #allocation1 [shape = 'u32[144,128]{1,0:T(1,128)}', space=vmem, size = 0x12000, scoped, tag = 'internal scratch']
  #allocation2 [shape = 'bf16[2,18,18,16]{3,2,1,0:T(8,128)(2,1)}', space=vmem, size = 0x36000, scoped, tag = 'scratch operand']
  #allocation3 [shape = 'f32[512,16]{1,0:T(8,128)}', space=vmem, size = 0x40000, scoped, tag = 'scratch operand']
  %s0 = inlined_call_operand.vmem [shape: bf16[2,16,16,16], index: 0, kind: input, shape index: {}]
  %s1 = inlined_call_operand.vmem [shape: bf16[3,48,16], index: 1, kind: input, shape index: {}]
  %s2 = inlined_call_operand.vmem [shape: f32[1,16], index: 2, kind: input, shape index: {}]
  %s3 = inlined_call_operand.vmem [shape: bf16[2,16,16,16], index: 3, kind: output, shape index: {}]
  %s4 = sld [smem:[#allocation0]]
  $region22: #{_lambda_.5} parent=0
    _
  %s6 = ssub.s32 1, %s4
  %s7 = scalar_select 0, %s6, %s4
  // Predicated region
  $region2: #{_lambda_.5} parent=0 // pred_check
    _
  $region3: #{_lambda_.5} parent=0 // pred_check_branch
    %9 = sbr.rel (0) target = $region5
  $region4: #{_lambda_.5} parent=0 // pred_region
    _
  $region5: #{_lambda_.5} parent=0 // pred_fallthru
    _
  // Predicated region
  $region6: #{_lambda_.5} parent=0 // pred_check
    _
  $region7: #{_lambda_.5} parent=0 // pred_check_branch
    %11 = sbr.rel (0) target = $region9
  $region8: #{_lambda_.5} parent=0 // pred_region
    _
  $region9: #{_lambda_.5} parent=0 // pred_fallthru
    _
  // Predicated region
  $region10: #{_lambda_.5} parent=0 // pred_check
    _
  $region11: #{_lambda_.5} parent=0 // pred_check_branch
    %13 = sbr.rel (0) target = $region13
  $region12: #{_lambda_.5} parent=0 // pred_region
    _
  $region13: #{_lambda_.5} parent=0 // pred_fallthru
    _
  %vm15 = vcmask 125952
  %16 = vst.msk [vmem:[#allocation2] sm:$0xf] %vm15, 0
  %17 = vst.msk [vmem:[#allocation2 + $0x4] sm:$0xf] %vm15, 0
  %vm18 = vcmask 122880
  %19 = vst.msk [vmem:[#allocation2 + $0x8] sm:$0x1] %vm18, 0
  %20 = vst.msk [vmem:[#allocation2 + $0xc] sm:$0xf] %vm15, 0
  %21 = vst.msk [vmem:[#allocation2 + $0x10] sm:$0xf] %vm15, 0
  %22 = vst.msk [vmem:[#allocation2 + $0x14] sm:$0x1] %vm18, 0
  %23 = vst.msk [vmem:[#allocation2 + $0x18] sm:$0xf] %vm15, 0
  %24 = vst.msk [vmem:[#allocation2 + $0x1c] sm:$0xf] %vm15, 0
  %25 = vst.msk [vmem:[#allocation2 + $0x20] sm:$0x1] %vm18, 0
  %26 = vst.msk [vmem:[#allocation2 + $0x24] sm:$0xf] %vm15, 0
  %27 = vst.msk [vmem:[#allocation2 + $0x28] sm:$0xf] %vm15, 0
  %28 = vst.msk [vmem:[#allocation2 + $0x2c] sm:$0x1] %vm18, 0
  %29 = vst.msk [vmem:[#allocation2 + $0x30] sm:$0xf] %vm15, 0
  %30 = vst.msk [vmem:[#allocation2 + $0x34] sm:$0xf] %vm15, 0
  %31 = vst.msk [vmem:[#allocation2 + $0x38] sm:$0x1] %vm18, 0
  %32 = vst.msk [vmem:[#allocation2 + $0x3c] sm:$0xf] %vm15, 0
  %33 = vst.msk [vmem:[#allocation2 + $0x40] sm:$0xf] %vm15, 0
  %34 = vst.msk [vmem:[#allocation2 + $0x44] sm:$0x1] %vm18, 0
  %35 = vst.msk [vmem:[#allocation2 + $0x48] sm:$0xf] %vm15, 0
  %36 = vst.msk [vmem:[#allocation2 + $0x4c] sm:$0xf] %vm15, 0
  %37 = vst.msk [vmem:[#allocation2 + $0x50] sm:$0x1] %vm18, 0
  %38 = vst.msk [vmem:[#allocation2 + $0x54] sm:$0xf] %vm15, 0
  %39 = vst.msk [vmem:[#allocation2 + $0x58] sm:$0xf] %vm15, 0
  %40 = vst.msk [vmem:[#allocation2 + $0x5c] sm:$0x1] %vm18, 0
  %41 = vst.msk [vmem:[#allocation2 + $0x60] sm:$0xf] %vm15, 0
  %42 = vst.msk [vmem:[#allocation2 + $0x64] sm:$0xf] %vm15, 0
  %43 = vst.msk [vmem:[#allocation2 + $0x68] sm:$0x1] %vm18, 0
  %44 = vst.msk [vmem:[#allocation2 + $0x6c] sm:$0xf] %vm15, 0
  %45 = vst.msk [vmem:[#allocation2 + $0x70] sm:$0xf] %vm15, 0
  %46 = vst.msk [vmem:[#allocation2 + $0x74] sm:$0x1] %vm18, 0
  %47 = vst.msk [vmem:[#allocation2 + $0x78] sm:$0xf] %vm15, 0
  %48 = vst.msk [vmem:[#allocation2 + $0x7c] sm:$0xf] %vm15, 0
  %49 = vst.msk [vmem:[#allocation2 + $0x80] sm:$0x1] %vm18, 0
  %50 = vst.msk [vmem:[#allocation2 + $0x84] sm:$0xf] %vm15, 0
  %51 = vst.msk [vmem:[#allocation2 + $0x88] sm:$0xf] %vm15, 0
  %52 = vst.msk [vmem:[#allocation2 + $0x8c] sm:$0x1] %vm18, 0
  %53 = vst.msk [vmem:[#allocation2 + $0x90] sm:$0xf] %vm15, 0
  %54 = vst.msk [vmem:[#allocation2 + $0x94] sm:$0xf] %vm15, 0
  %55 = vst.msk [vmem:[#allocation2 + $0x98] sm:$0x1] %vm18, 0
  %56 = vst.msk [vmem:[#allocation2 + $0x9c] sm:$0xf] %vm15, 0
  %57 = vst.msk [vmem:[#allocation2 + $0xa0] sm:$0xf] %vm15, 0
  %58 = vst.msk [vmem:[#allocation2 + $0xa4] sm:$0x1] %vm18, 0
  %59 = vst.msk [vmem:[#allocation2 + $0xa8] sm:$0xf] %vm15, 0
  %60 = vst.msk [vmem:[#allocation2 + $0xac] sm:$0xf] %vm15, 0
  %61 = vst.msk [vmem:[#allocation2 + $0xb0] sm:$0x1] %vm18, 0
  %62 = vst.msk [vmem:[#allocation2 + $0xb4] sm:$0xf] %vm15, 0
  %63 = vst.msk [vmem:[#allocation2 + $0xb8] sm:$0xf] %vm15, 0
  %64 = vst.msk [vmem:[#allocation2 + $0xbc] sm:$0x1] %vm18, 0
  %65 = vst.msk [vmem:[#allocation2 + $0xc0] sm:$0xf] %vm15, 0
  %66 = vst.msk [vmem:[#allocation2 + $0xc4] sm:$0xf] %vm15, 0
  %67 = vst.msk [vmem:[#allocation2 + $0xc8] sm:$0x1] %vm18, 0
  %68 = vst.msk [vmem:[#allocation2 + $0xcc] sm:$0xf] %vm15, 0
  %69 = vst.msk [vmem:[#allocation2 + $0xd0] sm:$0xf] %vm15, 0
  %70 = vst.msk [vmem:[#allocation2 + $0xd4] sm:$0x1] %vm18, 0
  %71 = vst.msk [vmem:[#allocation2 + $0xd8] sm:$0xf] %vm15, 0
  %72 = vst.msk [vmem:[#allocation2 + $0xdc] sm:$0xf] %vm15, 0
  %73 = vst.msk [vmem:[#allocation2 + $0xe0] sm:$0x1] %vm18, 0
  %74 = vst.msk [vmem:[#allocation2 + $0xe4] sm:$0xf] %vm15, 0
  %75 = vst.msk [vmem:[#allocation2 + $0xe8] sm:$0xf] %vm15, 0
  %76 = vst.msk [vmem:[#allocation2 + $0xec] sm:$0x1] %vm18, 0
  %77 = vst.msk [vmem:[#allocation2 + $0xf0] sm:$0xf] %vm15, 0
  %78 = vst.msk [vmem:[#allocation2 + $0xf4] sm:$0xf] %vm15, 0
  %79 = vst.msk [vmem:[#allocation2 + $0xf8] sm:$0x1] %vm18, 0
  %80 = vst.msk [vmem:[#allocation2 + $0xfc] sm:$0xf] %vm15, 0
  %81 = vst.msk [vmem:[#allocation2 + $0x100] sm:$0xf] %vm15, 0
  %82 = vst.msk [vmem:[#allocation2 + $0x104] sm:$0x1] %vm18, 0
  %83 = vst.msk [vmem:[#allocation2 + $0x108] sm:$0xf] %vm15, 0
  %84 = vst.msk [vmem:[#allocation2 + $0x10c] sm:$0xf] %vm15, 0
  %85 = vst.msk [vmem:[#allocation2 + $0x110] sm:$0x1] %vm18, 0
  %86 = vst.msk [vmem:[#allocation2 + $0x114] sm:$0xf] %vm15, 0
  %87 = vst.msk [vmem:[#allocation2 + $0x118] sm:$0xf] %vm15, 0
  %88 = vst.msk [vmem:[#allocation2 + $0x11c] sm:$0x1] %vm18, 0
  %89 = vst.msk [vmem:[#allocation2 + $0x120] sm:$0xf] %vm15, 0
  %90 = vst.msk [vmem:[#allocation2 + $0x124] sm:$0xf] %vm15, 0
  %91 = vst.msk [vmem:[#allocation2 + $0x128] sm:$0x1] %vm18, 0
  %92 = vst.msk [vmem:[#allocation2 + $0x12c] sm:$0xf] %vm15, 0
  %93 = vst.msk [vmem:[#allocation2 + $0x130] sm:$0xf] %vm15, 0
  %94 = vst.msk [vmem:[#allocation2 + $0x134] sm:$0x1] %vm18, 0
  %95 = vst.msk [vmem:[#allocation2 + $0x138] sm:$0xf] %vm15, 0
  %96 = vst.msk [vmem:[#allocation2 + $0x13c] sm:$0xf] %vm15, 0
  %97 = vst.msk [vmem:[#allocation2 + $0x140] sm:$0x1] %vm18, 0
  %98 = vst.msk [vmem:[#allocation2 + $0x144] sm:$0xf] %vm15, 0
  %99 = vst.msk [vmem:[#allocation2 + $0x148] sm:$0xf] %vm15, 0
  %100 = vst.msk [vmem:[#allocation2 + $0x14c] sm:$0x1] %vm18, 0
  %101 = vst.msk [vmem:[#allocation2 + $0x150] sm:$0xf] %vm15, 0
  %102 = vst.msk [vmem:[#allocation2 + $0x154] sm:$0xf] %vm15, 0
  %103 = vst.msk [vmem:[#allocation2 + $0x158] sm:$0x1] %vm18, 0
  %104 = vst.msk [vmem:[#allocation2 + $0x15c] sm:$0xf] %vm15, 0
  %105 = vst.msk [vmem:[#allocation2 + $0x160] sm:$0xf] %vm15, 0
  %106 = vst.msk [vmem:[#allocation2 + $0x164] sm:$0x1] %vm18, 0
  %107 = vst.msk [vmem:[#allocation2 + $0x168] sm:$0xf] %vm15, 0
  %108 = vst.msk [vmem:[#allocation2 + $0x16c] sm:$0xf] %vm15, 0
  %109 = vst.msk [vmem:[#allocation2 + $0x170] sm:$0x1] %vm18, 0
  %110 = vst.msk [vmem:[#allocation2 + $0x174] sm:$0xf] %vm15, 0
  %111 = vst.msk [vmem:[#allocation2 + $0x178] sm:$0xf] %vm15, 0
  %112 = vst.msk [vmem:[#allocation2 + $0x17c] sm:$0x1] %vm18, 0
  %113 = vst.msk [vmem:[#allocation2 + $0x180] sm:$0xf] %vm15, 0
  %114 = vst.msk [vmem:[#allocation2 + $0x184] sm:$0xf] %vm15, 0
  %115 = vst.msk [vmem:[#allocation2 + $0x188] sm:$0x1] %vm18, 0
  %116 = vst.msk [vmem:[#allocation2 + $0x18c] sm:$0xf] %vm15, 0
  %117 = vst.msk [vmem:[#allocation2 + $0x190] sm:$0xf] %vm15, 0
  %118 = vst.msk [vmem:[#allocation2 + $0x194] sm:$0x1] %vm18, 0
  %119 = vst.msk [vmem:[#allocation2 + $0x198] sm:$0xf] %vm15, 0
  %120 = vst.msk [vmem:[#allocation2 + $0x19c] sm:$0xf] %vm15, 0
  %121 = vst.msk [vmem:[#allocation2 + $0x1a0] sm:$0x1] %vm18, 0
  %122 = vst.msk [vmem:[#allocation2 + $0x1a4] sm:$0xf] %vm15, 0
  %123 = vst.msk [vmem:[#allocation2 + $0x1a8] sm:$0xf] %vm15, 0
  %124 = vst.msk [vmem:[#allocation2 + $0x1ac] sm:$0x1] %vm18, 0
  %v125 = vld [vmem:[%s0] sm:$0xf]
  %v126 = vld [vmem:[%s0 + $0x4] sm:$0xf]
  %v127 = vld [vmem:[%s0 + $0x8] sm:$0xf]
  %v128 = vld [vmem:[%s0 + $0xc] sm:$0xf]
  %v129 = vld [vmem:[%s0 + $0x10] sm:$0xf]
  %v130 = vld [vmem:[%s0 + $0x14] sm:$0xf]
  %v131 = vld [vmem:[%s0 + $0x18] sm:$0xf]
  %v132 = vld [vmem:[%s0 + $0x1c] sm:$0xf]
  %v133 = vld [vmem:[%s0 + $0x20] sm:$0xf]
  %v134 = vld [vmem:[%s0 + $0x24] sm:$0xf]
  %v135 = vld [vmem:[%s0 + $0x28] sm:$0xf]
  %v136 = vld [vmem:[%s0 + $0x2c] sm:$0xf]
  %v137 = vld [vmem:[%s0 + $0x30] sm:$0xf]
  %v138 = vld [vmem:[%s0 + $0x34] sm:$0xf]
  %v139 = vld [vmem:[%s0 + $0x38] sm:$0xf]
  %v140 = vld [vmem:[%s0 + $0x3c] sm:$0xf]
  %v141 = vld [vmem:[%s0 + $0x40] sm:$0xf]
  %v142 = vld [vmem:[%s0 + $0x44] sm:$0xf]
  %v143 = vld [vmem:[%s0 + $0x48] sm:$0xf]
  %v144 = vld [vmem:[%s0 + $0x4c] sm:$0xf]
  %v145 = vld [vmem:[%s0 + $0x50] sm:$0xf]
  %v146 = vld [vmem:[%s0 + $0x54] sm:$0xf]
  %v147 = vld [vmem:[%s0 + $0x58] sm:$0xf]
  %v148 = vld [vmem:[%s0 + $0x5c] sm:$0xf]
  %v149 = vld [vmem:[%s0 + $0x60] sm:$0xf]
  %v150 = vld [vmem:[%s0 + $0x64] sm:$0xf]
  %v151 = vld [vmem:[%s0 + $0x68] sm:$0xf]
  %v152 = vld [vmem:[%s0 + $0x6c] sm:$0xf]
  %v153 = vld [vmem:[%s0 + $0x70] sm:$0xf]
  %v154 = vld [vmem:[%s0 + $0x74] sm:$0xf]
  %v155 = vld [vmem:[%s0 + $0x78] sm:$0xf]
  %v156 = vld [vmem:[%s0 + $0x7c] sm:$0xf]
  %v157 = vld [vmem:[%s0 + $0x80] sm:$0xf]
  %v158 = vld [vmem:[%s0 + $0x84] sm:$0xf]
  %v159 = vld [vmem:[%s0 + $0x88] sm:$0xf]
  %v160 = vld [vmem:[%s0 + $0x8c] sm:$0xf]
  %v161 = vld [vmem:[%s0 + $0x90] sm:$0xf]
  %v162 = vld [vmem:[%s0 + $0x94] sm:$0xf]
  %v163 = vld [vmem:[%s0 + $0x98] sm:$0xf]
  %v164 = vld [vmem:[%s0 + $0x9c] sm:$0xf]
  %v165 = vld [vmem:[%s0 + $0xa0] sm:$0xf]
  %v166 = vld [vmem:[%s0 + $0xa4] sm:$0xf]
  %v167 = vld [vmem:[%s0 + $0xa8] sm:$0xf]
  %v168 = vld [vmem:[%s0 + $0xac] sm:$0xf]
  %v169 = vld [vmem:[%s0 + $0xb0] sm:$0xf]
  %v170 = vld [vmem:[%s0 + $0xb4] sm:$0xf]
  %v171 = vld [vmem:[%s0 + $0xb8] sm:$0xf]
  %v172 = vld [vmem:[%s0 + $0xbc] sm:$0xf]
  %v173 = vld [vmem:[%s0 + $0xc0] sm:$0xf]
  %v174 = vld [vmem:[%s0 + $0xc4] sm:$0xf]
  %v175 = vld [vmem:[%s0 + $0xc8] sm:$0xf]
  %v176 = vld [vmem:[%s0 + $0xcc] sm:$0xf]
  %v177 = vld [vmem:[%s0 + $0xd0] sm:$0xf]
  %v178 = vld [vmem:[%s0 + $0xd4] sm:$0xf]
  %v179 = vld [vmem:[%s0 + $0xd8] sm:$0xf]
  %v180 = vld [vmem:[%s0 + $0xdc] sm:$0xf]
  %v181 = vld [vmem:[%s0 + $0xe0] sm:$0xf]
  %v182 = vld [vmem:[%s0 + $0xe4] sm:$0xf]
  %v183 = vld [vmem:[%s0 + $0xe8] sm:$0xf]
  %v184 = vld [vmem:[%s0 + $0xec] sm:$0xf]
  %v185 = vld [vmem:[%s0 + $0xf0] sm:$0xf]
  %v186 = vld [vmem:[%s0 + $0xf4] sm:$0xf]
  %v187 = vld [vmem:[%s0 + $0xf8] sm:$0xf]
  %v188 = vld [vmem:[%s0 + $0xfc] sm:$0xf]
  %vm189 = vsmask.f32 256
  %vm190 = vsmask.f32 4368
  %vm191 = vmor %vm189, %vm190
  %v193 = vshrl.u32 %v125, 16
  %v195 = vrot.slane %v193, 7
  %v196 = vshll.u32 %v125, 16
  %v198 = vor.u32 %v195, %v196
  %v199 = vrot.slane %v195, 4
  %v201 = vshrl.u32 %v126, 16
  %v203 = vrot.slane %v201, 7
  %v204 = vshll.u32 %v126, 16
  %v206 = vor.u32 %v203, %v204
  %v207 = vsel %vm191, %v199, %v206
  %v208 = vrot.slane %v203, 4
  %v210 = vshrl.u32 %v127, 16
  %v212 = vrot.slane %v210, 7
  %v213 = vshll.u32 %v127, 16
  %v215 = vor.u32 %v212, %v213
  %v216 = vrot.slane %v212, 4
  %v218 = vshrl.u32 %v128, 16
  %v220 = vrot.slane %v218, 7
  %v221 = vshll.u32 %v128, 16
  %v223 = vor.u32 %v220, %v221
  %v224 = vsel %vm191, %v216, %v223
  %v225 = vrot.slane %v220, 4
  %v227 = vshrl.u32 %v129, 16
  %v229 = vrot.slane %v227, 7
  %v230 = vshll.u32 %v129, 16
  %v232 = vor.u32 %v229, %v230
  %v233 = vrot.slane %v229, 4
  %v235 = vshrl.u32 %v130, 16
  %v237 = vrot.slane %v235, 7
  %v238 = vshll.u32 %v130, 16
  %v240 = vor.u32 %v237, %v238
  %v241 = vsel %vm191, %v233, %v240
  %v242 = vrot.slane %v237, 4
  %v244 = vshrl.u32 %v131, 16
  %v246 = vrot.slane %v244, 7
  %v247 = vshll.u32 %v131, 16
  %v249 = vor.u32 %v246, %v247
  %v250 = vrot.slane %v246, 4
  %v252 = vshrl.u32 %v132, 16
  %v254 = vrot.slane %v252, 7
  %v255 = vshll.u32 %v132, 16
  %v257 = vor.u32 %v254, %v255
  %v258 = vsel %vm191, %v250, %v257
  %v259 = vrot.slane %v254, 4
  %v261 = vshrl.u32 %v133, 16
  %v263 = vrot.slane %v261, 7
  %v264 = vshll.u32 %v133, 16
  %v266 = vor.u32 %v263, %v264
  %v267 = vrot.slane %v263, 4
  %v269 = vshrl.u32 %v134, 16
  %v271 = vrot.slane %v269, 7
  %v272 = vshll.u32 %v134, 16
  %v274 = vor.u32 %v271, %v272
  %v275 = vsel %vm191, %v267, %v274
  %v276 = vrot.slane %v271, 4
  %v278 = vshrl.u32 %v135, 16
  %v280 = vrot.slane %v278, 7
  %v281 = vshll.u32 %v135, 16
  %v283 = vor.u32 %v280, %v281
  %v284 = vrot.slane %v280, 4
  %v286 = vshrl.u32 %v136, 16
  %v288 = vrot.slane %v286, 7
  %v289 = vshll.u32 %v136, 16
  %v291 = vor.u32 %v288, %v289
  %v292 = vsel %vm191, %v284, %v291
  %v293 = vrot.slane %v288, 4
  %v295 = vshrl.u32 %v137, 16
  %v297 = vrot.slane %v295, 7
  %v298 = vshll.u32 %v137, 16
  %v300 = vor.u32 %v297, %v298
  %v301 = vrot.slane %v297, 4
  %v303 = vshrl.u32 %v138, 16
  %v305 = vrot.slane %v303, 7
  %v306 = vshll.u32 %v138, 16
  %v308 = vor.u32 %v305, %v306
  %v309 = vsel %vm191, %v301, %v308
  %v310 = vrot.slane %v305, 4
  %v312 = vshrl.u32 %v139, 16
  %v314 = vrot.slane %v312, 7
  %v315 = vshll.u32 %v139, 16
  %v317 = vor.u32 %v314, %v315
  %v318 = vrot.slane %v314, 4
  %v320 = vshrl.u32 %v140, 16
  %v322 = vrot.slane %v320, 7
  %v323 = vshll.u32 %v140, 16
  %v325 = vor.u32 %v322, %v323
  %v326 = vsel %vm191, %v318, %v325
  %v327 = vrot.slane %v322, 4
  %v329 = vshrl.u32 %v141, 16
  %v331 = vrot.slane %v329, 7
  %v332 = vshll.u32 %v141, 16
  %v334 = vor.u32 %v331, %v332
  %v335 = vrot.slane %v331, 4
  %v337 = vshrl.u32 %v142, 16
  %v339 = vrot.slane %v337, 7
  %v340 = vshll.u32 %v142, 16
  %v342 = vor.u32 %v339, %v340
  %v343 = vsel %vm191, %v335, %v342
  %v344 = vrot.slane %v339, 4
  %v346 = vshrl.u32 %v143, 16
  %v348 = vrot.slane %v346, 7
  %v349 = vshll.u32 %v143, 16
  %v351 = vor.u32 %v348, %v349
  %v352 = vrot.slane %v348, 4
  %v354 = vshrl.u32 %v144, 16
  %v356 = vrot.slane %v354, 7
  %v357 = vshll.u32 %v144, 16
  %v359 = vor.u32 %v356, %v357
  %v360 = vsel %vm191, %v352, %v359
  %v361 = vrot.slane %v356, 4
  %v363 = vshrl.u32 %v145, 16
  %v365 = vrot.slane %v363, 7
  %v366 = vshll.u32 %v145, 16
  %v368 = vor.u32 %v365, %v366
  %v369 = vrot.slane %v365, 4
  %v371 = vshrl.u32 %v146, 16
  %v373 = vrot.slane %v371, 7
  %v374 = vshll.u32 %v146, 16
  %v376 = vor.u32 %v373, %v374
  %v377 = vsel %vm191, %v369, %v376
  %v378 = vrot.slane %v373, 4
  %v380 = vshrl.u32 %v147, 16
  %v382 = vrot.slane %v380, 7
  %v383 = vshll.u32 %v147, 16
  %v385 = vor.u32 %v382, %v383
  %v386 = vrot.slane %v382, 4
  %v388 = vshrl.u32 %v148, 16
  %v390 = vrot.slane %v388, 7
  %v391 = vshll.u32 %v148, 16
  %v393 = vor.u32 %v390, %v391
  %v394 = vsel %vm191, %v386, %v393
  %v395 = vrot.slane %v390, 4
  %v397 = vshrl.u32 %v149, 16
  %v399 = vrot.slane %v397, 7
  %v400 = vshll.u32 %v149, 16
  %v402 = vor.u32 %v399, %v400
  %v403 = vrot.slane %v399, 4
  %v405 = vshrl.u32 %v150, 16
  %v407 = vrot.slane %v405, 7
  %v408 = vshll.u32 %v150, 16
  %v410 = vor.u32 %v407, %v408
  %v411 = vsel %vm191, %v403, %v410
  %v412 = vrot.slane %v407, 4
  %v414 = vshrl.u32 %v151, 16
  %v416 = vrot.slane %v414, 7
  %v417 = vshll.u32 %v151, 16
  %v419 = vor.u32 %v416, %v417
  %v420 = vrot.slane %v416, 4
  %v422 = vshrl.u32 %v152, 16
  %v424 = vrot.slane %v422, 7
  %v425 = vshll.u32 %v152, 16
  %v427 = vor.u32 %v424, %v425
  %v428 = vsel %vm191, %v420, %v427
  %v429 = vrot.slane %v424, 4
  %v431 = vshrl.u32 %v153, 16
  %v433 = vrot.slane %v431, 7
  %v434 = vshll.u32 %v153, 16
  %v436 = vor.u32 %v433, %v434
  %v437 = vrot.slane %v433, 4
  %v439 = vshrl.u32 %v154, 16
  %v441 = vrot.slane %v439, 7
  %v442 = vshll.u32 %v154, 16
  %v444 = vor.u32 %v441, %v442
  %v445 = vsel %vm191, %v437, %v444
  %v446 = vrot.slane %v441, 4
  %v448 = vshrl.u32 %v155, 16
  %v450 = vrot.slane %v448, 7
  %v451 = vshll.u32 %v155, 16
  %v453 = vor.u32 %v450, %v451
  %v454 = vrot.slane %v450, 4
  %v456 = vshrl.u32 %v156, 16
  %v458 = vrot.slane %v456, 7
  %v459 = vshll.u32 %v156, 16
  %v461 = vor.u32 %v458, %v459
  %v462 = vsel %vm191, %v454, %v461
  %v463 = vrot.slane %v458, 4
  %v465 = vshrl.u32 %v157, 16
  %v467 = vrot.slane %v465, 7
  %v468 = vshll.u32 %v157, 16
  %v470 = vor.u32 %v467, %v468
  %v471 = vrot.slane %v467, 4
  %v473 = vshrl.u32 %v158, 16
  %v475 = vrot.slane %v473, 7
  %v476 = vshll.u32 %v158, 16
  %v478 = vor.u32 %v475, %v476
  %v479 = vsel %vm191, %v471, %v478
  %v480 = vrot.slane %v475, 4
  %v482 = vshrl.u32 %v159, 16
  %v484 = vrot.slane %v482, 7
  %v485 = vshll.u32 %v159, 16
  %v487 = vor.u32 %v484, %v485
  %v488 = vrot.slane %v484, 4
  %v490 = vshrl.u32 %v160, 16
  %v492 = vrot.slane %v490, 7
  %v493 = vshll.u32 %v160, 16
  %v495 = vor.u32 %v492, %v493
  %v496 = vsel %vm191, %v488, %v495
  %v497 = vrot.slane %v492, 4
  %v499 = vshrl.u32 %v161, 16
  %v501 = vrot.slane %v499, 7
  %v502 = vshll.u32 %v161, 16
  %v504 = vor.u32 %v501, %v502
  %v505 = vrot.slane %v501, 4
  %v507 = vshrl.u32 %v162, 16
  %v509 = vrot.slane %v507, 7
  %v510 = vshll.u32 %v162, 16
  %v512 = vor.u32 %v509, %v510
  %v513 = vsel %vm191, %v505, %v512
  %v514 = vrot.slane %v509, 4
  %v516 = vshrl.u32 %v163, 16
  %v518 = vrot.slane %v516, 7
  %v519 = vshll.u32 %v163, 16
  %v521 = vor.u32 %v518, %v519
  %v522 = vrot.slane %v518, 4
  %v524 = vshrl.u32 %v164, 16
  %v526 = vrot.slane %v524, 7
  %v527 = vshll.u32 %v164, 16
  %v529 = vor.u32 %v526, %v527
  %v530 = vsel %vm191, %v522, %v529
  %v531 = vrot.slane %v526, 4
  %v533 = vshrl.u32 %v165, 16
  %v535 = vrot.slane %v533, 7
  %v536 = vshll.u32 %v165, 16
  %v538 = vor.u32 %v535, %v536
  %v539 = vrot.slane %v535, 4
  %v541 = vshrl.u32 %v166, 16
  %v543 = vrot.slane %v541, 7
  %v544 = vshll.u32 %v166, 16
  %v546 = vor.u32 %v543, %v544
  %v547 = vsel %vm191, %v539, %v546
  %v548 = vrot.slane %v543, 4
  %v550 = vshrl.u32 %v167, 16
  %v552 = vrot.slane %v550, 7
  %v553 = vshll.u32 %v167, 16
  %v555 = vor.u32 %v552, %v553
  %v556 = vrot.slane %v552, 4
  %v558 = vshrl.u32 %v168, 16
  %v560 = vrot.slane %v558, 7
  %v561 = vshll.u32 %v168, 16
  %v563 = vor.u32 %v560, %v561
  %v564 = vsel %vm191, %v556, %v563
  %v565 = vrot.slane %v560, 4
  %v567 = vshrl.u32 %v169, 16
  %v569 = vrot.slane %v567, 7
  %v570 = vshll.u32 %v169, 16
  %v572 = vor.u32 %v569, %v570
  %v573 = vrot.slane %v569, 4
  %v575 = vshrl.u32 %v170, 16
  %v577 = vrot.slane %v575, 7
  %v578 = vshll.u32 %v170, 16
  %v580 = vor.u32 %v577, %v578
  %v581 = vsel %vm191, %v573, %v580
  %v582 = vrot.slane %v577, 4
  %v584 = vshrl.u32 %v171, 16
  %v586 = vrot.slane %v584, 7
  %v587 = vshll.u32 %v171, 16
  %v589 = vor.u32 %v586, %v587
  %v590 = vrot.slane %v586, 4
  %v592 = vshrl.u32 %v172, 16
  %v594 = vrot.slane %v592, 7
  %v595 = vshll.u32 %v172, 16
  %v597 = vor.u32 %v594, %v595
  %v598 = vsel %vm191, %v590, %v597
  %v599 = vrot.slane %v594, 4
  %v601 = vshrl.u32 %v173, 16
  %v603 = vrot.slane %v601, 7
  %v604 = vshll.u32 %v173, 16
  %v606 = vor.u32 %v603, %v604
  %v607 = vrot.slane %v603, 4
  %v609 = vshrl.u32 %v174, 16
  %v611 = vrot.slane %v609, 7
  %v612 = vshll.u32 %v174, 16
  %v614 = vor.u32 %v611, %v612
  %v615 = vsel %vm191, %v607, %v614
  %v616 = vrot.slane %v611, 4
  %v618 = vshrl.u32 %v175, 16
  %v620 = vrot.slane %v618, 7
  %v621 = vshll.u32 %v175, 16
  %v623 = vor.u32 %v620, %v621
  %v624 = vrot.slane %v620, 4
  %v626 = vshrl.u32 %v176, 16
  %v628 = vrot.slane %v626, 7
  %v629 = vshll.u32 %v176, 16
  %v631 = vor.u32 %v628, %v629
  %v632 = vsel %vm191, %v624, %v631
  %v633 = vrot.slane %v628, 4
  %v635 = vshrl.u32 %v177, 16
  %v637 = vrot.slane %v635, 7
  %v638 = vshll.u32 %v177, 16
  %v640 = vor.u32 %v637, %v638
  %v641 = vrot.slane %v637, 4
  %v643 = vshrl.u32 %v178, 16
  %v645 = vrot.slane %v643, 7
  %v646 = vshll.u32 %v178, 16
  %v648 = vor.u32 %v645, %v646
  %v649 = vsel %vm191, %v641, %v648
  %v650 = vrot.slane %v645, 4
  %v652 = vshrl.u32 %v179, 16
  %v654 = vrot.slane %v652, 7
  %v655 = vshll.u32 %v179, 16
  %v657 = vor.u32 %v654, %v655
  %v658 = vrot.slane %v654, 4
  %v660 = vshrl.u32 %v180, 16
  %v662 = vrot.slane %v660, 7
  %v663 = vshll.u32 %v180, 16
  %v665 = vor.u32 %v662, %v663
  %v666 = vsel %vm191, %v658, %v665
  %v667 = vrot.slane %v662, 4
  %v669 = vshrl.u32 %v181, 16
  %v671 = vrot.slane %v669, 7
  %v672 = vshll.u32 %v181, 16
  %v674 = vor.u32 %v671, %v672
  %v675 = vrot.slane %v671, 4
  %v677 = vshrl.u32 %v182, 16
  %v679 = vrot.slane %v677, 7
  %v680 = vshll.u32 %v182, 16
  %v682 = vor.u32 %v679, %v680
  %v683 = vsel %vm191, %v675, %v682
  %v684 = vrot.slane %v679, 4
  %v686 = vshrl.u32 %v183, 16
  %v688 = vrot.slane %v686, 7
  %v689 = vshll.u32 %v183, 16
  %v691 = vor.u32 %v688, %v689
  %v692 = vrot.slane %v688, 4
  %v694 = vshrl.u32 %v184, 16
  %v696 = vrot.slane %v694, 7
  %v697 = vshll.u32 %v184, 16
  %v699 = vor.u32 %v696, %v697
  %v700 = vsel %vm191, %v692, %v699
  %v701 = vrot.slane %v696, 4
  %v703 = vshrl.u32 %v185, 16
  %v705 = vrot.slane %v703, 7
  %v706 = vshll.u32 %v185, 16
  %v708 = vor.u32 %v705, %v706
  %v709 = vrot.slane %v705, 4
  %v711 = vshrl.u32 %v186, 16
  %v713 = vrot.slane %v711, 7
  %v714 = vshll.u32 %v186, 16
  %v716 = vor.u32 %v713, %v714
  %v717 = vsel %vm191, %v709, %v716
  %v718 = vrot.slane %v713, 4
  %v720 = vshrl.u32 %v187, 16
  %v722 = vrot.slane %v720, 7
  %v723 = vshll.u32 %v187, 16
  %v725 = vor.u32 %v722, %v723
  %v726 = vrot.slane %v722, 4
  %v728 = vshrl.u32 %v188, 16
  %v730 = vrot.slane %v728, 7
  %v731 = vshll.u32 %v188, 16
  %v733 = vor.u32 %v730, %v731
  %v734 = vsel %vm191, %v726, %v733
  %v735 = vrot.slane %v730, 4
  %s832 = scalar_lea.vmem [#allocation2], 12
  %vm833 = vcmask 125952
  %vm834 = vsmask.f32 7938
  %vm835 = vmand %vm833, %vm834
  %v836 = vld [vmem:[%s832] sm:$0xf]
  %v837 = vsel %vm835, %v198, %v836
  %838 = vst [vmem:[%s832] sm:$0xf] %v837
  %839 = vst.msk [vmem:[%s832 + $0x4] sm:$0xf] %vm15, %v207
  %vm840 = vcmask 122880
  %vm841 = vmand %vm840, %vm189
  %v842 = vld [vmem:[%s832 + $0x8] sm:$0x1]
  %v843 = vsel %vm841, %v208, %v842
  %844 = vst [vmem:[%s832 + $0x8] sm:$0x1] %v843
  %v845 = vld [vmem:[%s832 + $0xc] sm:$0xf]
  %v846 = vsel %vm835, %v215, %v845
  %847 = vst [vmem:[%s832 + $0xc] sm:$0xf] %v846
  %848 = vst.msk [vmem:[%s832 + $0x10] sm:$0xf] %vm15, %v224
  %v849 = vld [vmem:[%s832 + $0x14] sm:$0x1]
  %v850 = vsel %vm841, %v225, %v849
  %851 = vst [vmem:[%s832 + $0x14] sm:$0x1] %v850
  %v852 = vld [vmem:[%s832 + $0x18] sm:$0xf]
  %v853 = vsel %vm835, %v232, %v852
  %854 = vst [vmem:[%s832 + $0x18] sm:$0xf] %v853
  %855 = vst.msk [vmem:[%s832 + $0x1c] sm:$0xf] %vm15, %v241
  %v856 = vld [vmem:[%s832 + $0x20] sm:$0x1]
  %v857 = vsel %vm841, %v242, %v856
  %858 = vst [vmem:[%s832 + $0x20] sm:$0x1] %v857
  %v859 = vld [vmem:[%s832 + $0x24] sm:$0xf]
  %v860 = vsel %vm835, %v249, %v859
  %861 = vst [vmem:[%s832 + $0x24] sm:$0xf] %v860
  %862 = vst.msk [vmem:[%s832 + $0x28] sm:$0xf] %vm15, %v258
  %v863 = vld [vmem:[%s832 + $0x2c] sm:$0x1]
  %v864 = vsel %vm841, %v259, %v863
  %865 = vst [vmem:[%s832 + $0x2c] sm:$0x1] %v864
  %v866 = vld [vmem:[%s832 + $0x30] sm:$0xf]
  %v867 = vsel %vm835, %v266, %v866
  %868 = vst [vmem:[%s832 + $0x30] sm:$0xf] %v867
  %869 = vst.msk [vmem:[%s832 + $0x34] sm:$0xf] %vm15, %v275
  %v870 = vld [vmem:[%s832 + $0x38] sm:$0x1]
  %v871 = vsel %vm841, %v276, %v870
  %872 = vst [vmem:[%s832 + $0x38] sm:$0x1] %v871
  %v873 = vld [vmem:[%s832 + $0x3c] sm:$0xf]
  %v874 = vsel %vm835, %v283, %v873
  %875 = vst [vmem:[%s832 + $0x3c] sm:$0xf] %v874
  %876 = vst.msk [vmem:[%s832 + $0x40] sm:$0xf] %vm15, %v292
  %v877 = vld [vmem:[%s832 + $0x44] sm:$0x1]
  %v878 = vsel %vm841, %v293, %v877
  %879 = vst [vmem:[%s832 + $0x44] sm:$0x1] %v878
  %v880 = vld [vmem:[%s832 + $0x48] sm:$0xf]
  %v881 = vsel %vm835, %v300, %v880
  %882 = vst [vmem:[%s832 + $0x48] sm:$0xf] %v881
  %883 = vst.msk [vmem:[%s832 + $0x4c] sm:$0xf] %vm15, %v309
  %v884 = vld [vmem:[%s832 + $0x50] sm:$0x1]
  %v885 = vsel %vm841, %v310, %v884
  %886 = vst [vmem:[%s832 + $0x50] sm:$0x1] %v885
  %v887 = vld [vmem:[%s832 + $0x54] sm:$0xf]
  %v888 = vsel %vm835, %v317, %v887
  %889 = vst [vmem:[%s832 + $0x54] sm:$0xf] %v888
  %890 = vst.msk [vmem:[%s832 + $0x58] sm:$0xf] %vm15, %v326
  %v891 = vld [vmem:[%s832 + $0x5c] sm:$0x1]
  %v892 = vsel %vm841, %v327, %v891
  %893 = vst [vmem:[%s832 + $0x5c] sm:$0x1] %v892
  %v894 = vld [vmem:[%s832 + $0x60] sm:$0xf]
  %v895 = vsel %vm835, %v334, %v894
  %896 = vst [vmem:[%s832 + $0x60] sm:$0xf] %v895
  %897 = vst.msk [vmem:[%s832 + $0x64] sm:$0xf] %vm15, %v343
  %v898 = vld [vmem:[%s832 + $0x68] sm:$0x1]
  %v899 = vsel %vm841, %v344, %v898
  %900 = vst [vmem:[%s832 + $0x68] sm:$0x1] %v899
  %v901 = vld [vmem:[%s832 + $0x6c] sm:$0xf]
  %v902 = vsel %vm835, %v351, %v901
  %903 = vst [vmem:[%s832 + $0x6c] sm:$0xf] %v902
  %904 = vst.msk [vmem:[%s832 + $0x70] sm:$0xf] %vm15, %v360
  %v905 = vld [vmem:[%s832 + $0x74] sm:$0x1]
  %v906 = vsel %vm841, %v361, %v905
  %907 = vst [vmem:[%s832 + $0x74] sm:$0x1] %v906
  %v908 = vld [vmem:[%s832 + $0x78] sm:$0xf]
  %v909 = vsel %vm835, %v368, %v908
  %910 = vst [vmem:[%s832 + $0x78] sm:$0xf] %v909
  %911 = vst.msk [vmem:[%s832 + $0x7c] sm:$0xf] %vm15, %v377
  %v912 = vld [vmem:[%s832 + $0x80] sm:$0x1]
  %v913 = vsel %vm841, %v378, %v912
  %914 = vst [vmem:[%s832 + $0x80] sm:$0x1] %v913
  %v915 = vld [vmem:[%s832 + $0x84] sm:$0xf]
  %v916 = vsel %vm835, %v385, %v915
  %917 = vst [vmem:[%s832 + $0x84] sm:$0xf] %v916
  %918 = vst.msk [vmem:[%s832 + $0x88] sm:$0xf] %vm15, %v394
  %v919 = vld [vmem:[%s832 + $0x8c] sm:$0x1]
  %v920 = vsel %vm841, %v395, %v919
  %921 = vst [vmem:[%s832 + $0x8c] sm:$0x1] %v920
  %v922 = vld [vmem:[%s832 + $0x90] sm:$0xf]
  %v923 = vsel %vm835, %v402, %v922
  %924 = vst [vmem:[%s832 + $0x90] sm:$0xf] %v923
  %925 = vst.msk [vmem:[%s832 + $0x94] sm:$0xf] %vm15, %v411
  %v926 = vld [vmem:[%s832 + $0x98] sm:$0x1]
  %v927 = vsel %vm841, %v412, %v926
  %928 = vst [vmem:[%s832 + $0x98] sm:$0x1] %v927
  %v929 = vld [vmem:[%s832 + $0x9c] sm:$0xf]
  %v930 = vsel %vm835, %v419, %v929
  %931 = vst [vmem:[%s832 + $0x9c] sm:$0xf] %v930
  %932 = vst.msk [vmem:[%s832 + $0xa0] sm:$0xf] %vm15, %v428
  %v933 = vld [vmem:[%s832 + $0xa4] sm:$0x1]
  %v934 = vsel %vm841, %v429, %v933
  %935 = vst [vmem:[%s832 + $0xa4] sm:$0x1] %v934
  %v936 = vld [vmem:[%s832 + $0xa8] sm:$0xf]
  %v937 = vsel %vm835, %v436, %v936
  %938 = vst [vmem:[%s832 + $0xa8] sm:$0xf] %v937
  %939 = vst.msk [vmem:[%s832 + $0xac] sm:$0xf] %vm15, %v445
  %v940 = vld [vmem:[%s832 + $0xb0] sm:$0x1]
  %v941 = vsel %vm841, %v446, %v940
  %942 = vst [vmem:[%s832 + $0xb0] sm:$0x1] %v941
  %v943 = vld [vmem:[%s832 + $0xb4] sm:$0xf]
  %v944 = vsel %vm835, %v453, %v943
  %945 = vst [vmem:[%s832 + $0xb4] sm:$0xf] %v944
  %946 = vst.msk [vmem:[%s832 + $0xb8] sm:$0xf] %vm15, %v462
  %v947 = vld [vmem:[%s832 + $0xbc] sm:$0x1]
  %v948 = vsel %vm841, %v463, %v947
  %949 = vst [vmem:[%s832 + $0xbc] sm:$0x1] %v948
  %v950 = vld [vmem:[%s832 + $0xd8] sm:$0xf]
  %v951 = vsel %vm835, %v470, %v950
  %952 = vst [vmem:[%s832 + $0xd8] sm:$0xf] %v951
  %953 = vst.msk [vmem:[%s832 + $0xdc] sm:$0xf] %vm15, %v479
  %v954 = vld [vmem:[%s832 + $0xe0] sm:$0x1]
  %v955 = vsel %vm841, %v480, %v954
  %956 = vst [vmem:[%s832 + $0xe0] sm:$0x1] %v955
  %v957 = vld [vmem:[%s832 + $0xe4] sm:$0xf]
  %v958 = vsel %vm835, %v487, %v957
  %959 = vst [vmem:[%s832 + $0xe4] sm:$0xf] %v958
  %960 = vst.msk [vmem:[%s832 + $0xe8] sm:$0xf] %vm15, %v496
  %v961 = vld [vmem:[%s832 + $0xec] sm:$0x1]
  %v962 = vsel %vm841, %v497, %v961
  %963 = vst [vmem:[%s832 + $0xec] sm:$0x1] %v962
  %v964 = vld [vmem:[%s832 + $0xf0] sm:$0xf]
  %v965 = vsel %vm835, %v504, %v964
  %966 = vst [vmem:[%s832 + $0xf0] sm:$0xf] %v965
  %967 = vst.msk [vmem:[%s832 + $0xf4] sm:$0xf] %vm15, %v513
  %v968 = vld [vmem:[%s832 + $0xf8] sm:$0x1]
  %v969 = vsel %vm841, %v514, %v968
  %970 = vst [vmem:[%s832 + $0xf8] sm:$0x1] %v969
  %v971 = vld [vmem:[%s832 + $0xfc] sm:$0xf]
  %v972 = vsel %vm835, %v521, %v971
  %973 = vst [vmem:[%s832 + $0xfc] sm:$0xf] %v972
  %974 = vst.msk [vmem:[%s832 + $0x100] sm:$0xf] %vm15, %v530
  %v975 = vld [vmem:[%s832 + $0x104] sm:$0x1]
  %v976 = vsel %vm841, %v531, %v975
  %977 = vst [vmem:[%s832 + $0x104] sm:$0x1] %v976
  %v978 = vld [vmem:[%s832 + $0x108] sm:$0xf]
  %v979 = vsel %vm835, %v538, %v978
  %980 = vst [vmem:[%s832 + $0x108] sm:$0xf] %v979
  %981 = vst.msk [vmem:[%s832 + $0x10c] sm:$0xf] %vm15, %v547
  %v982 = vld [vmem:[%s832 + $0x110] sm:$0x1]
  %v983 = vsel %vm841, %v548, %v982
  %984 = vst [vmem:[%s832 + $0x110] sm:$0x1] %v983
  %v985 = vld [vmem:[%s832 + $0x114] sm:$0xf]
  %v986 = vsel %vm835, %v555, %v985
  %987 = vst [vmem:[%s832 + $0x114] sm:$0xf] %v986
  %988 = vst.msk [vmem:[%s832 + $0x118] sm:$0xf] %vm15, %v564
  %v989 = vld [vmem:[%s832 + $0x11c] sm:$0x1]
  %v990 = vsel %vm841, %v565, %v989
  %991 = vst [vmem:[%s832 + $0x11c] sm:$0x1] %v990
  %v992 = vld [vmem:[%s832 + $0x120] sm:$0xf]
  %v993 = vsel %vm835, %v572, %v992
  %994 = vst [vmem:[%s832 + $0x120] sm:$0xf] %v993
  %995 = vst.msk [vmem:[%s832 + $0x124] sm:$0xf] %vm15, %v581
  %v996 = vld [vmem:[%s832 + $0x128] sm:$0x1]
  %v997 = vsel %vm841, %v582, %v996
  %998 = vst [vmem:[%s832 + $0x128] sm:$0x1] %v997
  %v999 = vld [vmem:[%s832 + $0x12c] sm:$0xf]
  %v1000 = vsel %vm835, %v589, %v999
  %1001 = vst [vmem:[%s832 + $0x12c] sm:$0xf] %v1000
  %1002 = vst.msk [vmem:[%s832 + $0x130] sm:$0xf] %vm15, %v598
  %v1003 = vld [vmem:[%s832 + $0x134] sm:$0x1]
  %v1004 = vsel %vm841, %v599, %v1003
  %1005 = vst [vmem:[%s832 + $0x134] sm:$0x1] %v1004
  %v1006 = vld [vmem:[%s832 + $0x138] sm:$0xf]
  %v1007 = vsel %vm835, %v606, %v1006
  %1008 = vst [vmem:[%s832 + $0x138] sm:$0xf] %v1007
  %1009 = vst.msk [vmem:[%s832 + $0x13c] sm:$0xf] %vm15, %v615
  %v1010 = vld [vmem:[%s832 + $0x140] sm:$0x1]
  %v1011 = vsel %vm841, %v616, %v1010
  %1012 = vst [vmem:[%s832 + $0x140] sm:$0x1] %v1011
  %v1013 = vld [vmem:[%s832 + $0x144] sm:$0xf]
  %v1014 = vsel %vm835, %v623, %v1013
  %1015 = vst [vmem:[%s832 + $0x144] sm:$0xf] %v1014
  %1016 = vst.msk [vmem:[%s832 + $0x148] sm:$0xf] %vm15, %v632
  %v1017 = vld [vmem:[%s832 + $0x14c] sm:$0x1]
  %v1018 = vsel %vm841, %v633, %v1017
  %1019 = vst [vmem:[%s832 + $0x14c] sm:$0x1] %v1018
  %v1020 = vld [vmem:[%s832 + $0x150] sm:$0xf]
  %v1021 = vsel %vm835, %v640, %v1020
  %1022 = vst [vmem:[%s832 + $0x150] sm:$0xf] %v1021
  %1023 = vst.msk [vmem:[%s832 + $0x154] sm:$0xf] %vm15, %v649
  %v1024 = vld [vmem:[%s832 + $0x158] sm:$0x1]
  %v1025 = vsel %vm841, %v650, %v1024
  %1026 = vst [vmem:[%s832 + $0x158] sm:$0x1] %v1025
  %v1027 = vld [vmem:[%s832 + $0x15c] sm:$0xf]
  %v1028 = vsel %vm835, %v657, %v1027
  %1029 = vst [vmem:[%s832 + $0x15c] sm:$0xf] %v1028
  %1030 = vst.msk [vmem:[%s832 + $0x160] sm:$0xf] %vm15, %v666
  %v1031 = vld [vmem:[%s832 + $0x164] sm:$0x1]
  %v1032 = vsel %vm841, %v667, %v1031
  %1033 = vst [vmem:[%s832 + $0x164] sm:$0x1] %v1032
  %v1034 = vld [vmem:[%s832 + $0x168] sm:$0xf]
  %v1035 = vsel %vm835, %v674, %v1034
  %1036 = vst [vmem:[%s832 + $0x168] sm:$0xf] %v1035
  %1037 = vst.msk [vmem:[%s832 + $0x16c] sm:$0xf] %vm15, %v683
  %v1038 = vld [vmem:[%s832 + $0x170] sm:$0x1]
  %v1039 = vsel %vm841, %v684, %v1038
  %1040 = vst [vmem:[%s832 + $0x170] sm:$0x1] %v1039
  %v1041 = vld [vmem:[%s832 + $0x174] sm:$0xf]
  %v1042 = vsel %vm835, %v691, %v1041
  %1043 = vst [vmem:[%s832 + $0x174] sm:$0xf] %v1042
  %1044 = vst.msk [vmem:[%s832 + $0x178] sm:$0xf] %vm15, %v700
  %v1045 = vld [vmem:[%s832 + $0x17c] sm:$0x1]
  %v1046 = vsel %vm841, %v701, %v1045
  %1047 = vst [vmem:[%s832 + $0x17c] sm:$0x1] %v1046
  %v1048 = vld [vmem:[%s832 + $0x180] sm:$0xf]
  %v1049 = vsel %vm835, %v708, %v1048
  %1050 = vst [vmem:[%s832 + $0x180] sm:$0xf] %v1049
  %1051 = vst.msk [vmem:[%s832 + $0x184] sm:$0xf] %vm15, %v717
  %v1052 = vld [vmem:[%s832 + $0x188] sm:$0x1]
  %v1053 = vsel %vm841, %v718, %v1052
  %1054 = vst [vmem:[%s832 + $0x188] sm:$0x1] %v1053
  %v1055 = vld [vmem:[%s832 + $0x18c] sm:$0xf]
  %v1056 = vsel %vm835, %v725, %v1055
  %1057 = vst [vmem:[%s832 + $0x18c] sm:$0xf] %v1056
  %1058 = vst.msk [vmem:[%s832 + $0x190] sm:$0xf] %vm15, %v734
  %v1059 = vld [vmem:[%s832 + $0x194] sm:$0x1]
  %v1060 = vsel %vm841, %v735, %v1059
  %1061 = vst [vmem:[%s832 + $0x194] sm:$0x1] %v1060
  %v1062 = vld [vmem:[#allocation2] sm:$0xf]
  %v1063 = vld [vmem:[#allocation2 + $0x4] sm:$0xf]
  %v1064 = vld [vmem:[#allocation2 + $0x8] sm:$0x1]
  %v1065 = vld [vmem:[#allocation2 + $0xc] sm:$0xf]
  %v1066 = vld [vmem:[#allocation2 + $0x10] sm:$0xf]
  %v1067 = vld [vmem:[#allocation2 + $0x14] sm:$0x1]
  %v1068 = vld [vmem:[#allocation2 + $0x18] sm:$0xf]
  %v1069 = vld [vmem:[#allocation2 + $0x1c] sm:$0xf]
  %v1070 = vld [vmem:[#allocation2 + $0x20] sm:$0x1]
  %v1071 = vld [vmem:[#allocation2 + $0x24] sm:$0xf]
  %v1072 = vld [vmem:[#allocation2 + $0x28] sm:$0xf]
  %v1073 = vld [vmem:[#allocation2 + $0x2c] sm:$0x1]
  %v1074 = vld [vmem:[#allocation2 + $0x30] sm:$0xf]
  %v1075 = vld [vmem:[#allocation2 + $0x34] sm:$0xf]
  %v1076 = vld [vmem:[#allocation2 + $0x38] sm:$0x1]
  %v1077 = vld [vmem:[#allocation2 + $0x3c] sm:$0xf]
  %v1078 = vld [vmem:[#allocation2 + $0x40] sm:$0xf]
  %v1079 = vld [vmem:[#allocation2 + $0x44] sm:$0x1]
  %v1080 = vld [vmem:[#allocation2 + $0x48] sm:$0xf]
  %v1081 = vld [vmem:[#allocation2 + $0x4c] sm:$0xf]
  %v1082 = vld [vmem:[#allocation2 + $0x50] sm:$0x1]
  %v1083 = vld [vmem:[#allocation2 + $0x54] sm:$0xf]
  %v1084 = vld [vmem:[#allocation2 + $0x58] sm:$0xf]
  %v1085 = vld [vmem:[#allocation2 + $0x5c] sm:$0x1]
  %v1086 = vld [vmem:[#allocation2 + $0x60] sm:$0xf]
  %v1087 = vld [vmem:[#allocation2 + $0x64] sm:$0xf]
  %v1088 = vld [vmem:[#allocation2 + $0x68] sm:$0x1]
  %v1089 = vld [vmem:[#allocation2 + $0x6c] sm:$0xf]
  %v1090 = vld [vmem:[#allocation2 + $0x70] sm:$0xf]
  %v1091 = vld [vmem:[#allocation2 + $0x74] sm:$0x1]
  %v1092 = vld [vmem:[#allocation2 + $0x78] sm:$0xf]
  %v1093 = vld [vmem:[#allocation2 + $0x7c] sm:$0xf]
  %v1094 = vld [vmem:[#allocation2 + $0x80] sm:$0x1]
  %v1095 = vld [vmem:[#allocation2 + $0x84] sm:$0xf]
  %v1096 = vld [vmem:[#allocation2 + $0x88] sm:$0xf]
  %v1097 = vld [vmem:[#allocation2 + $0x8c] sm:$0x1]
  %v1098 = vld [vmem:[#allocation2 + $0x90] sm:$0xf]
  %v1099 = vld [vmem:[#allocation2 + $0x94] sm:$0xf]
  %v1100 = vld [vmem:[#allocation2 + $0x98] sm:$0x1]
  %v1101 = vld [vmem:[#allocation2 + $0x9c] sm:$0xf]
  %v1102 = vld [vmem:[#allocation2 + $0xa0] sm:$0xf]
  %v1103 = vld [vmem:[#allocation2 + $0xa4] sm:$0x1]
  %v1104 = vld [vmem:[#allocation2 + $0xa8] sm:$0xf]
  %v1105 = vld [vmem:[#allocation2 + $0xac] sm:$0xf]
  %v1106 = vld [vmem:[#allocation2 + $0xb0] sm:$0x1]
  %v1107 = vld [vmem:[#allocation2 + $0xb4] sm:$0xf]
  %v1108 = vld [vmem:[#allocation2 + $0xb8] sm:$0xf]
  %v1109 = vld [vmem:[#allocation2 + $0xbc] sm:$0x1]
  %v1110 = vld [vmem:[#allocation2 + $0xd8] sm:$0xf]
  %v1111 = vld [vmem:[#allocation2 + $0xdc] sm:$0xf]
  %v1112 = vld [vmem:[#allocation2 + $0xe0] sm:$0x1]
  %v1113 = vld [vmem:[#allocation2 + $0xe4] sm:$0xf]
  %v1114 = vld [vmem:[#allocation2 + $0xe8] sm:$0xf]
  %v1115 = vld [vmem:[#allocation2 + $0xec] sm:$0x1]
  %v1116 = vld [vmem:[#allocation2 + $0xf0] sm:$0xf]
  %v1117 = vld [vmem:[#allocation2 + $0xf4] sm:$0xf]
  %v1118 = vld [vmem:[#allocation2 + $0xf8] sm:$0x1]
  %v1119 = vld [vmem:[#allocation2 + $0xfc] sm:$0xf]
  %v1120 = vld [vmem:[#allocation2 + $0x100] sm:$0xf]
  %v1121 = vld [vmem:[#allocation2 + $0x104] sm:$0x1]
  %v1122 = vld [vmem:[#allocation2 + $0x108] sm:$0xf]
  %v1123 = vld [vmem:[#allocation2 + $0x10c] sm:$0xf]
  %v1124 = vld [vmem:[#allocation2 + $0x110] sm:$0x1]
  %v1125 = vld [vmem:[#allocation2 + $0x114] sm:$0xf]
  %v1126 = vld [vmem:[#allocation2 + $0x118] sm:$0xf]
  %v1127 = vld [vmem:[#allocation2 + $0x11c] sm:$0x1]
  %v1128 = vld [vmem:[#allocation2 + $0x120] sm:$0xf]
  %v1129 = vld [vmem:[#allocation2 + $0x124] sm:$0xf]
  %v1130 = vld [vmem:[#allocation2 + $0x128] sm:$0x1]
  %v1131 = vld [vmem:[#allocation2 + $0x12c] sm:$0xf]
  %v1132 = vld [vmem:[#allocation2 + $0x130] sm:$0xf]
  %v1133 = vld [vmem:[#allocation2 + $0x134] sm:$0x1]
  %v1134 = vld [vmem:[#allocation2 + $0x138] sm:$0xf]
  %v1135 = vld [vmem:[#allocation2 + $0x13c] sm:$0xf]
  %v1136 = vld [vmem:[#allocation2 + $0x140] sm:$0x1]
  %v1137 = vld [vmem:[#allocation2 + $0x144] sm:$0xf]
  %v1138 = vld [vmem:[#allocation2 + $0x148] sm:$0xf]
  %v1139 = vld [vmem:[#allocation2 + $0x14c] sm:$0x1]
  %v1140 = vld [vmem:[#allocation2 + $0x150] sm:$0xf]
  %v1141 = vld [vmem:[#allocation2 + $0x154] sm:$0xf]
  %v1142 = vld [vmem:[#allocation2 + $0x158] sm:$0x1]
  %v1143 = vld [vmem:[#allocation2 + $0x15c] sm:$0xf]
  %v1144 = vld [vmem:[#allocation2 + $0x160] sm:$0xf]
  %v1145 = vld [vmem:[#allocation2 + $0x164] sm:$0x1]
  %v1146 = vld [vmem:[#allocation2 + $0x168] sm:$0xf]
  %v1147 = vld [vmem:[#allocation2 + $0x16c] sm:$0xf]
  %v1148 = vld [vmem:[#allocation2 + $0x170] sm:$0x1]
  %v1149 = vld [vmem:[#allocation2 + $0x174] sm:$0xf]
  %v1150 = vld [vmem:[#allocation2 + $0x178] sm:$0xf]
  %v1151 = vld [vmem:[#allocation2 + $0x17c] sm:$0x1]
  %v1152 = vld [vmem:[#allocation2 + $0x180] sm:$0xf]
  %v1153 = vld [vmem:[#allocation2 + $0x184] sm:$0xf]
  %v1154 = vld [vmem:[#allocation2 + $0x188] sm:$0x1]
  %v1155 = vld [vmem:[#allocation2 + $0x18c] sm:$0xf]
  %v1156 = vld [vmem:[#allocation2 + $0x190] sm:$0xf]
  %v1157 = vld [vmem:[#allocation2 + $0x194] sm:$0x1]
  %v1222 = vunpack.c.l.b16 %v1062
  %v1223 = vunpack.c.l.b16 %v1063
  %v1224 = vunpack.c.l.b16 %v1065
  %v1225 = vunpack.c.l.b16 %v1066
  %v1226 = vunpack.c.l.b16 %v1068
  %v1227 = vunpack.c.l.b16 %v1069
  %v1228 = vunpack.c.l.b16 %v1071
  %v1229 = vunpack.c.l.b16 %v1072
  %v1230 = vunpack.c.l.b16 %v1074
  %v1231 = vunpack.c.l.b16 %v1075
  %v1232 = vunpack.c.l.b16 %v1077
  %v1233 = vunpack.c.l.b16 %v1078
  %v1234 = vunpack.c.l.b16 %v1080
  %v1235 = vunpack.c.l.b16 %v1081
  %v1236 = vunpack.c.l.b16 %v1083
  %v1237 = vunpack.c.l.b16 %v1084
  %v1238 = vunpack.c.l.b16 %v1086
  %v1239 = vunpack.c.l.b16 %v1087
  %v1240 = vunpack.c.l.b16 %v1089
  %v1241 = vunpack.c.l.b16 %v1090
  %v1242 = vunpack.c.l.b16 %v1092
  %v1243 = vunpack.c.l.b16 %v1093
  %v1244 = vunpack.c.l.b16 %v1095
  %v1245 = vunpack.c.l.b16 %v1096
  %v1246 = vunpack.c.l.b16 %v1098
  %v1247 = vunpack.c.l.b16 %v1099
  %v1248 = vunpack.c.l.b16 %v1101
  %v1249 = vunpack.c.l.b16 %v1102
  %v1250 = vunpack.c.l.b16 %v1104
  %v1251 = vunpack.c.l.b16 %v1105
  %v1252 = vunpack.c.l.b16 %v1107
  %v1253 = vunpack.c.l.b16 %v1108
  %v1254 = vunpack.c.l.b16 %v1110
  %v1255 = vunpack.c.l.b16 %v1111
  %v1256 = vunpack.c.l.b16 %v1113
  %v1257 = vunpack.c.l.b16 %v1114
  %v1258 = vunpack.c.l.b16 %v1116
  %v1259 = vunpack.c.l.b16 %v1117
  %v1260 = vunpack.c.l.b16 %v1119
  %v1261 = vunpack.c.l.b16 %v1120
  %v1262 = vunpack.c.l.b16 %v1122
  %v1263 = vunpack.c.l.b16 %v1123
  %v1264 = vunpack.c.l.b16 %v1125
  %v1265 = vunpack.c.l.b16 %v1126
  %v1266 = vunpack.c.l.b16 %v1128
  %v1267 = vunpack.c.l.b16 %v1129
  %v1268 = vunpack.c.l.b16 %v1131
  %v1269 = vunpack.c.l.b16 %v1132
  %v1270 = vunpack.c.l.b16 %v1134
  %v1271 = vunpack.c.l.b16 %v1135
  %v1272 = vunpack.c.l.b16 %v1137
  %v1273 = vunpack.c.l.b16 %v1138
  %v1274 = vunpack.c.l.b16 %v1140
  %v1275 = vunpack.c.l.b16 %v1141
  %v1276 = vunpack.c.l.b16 %v1143
  %v1277 = vunpack.c.l.b16 %v1144
  %v1278 = vunpack.c.l.b16 %v1146
  %v1279 = vunpack.c.l.b16 %v1147
  %v1280 = vunpack.c.l.b16 %v1149
  %v1281 = vunpack.c.l.b16 %v1150
  %v1282 = vunpack.c.l.b16 %v1152
  %v1283 = vunpack.c.l.b16 %v1153
  %v1284 = vunpack.c.l.b16 %v1155
  %v1285 = vunpack.c.l.b16 %v1156
  %v1286 = vpack.c.b16 %v1223, %v1222
  %v1287 = vpack.c.b16 %v1225, %v1224
  %v1288 = vpack.c.b16 %v1227, %v1226
  %v1289 = vpack.c.b16 %v1229, %v1228
  %v1290 = vpack.c.b16 %v1231, %v1230
  %v1291 = vpack.c.b16 %v1233, %v1232
  %v1292 = vpack.c.b16 %v1235, %v1234
  %v1293 = vpack.c.b16 %v1237, %v1236
  %v1294 = vpack.c.b16 %v1239, %v1238
  %v1295 = vpack.c.b16 %v1241, %v1240
  %v1296 = vpack.c.b16 %v1243, %v1242
  %v1297 = vpack.c.b16 %v1245, %v1244
  %v1298 = vpack.c.b16 %v1247, %v1246
  %v1299 = vpack.c.b16 %v1249, %v1248
  %v1300 = vpack.c.b16 %v1251, %v1250
  %v1301 = vpack.c.b16 %v1253, %v1252
  %v1302 = vpack.c.b16 %v1255, %v1254
  %v1303 = vpack.c.b16 %v1257, %v1256
  %v1304 = vpack.c.b16 %v1259, %v1258
  %v1305 = vpack.c.b16 %v1261, %v1260
  %v1306 = vpack.c.b16 %v1263, %v1262
  %v1307 = vpack.c.b16 %v1265, %v1264
  %v1308 = vpack.c.b16 %v1267, %v1266
  %v1309 = vpack.c.b16 %v1269, %v1268
  %v1310 = vpack.c.b16 %v1271, %v1270
  %v1311 = vpack.c.b16 %v1273, %v1272
  %v1312 = vpack.c.b16 %v1275, %v1274
  %v1313 = vpack.c.b16 %v1277, %v1276
  %v1314 = vpack.c.b16 %v1279, %v1278
  %v1315 = vpack.c.b16 %v1281, %v1280
  %v1316 = vpack.c.b16 %v1283, %v1282
  %v1317 = vpack.c.b16 %v1285, %v1284
  %v1350 = vunpack.c.l.b16 %v1064
  %v1351 = vunpack.c.l.b16 %v1067
  %v1352 = vunpack.c.l.b16 %v1070
  %v1353 = vunpack.c.l.b16 %v1073
  %v1354 = vunpack.c.l.b16 %v1076
  %v1355 = vunpack.c.l.b16 %v1079
  %v1356 = vunpack.c.l.b16 %v1082
  %v1357 = vunpack.c.l.b16 %v1085
  %v1358 = vunpack.c.l.b16 %v1088
  %v1359 = vunpack.c.l.b16 %v1091
  %v1360 = vunpack.c.l.b16 %v1094
  %v1361 = vunpack.c.l.b16 %v1097
  %v1362 = vunpack.c.l.b16 %v1100
  %v1363 = vunpack.c.l.b16 %v1103
  %v1364 = vunpack.c.l.b16 %v1106
  %v1365 = vunpack.c.l.b16 %v1109
  %v1366 = vunpack.c.l.b16 %v1112
  %v1367 = vunpack.c.l.b16 %v1115
  %v1368 = vunpack.c.l.b16 %v1118
  %v1369 = vunpack.c.l.b16 %v1121
  %v1370 = vunpack.c.l.b16 %v1124
  %v1371 = vunpack.c.l.b16 %v1127
  %v1372 = vunpack.c.l.b16 %v1130
  %v1373 = vunpack.c.l.b16 %v1133
  %v1374 = vunpack.c.l.b16 %v1136
  %v1375 = vunpack.c.l.b16 %v1139
  %v1376 = vunpack.c.l.b16 %v1142
  %v1377 = vunpack.c.l.b16 %v1145
  %v1378 = vunpack.c.l.b16 %v1148
  %v1379 = vunpack.c.l.b16 %v1151
  %v1380 = vunpack.c.l.b16 %v1154
  %v1381 = vunpack.c.l.b16 %v1157
  %v1382 = vpack.c.b16 %v1350, %v1350
  %v1383 = vpack.c.b16 %v1351, %v1351
  %v1384 = vpack.c.b16 %v1352, %v1352
  %v1385 = vpack.c.b16 %v1353, %v1353
  %v1386 = vpack.c.b16 %v1354, %v1354
  %v1387 = vpack.c.b16 %v1355, %v1355
  %v1388 = vpack.c.b16 %v1356, %v1356
  %v1389 = vpack.c.b16 %v1357, %v1357
  %v1390 = vpack.c.b16 %v1358, %v1358
  %v1391 = vpack.c.b16 %v1359, %v1359
  %v1392 = vpack.c.b16 %v1360, %v1360
  %v1393 = vpack.c.b16 %v1361, %v1361
  %v1394 = vpack.c.b16 %v1362, %v1362
  %v1395 = vpack.c.b16 %v1363, %v1363
  %v1396 = vpack.c.b16 %v1364, %v1364
  %v1397 = vpack.c.b16 %v1365, %v1365
  %v1398 = vpack.c.b16 %v1366, %v1366
  %v1399 = vpack.c.b16 %v1367, %v1367
  %v1400 = vpack.c.b16 %v1368, %v1368
  %v1401 = vpack.c.b16 %v1369, %v1369
  %v1402 = vpack.c.b16 %v1370, %v1370
  %v1403 = vpack.c.b16 %v1371, %v1371
  %v1404 = vpack.c.b16 %v1372, %v1372
  %v1405 = vpack.c.b16 %v1373, %v1373
  %v1406 = vpack.c.b16 %v1374, %v1374
  %v1407 = vpack.c.b16 %v1375, %v1375
  %v1408 = vpack.c.b16 %v1376, %v1376
  %v1409 = vpack.c.b16 %v1377, %v1377
  %v1410 = vpack.c.b16 %v1378, %v1378
  %v1411 = vpack.c.b16 %v1379, %v1379
  %v1412 = vpack.c.b16 %v1380, %v1380
  %v1413 = vpack.c.b16 %v1381, %v1381
  %vm1414 = vsmask.f32 7424
  %v1416 = vshrl.u32 %v1286, 16
  %v1418 = vshll.u32 %v1286, 16
  %v1420 = vrot.slane %v1418, 1
  %v1421 = vor.u32 %v1416, %v1420
  %v1423 = vshll.u32 %v1382, 16
  %v1425 = vrot.slane %v1423, 1
  %v1426 = vsel %vm1414, %v1421, %v1425
  %v1428 = vshrl.u32 %v1287, 16
  %v1430 = vshll.u32 %v1287, 16
  %v1432 = vrot.slane %v1430, 1
  %v1433 = vor.u32 %v1428, %v1432
  %v1435 = vshll.u32 %v1383, 16
  %v1437 = vrot.slane %v1435, 1
  %v1438 = vsel %vm1414, %v1433, %v1437
  %v1440 = vshrl.u32 %v1288, 16
  %v1442 = vshll.u32 %v1288, 16
  %v1444 = vrot.slane %v1442, 1
  %v1445 = vor.u32 %v1440, %v1444
  %v1447 = vshll.u32 %v1384, 16
  %v1449 = vrot.slane %v1447, 1
  %v1450 = vsel %vm1414, %v1445, %v1449
  %v1452 = vshrl.u32 %v1289, 16
  %v1454 = vshll.u32 %v1289, 16
  %v1456 = vrot.slane %v1454, 1
  %v1457 = vor.u32 %v1452, %v1456
  %v1459 = vshll.u32 %v1385, 16
  %v1461 = vrot.slane %v1459, 1
  %v1462 = vsel %vm1414, %v1457, %v1461
  %v1464 = vshrl.u32 %v1290, 16
  %v1466 = vshll.u32 %v1290, 16
  %v1468 = vrot.slane %v1466, 1
  %v1469 = vor.u32 %v1464, %v1468
  %v1471 = vshll.u32 %v1386, 16
  %v1473 = vrot.slane %v1471, 1
  %v1474 = vsel %vm1414, %v1469, %v1473
  %v1476 = vshrl.u32 %v1291, 16
  %v1478 = vshll.u32 %v1291, 16
  %v1480 = vrot.slane %v1478, 1
  %v1481 = vor.u32 %v1476, %v1480
  %v1483 = vshll.u32 %v1387, 16
  %v1485 = vrot.slane %v1483, 1
  %v1486 = vsel %vm1414, %v1481, %v1485
  %v1488 = vshrl.u32 %v1292, 16
  %v1490 = vshll.u32 %v1292, 16
  %v1492 = vrot.slane %v1490, 1
  %v1493 = vor.u32 %v1488, %v1492
  %v1495 = vshll.u32 %v1388, 16
  %v1497 = vrot.slane %v1495, 1
  %v1498 = vsel %vm1414, %v1493, %v1497
  %v1500 = vshrl.u32 %v1293, 16
  %v1502 = vshll.u32 %v1293, 16
  %v1504 = vrot.slane %v1502, 1
  %v1505 = vor.u32 %v1500, %v1504
  %v1507 = vshll.u32 %v1389, 16
  %v1509 = vrot.slane %v1507, 1
  %v1510 = vsel %vm1414, %v1505, %v1509
  %v1512 = vshrl.u32 %v1294, 16
  %v1514 = vshll.u32 %v1294, 16
  %v1516 = vrot.slane %v1514, 1
  %v1517 = vor.u32 %v1512, %v1516
  %v1519 = vshll.u32 %v1390, 16
  %v1521 = vrot.slane %v1519, 1
  %v1522 = vsel %vm1414, %v1517, %v1521
  %v1524 = vshrl.u32 %v1295, 16
  %v1526 = vshll.u32 %v1295, 16
  %v1528 = vrot.slane %v1526, 1
  %v1529 = vor.u32 %v1524, %v1528
  %v1531 = vshll.u32 %v1391, 16
  %v1533 = vrot.slane %v1531, 1
  %v1534 = vsel %vm1414, %v1529, %v1533
  %v1536 = vshrl.u32 %v1296, 16
  %v1538 = vshll.u32 %v1296, 16
  %v1540 = vrot.slane %v1538, 1
  %v1541 = vor.u32 %v1536, %v1540
  %v1543 = vshll.u32 %v1392, 16
  %v1545 = vrot.slane %v1543, 1
  %v1546 = vsel %vm1414, %v1541, %v1545
  %v1548 = vshrl.u32 %v1297, 16
  %v1550 = vshll.u32 %v1297, 16
  %v1552 = vrot.slane %v1550, 1
  %v1553 = vor.u32 %v1548, %v1552
  %v1555 = vshll.u32 %v1393, 16
  %v1557 = vrot.slane %v1555, 1
  %v1558 = vsel %vm1414, %v1553, %v1557
  %v1560 = vshrl.u32 %v1298, 16
  %v1562 = vshll.u32 %v1298, 16
  %v1564 = vrot.slane %v1562, 1
  %v1565 = vor.u32 %v1560, %v1564
  %v1567 = vshll.u32 %v1394, 16
  %v1569 = vrot.slane %v1567, 1
  %v1570 = vsel %vm1414, %v1565, %v1569
  %v1572 = vshrl.u32 %v1299, 16
  %v1574 = vshll.u32 %v1299, 16
  %v1576 = vrot.slane %v1574, 1
  %v1577 = vor.u32 %v1572, %v1576
  %v1579 = vshll.u32 %v1395, 16
  %v1581 = vrot.slane %v1579, 1
  %v1582 = vsel %vm1414, %v1577, %v1581
  %v1584 = vshrl.u32 %v1300, 16
  %v1586 = vshll.u32 %v1300, 16
  %v1588 = vrot.slane %v1586, 1
  %v1589 = vor.u32 %v1584, %v1588
  %v1591 = vshll.u32 %v1396, 16
  %v1593 = vrot.slane %v1591, 1
  %v1594 = vsel %vm1414, %v1589, %v1593
  %v1596 = vshrl.u32 %v1301, 16
  %v1598 = vshll.u32 %v1301, 16
  %v1600 = vrot.slane %v1598, 1
  %v1601 = vor.u32 %v1596, %v1600
  %v1603 = vshll.u32 %v1397, 16
  %v1605 = vrot.slane %v1603, 1
  %v1606 = vsel %vm1414, %v1601, %v1605
  %v1608 = vshrl.u32 %v1302, 16
  %v1610 = vshll.u32 %v1302, 16
  %v1612 = vrot.slane %v1610, 1
  %v1613 = vor.u32 %v1608, %v1612
  %v1615 = vshll.u32 %v1398, 16
  %v1617 = vrot.slane %v1615, 1
  %v1618 = vsel %vm1414, %v1613, %v1617
  %v1620 = vshrl.u32 %v1303, 16
  %v1622 = vshll.u32 %v1303, 16
  %v1624 = vrot.slane %v1622, 1
  %v1625 = vor.u32 %v1620, %v1624
  %v1627 = vshll.u32 %v1399, 16
  %v1629 = vrot.slane %v1627, 1
  %v1630 = vsel %vm1414, %v1625, %v1629
  %v1632 = vshrl.u32 %v1304, 16
  %v1634 = vshll.u32 %v1304, 16
  %v1636 = vrot.slane %v1634, 1
  %v1637 = vor.u32 %v1632, %v1636
  %v1639 = vshll.u32 %v1400, 16
  %v1641 = vrot.slane %v1639, 1
  %v1642 = vsel %vm1414, %v1637, %v1641
  %v1644 = vshrl.u32 %v1305, 16
  %v1646 = vshll.u32 %v1305, 16
  %v1648 = vrot.slane %v1646, 1
  %v1649 = vor.u32 %v1644, %v1648
  %v1651 = vshll.u32 %v1401, 16
  %v1653 = vrot.slane %v1651, 1
  %v1654 = vsel %vm1414, %v1649, %v1653
  %v1656 = vshrl.u32 %v1306, 16
  %v1658 = vshll.u32 %v1306, 16
  %v1660 = vrot.slane %v1658, 1
  %v1661 = vor.u32 %v1656, %v1660
  %v1663 = vshll.u32 %v1402, 16
  %v1665 = vrot.slane %v1663, 1
  %v1666 = vsel %vm1414, %v1661, %v1665
  %v1668 = vshrl.u32 %v1307, 16
  %v1670 = vshll.u32 %v1307, 16
  %v1672 = vrot.slane %v1670, 1
  %v1673 = vor.u32 %v1668, %v1672
  %v1675 = vshll.u32 %v1403, 16
  %v1677 = vrot.slane %v1675, 1
  %v1678 = vsel %vm1414, %v1673, %v1677
  %v1680 = vshrl.u32 %v1308, 16
  %v1682 = vshll.u32 %v1308, 16
  %v1684 = vrot.slane %v1682, 1
  %v1685 = vor.u32 %v1680, %v1684
  %v1687 = vshll.u32 %v1404, 16
  %v1689 = vrot.slane %v1687, 1
  %v1690 = vsel %vm1414, %v1685, %v1689
  %v1692 = vshrl.u32 %v1309, 16
  %v1694 = vshll.u32 %v1309, 16
  %v1696 = vrot.slane %v1694, 1
  %v1697 = vor.u32 %v1692, %v1696
  %v1699 = vshll.u32 %v1405, 16
  %v1701 = vrot.slane %v1699, 1
  %v1702 = vsel %vm1414, %v1697, %v1701
  %v1704 = vshrl.u32 %v1310, 16
  %v1706 = vshll.u32 %v1310, 16
  %v1708 = vrot.slane %v1706, 1
  %v1709 = vor.u32 %v1704, %v1708
  %v1711 = vshll.u32 %v1406, 16
  %v1713 = vrot.slane %v1711, 1
  %v1714 = vsel %vm1414, %v1709, %v1713
  %v1716 = vshrl.u32 %v1311, 16
  %v1718 = vshll.u32 %v1311, 16
  %v1720 = vrot.slane %v1718, 1
  %v1721 = vor.u32 %v1716, %v1720
  %v1723 = vshll.u32 %v1407, 16
  %v1725 = vrot.slane %v1723, 1
  %v1726 = vsel %vm1414, %v1721, %v1725
  %v1728 = vshrl.u32 %v1312, 16
  %v1730 = vshll.u32 %v1312, 16
  %v1732 = vrot.slane %v1730, 1
  %v1733 = vor.u32 %v1728, %v1732
  %v1735 = vshll.u32 %v1408, 16
  %v1737 = vrot.slane %v1735, 1
  %v1738 = vsel %vm1414, %v1733, %v1737
  %v1740 = vshrl.u32 %v1313, 16
  %v1742 = vshll.u32 %v1313, 16
  %v1744 = vrot.slane %v1742, 1
  %v1745 = vor.u32 %v1740, %v1744
  %v1747 = vshll.u32 %v1409, 16
  %v1749 = vrot.slane %v1747, 1
  %v1750 = vsel %vm1414, %v1745, %v1749
  %v1752 = vshrl.u32 %v1314, 16
  %v1754 = vshll.u32 %v1314, 16
  %v1756 = vrot.slane %v1754, 1
  %v1757 = vor.u32 %v1752, %v1756
  %v1759 = vshll.u32 %v1410, 16
  %v1761 = vrot.slane %v1759, 1
  %v1762 = vsel %vm1414, %v1757, %v1761
  %v1764 = vshrl.u32 %v1315, 16
  %v1766 = vshll.u32 %v1315, 16
  %v1768 = vrot.slane %v1766, 1
  %v1769 = vor.u32 %v1764, %v1768
  %v1771 = vshll.u32 %v1411, 16
  %v1773 = vrot.slane %v1771, 1
  %v1774 = vsel %vm1414, %v1769, %v1773
  %v1776 = vshrl.u32 %v1316, 16
  %v1778 = vshll.u32 %v1316, 16
  %v1780 = vrot.slane %v1778, 1
  %v1781 = vor.u32 %v1776, %v1780
  %v1783 = vshll.u32 %v1412, 16
  %v1785 = vrot.slane %v1783, 1
  %v1786 = vsel %vm1414, %v1781, %v1785
  %v1788 = vshrl.u32 %v1317, 16
  %v1790 = vshll.u32 %v1317, 16
  %v1792 = vrot.slane %v1790, 1
  %v1793 = vor.u32 %v1788, %v1792
  %v1795 = vshll.u32 %v1413, 16
  %v1797 = vrot.slane %v1795, 1
  %v1798 = vsel %vm1414, %v1793, %v1797
  %1799 = vrot.lane.b32.xlu0 %v1426, 16
  %v1800 = vpop.permute.xlu0 %1799
  %1801 = vrot.lane.b32.xlu0 %v1438, 16
  %v1802 = vpop.permute.xlu0 %1801
  %1803 = vrot.lane.b32.xlu0 %v1450, 16
  %v1804 = vpop.permute.xlu0 %1803
  %1805 = vrot.lane.b32.xlu0 %v1462, 16
  %v1806 = vpop.permute.xlu0 %1805
  %1807 = vrot.lane.b32.xlu0 %v1474, 16
  %v1808 = vpop.permute.xlu0 %1807
  %1809 = vrot.lane.b32.xlu0 %v1486, 16
  %v1810 = vpop.permute.xlu0 %1809
  %1811 = vrot.lane.b32.xlu0 %v1498, 16
  %v1812 = vpop.permute.xlu0 %1811
  %1813 = vrot.lane.b32.xlu0 %v1510, 16
  %v1814 = vpop.permute.xlu0 %1813
  %1815 = vrot.lane.b32.xlu0 %v1522, 16
  %v1816 = vpop.permute.xlu0 %1815
  %1817 = vrot.lane.b32.xlu0 %v1534, 16
  %v1818 = vpop.permute.xlu0 %1817
  %1819 = vrot.lane.b32.xlu0 %v1546, 16
  %v1820 = vpop.permute.xlu0 %1819
  %1821 = vrot.lane.b32.xlu0 %v1558, 16
  %v1822 = vpop.permute.xlu0 %1821
  %1823 = vrot.lane.b32.xlu0 %v1570, 16
  %v1824 = vpop.permute.xlu0 %1823
  %1825 = vrot.lane.b32.xlu0 %v1582, 16
  %v1826 = vpop.permute.xlu0 %1825
  %1827 = vrot.lane.b32.xlu0 %v1594, 16
  %v1828 = vpop.permute.xlu0 %1827
  %1829 = vrot.lane.b32.xlu0 %v1606, 16
  %v1830 = vpop.permute.xlu0 %1829
  %1831 = vrot.lane.b32.xlu0 %v1618, 16
  %v1832 = vpop.permute.xlu0 %1831
  %1833 = vrot.lane.b32.xlu0 %v1630, 16
  %v1834 = vpop.permute.xlu0 %1833
  %1835 = vrot.lane.b32.xlu0 %v1642, 16
  %v1836 = vpop.permute.xlu0 %1835
  %1837 = vrot.lane.b32.xlu0 %v1654, 16
  %v1838 = vpop.permute.xlu0 %1837
  %1839 = vrot.lane.b32.xlu0 %v1666, 16
  %v1840 = vpop.permute.xlu0 %1839
  %1841 = vrot.lane.b32.xlu0 %v1678, 16
  %v1842 = vpop.permute.xlu0 %1841
  %1843 = vrot.lane.b32.xlu0 %v1690, 16
  %v1844 = vpop.permute.xlu0 %1843
  %1845 = vrot.lane.b32.xlu0 %v1702, 16
  %v1846 = vpop.permute.xlu0 %1845
  %1847 = vrot.lane.b32.xlu0 %v1714, 16
  %v1848 = vpop.permute.xlu0 %1847
  %1849 = vrot.lane.b32.xlu0 %v1726, 16
  %v1850 = vpop.permute.xlu0 %1849
  %1851 = vrot.lane.b32.xlu0 %v1738, 16
  %v1852 = vpop.permute.xlu0 %1851
  %1853 = vrot.lane.b32.xlu0 %v1750, 16
  %v1854 = vpop.permute.xlu0 %1853
  %1855 = vrot.lane.b32.xlu0 %v1762, 16
  %v1856 = vpop.permute.xlu0 %1855
  %1857 = vrot.lane.b32.xlu0 %v1774, 16
  %v1858 = vpop.permute.xlu0 %1857
  %1859 = vrot.lane.b32.xlu0 %v1786, 16
  %v1860 = vpop.permute.xlu0 %1859
  %1861 = vrot.lane.b32.xlu0 %v1798, 16
  %v1862 = vpop.permute.xlu0 %1861
  %vm1863 = vcmask 1046528
  %v1864 = vrot.slane %v1286, 1
  %v1865 = vrot.slane %v1382, 1
  %v1866 = vsel %vm1863, %v1864, %v1865
  %v1867 = vrot.slane %v1287, 1
  %v1868 = vrot.slane %v1383, 1
  %v1869 = vsel %vm1863, %v1867, %v1868
  %v1870 = vrot.slane %v1288, 1
  %v1871 = vrot.slane %v1384, 1
  %v1872 = vsel %vm1863, %v1870, %v1871
  %v1873 = vrot.slane %v1289, 1
  %v1874 = vrot.slane %v1385, 1
  %v1875 = vsel %vm1863, %v1873, %v1874
  %v1876 = vrot.slane %v1290, 1
  %v1877 = vrot.slane %v1386, 1
  %v1878 = vsel %vm1863, %v1876, %v1877
  %v1879 = vrot.slane %v1291, 1
  %v1880 = vrot.slane %v1387, 1
  %v1881 = vsel %vm1863, %v1879, %v1880
  %v1882 = vrot.slane %v1292, 1
  %v1883 = vrot.slane %v1388, 1
  %v1884 = vsel %vm1863, %v1882, %v1883
  %v1885 = vrot.slane %v1293, 1
  %v1886 = vrot.slane %v1389, 1
  %v1887 = vsel %vm1863, %v1885, %v1886
  %v1888 = vrot.slane %v1294, 1
  %v1889 = vrot.slane %v1390, 1
  %v1890 = vsel %vm1863, %v1888, %v1889
  %v1891 = vrot.slane %v1295, 1
  %v1892 = vrot.slane %v1391, 1
  %v1893 = vsel %vm1863, %v1891, %v1892
  %v1894 = vrot.slane %v1296, 1
  %v1895 = vrot.slane %v1392, 1
  %v1896 = vsel %vm1863, %v1894, %v1895
  %v1897 = vrot.slane %v1297, 1
  %v1898 = vrot.slane %v1393, 1
  %v1899 = vsel %vm1863, %v1897, %v1898
  %v1900 = vrot.slane %v1298, 1
  %v1901 = vrot.slane %v1394, 1
  %v1902 = vsel %vm1863, %v1900, %v1901
  %v1903 = vrot.slane %v1299, 1
  %v1904 = vrot.slane %v1395, 1
  %v1905 = vsel %vm1863, %v1903, %v1904
  %v1906 = vrot.slane %v1300, 1
  %v1907 = vrot.slane %v1396, 1
  %v1908 = vsel %vm1863, %v1906, %v1907
  %v1909 = vrot.slane %v1301, 1
  %v1910 = vrot.slane %v1397, 1
  %v1911 = vsel %vm1863, %v1909, %v1910
  %v1912 = vrot.slane %v1302, 1
  %v1913 = vrot.slane %v1398, 1
  %v1914 = vsel %vm1863, %v1912, %v1913
  %v1915 = vrot.slane %v1303, 1
  %v1916 = vrot.slane %v1399, 1
  %v1917 = vsel %vm1863, %v1915, %v1916
  %v1918 = vrot.slane %v1304, 1
  %v1919 = vrot.slane %v1400, 1
  %v1920 = vsel %vm1863, %v1918, %v1919
  %v1921 = vrot.slane %v1305, 1
  %v1922 = vrot.slane %v1401, 1
  %v1923 = vsel %vm1863, %v1921, %v1922
  %v1924 = vrot.slane %v1306, 1
  %v1925 = vrot.slane %v1402, 1
  %v1926 = vsel %vm1863, %v1924, %v1925
  %v1927 = vrot.slane %v1307, 1
  %v1928 = vrot.slane %v1403, 1
  %v1929 = vsel %vm1863, %v1927, %v1928
  %v1930 = vrot.slane %v1308, 1
  %v1931 = vrot.slane %v1404, 1
  %v1932 = vsel %vm1863, %v1930, %v1931
  %v1933 = vrot.slane %v1309, 1
  %v1934 = vrot.slane %v1405, 1
  %v1935 = vsel %vm1863, %v1933, %v1934
  %v1936 = vrot.slane %v1310, 1
  %v1937 = vrot.slane %v1406, 1
  %v1938 = vsel %vm1863, %v1936, %v1937
  %v1939 = vrot.slane %v1311, 1
  %v1940 = vrot.slane %v1407, 1
  %v1941 = vsel %vm1863, %v1939, %v1940
  %v1942 = vrot.slane %v1312, 1
  %v1943 = vrot.slane %v1408, 1
  %v1944 = vsel %vm1863, %v1942, %v1943
  %v1945 = vrot.slane %v1313, 1
  %v1946 = vrot.slane %v1409, 1
  %v1947 = vsel %vm1863, %v1945, %v1946
  %v1948 = vrot.slane %v1314, 1
  %v1949 = vrot.slane %v1410, 1
  %v1950 = vsel %vm1863, %v1948, %v1949
  %v1951 = vrot.slane %v1315, 1
  %v1952 = vrot.slane %v1411, 1
  %v1953 = vsel %vm1863, %v1951, %v1952
  %v1954 = vrot.slane %v1316, 1
  %v1955 = vrot.slane %v1412, 1
  %v1956 = vsel %vm1863, %v1954, %v1955
  %v1957 = vrot.slane %v1317, 1
  %v1958 = vrot.slane %v1413, 1
  %v1959 = vsel %vm1863, %v1957, %v1958
  %1960 = vrot.lane.b32.xlu0 %v1866, 32
  %v1961 = vpop.permute.xlu0 %1960
  %1962 = vrot.lane.b32.xlu0 %v1869, 32
  %v1963 = vpop.permute.xlu0 %1962
  %1964 = vrot.lane.b32.xlu0 %v1872, 32
  %v1965 = vpop.permute.xlu0 %1964
  %1966 = vrot.lane.b32.xlu0 %v1875, 32
  %v1967 = vpop.permute.xlu0 %1966
  %1968 = vrot.lane.b32.xlu0 %v1878, 32
  %v1969 = vpop.permute.xlu0 %1968
  %1970 = vrot.lane.b32.xlu0 %v1881, 32
  %v1971 = vpop.permute.xlu0 %1970
  %1972 = vrot.lane.b32.xlu0 %v1884, 32
  %v1973 = vpop.permute.xlu0 %1972
  %1974 = vrot.lane.b32.xlu0 %v1887, 32
  %v1975 = vpop.permute.xlu0 %1974
  %1976 = vrot.lane.b32.xlu0 %v1890, 32
  %v1977 = vpop.permute.xlu0 %1976
  %1978 = vrot.lane.b32.xlu0 %v1893, 32
  %v1979 = vpop.permute.xlu0 %1978
  %1980 = vrot.lane.b32.xlu0 %v1896, 32
  %v1981 = vpop.permute.xlu0 %1980
  %1982 = vrot.lane.b32.xlu0 %v1899, 32
  %v1983 = vpop.permute.xlu0 %1982
  %1984 = vrot.lane.b32.xlu0 %v1902, 32
  %v1985 = vpop.permute.xlu0 %1984
  %1986 = vrot.lane.b32.xlu0 %v1905, 32
  %v1987 = vpop.permute.xlu0 %1986
  %1988 = vrot.lane.b32.xlu0 %v1908, 32
  %v1989 = vpop.permute.xlu0 %1988
  %1990 = vrot.lane.b32.xlu0 %v1911, 32
  %v1991 = vpop.permute.xlu0 %1990
  %1992 = vrot.lane.b32.xlu0 %v1914, 32
  %v1993 = vpop.permute.xlu0 %1992
  %1994 = vrot.lane.b32.xlu0 %v1917, 32
  %v1995 = vpop.permute.xlu0 %1994
  %1996 = vrot.lane.b32.xlu0 %v1920, 32
  %v1997 = vpop.permute.xlu0 %1996
  %1998 = vrot.lane.b32.xlu0 %v1923, 32
  %v1999 = vpop.permute.xlu0 %1998
  %2000 = vrot.lane.b32.xlu0 %v1926, 32
  %v2001 = vpop.permute.xlu0 %2000
  %2002 = vrot.lane.b32.xlu0 %v1929, 32
  %v2003 = vpop.permute.xlu0 %2002
  %2004 = vrot.lane.b32.xlu0 %v1932, 32
  %v2005 = vpop.permute.xlu0 %2004
  %2006 = vrot.lane.b32.xlu0 %v1935, 32
  %v2007 = vpop.permute.xlu0 %2006
  %2008 = vrot.lane.b32.xlu0 %v1938, 32
  %v2009 = vpop.permute.xlu0 %2008
  %2010 = vrot.lane.b32.xlu0 %v1941, 32
  %v2011 = vpop.permute.xlu0 %2010
  %2012 = vrot.lane.b32.xlu0 %v1944, 32
  %v2013 = vpop.permute.xlu0 %2012
  %2014 = vrot.lane.b32.xlu0 %v1947, 32
  %v2015 = vpop.permute.xlu0 %2014
  %2016 = vrot.lane.b32.xlu0 %v1950, 32
  %v2017 = vpop.permute.xlu0 %2016
  %2018 = vrot.lane.b32.xlu0 %v1953, 32
  %v2019 = vpop.permute.xlu0 %2018
  %2020 = vrot.lane.b32.xlu0 %v1956, 32
  %v2021 = vpop.permute.xlu0 %2020
  %2022 = vrot.lane.b32.xlu0 %v1959, 32
  %v2023 = vpop.permute.xlu0 %2022
  %vm2024 = vcmask 130048
  %v2026 = vsel %vm2024, %v1286, %v1800
  %v2028 = vsel %vm2024, %v1287, %v1802
  %v2030 = vsel %vm2024, %v1288, %v1804
  %v2032 = vsel %vm2024, %v1289, %v1806
  %v2034 = vsel %vm2024, %v1290, %v1808
  %v2036 = vsel %vm2024, %v1291, %v1810
  %v2038 = vsel %vm2024, %v1292, %v1812
  %v2040 = vsel %vm2024, %v1293, %v1814
  %v2042 = vsel %vm2024, %v1294, %v1816
  %v2044 = vsel %vm2024, %v1295, %v1818
  %v2046 = vsel %vm2024, %v1296, %v1820
  %v2048 = vsel %vm2024, %v1297, %v1822
  %v2050 = vsel %vm2024, %v1298, %v1824
  %v2052 = vsel %vm2024, %v1299, %v1826
  %v2054 = vsel %vm2024, %v1300, %v1828
  %v2056 = vsel %vm2024, %v1301, %v1830
  %v2058 = vsel %vm2024, %v1302, %v1832
  %v2060 = vsel %vm2024, %v1303, %v1834
  %v2062 = vsel %vm2024, %v1304, %v1836
  %v2064 = vsel %vm2024, %v1305, %v1838
  %v2066 = vsel %vm2024, %v1306, %v1840
  %v2068 = vsel %vm2024, %v1307, %v1842
  %v2070 = vsel %vm2024, %v1308, %v1844
  %v2072 = vsel %vm2024, %v1309, %v1846
  %v2074 = vsel %vm2024, %v1310, %v1848
  %v2076 = vsel %vm2024, %v1311, %v1850
  %v2078 = vsel %vm2024, %v1312, %v1852
  %v2080 = vsel %vm2024, %v1313, %v1854
  %v2082 = vsel %vm2024, %v1314, %v1856
  %v2084 = vsel %vm2024, %v1315, %v1858
  %v2086 = vsel %vm2024, %v1316, %v1860
  %v2088 = vsel %vm2024, %v1317, %v1862
  %vm2089 = vcmask 261120
  %v2091 = vsel %vm2089, %v2026, %v1961
  %v2093 = vsel %vm2089, %v2028, %v1963
  %v2095 = vsel %vm2089, %v2030, %v1965
  %v2097 = vsel %vm2089, %v2032, %v1967
  %v2099 = vsel %vm2089, %v2034, %v1969
  %v2101 = vsel %vm2089, %v2036, %v1971
  %v2103 = vsel %vm2089, %v2038, %v1973
  %v2105 = vsel %vm2089, %v2040, %v1975
  %v2107 = vsel %vm2089, %v2042, %v1977
  %v2109 = vsel %vm2089, %v2044, %v1979
  %v2111 = vsel %vm2089, %v2046, %v1981
  %v2113 = vsel %vm2089, %v2048, %v1983
  %v2115 = vsel %vm2089, %v2050, %v1985
  %v2117 = vsel %vm2089, %v2052, %v1987
  %v2119 = vsel %vm2089, %v2054, %v1989
  %v2121 = vsel %vm2089, %v2056, %v1991
  %v2123 = vsel %vm2089, %v2058, %v1993
  %v2125 = vsel %vm2089, %v2060, %v1995
  %v2127 = vsel %vm2089, %v2062, %v1997
  %v2129 = vsel %vm2089, %v2064, %v1999
  %v2131 = vsel %vm2089, %v2066, %v2001
  %v2133 = vsel %vm2089, %v2068, %v2003
  %v2135 = vsel %vm2089, %v2070, %v2005
  %v2137 = vsel %vm2089, %v2072, %v2007
  %v2139 = vsel %vm2089, %v2074, %v2009
  %v2141 = vsel %vm2089, %v2076, %v2011
  %v2143 = vsel %vm2089, %v2078, %v2013
  %v2145 = vsel %vm2089, %v2080, %v2015
  %v2147 = vsel %vm2089, %v2082, %v2017
  %v2149 = vsel %vm2089, %v2084, %v2019
  %v2151 = vsel %vm2089, %v2086, %v2021
  %v2153 = vsel %vm2089, %v2088, %v2023
  %v2154 = vld [vmem:[%s1] sm:$0xf]
  %v2155 = vld [vmem:[%s1 + $0x4] sm:$0xf]
  %v2156 = vld [vmem:[%s1 + $0x8] sm:$0xf]
  %v2157 = vld [vmem:[%s1 + $0xc] sm:$0xf]
  %v2158 = vld [vmem:[%s1 + $0x10] sm:$0xf]
  %v2159 = vld [vmem:[%s1 + $0x14] sm:$0xf]
  %v2166 = vunpack.c.l.b16 %v2154
  %v2167 = vunpack.c.l.b16 %v2155
  %v2168 = vunpack.c.l.b16 %v2156
  %v2169 = vunpack.c.l.b16 %v2157
  %v2170 = vunpack.c.l.b16 %v2158
  %v2171 = vunpack.c.l.b16 %v2159
  %v2172 = vpack.c.b16 %v2167, %v2166
  %v2173 = vpack.c.b16 %v2169, %v2168
  %v2174 = vpack.c.b16 %v2171, %v2170
  %vm2178 = vcmask 392192
  %v2179 = vsel %vm2178, %v2091, 0
  %v2181 = vsel %vm2178, %v2093, 0
  %v2183 = vsel %vm2178, %v2095, 0
  %v2185 = vsel %vm2178, %v2097, 0
  %v2187 = vsel %vm2178, %v2099, 0
  %v2189 = vsel %vm2178, %v2101, 0
  %v2191 = vsel %vm2178, %v2103, 0
  %v2193 = vsel %vm2178, %v2105, 0
  %v2195 = vsel %vm2178, %v2107, 0
  %v2197 = vsel %vm2178, %v2109, 0
  %v2199 = vsel %vm2178, %v2111, 0
  %v2201 = vsel %vm2178, %v2113, 0
  %v2203 = vsel %vm2178, %v2115, 0
  %v2205 = vsel %vm2178, %v2117, 0
  %v2207 = vsel %vm2178, %v2119, 0
  %v2209 = vsel %vm2178, %v2121, 0
  %v2211 = vsel %vm2178, %v2123, 0
  %v2213 = vsel %vm2178, %v2125, 0
  %v2215 = vsel %vm2178, %v2127, 0
  %v2217 = vsel %vm2178, %v2129, 0
  %v2219 = vsel %vm2178, %v2131, 0
  %v2221 = vsel %vm2178, %v2133, 0
  %v2223 = vsel %vm2178, %v2135, 0
  %v2225 = vsel %vm2178, %v2137, 0
  %v2227 = vsel %vm2178, %v2139, 0
  %v2229 = vsel %vm2178, %v2141, 0
  %v2231 = vsel %vm2178, %v2143, 0
  %v2233 = vsel %vm2178, %v2145, 0
  %v2235 = vsel %vm2178, %v2147, 0
  %v2237 = vsel %vm2178, %v2149, 0
  %v2239 = vsel %vm2178, %v2151, 0
  %v2241 = vsel %vm2178, %v2153, 0
  %2243 = vmatprep.subr.bf16.mxu0 0
  %2244 = vmatpush1.bf16.msra.mxu0 %v2172
  %2245 = vmatprep.subr.bf16.mxu0 0
  %2246 = vmatpush1.bf16.msra.mxu0 %v2173
  %2247 = vmatprep.subr.bf16.mxu0 0
  %2248 = vmatpush1.bf16.msra.mxu0 %v2174
  %2249 = vmatprep.subr.bf16.mxu0 0
  %2250 = vmatpush1.bf16.msra.mxu0 0
  %2251 = vmatprep.subr.bf16.mxu0 0
  %2252 = vmatpush1.bf16.msra.mxu0 0
  %2253 = vmatprep.subr.bf16.mxu0 0
  %2254 = vmatpush1.bf16.msra.mxu0 0
  %2255 = vmatprep.subr.bf16.mxu0 0
  %2256 = vmatpush1.bf16.msra.mxu0 0
  %2257 = vmatprep.subr.bf16.mxu0 0
  %2258 = vmatpush1.bf16.msra.mxu0 0
  %2259 = vmatprep.subr.bf16.mxu0 0
  %2260 = vmatpush1.bf16.msra.mxu0 0
  %2261 = vmatprep.subr.bf16.mxu0 0
  %2262 = vmatpush1.bf16.msra.mxu0 0
  %2263 = vmatprep.subr.bf16.mxu0 0
  %2264 = vmatpush1.bf16.msra.mxu0 0
  %2265 = vmatprep.subr.bf16.mxu0 0
  %2266 = vmatpush1.bf16.msra.mxu0 0
  %2267 = vmatprep.subr.bf16.mxu0 0
  %2268 = vmatpush1.bf16.msra.mxu0 0
  %2269 = vmatprep.subr.bf16.mxu0 0
  %2270 = vmatpush1.bf16.msra.mxu0 0
  %2271 = vmatprep.subr.bf16.mxu0 0
  %2272 = vmatpush1.bf16.msra.mxu0 0
  %2273 = vmatprep.subr.bf16.mxu0 0
  %2274 = vmatpush1.bf16.msra.mxu0 0
  %2275 = vmatprep.mubr.bf16.mxu0 0
  %2276 = vmatmul.mubr.bf16.gmra.mrb[0].mxu0 %v2179
  %v2277 = vpop.f32.mrb[0].mxu0
  %v2278 = vadd.f32 0.0, %v2277
  %v2279 = vpop.f32.mrb[0].mxu0
  %v2280 = vpop.f32.mrb[0].mxu0
  %v2281 = vadd.f32 0.0, %v2280
  %v2282 = vpop.f32.mrb[0].mxu0
  %2283 = vmatprep.mubr.bf16.mxu0 0
  %2284 = vmatmul.mubr.bf16.gmra.mrb[0].mxu0 %v2181
  %v2285 = vpop.f32.mrb[0].mxu0
  %v2286 = vadd.f32 0.0, %v2285
  %v2287 = vpop.f32.mrb[0].mxu0
  %v2288 = vpop.f32.mrb[0].mxu0
  %v2289 = vadd.f32 0.0, %v2288
  %v2290 = vpop.f32.mrb[0].mxu0
  %2291 = vmatprep.mubr.bf16.mxu0 0
  %2292 = vmatmul.mubr.bf16.gmra.mrb[0].mxu0 %v2183
  %v2293 = vpop.f32.mrb[0].mxu0
  %v2294 = vadd.f32 0.0, %v2293
  %v2295 = vpop.f32.mrb[0].mxu0
  %v2296 = vpop.f32.mrb[0].mxu0
  %v2297 = vadd.f32 0.0, %v2296
  %v2298 = vpop.f32.mrb[0].mxu0
  %2299 = vmatprep.mubr.bf16.mxu0 0
  %2300 = vmatmul.mubr.bf16.gmra.mrb[0].mxu0 %v2185
  %v2301 = vpop.f32.mrb[0].mxu0
  %v2302 = vadd.f32 0.0, %v2301
  %v2303 = vpop.f32.mrb[0].mxu0
  %v2304 = vpop.f32.mrb[0].mxu0
  %v2305 = vadd.f32 0.0, %v2304
  %v2306 = vpop.f32.mrb[0].mxu0
  %2307 = vmatprep.mubr.bf16.mxu0 0
  %2308 = vmatmul.mubr.bf16.gmra.mrb[0].mxu0 %v2187
  %v2309 = vpop.f32.mrb[0].mxu0
  %v2310 = vadd.f32 0.0, %v2309
  %v2311 = vpop.f32.mrb[0].mxu0
  %v2312 = vpop.f32.mrb[0].mxu0
  %v2313 = vadd.f32 0.0, %v2312
  %v2314 = vpop.f32.mrb[0].mxu0
  %2315 = vmatprep.mubr.bf16.mxu0 0
  %2316 = vmatmul.mubr.bf16.gmra.mrb[0].mxu0 %v2189
  %v2317 = vpop.f32.mrb[0].mxu0
  %v2318 = vadd.f32 0.0, %v2317
  %v2319 = vpop.f32.mrb[0].mxu0
  %v2320 = vpop.f32.mrb[0].mxu0
  %v2321 = vadd.f32 0.0, %v2320
  %v2322 = vpop.f32.mrb[0].mxu0
  %2323 = vmatprep.mubr.bf16.mxu0 0
  %2324 = vmatmul.mubr.bf16.gmra.mrb[0].mxu0 %v2191
  %v2325 = vpop.f32.mrb[0].mxu0
  %v2326 = vadd.f32 0.0, %v2325
  %v2327 = vpop.f32.mrb[0].mxu0
  %v2328 = vpop.f32.mrb[0].mxu0
  %v2329 = vadd.f32 0.0, %v2328
  %v2330 = vpop.f32.mrb[0].mxu0
  %2331 = vmatprep.mubr.bf16.mxu0 0
  %2332 = vmatmul.mubr.bf16.gmra.mrb[0].mxu0 %v2193
  %v2333 = vpop.f32.mrb[0].mxu0
  %v2334 = vadd.f32 0.0, %v2333
  %v2335 = vpop.f32.mrb[0].mxu0
  %v2336 = vpop.f32.mrb[0].mxu0
  %v2337 = vadd.f32 0.0, %v2336
  %v2338 = vpop.f32.mrb[0].mxu0
  %2339 = vmatprep.mubr.bf16.mxu0 0
  %2340 = vmatmul.mubr.bf16.gmra.mrb[0].mxu0 %v2195
  %v2341 = vpop.f32.mrb[0].mxu0
  %v2342 = vadd.f32 0.0, %v2341
  %v2343 = vpop.f32.mrb[0].mxu0
  %v2344 = vpop.f32.mrb[0].mxu0
  %v2345 = vadd.f32 0.0, %v2344
  %v2346 = vpop.f32.mrb[0].mxu0
  %2347 = vmatprep.mubr.bf16.mxu0 0
  %2348 = vmatmul.mubr.bf16.gmra.mrb[0].mxu0 %v2197
  %v2349 = vpop.f32.mrb[0].mxu0
  %v2350 = vadd.f32 0.0, %v2349
  %v2351 = vpop.f32.mrb[0].mxu0
  %v2352 = vpop.f32.mrb[0].mxu0
  %v2353 = vadd.f32 0.0, %v2352
  %v2354 = vpop.f32.mrb[0].mxu0
  %2355 = vmatprep.mubr.bf16.mxu0 0
  %2356 = vmatmul.mubr.bf16.gmra.mrb[0].mxu0 %v2199
  %v2357 = vpop.f32.mrb[0].mxu0
  %v2358 = vadd.f32 0.0, %v2357
  %v2359 = vpop.f32.mrb[0].mxu0
  %v2360 = vpop.f32.mrb[0].mxu0
  %v2361 = vadd.f32 0.0, %v2360
  %v2362 = vpop.f32.mrb[0].mxu0
  %2363 = vmatprep.mubr.bf16.mxu0 0
  %2364 = vmatmul.mubr.bf16.gmra.mrb[0].mxu0 %v2201
  %v2365 = vpop.f32.mrb[0].mxu0
  %v2366 = vadd.f32 0.0, %v2365
  %v2367 = vpop.f32.mrb[0].mxu0
  %v2368 = vpop.f32.mrb[0].mxu0
  %v2369 = vadd.f32 0.0, %v2368
  %v2370 = vpop.f32.mrb[0].mxu0
  %2371 = vmatprep.mubr.bf16.mxu0 0
  %2372 = vmatmul.mubr.bf16.gmra.mrb[0].mxu0 %v2203
  %v2373 = vpop.f32.mrb[0].mxu0
  %v2374 = vadd.f32 0.0, %v2373
  %v2375 = vpop.f32.mrb[0].mxu0
  %v2376 = vpop.f32.mrb[0].mxu0
  %v2377 = vadd.f32 0.0, %v2376
  %v2378 = vpop.f32.mrb[0].mxu0
  %2379 = vmatprep.mubr.bf16.mxu0 0
  %2380 = vmatmul.mubr.bf16.gmra.mrb[0].mxu0 %v2205
  %v2381 = vpop.f32.mrb[0].mxu0
  %v2382 = vadd.f32 0.0, %v2381
  %v2383 = vpop.f32.mrb[0].mxu0
  %v2384 = vpop.f32.mrb[0].mxu0
  %v2385 = vadd.f32 0.0, %v2384
  %v2386 = vpop.f32.mrb[0].mxu0
  %2387 = vmatprep.mubr.bf16.mxu0 0
  %2388 = vmatmul.mubr.bf16.gmra.mrb[0].mxu0 %v2207
  %v2389 = vpop.f32.mrb[0].mxu0
  %v2390 = vadd.f32 0.0, %v2389
  %v2391 = vpop.f32.mrb[0].mxu0
  %v2392 = vpop.f32.mrb[0].mxu0
  %v2393 = vadd.f32 0.0, %v2392
  %v2394 = vpop.f32.mrb[0].mxu0
  %2395 = vmatprep.mubr.bf16.mxu0 0
  %2396 = vmatmul.mubr.bf16.gmra.mrb[0].mxu0 %v2209
  %v2397 = vpop.f32.mrb[0].mxu0
  %v2398 = vadd.f32 0.0, %v2397
  %v2399 = vpop.f32.mrb[0].mxu0
  %v2400 = vpop.f32.mrb[0].mxu0
  %v2401 = vadd.f32 0.0, %v2400
  %v2402 = vpop.f32.mrb[0].mxu0
  %2403 = vmatprep.mubr.bf16.mxu0 0
  %2404 = vmatmul.mubr.bf16.gmra.mrb[0].mxu0 %v2211
  %v2405 = vpop.f32.mrb[0].mxu0
  %v2406 = vadd.f32 0.0, %v2405
  %v2407 = vpop.f32.mrb[0].mxu0
  %v2408 = vpop.f32.mrb[0].mxu0
  %v2409 = vadd.f32 0.0, %v2408
  %v2410 = vpop.f32.mrb[0].mxu0
  %2411 = vmatprep.mubr.bf16.mxu0 0
  %2412 = vmatmul.mubr.bf16.gmra.mrb[0].mxu0 %v2213
  %v2413 = vpop.f32.mrb[0].mxu0
  %v2414 = vadd.f32 0.0, %v2413
  %v2415 = vpop.f32.mrb[0].mxu0
  %v2416 = vpop.f32.mrb[0].mxu0
  %v2417 = vadd.f32 0.0, %v2416
  %v2418 = vpop.f32.mrb[0].mxu0
  %2419 = vmatprep.mubr.bf16.mxu0 0
  %2420 = vmatmul.mubr.bf16.gmra.mrb[0].mxu0 %v2215
  %v2421 = vpop.f32.mrb[0].mxu0
  %v2422 = vadd.f32 0.0, %v2421
  %v2423 = vpop.f32.mrb[0].mxu0
  %v2424 = vpop.f32.mrb[0].mxu0
  %v2425 = vadd.f32 0.0, %v2424
  %v2426 = vpop.f32.mrb[0].mxu0
  %2427 = vmatprep.mubr.bf16.mxu0 0
  %2428 = vmatmul.mubr.bf16.gmra.mrb[0].mxu0 %v2217
  %v2429 = vpop.f32.mrb[0].mxu0
  %v2430 = vadd.f32 0.0, %v2429
  %v2431 = vpop.f32.mrb[0].mxu0
  %v2432 = vpop.f32.mrb[0].mxu0
  %v2433 = vadd.f32 0.0, %v2432
  %v2434 = vpop.f32.mrb[0].mxu0
  %2435 = vmatprep.mubr.bf16.mxu0 0
  %2436 = vmatmul.mubr.bf16.gmra.mrb[0].mxu0 %v2219
  %v2437 = vpop.f32.mrb[0].mxu0
  %v2438 = vadd.f32 0.0, %v2437
  %v2439 = vpop.f32.mrb[0].mxu0
  %v2440 = vpop.f32.mrb[0].mxu0
  %v2441 = vadd.f32 0.0, %v2440
  %v2442 = vpop.f32.mrb[0].mxu0
  %2443 = vmatprep.mubr.bf16.mxu0 0
  %2444 = vmatmul.mubr.bf16.gmra.mrb[0].mxu0 %v2221
  %v2445 = vpop.f32.mrb[0].mxu0
  %v2446 = vadd.f32 0.0, %v2445
  %v2447 = vpop.f32.mrb[0].mxu0
  %v2448 = vpop.f32.mrb[0].mxu0
  %v2449 = vadd.f32 0.0, %v2448
  %v2450 = vpop.f32.mrb[0].mxu0
  %2451 = vmatprep.mubr.bf16.mxu0 0
  %2452 = vmatmul.mubr.bf16.gmra.mrb[0].mxu0 %v2223
  %v2453 = vpop.f32.mrb[0].mxu0
  %v2454 = vadd.f32 0.0, %v2453
  %v2455 = vpop.f32.mrb[0].mxu0
  %v2456 = vpop.f32.mrb[0].mxu0
  %v2457 = vadd.f32 0.0, %v2456
  %v2458 = vpop.f32.mrb[0].mxu0
  %2459 = vmatprep.mubr.bf16.mxu0 0
  %2460 = vmatmul.mubr.bf16.gmra.mrb[0].mxu0 %v2225
  %v2461 = vpop.f32.mrb[0].mxu0
  %v2462 = vadd.f32 0.0, %v2461
  %v2463 = vpop.f32.mrb[0].mxu0
  %v2464 = vpop.f32.mrb[0].mxu0
  %v2465 = vadd.f32 0.0, %v2464
  %v2466 = vpop.f32.mrb[0].mxu0
  %2467 = vmatprep.mubr.bf16.mxu0 0
  %2468 = vmatmul.mubr.bf16.gmra.mrb[0].mxu0 %v2227
  %v2469 = vpop.f32.mrb[0].mxu0
  %v2470 = vadd.f32 0.0, %v2469
  %v2471 = vpop.f32.mrb[0].mxu0
  %v2472 = vpop.f32.mrb[0].mxu0
  %v2473 = vadd.f32 0.0, %v2472
  %v2474 = vpop.f32.mrb[0].mxu0
  %2475 = vmatprep.mubr.bf16.mxu0 0
  %2476 = vmatmul.mubr.bf16.gmra.mrb[0].mxu0 %v2229
  %v2477 = vpop.f32.mrb[0].mxu0
  %v2478 = vadd.f32 0.0, %v2477
  %v2479 = vpop.f32.mrb[0].mxu0
  %v2480 = vpop.f32.mrb[0].mxu0
  %v2481 = vadd.f32 0.0, %v2480
  %v2482 = vpop.f32.mrb[0].mxu0
  %2483 = vmatprep.mubr.bf16.mxu0 0
  %2484 = vmatmul.mubr.bf16.gmra.mrb[0].mxu0 %v2231
  %v2485 = vpop.f32.mrb[0].mxu0
  %v2486 = vadd.f32 0.0, %v2485
  %v2487 = vpop.f32.mrb[0].mxu0
  %v2488 = vpop.f32.mrb[0].mxu0
  %v2489 = vadd.f32 0.0, %v2488
  %v2490 = vpop.f32.mrb[0].mxu0
  %2491 = vmatprep.mubr.bf16.mxu0 0
  %2492 = vmatmul.mubr.bf16.gmra.mrb[0].mxu0 %v2233
  %v2493 = vpop.f32.mrb[0].mxu0
  %v2494 = vadd.f32 0.0, %v2493
  %v2495 = vpop.f32.mrb[0].mxu0
  %v2496 = vpop.f32.mrb[0].mxu0
  %v2497 = vadd.f32 0.0, %v2496
  %v2498 = vpop.f32.mrb[0].mxu0
  %2499 = vmatprep.mubr.bf16.mxu0 0
  %2500 = vmatmul.mubr.bf16.gmra.mrb[0].mxu0 %v2235
  %v2501 = vpop.f32.mrb[0].mxu0
  %v2502 = vadd.f32 0.0, %v2501
  %v2503 = vpop.f32.mrb[0].mxu0
  %v2504 = vpop.f32.mrb[0].mxu0
  %v2505 = vadd.f32 0.0, %v2504
  %v2506 = vpop.f32.mrb[0].mxu0
  %2507 = vmatprep.mubr.bf16.mxu0 0
  %2508 = vmatmul.mubr.bf16.gmra.mrb[0].mxu0 %v2237
  %v2509 = vpop.f32.mrb[0].mxu0
  %v2510 = vadd.f32 0.0, %v2509
  %v2511 = vpop.f32.mrb[0].mxu0
  %v2512 = vpop.f32.mrb[0].mxu0
  %v2513 = vadd.f32 0.0, %v2512
  %v2514 = vpop.f32.mrb[0].mxu0
  %2515 = vmatprep.mubr.bf16.mxu0 0
  %2516 = vmatmul.mubr.bf16.gmra.mrb[0].mxu0 %v2239
  %v2517 = vpop.f32.mrb[0].mxu0
  %v2518 = vadd.f32 0.0, %v2517
  %v2519 = vpop.f32.mrb[0].mxu0
  %v2520 = vpop.f32.mrb[0].mxu0
  %v2521 = vadd.f32 0.0, %v2520
  %v2522 = vpop.f32.mrb[0].mxu0
  %2523 = vmatprep.mubr.bf16.mxu0 0
  %2524 = vmatmul.mubr.bf16.gmra.mrb[0].mxu0 %v2241
  %v2525 = vpop.f32.mrb[0].mxu0
  %v2526 = vadd.f32 0.0, %v2525
  %v2527 = vpop.f32.mrb[0].mxu0
  %v2528 = vpop.f32.mrb[0].mxu0
  %v2529 = vadd.f32 0.0, %v2528
  %v2530 = vpop.f32.mrb[0].mxu0
  %2531 = vdwg.mxu0
  %2532 = vst.msk [vmem:[#allocation3] sm:$0xff] %vm2024, %v2278
  %2533 = vst.msk [vmem:[#allocation3 + $0x8] sm:$0xff] %vm2024, %v2281
  %2534 = vst.msk [vmem:[#allocation3 + $0x10] sm:$0xff] %vm2024, %v2286
  %2535 = vst.msk [vmem:[#allocation3 + $0x18] sm:$0xff] %vm2024, %v2289
  %2536 = vst.msk [vmem:[#allocation3 + $0x20] sm:$0xff] %vm2024, %v2294
  %2537 = vst.msk [vmem:[#allocation3 + $0x28] sm:$0xff] %vm2024, %v2297
  %2538 = vst.msk [vmem:[#allocation3 + $0x30] sm:$0xff] %vm2024, %v2302
  %2539 = vst.msk [vmem:[#allocation3 + $0x38] sm:$0xff] %vm2024, %v2305
  %2540 = vst.msk [vmem:[#allocation3 + $0x40] sm:$0xff] %vm2024, %v2310
  %2541 = vst.msk [vmem:[#allocation3 + $0x48] sm:$0xff] %vm2024, %v2313
  %2542 = vst.msk [vmem:[#allocation3 + $0x50] sm:$0xff] %vm2024, %v2318
  %2543 = vst.msk [vmem:[#allocation3 + $0x58] sm:$0xff] %vm2024, %v2321
  %2544 = vst.msk [vmem:[#allocation3 + $0x60] sm:$0xff] %vm2024, %v2326
  %2545 = vst.msk [vmem:[#allocation3 + $0x68] sm:$0xff] %vm2024, %v2329
  %2546 = vst.msk [vmem:[#allocation3 + $0x70] sm:$0xff] %vm2024, %v2334
  %2547 = vst.msk [vmem:[#allocation3 + $0x78] sm:$0xff] %vm2024, %v2337
  %2548 = vst.msk [vmem:[#allocation3 + $0x80] sm:$0xff] %vm2024, %v2342
  %2549 = vst.msk [vmem:[#allocation3 + $0x88] sm:$0xff] %vm2024, %v2345
  %2550 = vst.msk [vmem:[#allocation3 + $0x90] sm:$0xff] %vm2024, %v2350
  %2551 = vst.msk [vmem:[#allocation3 + $0x98] sm:$0xff] %vm2024, %v2353
  %2552 = vst.msk [vmem:[#allocation3 + $0xa0] sm:$0xff] %vm2024, %v2358
  %2553 = vst.msk [vmem:[#allocation3 + $0xa8] sm:$0xff] %vm2024, %v2361
  %2554 = vst.msk [vmem:[#allocation3 + $0xb0] sm:$0xff] %vm2024, %v2366
  %2555 = vst.msk [vmem:[#allocation3 + $0xb8] sm:$0xff] %vm2024, %v2369
  %2556 = vst.msk [vmem:[#allocation3 + $0xc0] sm:$0xff] %vm2024, %v2374
  %2557 = vst.msk [vmem:[#allocation3 + $0xc8] sm:$0xff] %vm2024, %v2377
  %2558 = vst.msk [vmem:[#allocation3 + $0xd0] sm:$0xff] %vm2024, %v2382
  %2559 = vst.msk [vmem:[#allocation3 + $0xd8] sm:$0xff] %vm2024, %v2385
  %2560 = vst.msk [vmem:[#allocation3 + $0xe0] sm:$0xff] %vm2024, %v2390
  %2561 = vst.msk [vmem:[#allocation3 + $0xe8] sm:$0xff] %vm2024, %v2393
  %2562 = vst.msk [vmem:[#allocation3 + $0xf0] sm:$0xff] %vm2024, %v2398
  %2563 = vst.msk [vmem:[#allocation3 + $0xf8] sm:$0xff] %vm2024, %v2401
  %2564 = vst.msk [vmem:[#allocation3 + $0x100] sm:$0xff] %vm2024, %v2406
  %2565 = vst.msk [vmem:[#allocation3 + $0x108] sm:$0xff] %vm2024, %v2409
  %2566 = vst.msk [vmem:[#allocation3 + $0x110] sm:$0xff] %vm2024, %v2414
  %2567 = vst.msk [vmem:[#allocation3 + $0x118] sm:$0xff] %vm2024, %v2417
  %2568 = vst.msk [vmem:[#allocation3 + $0x120] sm:$0xff] %vm2024, %v2422
  %2569 = vst.msk [vmem:[#allocation3 + $0x128] sm:$0xff] %vm2024, %v2425
  %2570 = vst.msk [vmem:[#allocation3 + $0x130] sm:$0xff] %vm2024, %v2430
  %2571 = vst.msk [vmem:[#allocation3 + $0x138] sm:$0xff] %vm2024, %v2433
  %2572 = vst.msk [vmem:[#allocation3 + $0x140] sm:$0xff] %vm2024, %v2438
  %2573 = vst.msk [vmem:[#allocation3 + $0x148] sm:$0xff] %vm2024, %v2441
  %2574 = vst.msk [vmem:[#allocation3 + $0x150] sm:$0xff] %vm2024, %v2446
  %2575 = vst.msk [vmem:[#allocation3 + $0x158] sm:$0xff] %vm2024, %v2449
  %2576 = vst.msk [vmem:[#allocation3 + $0x160] sm:$0xff] %vm2024, %v2454
  %2577 = vst.msk [vmem:[#allocation3 + $0x168] sm:$0xff] %vm2024, %v2457
  %2578 = vst.msk [vmem:[#allocation3 + $0x170] sm:$0xff] %vm2024, %v2462
  %2579 = vst.msk [vmem:[#allocation3 + $0x178] sm:$0xff] %vm2024, %v2465
  %2580 = vst.msk [vmem:[#allocation3 + $0x180] sm:$0xff] %vm2024, %v2470
  %2581 = vst.msk [vmem:[#allocation3 + $0x188] sm:$0xff] %vm2024, %v2473
  %2582 = vst.msk [vmem:[#allocation3 + $0x190] sm:$0xff] %vm2024, %v2478
  %2583 = vst.msk [vmem:[#allocation3 + $0x198] sm:$0xff] %vm2024, %v2481
  %2584 = vst.msk [vmem:[#allocation3 + $0x1a0] sm:$0xff] %vm2024, %v2486
  %2585 = vst.msk [vmem:[#allocation3 + $0x1a8] sm:$0xff] %vm2024, %v2489
  %2586 = vst.msk [vmem:[#allocation3 + $0x1b0] sm:$0xff] %vm2024, %v2494
  %2587 = vst.msk [vmem:[#allocation3 + $0x1b8] sm:$0xff] %vm2024, %v2497
  %2588 = vst.msk [vmem:[#allocation3 + $0x1c0] sm:$0xff] %vm2024, %v2502
  %2589 = vst.msk [vmem:[#allocation3 + $0x1c8] sm:$0xff] %vm2024, %v2505
  %2590 = vst.msk [vmem:[#allocation3 + $0x1d0] sm:$0xff] %vm2024, %v2510
  %2591 = vst.msk [vmem:[#allocation3 + $0x1d8] sm:$0xff] %vm2024, %v2513
  %2592 = vst.msk [vmem:[#allocation3 + $0x1e0] sm:$0xff] %vm2024, %v2518
  %2593 = vst.msk [vmem:[#allocation3 + $0x1e8] sm:$0xff] %vm2024, %v2521
  %2594 = vst.msk [vmem:[#allocation3 + $0x1f0] sm:$0xff] %vm2024, %v2526
  %2595 = vst.msk [vmem:[#allocation3 + $0x1f8] sm:$0xff] %vm2024, %v2529
  %v2596 = vld [vmem:[%s832] sm:$0xf]
  %v2597 = vld [vmem:[%s832 + $0x4] sm:$0xf]
  %v2598 = vld [vmem:[%s832 + $0x8] sm:$0x1]
  %v2599 = vld [vmem:[%s832 + $0xc] sm:$0xf]
  %v2600 = vld [vmem:[%s832 + $0x10] sm:$0xf]
  %v2601 = vld [vmem:[%s832 + $0x14] sm:$0x1]
  %v2602 = vld [vmem:[%s832 + $0x18] sm:$0xf]
  %v2603 = vld [vmem:[%s832 + $0x1c] sm:$0xf]
  %v2604 = vld [vmem:[%s832 + $0x20] sm:$0x1]
  %v2605 = vld [vmem:[%s832 + $0x24] sm:$0xf]
  %v2606 = vld [vmem:[%s832 + $0x28] sm:$0xf]
  %v2607 = vld [vmem:[%s832 + $0x2c] sm:$0x1]
  %v2608 = vld [vmem:[%s832 + $0x30] sm:$0xf]
  %v2609 = vld [vmem:[%s832 + $0x34] sm:$0xf]
  %v2610 = vld [vmem:[%s832 + $0x38] sm:$0x1]
  %v2611 = vld [vmem:[%s832 + $0x3c] sm:$0xf]
  %v2612 = vld [vmem:[%s832 + $0x40] sm:$0xf]
  %v2613 = vld [vmem:[%s832 + $0x44] sm:$0x1]
  %v2614 = vld [vmem:[%s832 + $0x48] sm:$0xf]
  %v2615 = vld [vmem:[%s832 + $0x4c] sm:$0xf]
  %v2616 = vld [vmem:[%s832 + $0x50] sm:$0x1]
  %v2617 = vld [vmem:[%s832 + $0x54] sm:$0xf]
  %v2618 = vld [vmem:[%s832 + $0x58] sm:$0xf]
  %v2619 = vld [vmem:[%s832 + $0x5c] sm:$0x1]
  %v2620 = vld [vmem:[%s832 + $0x60] sm:$0xf]
  %v2621 = vld [vmem:[%s832 + $0x64] sm:$0xf]
  %v2622 = vld [vmem:[%s832 + $0x68] sm:$0x1]
  %v2623 = vld [vmem:[%s832 + $0x6c] sm:$0xf]
  %v2624 = vld [vmem:[%s832 + $0x70] sm:$0xf]
  %v2625 = vld [vmem:[%s832 + $0x74] sm:$0x1]
  %v2626 = vld [vmem:[%s832 + $0x78] sm:$0xf]
  %v2627 = vld [vmem:[%s832 + $0x7c] sm:$0xf]
  %v2628 = vld [vmem:[%s832 + $0x80] sm:$0x1]
  %v2629 = vld [vmem:[%s832 + $0x84] sm:$0xf]
  %v2630 = vld [vmem:[%s832 + $0x88] sm:$0xf]
  %v2631 = vld [vmem:[%s832 + $0x8c] sm:$0x1]
  %v2632 = vld [vmem:[%s832 + $0x90] sm:$0xf]
  %v2633 = vld [vmem:[%s832 + $0x94] sm:$0xf]
  %v2634 = vld [vmem:[%s832 + $0x98] sm:$0x1]
  %v2635 = vld [vmem:[%s832 + $0x9c] sm:$0xf]
  %v2636 = vld [vmem:[%s832 + $0xa0] sm:$0xf]
  %v2637 = vld [vmem:[%s832 + $0xa4] sm:$0x1]
  %v2638 = vld [vmem:[%s832 + $0xa8] sm:$0xf]
  %v2639 = vld [vmem:[%s832 + $0xac] sm:$0xf]
  %v2640 = vld [vmem:[%s832 + $0xb0] sm:$0x1]
  %v2641 = vld [vmem:[%s832 + $0xb4] sm:$0xf]
  %v2642 = vld [vmem:[%s832 + $0xb8] sm:$0xf]
  %v2643 = vld [vmem:[%s832 + $0xbc] sm:$0x1]
  %v2644 = vld [vmem:[%s832 + $0xd8] sm:$0xf]
  %v2645 = vld [vmem:[%s832 + $0xdc] sm:$0xf]
  %v2646 = vld [vmem:[%s832 + $0xe0] sm:$0x1]
  %v2647 = vld [vmem:[%s832 + $0xe4] sm:$0xf]
  %v2648 = vld [vmem:[%s832 + $0xe8] sm:$0xf]
  %v2649 = vld [vmem:[%s832 + $0xec] sm:$0x1]
  %v2650 = vld [vmem:[%s832 + $0xf0] sm:$0xf]
  %v2651 = vld [vmem:[%s832 + $0xf4] sm:$0xf]
  %v2652 = vld [vmem:[%s832 + $0xf8] sm:$0x1]
  %v2653 = vld [vmem:[%s832 + $0xfc] sm:$0xf]
  %v2654 = vld [vmem:[%s832 + $0x100] sm:$0xf]
  %v2655 = vld [vmem:[%s832 + $0x104] sm:$0x1]
  %v2656 = vld [vmem:[%s832 + $0x108] sm:$0xf]
  %v2657 = vld [vmem:[%s832 + $0x10c] sm:$0xf]
  %v2658 = vld [vmem:[%s832 + $0x110] sm:$0x1]
  %v2659 = vld [vmem:[%s832 + $0x114] sm:$0xf]
  %v2660 = vld [vmem:[%s832 + $0x118] sm:$0xf]
  %v2661 = vld [vmem:[%s832 + $0x11c] sm:$0x1]
  %v2662 = vld [vmem:[%s832 + $0x120] sm:$0xf]
  %v2663 = vld [vmem:[%s832 + $0x124] sm:$0xf]
  %v2664 = vld [vmem:[%s832 + $0x128] sm:$0x1]
  %v2665 = vld [vmem:[%s832 + $0x12c] sm:$0xf]
  %v2666 = vld [vmem:[%s832 + $0x130] sm:$0xf]
  %v2667 = vld [vmem:[%s832 + $0x134] sm:$0x1]
  %v2668 = vld [vmem:[%s832 + $0x138] sm:$0xf]
  %v2669 = vld [vmem:[%s832 + $0x13c] sm:$0xf]
  %v2670 = vld [vmem:[%s832 + $0x140] sm:$0x1]
  %v2671 = vld [vmem:[%s832 + $0x144] sm:$0xf]
  %v2672 = vld [vmem:[%s832 + $0x148] sm:$0xf]
  %v2673 = vld [vmem:[%s832 + $0x14c] sm:$0x1]
  %v2674 = vld [vmem:[%s832 + $0x150] sm:$0xf]
  %v2675 = vld [vmem:[%s832 + $0x154] sm:$0xf]
  %v2676 = vld [vmem:[%s832 + $0x158] sm:$0x1]
  %v2677 = vld [vmem:[%s832 + $0x15c] sm:$0xf]
  %v2678 = vld [vmem:[%s832 + $0x160] sm:$0xf]
  %v2679 = vld [vmem:[%s832 + $0x164] sm:$0x1]
  %v2680 = vld [vmem:[%s832 + $0x168] sm:$0xf]
  %v2681 = vld [vmem:[%s832 + $0x16c] sm:$0xf]
  %v2682 = vld [vmem:[%s832 + $0x170] sm:$0x1]
  %v2683 = vld [vmem:[%s832 + $0x174] sm:$0xf]
  %v2684 = vld [vmem:[%s832 + $0x178] sm:$0xf]
  %v2685 = vld [vmem:[%s832 + $0x17c] sm:$0x1]
  %v2686 = vld [vmem:[%s832 + $0x180] sm:$0xf]
  %v2687 = vld [vmem:[%s832 + $0x184] sm:$0xf]
  %v2688 = vld [vmem:[%s832 + $0x188] sm:$0x1]
  %v2689 = vld [vmem:[%s832 + $0x18c] sm:$0xf]
  %v2690 = vld [vmem:[%s832 + $0x190] sm:$0xf]
  %v2691 = vld [vmem:[%s832 + $0x194] sm:$0x1]
  %v2756 = vunpack.c.l.b16 %v2596
  %v2757 = vunpack.c.l.b16 %v2597
  %v2758 = vunpack.c.l.b16 %v2599
  %v2759 = vunpack.c.l.b16 %v2600
  %v2760 = vunpack.c.l.b16 %v2602
  %v2761 = vunpack.c.l.b16 %v2603
  %v2762 = vunpack.c.l.b16 %v2605
  %v2763 = vunpack.c.l.b16 %v2606
  %v2764 = vunpack.c.l.b16 %v2608
  %v2765 = vunpack.c.l.b16 %v2609
  %v2766 = vunpack.c.l.b16 %v2611
  %v2767 = vunpack.c.l.b16 %v2612
  %v2768 = vunpack.c.l.b16 %v2614
  %v2769 = vunpack.c.l.b16 %v2615
  %v2770 = vunpack.c.l.b16 %v2617
  %v2771 = vunpack.c.l.b16 %v2618
  %v2772 = vunpack.c.l.b16 %v2620
  %v2773 = vunpack.c.l.b16 %v2621
  %v2774 = vunpack.c.l.b16 %v2623
  %v2775 = vunpack.c.l.b16 %v2624
  %v2776 = vunpack.c.l.b16 %v2626
  %v2777 = vunpack.c.l.b16 %v2627
  %v2778 = vunpack.c.l.b16 %v2629
  %v2779 = vunpack.c.l.b16 %v2630
  %v2780 = vunpack.c.l.b16 %v2632
  %v2781 = vunpack.c.l.b16 %v2633
  %v2782 = vunpack.c.l.b16 %v2635
  %v2783 = vunpack.c.l.b16 %v2636
  %v2784 = vunpack.c.l.b16 %v2638
  %v2785 = vunpack.c.l.b16 %v2639
  %v2786 = vunpack.c.l.b16 %v2641
  %v2787 = vunpack.c.l.b16 %v2642
  %v2788 = vunpack.c.l.b16 %v2644
  %v2789 = vunpack.c.l.b16 %v2645
  %v2790 = vunpack.c.l.b16 %v2647
  %v2791 = vunpack.c.l.b16 %v2648
  %v2792 = vunpack.c.l.b16 %v2650
  %v2793 = vunpack.c.l.b16 %v2651
  %v2794 = vunpack.c.l.b16 %v2653
  %v2795 = vunpack.c.l.b16 %v2654
  %v2796 = vunpack.c.l.b16 %v2656
  %v2797 = vunpack.c.l.b16 %v2657
  %v2798 = vunpack.c.l.b16 %v2659
  %v2799 = vunpack.c.l.b16 %v2660
  %v2800 = vunpack.c.l.b16 %v2662
  %v2801 = vunpack.c.l.b16 %v2663
  %v2802 = vunpack.c.l.b16 %v2665
  %v2803 = vunpack.c.l.b16 %v2666
  %v2804 = vunpack.c.l.b16 %v2668
  %v2805 = vunpack.c.l.b16 %v2669
  %v2806 = vunpack.c.l.b16 %v2671
  %v2807 = vunpack.c.l.b16 %v2672
  %v2808 = vunpack.c.l.b16 %v2674
  %v2809 = vunpack.c.l.b16 %v2675
  %v2810 = vunpack.c.l.b16 %v2677
  %v2811 = vunpack.c.l.b16 %v2678
  %v2812 = vunpack.c.l.b16 %v2680
  %v2813 = vunpack.c.l.b16 %v2681
  %v2814 = vunpack.c.l.b16 %v2683
  %v2815 = vunpack.c.l.b16 %v2684
  %v2816 = vunpack.c.l.b16 %v2686
  %v2817 = vunpack.c.l.b16 %v2687
  %v2818 = vunpack.c.l.b16 %v2689
  %v2819 = vunpack.c.l.b16 %v2690
  %v2820 = vpack.c.b16 %v2757, %v2756
  %v2821 = vpack.c.b16 %v2759, %v2758
  %v2822 = vpack.c.b16 %v2761, %v2760
  %v2823 = vpack.c.b16 %v2763, %v2762
  %v2824 = vpack.c.b16 %v2765, %v2764
  %v2825 = vpack.c.b16 %v2767, %v2766
  %v2826 = vpack.c.b16 %v2769, %v2768
  %v2827 = vpack.c.b16 %v2771, %v2770
  %v2828 = vpack.c.b16 %v2773, %v2772
  %v2829 = vpack.c.b16 %v2775, %v2774
  %v2830 = vpack.c.b16 %v2777, %v2776
  %v2831 = vpack.c.b16 %v2779, %v2778
  %v2832 = vpack.c.b16 %v2781, %v2780
  %v2833 = vpack.c.b16 %v2783, %v2782
  %v2834 = vpack.c.b16 %v2785, %v2784
  %v2835 = vpack.c.b16 %v2787, %v2786
  %v2836 = vpack.c.b16 %v2789, %v2788
  %v2837 = vpack.c.b16 %v2791, %v2790
  %v2838 = vpack.c.b16 %v2793, %v2792
  %v2839 = vpack.c.b16 %v2795, %v2794
  %v2840 = vpack.c.b16 %v2797, %v2796
  %v2841 = vpack.c.b16 %v2799, %v2798
  %v2842 = vpack.c.b16 %v2801, %v2800
  %v2843 = vpack.c.b16 %v2803, %v2802
  %v2844 = vpack.c.b16 %v2805, %v2804
  %v2845 = vpack.c.b16 %v2807, %v2806
  %v2846 = vpack.c.b16 %v2809, %v2808
  %v2847 = vpack.c.b16 %v2811, %v2810
  %v2848 = vpack.c.b16 %v2813, %v2812
  %v2849 = vpack.c.b16 %v2815, %v2814
  %v2850 = vpack.c.b16 %v2817, %v2816
  %v2851 = vpack.c.b16 %v2819, %v2818
  %v2884 = vunpack.c.l.b16 %v2598
  %v2885 = vunpack.c.l.b16 %v2601
  %v2886 = vunpack.c.l.b16 %v2604
  %v2887 = vunpack.c.l.b16 %v2607
  %v2888 = vunpack.c.l.b16 %v2610
  %v2889 = vunpack.c.l.b16 %v2613
  %v2890 = vunpack.c.l.b16 %v2616
  %v2891 = vunpack.c.l.b16 %v2619
  %v2892 = vunpack.c.l.b16 %v2622
  %v2893 = vunpack.c.l.b16 %v2625
  %v2894 = vunpack.c.l.b16 %v2628
  %v2895 = vunpack.c.l.b16 %v2631
  %v2896 = vunpack.c.l.b16 %v2634
  %v2897 = vunpack.c.l.b16 %v2637
  %v2898 = vunpack.c.l.b16 %v2640
  %v2899 = vunpack.c.l.b16 %v2643
  %v2900 = vunpack.c.l.b16 %v2646
  %v2901 = vunpack.c.l.b16 %v2649
  %v2902 = vunpack.c.l.b16 %v2652
  %v2903 = vunpack.c.l.b16 %v2655
  %v2904 = vunpack.c.l.b16 %v2658
  %v2905 = vunpack.c.l.b16 %v2661
  %v2906 = vunpack.c.l.b16 %v2664
  %v2907 = vunpack.c.l.b16 %v2667
  %v2908 = vunpack.c.l.b16 %v2670
  %v2909 = vunpack.c.l.b16 %v2673
  %v2910 = vunpack.c.l.b16 %v2676
  %v2911 = vunpack.c.l.b16 %v2679
  %v2912 = vunpack.c.l.b16 %v2682
  %v2913 = vunpack.c.l.b16 %v2685
  %v2914 = vunpack.c.l.b16 %v2688
  %v2915 = vunpack.c.l.b16 %v2691
  %v2916 = vpack.c.b16 %v2884, %v2884
  %v2917 = vpack.c.b16 %v2885, %v2885
  %v2918 = vpack.c.b16 %v2886, %v2886
  %v2919 = vpack.c.b16 %v2887, %v2887
  %v2920 = vpack.c.b16 %v2888, %v2888
  %v2921 = vpack.c.b16 %v2889, %v2889
  %v2922 = vpack.c.b16 %v2890, %v2890
  %v2923 = vpack.c.b16 %v2891, %v2891
  %v2924 = vpack.c.b16 %v2892, %v2892
  %v2925 = vpack.c.b16 %v2893, %v2893
  %v2926 = vpack.c.b16 %v2894, %v2894
  %v2927 = vpack.c.b16 %v2895, %v2895
  %v2928 = vpack.c.b16 %v2896, %v2896
  %v2929 = vpack.c.b16 %v2897, %v2897
  %v2930 = vpack.c.b16 %v2898, %v2898
  %v2931 = vpack.c.b16 %v2899, %v2899
  %v2932 = vpack.c.b16 %v2900, %v2900
  %v2933 = vpack.c.b16 %v2901, %v2901
  %v2934 = vpack.c.b16 %v2902, %v2902
  %v2935 = vpack.c.b16 %v2903, %v2903
  %v2936 = vpack.c.b16 %v2904, %v2904
  %v2937 = vpack.c.b16 %v2905, %v2905
  %v2938 = vpack.c.b16 %v2906, %v2906
  %v2939 = vpack.c.b16 %v2907, %v2907
  %v2940 = vpack.c.b16 %v2908, %v2908
  %v2941 = vpack.c.b16 %v2909, %v2909
  %v2942 = vpack.c.b16 %v2910, %v2910
  %v2943 = vpack.c.b16 %v2911, %v2911
  %v2944 = vpack.c.b16 %v2912, %v2912
  %v2945 = vpack.c.b16 %v2913, %v2913
  %v2946 = vpack.c.b16 %v2914, %v2914
  %v2947 = vpack.c.b16 %v2915, %v2915
  %v2949 = vshrl.u32 %v2820, 16
  %v2951 = vshll.u32 %v2820, 16
  %v2953 = vrot.slane %v2951, 1
  %v2954 = vor.u32 %v2949, %v2953
  %v2956 = vshll.u32 %v2916, 16
  %v2958 = vrot.slane %v2956, 1
  %v2959 = vsel %vm1414, %v2954, %v2958
  %v2961 = vshrl.u32 %v2821, 16
  %v2963 = vshll.u32 %v2821, 16
  %v2965 = vrot.slane %v2963, 1
  %v2966 = vor.u32 %v2961, %v2965
  %v2968 = vshll.u32 %v2917, 16
  %v2970 = vrot.slane %v2968, 1
  %v2971 = vsel %vm1414, %v2966, %v2970
  %v2973 = vshrl.u32 %v2822, 16
  %v2975 = vshll.u32 %v2822, 16
  %v2977 = vrot.slane %v2975, 1
  %v2978 = vor.u32 %v2973, %v2977
  %v2980 = vshll.u32 %v2918, 16
  %v2982 = vrot.slane %v2980, 1
  %v2983 = vsel %vm1414, %v2978, %v2982
  %v2985 = vshrl.u32 %v2823, 16
  %v2987 = vshll.u32 %v2823, 16
  %v2989 = vrot.slane %v2987, 1
  %v2990 = vor.u32 %v2985, %v2989
  %v2992 = vshll.u32 %v2919, 16
  %v2994 = vrot.slane %v2992, 1
  %v2995 = vsel %vm1414, %v2990, %v2994
  %v2997 = vshrl.u32 %v2824, 16
  %v2999 = vshll.u32 %v2824, 16
  %v3001 = vrot.slane %v2999, 1
  %v3002 = vor.u32 %v2997, %v3001
  %v3004 = vshll.u32 %v2920, 16
  %v3006 = vrot.slane %v3004, 1
  %v3007 = vsel %vm1414, %v3002, %v3006
  %v3009 = vshrl.u32 %v2825, 16
  %v3011 = vshll.u32 %v2825, 16
  %v3013 = vrot.slane %v3011, 1
  %v3014 = vor.u32 %v3009, %v3013
  %v3016 = vshll.u32 %v2921, 16
  %v3018 = vrot.slane %v3016, 1
  %v3019 = vsel %vm1414, %v3014, %v3018
  %v3021 = vshrl.u32 %v2826, 16
  %v3023 = vshll.u32 %v2826, 16
  %v3025 = vrot.slane %v3023, 1
  %v3026 = vor.u32 %v3021, %v3025
  %v3028 = vshll.u32 %v2922, 16
  %v3030 = vrot.slane %v3028, 1
  %v3031 = vsel %vm1414, %v3026, %v3030
  %v3033 = vshrl.u32 %v2827, 16
  %v3035 = vshll.u32 %v2827, 16
  %v3037 = vrot.slane %v3035, 1
  %v3038 = vor.u32 %v3033, %v3037
  %v3040 = vshll.u32 %v2923, 16
  %v3042 = vrot.slane %v3040, 1
  %v3043 = vsel %vm1414, %v3038, %v3042
  %v3045 = vshrl.u32 %v2828, 16
  %v3047 = vshll.u32 %v2828, 16
  %v3049 = vrot.slane %v3047, 1
  %v3050 = vor.u32 %v3045, %v3049
  %v3052 = vshll.u32 %v2924, 16
  %v3054 = vrot.slane %v3052, 1
  %v3055 = vsel %vm1414, %v3050, %v3054
  %v3057 = vshrl.u32 %v2829, 16
  %v3059 = vshll.u32 %v2829, 16
  %v3061 = vrot.slane %v3059, 1
  %v3062 = vor.u32 %v3057, %v3061
  %v3064 = vshll.u32 %v2925, 16
  %v3066 = vrot.slane %v3064, 1
  %v3067 = vsel %vm1414, %v3062, %v3066
  %v3069 = vshrl.u32 %v2830, 16
  %v3071 = vshll.u32 %v2830, 16
  %v3073 = vrot.slane %v3071, 1
  %v3074 = vor.u32 %v3069, %v3073
  %v3076 = vshll.u32 %v2926, 16
  %v3078 = vrot.slane %v3076, 1
  %v3079 = vsel %vm1414, %v3074, %v3078
  %v3081 = vshrl.u32 %v2831, 16
  %v3083 = vshll.u32 %v2831, 16
  %v3085 = vrot.slane %v3083, 1
  %v3086 = vor.u32 %v3081, %v3085
  %v3088 = vshll.u32 %v2927, 16
  %v3090 = vrot.slane %v3088, 1
  %v3091 = vsel %vm1414, %v3086, %v3090
  %v3093 = vshrl.u32 %v2832, 16
  %v3095 = vshll.u32 %v2832, 16
  %v3097 = vrot.slane %v3095, 1
  %v3098 = vor.u32 %v3093, %v3097
  %v3100 = vshll.u32 %v2928, 16
  %v3102 = vrot.slane %v3100, 1
  %v3103 = vsel %vm1414, %v3098, %v3102
  %v3105 = vshrl.u32 %v2833, 16
  %v3107 = vshll.u32 %v2833, 16
  %v3109 = vrot.slane %v3107, 1
  %v3110 = vor.u32 %v3105, %v3109
  %v3112 = vshll.u32 %v2929, 16
  %v3114 = vrot.slane %v3112, 1
  %v3115 = vsel %vm1414, %v3110, %v3114
  %v3117 = vshrl.u32 %v2834, 16
  %v3119 = vshll.u32 %v2834, 16
  %v3121 = vrot.slane %v3119, 1
  %v3122 = vor.u32 %v3117, %v3121
  %v3124 = vshll.u32 %v2930, 16
  %v3126 = vrot.slane %v3124, 1
  %v3127 = vsel %vm1414, %v3122, %v3126
  %v3129 = vshrl.u32 %v2835, 16
  %v3131 = vshll.u32 %v2835, 16
  %v3133 = vrot.slane %v3131, 1
  %v3134 = vor.u32 %v3129, %v3133
  %v3136 = vshll.u32 %v2931, 16
  %v3138 = vrot.slane %v3136, 1
  %v3139 = vsel %vm1414, %v3134, %v3138
  %v3141 = vshrl.u32 %v2836, 16
  %v3143 = vshll.u32 %v2836, 16
  %v3145 = vrot.slane %v3143, 1
  %v3146 = vor.u32 %v3141, %v3145
  %v3148 = vshll.u32 %v2932, 16
  %v3150 = vrot.slane %v3148, 1
  %v3151 = vsel %vm1414, %v3146, %v3150
  %v3153 = vshrl.u32 %v2837, 16
  %v3155 = vshll.u32 %v2837, 16
  %v3157 = vrot.slane %v3155, 1
  %v3158 = vor.u32 %v3153, %v3157
  %v3160 = vshll.u32 %v2933, 16
  %v3162 = vrot.slane %v3160, 1
  %v3163 = vsel %vm1414, %v3158, %v3162
  %v3165 = vshrl.u32 %v2838, 16
  %v3167 = vshll.u32 %v2838, 16
  %v3169 = vrot.slane %v3167, 1
  %v3170 = vor.u32 %v3165, %v3169
  %v3172 = vshll.u32 %v2934, 16
  %v3174 = vrot.slane %v3172, 1
  %v3175 = vsel %vm1414, %v3170, %v3174
  %v3177 = vshrl.u32 %v2839, 16
  %v3179 = vshll.u32 %v2839, 16
  %v3181 = vrot.slane %v3179, 1
  %v3182 = vor.u32 %v3177, %v3181
  %v3184 = vshll.u32 %v2935, 16
  %v3186 = vrot.slane %v3184, 1
  %v3187 = vsel %vm1414, %v3182, %v3186
  %v3189 = vshrl.u32 %v2840, 16
  %v3191 = vshll.u32 %v2840, 16
  %v3193 = vrot.slane %v3191, 1
  %v3194 = vor.u32 %v3189, %v3193
  %v3196 = vshll.u32 %v2936, 16
  %v3198 = vrot.slane %v3196, 1
  %v3199 = vsel %vm1414, %v3194, %v3198
  %v3201 = vshrl.u32 %v2841, 16
  %v3203 = vshll.u32 %v2841, 16
  %v3205 = vrot.slane %v3203, 1
  %v3206 = vor.u32 %v3201, %v3205
  %v3208 = vshll.u32 %v2937, 16
  %v3210 = vrot.slane %v3208, 1
  %v3211 = vsel %vm1414, %v3206, %v3210
  %v3213 = vshrl.u32 %v2842, 16
  %v3215 = vshll.u32 %v2842, 16
  %v3217 = vrot.slane %v3215, 1
  %v3218 = vor.u32 %v3213, %v3217
  %v3220 = vshll.u32 %v2938, 16
  %v3222 = vrot.slane %v3220, 1
  %v3223 = vsel %vm1414, %v3218, %v3222
  %v3225 = vshrl.u32 %v2843, 16
  %v3227 = vshll.u32 %v2843, 16
  %v3229 = vrot.slane %v3227, 1
  %v3230 = vor.u32 %v3225, %v3229
  %v3232 = vshll.u32 %v2939, 16
  %v3234 = vrot.slane %v3232, 1
  %v3235 = vsel %vm1414, %v3230, %v3234
  %v3237 = vshrl.u32 %v2844, 16
  %v3239 = vshll.u32 %v2844, 16
  %v3241 = vrot.slane %v3239, 1
  %v3242 = vor.u32 %v3237, %v3241
  %v3244 = vshll.u32 %v2940, 16
  %v3246 = vrot.slane %v3244, 1
  %v3247 = vsel %vm1414, %v3242, %v3246
  %v3249 = vshrl.u32 %v2845, 16
  %v3251 = vshll.u32 %v2845, 16
  %v3253 = vrot.slane %v3251, 1
  %v3254 = vor.u32 %v3249, %v3253
  %v3256 = vshll.u32 %v2941, 16
  %v3258 = vrot.slane %v3256, 1
  %v3259 = vsel %vm1414, %v3254, %v3258
  %v3261 = vshrl.u32 %v2846, 16
  %v3263 = vshll.u32 %v2846, 16
  %v3265 = vrot.slane %v3263, 1
  %v3266 = vor.u32 %v3261, %v3265
  %v3268 = vshll.u32 %v2942, 16
  %v3270 = vrot.slane %v3268, 1
  %v3271 = vsel %vm1414, %v3266, %v3270
  %v3273 = vshrl.u32 %v2847, 16
  %v3275 = vshll.u32 %v2847, 16
  %v3277 = vrot.slane %v3275, 1
  %v3278 = vor.u32 %v3273, %v3277
  %v3280 = vshll.u32 %v2943, 16
  %v3282 = vrot.slane %v3280, 1
  %v3283 = vsel %vm1414, %v3278, %v3282
  %v3285 = vshrl.u32 %v2848, 16
  %v3287 = vshll.u32 %v2848, 16
  %v3289 = vrot.slane %v3287, 1
  %v3290 = vor.u32 %v3285, %v3289
  %v3292 = vshll.u32 %v2944, 16
  %v3294 = vrot.slane %v3292, 1
  %v3295 = vsel %vm1414, %v3290, %v3294
  %v3297 = vshrl.u32 %v2849, 16
  %v3299 = vshll.u32 %v2849, 16
  %v3301 = vrot.slane %v3299, 1
  %v3302 = vor.u32 %v3297, %v3301
  %v3304 = vshll.u32 %v2945, 16
  %v3306 = vrot.slane %v3304, 1
  %v3307 = vsel %vm1414, %v3302, %v3306
  %v3309 = vshrl.u32 %v2850, 16
  %v3311 = vshll.u32 %v2850, 16
  %v3313 = vrot.slane %v3311, 1
  %v3314 = vor.u32 %v3309, %v3313
  %v3316 = vshll.u32 %v2946, 16
  %v3318 = vrot.slane %v3316, 1
  %v3319 = vsel %vm1414, %v3314, %v3318
  %v3321 = vshrl.u32 %v2851, 16
  %v3323 = vshll.u32 %v2851, 16
  %v3325 = vrot.slane %v3323, 1
  %v3326 = vor.u32 %v3321, %v3325
  %v3328 = vshll.u32 %v2947, 16
  %v3330 = vrot.slane %v3328, 1
  %v3331 = vsel %vm1414, %v3326, %v3330
  %3332 = vrot.lane.b32.xlu0 %v2959, 16
  %v3333 = vpop.permute.xlu0 %3332
  %3334 = vrot.lane.b32.xlu0 %v2971, 16
  %v3335 = vpop.permute.xlu0 %3334
  %3336 = vrot.lane.b32.xlu0 %v2983, 16
  %v3337 = vpop.permute.xlu0 %3336
  %3338 = vrot.lane.b32.xlu0 %v2995, 16
  %v3339 = vpop.permute.xlu0 %3338
  %3340 = vrot.lane.b32.xlu0 %v3007, 16
  %v3341 = vpop.permute.xlu0 %3340
  %3342 = vrot.lane.b32.xlu0 %v3019, 16
  %v3343 = vpop.permute.xlu0 %3342
  %3344 = vrot.lane.b32.xlu0 %v3031, 16
  %v3345 = vpop.permute.xlu0 %3344
  %3346 = vrot.lane.b32.xlu0 %v3043, 16
  %v3347 = vpop.permute.xlu0 %3346
  %3348 = vrot.lane.b32.xlu0 %v3055, 16
  %v3349 = vpop.permute.xlu0 %3348
  %3350 = vrot.lane.b32.xlu0 %v3067, 16
  %v3351 = vpop.permute.xlu0 %3350
  %3352 = vrot.lane.b32.xlu0 %v3079, 16
  %v3353 = vpop.permute.xlu0 %3352
  %3354 = vrot.lane.b32.xlu0 %v3091, 16
  %v3355 = vpop.permute.xlu0 %3354
  %3356 = vrot.lane.b32.xlu0 %v3103, 16
  %v3357 = vpop.permute.xlu0 %3356
  %3358 = vrot.lane.b32.xlu0 %v3115, 16
  %v3359 = vpop.permute.xlu0 %3358
  %3360 = vrot.lane.b32.xlu0 %v3127, 16
  %v3361 = vpop.permute.xlu0 %3360
  %3362 = vrot.lane.b32.xlu0 %v3139, 16
  %v3363 = vpop.permute.xlu0 %3362
  %3364 = vrot.lane.b32.xlu0 %v3151, 16
  %v3365 = vpop.permute.xlu0 %3364
  %3366 = vrot.lane.b32.xlu0 %v3163, 16
  %v3367 = vpop.permute.xlu0 %3366
  %3368 = vrot.lane.b32.xlu0 %v3175, 16
  %v3369 = vpop.permute.xlu0 %3368
  %3370 = vrot.lane.b32.xlu0 %v3187, 16
  %v3371 = vpop.permute.xlu0 %3370
  %3372 = vrot.lane.b32.xlu0 %v3199, 16
  %v3373 = vpop.permute.xlu0 %3372
  %3374 = vrot.lane.b32.xlu0 %v3211, 16
  %v3375 = vpop.permute.xlu0 %3374
  %3376 = vrot.lane.b32.xlu0 %v3223, 16
  %v3377 = vpop.permute.xlu0 %3376
  %3378 = vrot.lane.b32.xlu0 %v3235, 16
  %v3379 = vpop.permute.xlu0 %3378
  %3380 = vrot.lane.b32.xlu0 %v3247, 16
  %v3381 = vpop.permute.xlu0 %3380
  %3382 = vrot.lane.b32.xlu0 %v3259, 16
  %v3383 = vpop.permute.xlu0 %3382
  %3384 = vrot.lane.b32.xlu0 %v3271, 16
  %v3385 = vpop.permute.xlu0 %3384
  %3386 = vrot.lane.b32.xlu0 %v3283, 16
  %v3387 = vpop.permute.xlu0 %3386
  %3388 = vrot.lane.b32.xlu0 %v3295, 16
  %v3389 = vpop.permute.xlu0 %3388
  %3390 = vrot.lane.b32.xlu0 %v3307, 16
  %v3391 = vpop.permute.xlu0 %3390
  %3392 = vrot.lane.b32.xlu0 %v3319, 16
  %v3393 = vpop.permute.xlu0 %3392
  %3394 = vrot.lane.b32.xlu0 %v3331, 16
  %v3395 = vpop.permute.xlu0 %3394
  %v3396 = vrot.slane %v2820, 1
  %v3397 = vrot.slane %v2916, 1
  %v3398 = vsel %vm1863, %v3396, %v3397
  %v3399 = vrot.slane %v2821, 1
  %v3400 = vrot.slane %v2917, 1
  %v3401 = vsel %vm1863, %v3399, %v3400
  %v3402 = vrot.slane %v2822, 1
  %v3403 = vrot.slane %v2918, 1
  %v3404 = vsel %vm1863, %v3402, %v3403
  %v3405 = vrot.slane %v2823, 1
  %v3406 = vrot.slane %v2919, 1
  %v3407 = vsel %vm1863, %v3405, %v3406
  %v3408 = vrot.slane %v2824, 1
  %v3409 = vrot.slane %v2920, 1
  %v3410 = vsel %vm1863, %v3408, %v3409
  %v3411 = vrot.slane %v2825, 1
  %v3412 = vrot.slane %v2921, 1
  %v3413 = vsel %vm1863, %v3411, %v3412
  %v3414 = vrot.slane %v2826, 1
  %v3415 = vrot.slane %v2922, 1
  %v3416 = vsel %vm1863, %v3414, %v3415
  %v3417 = vrot.slane %v2827, 1
  %v3418 = vrot.slane %v2923, 1
  %v3419 = vsel %vm1863, %v3417, %v3418
  %v3420 = vrot.slane %v2828, 1
  %v3421 = vrot.slane %v2924, 1
  %v3422 = vsel %vm1863, %v3420, %v3421
  %v3423 = vrot.slane %v2829, 1
  %v3424 = vrot.slane %v2925, 1
  %v3425 = vsel %vm1863, %v3423, %v3424
  %v3426 = vrot.slane %v2830, 1
  %v3427 = vrot.slane %v2926, 1
  %v3428 = vsel %vm1863, %v3426, %v3427
  %v3429 = vrot.slane %v2831, 1
  %v3430 = vrot.slane %v2927, 1
  %v3431 = vsel %vm1863, %v3429, %v3430
  %v3432 = vrot.slane %v2832, 1
  %v3433 = vrot.slane %v2928, 1
  %v3434 = vsel %vm1863, %v3432, %v3433
  %v3435 = vrot.slane %v2833, 1
  %v3436 = vrot.slane %v2929, 1
  %v3437 = vsel %vm1863, %v3435, %v3436
  %v3438 = vrot.slane %v2834, 1
  %v3439 = vrot.slane %v2930, 1
  %v3440 = vsel %vm1863, %v3438, %v3439
  %v3441 = vrot.slane %v2835, 1
  %v3442 = vrot.slane %v2931, 1
  %v3443 = vsel %vm1863, %v3441, %v3442
  %v3444 = vrot.slane %v2836, 1
  %v3445 = vrot.slane %v2932, 1
  %v3446 = vsel %vm1863, %v3444, %v3445
  %v3447 = vrot.slane %v2837, 1
  %v3448 = vrot.slane %v2933, 1
  %v3449 = vsel %vm1863, %v3447, %v3448
  %v3450 = vrot.slane %v2838, 1
  %v3451 = vrot.slane %v2934, 1
  %v3452 = vsel %vm1863, %v3450, %v3451
  %v3453 = vrot.slane %v2839, 1
  %v3454 = vrot.slane %v2935, 1
  %v3455 = vsel %vm1863, %v3453, %v3454
  %v3456 = vrot.slane %v2840, 1
  %v3457 = vrot.slane %v2936, 1
  %v3458 = vsel %vm1863, %v3456, %v3457
  %v3459 = vrot.slane %v2841, 1
  %v3460 = vrot.slane %v2937, 1
  %v3461 = vsel %vm1863, %v3459, %v3460
  %v3462 = vrot.slane %v2842, 1
  %v3463 = vrot.slane %v2938, 1
  %v3464 = vsel %vm1863, %v3462, %v3463
  %v3465 = vrot.slane %v2843, 1
  %v3466 = vrot.slane %v2939, 1
  %v3467 = vsel %vm1863, %v3465, %v3466
  %v3468 = vrot.slane %v2844, 1
  %v3469 = vrot.slane %v2940, 1
  %v3470 = vsel %vm1863, %v3468, %v3469
  %v3471 = vrot.slane %v2845, 1
  %v3472 = vrot.slane %v2941, 1
  %v3473 = vsel %vm1863, %v3471, %v3472
  %v3474 = vrot.slane %v2846, 1
  %v3475 = vrot.slane %v2942, 1
  %v3476 = vsel %vm1863, %v3474, %v3475
  %v3477 = vrot.slane %v2847, 1
  %v3478 = vrot.slane %v2943, 1
  %v3479 = vsel %vm1863, %v3477, %v3478
  %v3480 = vrot.slane %v2848, 1
  %v3481 = vrot.slane %v2944, 1
  %v3482 = vsel %vm1863, %v3480, %v3481
  %v3483 = vrot.slane %v2849, 1
  %v3484 = vrot.slane %v2945, 1
  %v3485 = vsel %vm1863, %v3483, %v3484
  %v3486 = vrot.slane %v2850, 1
  %v3487 = vrot.slane %v2946, 1
  %v3488 = vsel %vm1863, %v3486, %v3487
  %v3489 = vrot.slane %v2851, 1
  %v3490 = vrot.slane %v2947, 1
  %v3491 = vsel %vm1863, %v3489, %v3490
  %3492 = vrot.lane.b32.xlu0 %v3398, 32
  %v3493 = vpop.permute.xlu0 %3492
  %3494 = vrot.lane.b32.xlu0 %v3401, 32
  %v3495 = vpop.permute.xlu0 %3494
  %3496 = vrot.lane.b32.xlu0 %v3404, 32
  %v3497 = vpop.permute.xlu0 %3496
  %3498 = vrot.lane.b32.xlu0 %v3407, 32
  %v3499 = vpop.permute.xlu0 %3498
  %3500 = vrot.lane.b32.xlu0 %v3410, 32
  %v3501 = vpop.permute.xlu0 %3500
  %3502 = vrot.lane.b32.xlu0 %v3413, 32
  %v3503 = vpop.permute.xlu0 %3502
  %3504 = vrot.lane.b32.xlu0 %v3416, 32
  %v3505 = vpop.permute.xlu0 %3504
  %3506 = vrot.lane.b32.xlu0 %v3419, 32
  %v3507 = vpop.permute.xlu0 %3506
  %3508 = vrot.lane.b32.xlu0 %v3422, 32
  %v3509 = vpop.permute.xlu0 %3508
  %3510 = vrot.lane.b32.xlu0 %v3425, 32
  %v3511 = vpop.permute.xlu0 %3510
  %3512 = vrot.lane.b32.xlu0 %v3428, 32
  %v3513 = vpop.permute.xlu0 %3512
  %3514 = vrot.lane.b32.xlu0 %v3431, 32
  %v3515 = vpop.permute.xlu0 %3514
  %3516 = vrot.lane.b32.xlu0 %v3434, 32
  %v3517 = vpop.permute.xlu0 %3516
  %3518 = vrot.lane.b32.xlu0 %v3437, 32
  %v3519 = vpop.permute.xlu0 %3518
  %3520 = vrot.lane.b32.xlu0 %v3440, 32
  %v3521 = vpop.permute.xlu0 %3520
  %3522 = vrot.lane.b32.xlu0 %v3443, 32
  %v3523 = vpop.permute.xlu0 %3522
  %3524 = vrot.lane.b32.xlu0 %v3446, 32
  %v3525 = vpop.permute.xlu0 %3524
  %3526 = vrot.lane.b32.xlu0 %v3449, 32
  %v3527 = vpop.permute.xlu0 %3526
  %3528 = vrot.lane.b32.xlu0 %v3452, 32
  %v3529 = vpop.permute.xlu0 %3528
  %3530 = vrot.lane.b32.xlu0 %v3455, 32
  %v3531 = vpop.permute.xlu0 %3530
  %3532 = vrot.lane.b32.xlu0 %v3458, 32
  %v3533 = vpop.permute.xlu0 %3532
  %3534 = vrot.lane.b32.xlu0 %v3461, 32
  %v3535 = vpop.permute.xlu0 %3534
  %3536 = vrot.lane.b32.xlu0 %v3464, 32
  %v3537 = vpop.permute.xlu0 %3536
  %3538 = vrot.lane.b32.xlu0 %v3467, 32
  %v3539 = vpop.permute.xlu0 %3538
  %3540 = vrot.lane.b32.xlu0 %v3470, 32
  %v3541 = vpop.permute.xlu0 %3540
  %3542 = vrot.lane.b32.xlu0 %v3473, 32
  %v3543 = vpop.permute.xlu0 %3542
  %3544 = vrot.lane.b32.xlu0 %v3476, 32
  %v3545 = vpop.permute.xlu0 %3544
  %3546 = vrot.lane.b32.xlu0 %v3479, 32
  %v3547 = vpop.permute.xlu0 %3546
  %3548 = vrot.lane.b32.xlu0 %v3482, 32
  %v3549 = vpop.permute.xlu0 %3548
  %3550 = vrot.lane.b32.xlu0 %v3485, 32
  %v3551 = vpop.permute.xlu0 %3550
  %3552 = vrot.lane.b32.xlu0 %v3488, 32
  %v3553 = vpop.permute.xlu0 %3552
  %3554 = vrot.lane.b32.xlu0 %v3491, 32
  %v3555 = vpop.permute.xlu0 %3554
  %v3557 = vsel %vm2024, %v2820, %v3333
  %v3559 = vsel %vm2024, %v2821, %v3335
  %v3561 = vsel %vm2024, %v2822, %v3337
  %v3563 = vsel %vm2024, %v2823, %v3339
  %v3565 = vsel %vm2024, %v2824, %v3341
  %v3567 = vsel %vm2024, %v2825, %v3343
  %v3569 = vsel %vm2024, %v2826, %v3345
  %v3571 = vsel %vm2024, %v2827, %v3347
  %v3573 = vsel %vm2024, %v2828, %v3349
  %v3575 = vsel %vm2024, %v2829, %v3351
  %v3577 = vsel %vm2024, %v2830, %v3353
  %v3579 = vsel %vm2024, %v2831, %v3355
  %v3581 = vsel %vm2024, %v2832, %v3357
  %v3583 = vsel %vm2024, %v2833, %v3359
  %v3585 = vsel %vm2024, %v2834, %v3361
  %v3587 = vsel %vm2024, %v2835, %v3363
  %v3589 = vsel %vm2024, %v2836, %v3365
  %v3591 = vsel %vm2024, %v2837, %v3367
  %v3593 = vsel %vm2024, %v2838, %v3369
  %v3595 = vsel %vm2024, %v2839, %v3371
  %v3597 = vsel %vm2024, %v2840, %v3373
  %v3599 = vsel %vm2024, %v2841, %v3375
  %v3601 = vsel %vm2024, %v2842, %v3377
  %v3603 = vsel %vm2024, %v2843, %v3379
  %v3605 = vsel %vm2024, %v2844, %v3381
  %v3607 = vsel %vm2024, %v2845, %v3383
  %v3609 = vsel %vm2024, %v2846, %v3385
  %v3611 = vsel %vm2024, %v2847, %v3387
  %v3613 = vsel %vm2024, %v2848, %v3389
  %v3615 = vsel %vm2024, %v2849, %v3391
  %v3617 = vsel %vm2024, %v2850, %v3393
  %v3619 = vsel %vm2024, %v2851, %v3395
  %v3621 = vsel %vm2089, %v3557, %v3493
  %v3623 = vsel %vm2089, %v3559, %v3495
  %v3625 = vsel %vm2089, %v3561, %v3497
  %v3627 = vsel %vm2089, %v3563, %v3499
  %v3629 = vsel %vm2089, %v3565, %v3501
  %v3631 = vsel %vm2089, %v3567, %v3503
  %v3633 = vsel %vm2089, %v3569, %v3505
  %v3635 = vsel %vm2089, %v3571, %v3507
  %v3637 = vsel %vm2089, %v3573, %v3509
  %v3639 = vsel %vm2089, %v3575, %v3511
  %v3641 = vsel %vm2089, %v3577, %v3513
  %v3643 = vsel %vm2089, %v3579, %v3515
  %v3645 = vsel %vm2089, %v3581, %v3517
  %v3647 = vsel %vm2089, %v3583, %v3519
  %v3649 = vsel %vm2089, %v3585, %v3521
  %v3651 = vsel %vm2089, %v3587, %v3523
  %v3653 = vsel %vm2089, %v3589, %v3525
  %v3655 = vsel %vm2089, %v3591, %v3527
  %v3657 = vsel %vm2089, %v3593, %v3529
  %v3659 = vsel %vm2089, %v3595, %v3531
  %v3661 = vsel %vm2089, %v3597, %v3533
  %v3663 = vsel %vm2089, %v3599, %v3535
  %v3665 = vsel %vm2089, %v3601, %v3537
  %v3667 = vsel %vm2089, %v3603, %v3539
  %v3669 = vsel %vm2089, %v3605, %v3541
  %v3671 = vsel %vm2089, %v3607, %v3543
  %v3673 = vsel %vm2089, %v3609, %v3545
  %v3675 = vsel %vm2089, %v3611, %v3547
  %v3677 = vsel %vm2089, %v3613, %v3549
  %v3679 = vsel %vm2089, %v3615, %v3551
  %v3681 = vsel %vm2089, %v3617, %v3553
  %v3683 = vsel %vm2089, %v3619, %v3555
  %s3684 = scalar_lea.vmem %s1, 24
  %v3685 = vld [vmem:[%s3684] sm:$0xf]
  %v3686 = vld [vmem:[%s3684 + $0x4] sm:$0xf]
  %v3687 = vld [vmem:[%s3684 + $0x8] sm:$0xf]
  %v3688 = vld [vmem:[%s3684 + $0xc] sm:$0xf]
  %v3689 = vld [vmem:[%s3684 + $0x10] sm:$0xf]
  %v3690 = vld [vmem:[%s3684 + $0x14] sm:$0xf]
  %v3697 = vunpack.c.l.b16 %v3685
  %v3698 = vunpack.c.l.b16 %v3686
  %v3699 = vunpack.c.l.b16 %v3687
  %v3700 = vunpack.c.l.b16 %v3688
  %v3701 = vunpack.c.l.b16 %v3689
  %v3702 = vunpack.c.l.b16 %v3690
  %v3703 = vpack.c.b16 %v3698, %v3697
  %v3704 = vpack.c.b16 %v3700, %v3699
  %v3705 = vpack.c.b16 %v3702, %v3701
  %v3709 = vsel %vm2178, %v3621, 0
  %v3711 = vsel %vm2178, %v3623, 0
  %v3713 = vsel %vm2178, %v3625, 0
  %v3715 = vsel %vm2178, %v3627, 0
  %v3717 = vsel %vm2178, %v3629, 0
  %v3719 = vsel %vm2178, %v3631, 0
  %v3721 = vsel %vm2178, %v3633, 0
  %v3723 = vsel %vm2178, %v3635, 0
  %v3725 = vsel %vm2178, %v3637, 0
  %v3727 = vsel %vm2178, %v3639, 0
  %v3729 = vsel %vm2178, %v3641, 0
  %v3731 = vsel %vm2178, %v3643, 0
  %v3733 = vsel %vm2178, %v3645, 0
  %v3735 = vsel %vm2178, %v3647, 0
  %v3737 = vsel %vm2178, %v3649, 0
  %v3739 = vsel %vm2178, %v3651, 0
  %v3741 = vsel %vm2178, %v3653, 0
  %v3743 = vsel %vm2178, %v3655, 0
  %v3745 = vsel %vm2178, %v3657, 0
  %v3747 = vsel %vm2178, %v3659, 0
  %v3749 = vsel %vm2178, %v3661, 0
  %v3751 = vsel %vm2178, %v3663, 0
  %v3753 = vsel %vm2178, %v3665, 0
  %v3755 = vsel %vm2178, %v3667, 0
  %v3757 = vsel %vm2178, %v3669, 0
  %v3759 = vsel %vm2178, %v3671, 0
  %v3761 = vsel %vm2178, %v3673, 0
  %v3763 = vsel %vm2178, %v3675, 0
  %v3765 = vsel %vm2178, %v3677, 0
  %v3767 = vsel %vm2178, %v3679, 0
  %v3769 = vsel %vm2178, %v3681, 0
  %v3771 = vsel %vm2178, %v3683, 0
  %3773 = vmatprep.subr.bf16.mxu0 0
  %3774 = vmatpush1.bf16.msra.mxu0 %v3703
  %3775 = vmatprep.subr.bf16.mxu0 0
  %3776 = vmatpush1.bf16.msra.mxu0 %v3704
  %3777 = vmatprep.subr.bf16.mxu0 0
  %3778 = vmatpush1.bf16.msra.mxu0 %v3705
  %3779 = vmatprep.subr.bf16.mxu0 0
  %3780 = vmatpush1.bf16.msra.mxu0 0
  %3781 = vmatprep.subr.bf16.mxu0 0
  %3782 = vmatpush1.bf16.msra.mxu0 0
  %3783 = vmatprep.subr.bf16.mxu0 0
  %3784 = vmatpush1.bf16.msra.mxu0 0
  %3785 = vmatprep.subr.bf16.mxu0 0
  %3786 = vmatpush1.bf16.msra.mxu0 0
  %3787 = vmatprep.subr.bf16.mxu0 0
  %3788 = vmatpush1.bf16.msra.mxu0 0
  %3789 = vmatprep.subr.bf16.mxu0 0
  %3790 = vmatpush1.bf16.msra.mxu0 0
  %3791 = vmatprep.subr.bf16.mxu0 0
  %3792 = vmatpush1.bf16.msra.mxu0 0
  %3793 = vmatprep.subr.bf16.mxu0 0
  %3794 = vmatpush1.bf16.msra.mxu0 0
  %3795 = vmatprep.subr.bf16.mxu0 0
  %3796 = vmatpush1.bf16.msra.mxu0 0
  %3797 = vmatprep.subr.bf16.mxu0 0
  %3798 = vmatpush1.bf16.msra.mxu0 0
  %3799 = vmatprep.subr.bf16.mxu0 0
  %3800 = vmatpush1.bf16.msra.mxu0 0
  %3801 = vmatprep.subr.bf16.mxu0 0
  %3802 = vmatpush1.bf16.msra.mxu0 0
  %3803 = vmatprep.subr.bf16.mxu0 0
  %3804 = vmatpush1.bf16.msra.mxu0 0
  %3805 = vmatprep.mubr.bf16.mxu0 0
  %3806 = vmatmul.mubr.bf16.gmra.mrb[0].mxu0 %v3709
  %v3807 = vpop.f32.mrb[0].mxu0
  %v3808 = vadd.f32 0.0, %v3807
  %v3809 = vpop.f32.mrb[0].mxu0
  %v3810 = vpop.f32.mrb[0].mxu0
  %v3811 = vadd.f32 0.0, %v3810
  %v3812 = vpop.f32.mrb[0].mxu0
  %3813 = vmatprep.mubr.bf16.mxu0 0
  %3814 = vmatmul.mubr.bf16.gmra.mrb[0].mxu0 %v3711
  %v3815 = vpop.f32.mrb[0].mxu0
  %v3816 = vadd.f32 0.0, %v3815
  %v3817 = vpop.f32.mrb[0].mxu0
  %v3818 = vpop.f32.mrb[0].mxu0
  %v3819 = vadd.f32 0.0, %v3818
  %v3820 = vpop.f32.mrb[0].mxu0
  %3821 = vmatprep.mubr.bf16.mxu0 0
  %3822 = vmatmul.mubr.bf16.gmra.mrb[0].mxu0 %v3713
  %v3823 = vpop.f32.mrb[0].mxu0
  %v3824 = vadd.f32 0.0, %v3823
  %v3825 = vpop.f32.mrb[0].mxu0
  %v3826 = vpop.f32.mrb[0].mxu0
  %v3827 = vadd.f32 0.0, %v3826
  %v3828 = vpop.f32.mrb[0].mxu0
  %3829 = vmatprep.mubr.bf16.mxu0 0
  %3830 = vmatmul.mubr.bf16.gmra.mrb[0].mxu0 %v3715
  %v3831 = vpop.f32.mrb[0].mxu0
  %v3832 = vadd.f32 0.0, %v3831
  %v3833 = vpop.f32.mrb[0].mxu0
  %v3834 = vpop.f32.mrb[0].mxu0
  %v3835 = vadd.f32 0.0, %v3834
  %v3836 = vpop.f32.mrb[0].mxu0
  %3837 = vmatprep.mubr.bf16.mxu0 0
  %3838 = vmatmul.mubr.bf16.gmra.mrb[0].mxu0 %v3717
  %v3839 = vpop.f32.mrb[0].mxu0
  %v3840 = vadd.f32 0.0, %v3839
  %v3841 = vpop.f32.mrb[0].mxu0
  %v3842 = vpop.f32.mrb[0].mxu0
  %v3843 = vadd.f32 0.0, %v3842
  %v3844 = vpop.f32.mrb[0].mxu0
  %3845 = vmatprep.mubr.bf16.mxu0 0
  %3846 = vmatmul.mubr.bf16.gmra.mrb[0].mxu0 %v3719
  %v3847 = vpop.f32.mrb[0].mxu0
  %v3848 = vadd.f32 0.0, %v3847
  %v3849 = vpop.f32.mrb[0].mxu0
  %v3850 = vpop.f32.mrb[0].mxu0
  %v3851 = vadd.f32 0.0, %v3850
  %v3852 = vpop.f32.mrb[0].mxu0
  %3853 = vmatprep.mubr.bf16.mxu0 0
  %3854 = vmatmul.mubr.bf16.gmra.mrb[0].mxu0 %v3721
  %v3855 = vpop.f32.mrb[0].mxu0
  %v3856 = vadd.f32 0.0, %v3855
  %v3857 = vpop.f32.mrb[0].mxu0
  %v3858 = vpop.f32.mrb[0].mxu0
  %v3859 = vadd.f32 0.0, %v3858
  %v3860 = vpop.f32.mrb[0].mxu0
  %3861 = vmatprep.mubr.bf16.mxu0 0
  %3862 = vmatmul.mubr.bf16.gmra.mrb[0].mxu0 %v3723
  %v3863 = vpop.f32.mrb[0].mxu0
  %v3864 = vadd.f32 0.0, %v3863
  %v3865 = vpop.f32.mrb[0].mxu0
  %v3866 = vpop.f32.mrb[0].mxu0
  %v3867 = vadd.f32 0.0, %v3866
  %v3868 = vpop.f32.mrb[0].mxu0
  %3869 = vmatprep.mubr.bf16.mxu0 0
  %3870 = vmatmul.mubr.bf16.gmra.mrb[0].mxu0 %v3725
  %v3871 = vpop.f32.mrb[0].mxu0
  %v3872 = vadd.f32 0.0, %v3871
  %v3873 = vpop.f32.mrb[0].mxu0
  %v3874 = vpop.f32.mrb[0].mxu0
  %v3875 = vadd.f32 0.0, %v3874
  %v3876 = vpop.f32.mrb[0].mxu0
  %3877 = vmatprep.mubr.bf16.mxu0 0
  %3878 = vmatmul.mubr.bf16.gmra.mrb[0].mxu0 %v3727
  %v3879 = vpop.f32.mrb[0].mxu0
  %v3880 = vadd.f32 0.0, %v3879
  %v3881 = vpop.f32.mrb[0].mxu0
  %v3882 = vpop.f32.mrb[0].mxu0
  %v3883 = vadd.f32 0.0, %v3882
  %v3884 = vpop.f32.mrb[0].mxu0
  %3885 = vmatprep.mubr.bf16.mxu0 0
  %3886 = vmatmul.mubr.bf16.gmra.mrb[0].mxu0 %v3729
  %v3887 = vpop.f32.mrb[0].mxu0
  %v3888 = vadd.f32 0.0, %v3887
  %v3889 = vpop.f32.mrb[0].mxu0
  %v3890 = vpop.f32.mrb[0].mxu0
  %v3891 = vadd.f32 0.0, %v3890
  %v3892 = vpop.f32.mrb[0].mxu0
  %3893 = vmatprep.mubr.bf16.mxu0 0
  %3894 = vmatmul.mubr.bf16.gmra.mrb[0].mxu0 %v3731
  %v3895 = vpop.f32.mrb[0].mxu0
  %v3896 = vadd.f32 0.0, %v3895
  %v3897 = vpop.f32.mrb[0].mxu0
  %v3898 = vpop.f32.mrb[0].mxu0
  %v3899 = vadd.f32 0.0, %v3898
  %v3900 = vpop.f32.mrb[0].mxu0
  %3901 = vmatprep.mubr.bf16.mxu0 0
  %3902 = vmatmul.mubr.bf16.gmra.mrb[0].mxu0 %v3733
  %v3903 = vpop.f32.mrb[0].mxu0
  %v3904 = vadd.f32 0.0, %v3903
  %v3905 = vpop.f32.mrb[0].mxu0
  %v3906 = vpop.f32.mrb[0].mxu0
  %v3907 = vadd.f32 0.0, %v3906
  %v3908 = vpop.f32.mrb[0].mxu0
  %3909 = vmatprep.mubr.bf16.mxu0 0
  %3910 = vmatmul.mubr.bf16.gmra.mrb[0].mxu0 %v3735
  %v3911 = vpop.f32.mrb[0].mxu0
  %v3912 = vadd.f32 0.0, %v3911
  %v3913 = vpop.f32.mrb[0].mxu0
  %v3914 = vpop.f32.mrb[0].mxu0
  %v3915 = vadd.f32 0.0, %v3914
  %v3916 = vpop.f32.mrb[0].mxu0
  %3917 = vmatprep.mubr.bf16.mxu0 0
  %3918 = vmatmul.mubr.bf16.gmra.mrb[0].mxu0 %v3737
  %v3919 = vpop.f32.mrb[0].mxu0
  %v3920 = vadd.f32 0.0, %v3919
  %v3921 = vpop.f32.mrb[0].mxu0
  %v3922 = vpop.f32.mrb[0].mxu0
  %v3923 = vadd.f32 0.0, %v3922
  %v3924 = vpop.f32.mrb[0].mxu0
  %3925 = vmatprep.mubr.bf16.mxu0 0
  %3926 = vmatmul.mubr.bf16.gmra.mrb[0].mxu0 %v3739
  %v3927 = vpop.f32.mrb[0].mxu0
  %v3928 = vadd.f32 0.0, %v3927
  %v3929 = vpop.f32.mrb[0].mxu0
  %v3930 = vpop.f32.mrb[0].mxu0
  %v3931 = vadd.f32 0.0, %v3930
  %v3932 = vpop.f32.mrb[0].mxu0
  %3933 = vmatprep.mubr.bf16.mxu0 0
  %3934 = vmatmul.mubr.bf16.gmra.mrb[0].mxu0 %v3741
  %v3935 = vpop.f32.mrb[0].mxu0
  %v3936 = vadd.f32 0.0, %v3935
  %v3937 = vpop.f32.mrb[0].mxu0
  %v3938 = vpop.f32.mrb[0].mxu0
  %v3939 = vadd.f32 0.0, %v3938
  %v3940 = vpop.f32.mrb[0].mxu0
  %3941 = vmatprep.mubr.bf16.mxu0 0
  %3942 = vmatmul.mubr.bf16.gmra.mrb[0].mxu0 %v3743
  %v3943 = vpop.f32.mrb[0].mxu0
  %v3944 = vadd.f32 0.0, %v3943
  %v3945 = vpop.f32.mrb[0].mxu0
  %v3946 = vpop.f32.mrb[0].mxu0
  %v3947 = vadd.f32 0.0, %v3946
  %v3948 = vpop.f32.mrb[0].mxu0
  %3949 = vmatprep.mubr.bf16.mxu0 0
  %3950 = vmatmul.mubr.bf16.gmra.mrb[0].mxu0 %v3745
  %v3951 = vpop.f32.mrb[0].mxu0
  %v3952 = vadd.f32 0.0, %v3951
  %v3953 = vpop.f32.mrb[0].mxu0
  %v3954 = vpop.f32.mrb[0].mxu0
  %v3955 = vadd.f32 0.0, %v3954
  %v3956 = vpop.f32.mrb[0].mxu0
  %3957 = vmatprep.mubr.bf16.mxu0 0
  %3958 = vmatmul.mubr.bf16.gmra.mrb[0].mxu0 %v3747
  %v3959 = vpop.f32.mrb[0].mxu0
  %v3960 = vadd.f32 0.0, %v3959
  %v3961 = vpop.f32.mrb[0].mxu0
  %v3962 = vpop.f32.mrb[0].mxu0
  %v3963 = vadd.f32 0.0, %v3962
  %v3964 = vpop.f32.mrb[0].mxu0
  %3965 = vmatprep.mubr.bf16.mxu0 0
  %3966 = vmatmul.mubr.bf16.gmra.mrb[0].mxu0 %v3749
  %v3967 = vpop.f32.mrb[0].mxu0
  %v3968 = vadd.f32 0.0, %v3967
  %v3969 = vpop.f32.mrb[0].mxu0
  %v3970 = vpop.f32.mrb[0].mxu0
  %v3971 = vadd.f32 0.0, %v3970
  %v3972 = vpop.f32.mrb[0].mxu0
  %3973 = vmatprep.mubr.bf16.mxu0 0
  %3974 = vmatmul.mubr.bf16.gmra.mrb[0].mxu0 %v3751
  %v3975 = vpop.f32.mrb[0].mxu0
  %v3976 = vadd.f32 0.0, %v3975
  %v3977 = vpop.f32.mrb[0].mxu0
  %v3978 = vpop.f32.mrb[0].mxu0
  %v3979 = vadd.f32 0.0, %v3978
  %v3980 = vpop.f32.mrb[0].mxu0
  %3981 = vmatprep.mubr.bf16.mxu0 0
  %3982 = vmatmul.mubr.bf16.gmra.mrb[0].mxu0 %v3753
  %v3983 = vpop.f32.mrb[0].mxu0
  %v3984 = vadd.f32 0.0, %v3983
  %v3985 = vpop.f32.mrb[0].mxu0
  %v3986 = vpop.f32.mrb[0].mxu0
  %v3987 = vadd.f32 0.0, %v3986
  %v3988 = vpop.f32.mrb[0].mxu0
  %3989 = vmatprep.mubr.bf16.mxu0 0
  %3990 = vmatmul.mubr.bf16.gmra.mrb[0].mxu0 %v3755
  %v3991 = vpop.f32.mrb[0].mxu0
  %v3992 = vadd.f32 0.0, %v3991
  %v3993 = vpop.f32.mrb[0].mxu0
  %v3994 = vpop.f32.mrb[0].mxu0
  %v3995 = vadd.f32 0.0, %v3994
  %v3996 = vpop.f32.mrb[0].mxu0
  %3997 = vmatprep.mubr.bf16.mxu0 0
  %3998 = vmatmul.mubr.bf16.gmra.mrb[0].mxu0 %v3757
  %v3999 = vpop.f32.mrb[0].mxu0
  %v4000 = vadd.f32 0.0, %v3999
  %v4001 = vpop.f32.mrb[0].mxu0
  %v4002 = vpop.f32.mrb[0].mxu0
  %v4003 = vadd.f32 0.0, %v4002
  %v4004 = vpop.f32.mrb[0].mxu0
  %4005 = vmatprep.mubr.bf16.mxu0 0
  %4006 = vmatmul.mubr.bf16.gmra.mrb[0].mxu0 %v3759
  %v4007 = vpop.f32.mrb[0].mxu0
  %v4008 = vadd.f32 0.0, %v4007
  %v4009 = vpop.f32.mrb[0].mxu0
  %v4010 = vpop.f32.mrb[0].mxu0
  %v4011 = vadd.f32 0.0, %v4010
  %v4012 = vpop.f32.mrb[0].mxu0
  %4013 = vmatprep.mubr.bf16.mxu0 0
  %4014 = vmatmul.mubr.bf16.gmra.mrb[0].mxu0 %v3761
  %v4015 = vpop.f32.mrb[0].mxu0
  %v4016 = vadd.f32 0.0, %v4015
  %v4017 = vpop.f32.mrb[0].mxu0
  %v4018 = vpop.f32.mrb[0].mxu0
  %v4019 = vadd.f32 0.0, %v4018
  %v4020 = vpop.f32.mrb[0].mxu0
  %4021 = vmatprep.mubr.bf16.mxu0 0
  %4022 = vmatmul.mubr.bf16.gmra.mrb[0].mxu0 %v3763
  %v4023 = vpop.f32.mrb[0].mxu0
  %v4024 = vadd.f32 0.0, %v4023
  %v4025 = vpop.f32.mrb[0].mxu0
  %v4026 = vpop.f32.mrb[0].mxu0
  %v4027 = vadd.f32 0.0, %v4026
  %v4028 = vpop.f32.mrb[0].mxu0
  %4029 = vmatprep.mubr.bf16.mxu0 0
  %4030 = vmatmul.mubr.bf16.gmra.mrb[0].mxu0 %v3765
  %v4031 = vpop.f32.mrb[0].mxu0
  %v4032 = vadd.f32 0.0, %v4031
  %v4033 = vpop.f32.mrb[0].mxu0
  %v4034 = vpop.f32.mrb[0].mxu0
  %v4035 = vadd.f32 0.0, %v4034
  %v4036 = vpop.f32.mrb[0].mxu0
  %4037 = vmatprep.mubr.bf16.mxu0 0
  %4038 = vmatmul.mubr.bf16.gmra.mrb[0].mxu0 %v3767
  %v4039 = vpop.f32.mrb[0].mxu0
  %v4040 = vadd.f32 0.0, %v4039
  %v4041 = vpop.f32.mrb[0].mxu0
  %v4042 = vpop.f32.mrb[0].mxu0
  %v4043 = vadd.f32 0.0, %v4042
  %v4044 = vpop.f32.mrb[0].mxu0
  %4045 = vmatprep.mubr.bf16.mxu0 0
  %4046 = vmatmul.mubr.bf16.gmra.mrb[0].mxu0 %v3769
  %v4047 = vpop.f32.mrb[0].mxu0
  %v4048 = vadd.f32 0.0, %v4047
  %v4049 = vpop.f32.mrb[0].mxu0
  %v4050 = vpop.f32.mrb[0].mxu0
  %v4051 = vadd.f32 0.0, %v4050
  %v4052 = vpop.f32.mrb[0].mxu0
  %4053 = vmatprep.mubr.bf16.mxu0 0
  %4054 = vmatmul.mubr.bf16.gmra.mrb[0].mxu0 %v3771
  %v4055 = vpop.f32.mrb[0].mxu0
  %v4056 = vadd.f32 0.0, %v4055
  %v4057 = vpop.f32.mrb[0].mxu0
  %v4058 = vpop.f32.mrb[0].mxu0
  %v4059 = vadd.f32 0.0, %v4058
  %v4060 = vpop.f32.mrb[0].mxu0
  %4061 = vdwg.mxu0
  %v4062 = vld [vmem:[#allocation3] sm:$0xff]
  %v4063 = vld [vmem:[#allocation3 + $0x8] sm:$0xff]
  %v4064 = vld [vmem:[#allocation3 + $0x10] sm:$0xff]
  %v4065 = vld [vmem:[#allocation3 + $0x18] sm:$0xff]
  %v4066 = vld [vmem:[#allocation3 + $0x20] sm:$0xff]
  %v4067 = vld [vmem:[#allocation3 + $0x28] sm:$0xff]
  %v4068 = vld [vmem:[#allocation3 + $0x30] sm:$0xff]
  %v4069 = vld [vmem:[#allocation3 + $0x38] sm:$0xff]
  %v4070 = vld [vmem:[#allocation3 + $0x40] sm:$0xff]
  %v4071 = vld [vmem:[#allocation3 + $0x48] sm:$0xff]
  %v4072 = vld [vmem:[#allocation3 + $0x50] sm:$0xff]
  %v4073 = vld [vmem:[#allocation3 + $0x58] sm:$0xff]
  %v4074 = vld [vmem:[#allocation3 + $0x60] sm:$0xff]
  %v4075 = vld [vmem:[#allocation3 + $0x68] sm:$0xff]
  %v4076 = vld [vmem:[#allocation3 + $0x70] sm:$0xff]
  %v4077 = vld [vmem:[#allocation3 + $0x78] sm:$0xff]
  %v4078 = vld [vmem:[#allocation3 + $0x80] sm:$0xff]
  %v4079 = vld [vmem:[#allocation3 + $0x88] sm:$0xff]
  %v4080 = vld [vmem:[#allocation3 + $0x90] sm:$0xff]
  %v4081 = vld [vmem:[#allocation3 + $0x98] sm:$0xff]
  %v4082 = vld [vmem:[#allocation3 + $0xa0] sm:$0xff]
  %v4083 = vld [vmem:[#allocation3 + $0xa8] sm:$0xff]
  %v4084 = vld [vmem:[#allocation3 + $0xb0] sm:$0xff]
  %v4085 = vld [vmem:[#allocation3 + $0xb8] sm:$0xff]
  %v4086 = vld [vmem:[#allocation3 + $0xc0] sm:$0xff]
  %v4087 = vld [vmem:[#allocation3 + $0xc8] sm:$0xff]
  %v4088 = vld [vmem:[#allocation3 + $0xd0] sm:$0xff]
  %v4089 = vld [vmem:[#allocation3 + $0xd8] sm:$0xff]
  %v4090 = vld [vmem:[#allocation3 + $0xe0] sm:$0xff]
  %v4091 = vld [vmem:[#allocation3 + $0xe8] sm:$0xff]
  %v4092 = vld [vmem:[#allocation3 + $0xf0] sm:$0xff]
  %v4093 = vld [vmem:[#allocation3 + $0xf8] sm:$0xff]
  %v4094 = vld [vmem:[#allocation3 + $0x100] sm:$0xff]
  %v4095 = vld [vmem:[#allocation3 + $0x108] sm:$0xff]
  %v4096 = vld [vmem:[#allocation3 + $0x110] sm:$0xff]
  %v4097 = vld [vmem:[#allocation3 + $0x118] sm:$0xff]
  %v4098 = vld [vmem:[#allocation3 + $0x120] sm:$0xff]
  %v4099 = vld [vmem:[#allocation3 + $0x128] sm:$0xff]
  %v4100 = vld [vmem:[#allocation3 + $0x130] sm:$0xff]
  %v4101 = vld [vmem:[#allocation3 + $0x138] sm:$0xff]
  %v4102 = vld [vmem:[#allocation3 + $0x140] sm:$0xff]
  %v4103 = vld [vmem:[#allocation3 + $0x148] sm:$0xff]
  %v4104 = vld [vmem:[#allocation3 + $0x150] sm:$0xff]
  %v4105 = vld [vmem:[#allocation3 + $0x158] sm:$0xff]
  %v4106 = vld [vmem:[#allocation3 + $0x160] sm:$0xff]
  %v4107 = vld [vmem:[#allocation3 + $0x168] sm:$0xff]
  %v4108 = vld [vmem:[#allocation3 + $0x170] sm:$0xff]
  %v4109 = vld [vmem:[#allocation3 + $0x178] sm:$0xff]
  %v4110 = vld [vmem:[#allocation3 + $0x180] sm:$0xff]
  %v4111 = vld [vmem:[#allocation3 + $0x188] sm:$0xff]
  %v4112 = vld [vmem:[#allocation3 + $0x190] sm:$0xff]
  %v4113 = vld [vmem:[#allocation3 + $0x198] sm:$0xff]
  %v4114 = vld [vmem:[#allocation3 + $0x1a0] sm:$0xff]
  %v4115 = vld [vmem:[#allocation3 + $0x1a8] sm:$0xff]
  %v4116 = vld [vmem:[#allocation3 + $0x1b0] sm:$0xff]
  %v4117 = vld [vmem:[#allocation3 + $0x1b8] sm:$0xff]
  %v4118 = vld [vmem:[#allocation3 + $0x1c0] sm:$0xff]
  %v4119 = vld [vmem:[#allocation3 + $0x1c8] sm:$0xff]
  %v4120 = vld [vmem:[#allocation3 + $0x1d0] sm:$0xff]
  %v4121 = vld [vmem:[#allocation3 + $0x1d8] sm:$0xff]
  %v4122 = vld [vmem:[#allocation3 + $0x1e0] sm:$0xff]
  %v4123 = vld [vmem:[#allocation3 + $0x1e8] sm:$0xff]
  %v4124 = vld [vmem:[#allocation3 + $0x1f0] sm:$0xff]
  %v4125 = vld [vmem:[#allocation3 + $0x1f8] sm:$0xff]
  %v4126 = vadd.f32 %v4062, %v3808
  %v4127 = vadd.f32 %v4063, %v3811
  %v4128 = vadd.f32 %v4064, %v3816
  %v4129 = vadd.f32 %v4065, %v3819
  %v4130 = vadd.f32 %v4066, %v3824
  %v4131 = vadd.f32 %v4067, %v3827
  %v4132 = vadd.f32 %v4068, %v3832
  %v4133 = vadd.f32 %v4069, %v3835
  %v4134 = vadd.f32 %v4070, %v3840
  %v4135 = vadd.f32 %v4071, %v3843
  %v4136 = vadd.f32 %v4072, %v3848
  %v4137 = vadd.f32 %v4073, %v3851
  %v4138 = vadd.f32 %v4074, %v3856
  %v4139 = vadd.f32 %v4075, %v3859
  %v4140 = vadd.f32 %v4076, %v3864
  %v4141 = vadd.f32 %v4077, %v3867
  %v4142 = vadd.f32 %v4078, %v3872
  %v4143 = vadd.f32 %v4079, %v3875
  %v4144 = vadd.f32 %v4080, %v3880
  %v4145 = vadd.f32 %v4081, %v3883
  %v4146 = vadd.f32 %v4082, %v3888
  %v4147 = vadd.f32 %v4083, %v3891
  %v4148 = vadd.f32 %v4084, %v3896
  %v4149 = vadd.f32 %v4085, %v3899
  %v4150 = vadd.f32 %v4086, %v3904
  %v4151 = vadd.f32 %v4087, %v3907
  %v4152 = vadd.f32 %v4088, %v3912
  %v4153 = vadd.f32 %v4089, %v3915
  %v4154 = vadd.f32 %v4090, %v3920
  %v4155 = vadd.f32 %v4091, %v3923
  %v4156 = vadd.f32 %v4092, %v3928
  %v4157 = vadd.f32 %v4093, %v3931
  %v4158 = vadd.f32 %v4094, %v3936
  %v4159 = vadd.f32 %v4095, %v3939
  %v4160 = vadd.f32 %v4096, %v3944
  %v4161 = vadd.f32 %v4097, %v3947
  %v4162 = vadd.f32 %v4098, %v3952
  %v4163 = vadd.f32 %v4099, %v3955
  %v4164 = vadd.f32 %v4100, %v3960
  %v4165 = vadd.f32 %v4101, %v3963
  %v4166 = vadd.f32 %v4102, %v3968
  %v4167 = vadd.f32 %v4103, %v3971
  %v4168 = vadd.f32 %v4104, %v3976
  %v4169 = vadd.f32 %v4105, %v3979
  %v4170 = vadd.f32 %v4106, %v3984
  %v4171 = vadd.f32 %v4107, %v3987
  %v4172 = vadd.f32 %v4108, %v3992
  %v4173 = vadd.f32 %v4109, %v3995
  %v4174 = vadd.f32 %v4110, %v4000
  %v4175 = vadd.f32 %v4111, %v4003
  %v4176 = vadd.f32 %v4112, %v4008
  %v4177 = vadd.f32 %v4113, %v4011
  %v4178 = vadd.f32 %v4114, %v4016
  %v4179 = vadd.f32 %v4115, %v4019
  %v4180 = vadd.f32 %v4116, %v4024
  %v4181 = vadd.f32 %v4117, %v4027
  %v4182 = vadd.f32 %v4118, %v4032
  %v4183 = vadd.f32 %v4119, %v4035
  %v4184 = vadd.f32 %v4120, %v4040
  %v4185 = vadd.f32 %v4121, %v4043
  %v4186 = vadd.f32 %v4122, %v4048
  %v4187 = vadd.f32 %v4123, %v4051
  %v4188 = vadd.f32 %v4124, %v4056
  %v4189 = vadd.f32 %v4125, %v4059
  %4190 = vst.msk [vmem:[#allocation3] sm:$0xff] %vm2024, %v4126
  %4191 = vst.msk [vmem:[#allocation3 + $0x8] sm:$0xff] %vm2024, %v4127
  %4192 = vst.msk [vmem:[#allocation3 + $0x10] sm:$0xff] %vm2024, %v4128
  %4193 = vst.msk [vmem:[#allocation3 + $0x18] sm:$0xff] %vm2024, %v4129
  %4194 = vst.msk [vmem:[#allocation3 + $0x20] sm:$0xff] %vm2024, %v4130
  %4195 = vst.msk [vmem:[#allocation3 + $0x28] sm:$0xff] %vm2024, %v4131
  %4196 = vst.msk [vmem:[#allocation3 + $0x30] sm:$0xff] %vm2024, %v4132
  %4197 = vst.msk [vmem:[#allocation3 + $0x38] sm:$0xff] %vm2024, %v4133
  %4198 = vst.msk [vmem:[#allocation3 + $0x40] sm:$0xff] %vm2024, %v4134
  %4199 = vst.msk [vmem:[#allocation3 + $0x48] sm:$0xff] %vm2024, %v4135
  %4200 = vst.msk [vmem:[#allocation3 + $0x50] sm:$0xff] %vm2024, %v4136
  %4201 = vst.msk [vmem:[#allocation3 + $0x58] sm:$0xff] %vm2024, %v4137
  %4202 = vst.msk [vmem:[#allocation3 + $0x60] sm:$0xff] %vm2024, %v4138
  %4203 = vst.msk [vmem:[#allocation3 + $0x68] sm:$0xff] %vm2024, %v4139
  %4204 = vst.msk [vmem:[#allocation3 + $0x70] sm:$0xff] %vm2024, %v4140
  %4205 = vst.msk [vmem:[#allocation3 + $0x78] sm:$0xff] %vm2024, %v4141
  %4206 = vst.msk [vmem:[#allocation3 + $0x80] sm:$0xff] %vm2024, %v4142
  %4207 = vst.msk [vmem:[#allocation3 + $0x88] sm:$0xff] %vm2024, %v4143
  %4208 = vst.msk [vmem:[#allocation3 + $0x90] sm:$0xff] %vm2024, %v4144
  %4209 = vst.msk [vmem:[#allocation3 + $0x98] sm:$0xff] %vm2024, %v4145
  %4210 = vst.msk [vmem:[#allocation3 + $0xa0] sm:$0xff] %vm2024, %v4146
  %4211 = vst.msk [vmem:[#allocation3 + $0xa8] sm:$0xff] %vm2024, %v4147
  %4212 = vst.msk [vmem:[#allocation3 + $0xb0] sm:$0xff] %vm2024, %v4148
  %4213 = vst.msk [vmem:[#allocation3 + $0xb8] sm:$0xff] %vm2024, %v4149
  %4214 = vst.msk [vmem:[#allocation3 + $0xc0] sm:$0xff] %vm2024, %v4150
  %4215 = vst.msk [vmem:[#allocation3 + $0xc8] sm:$0xff] %vm2024, %v4151
  %4216 = vst.msk [vmem:[#allocation3 + $0xd0] sm:$0xff] %vm2024, %v4152
  %4217 = vst.msk [vmem:[#allocation3 + $0xd8] sm:$0xff] %vm2024, %v4153
  %4218 = vst.msk [vmem:[#allocation3 + $0xe0] sm:$0xff] %vm2024, %v4154
  %4219 = vst.msk [vmem:[#allocation3 + $0xe8] sm:$0xff] %vm2024, %v4155
  %4220 = vst.msk [vmem:[#allocation3 + $0xf0] sm:$0xff] %vm2024, %v4156
  %4221 = vst.msk [vmem:[#allocation3 + $0xf8] sm:$0xff] %vm2024, %v4157
  %4222 = vst.msk [vmem:[#allocation3 + $0x100] sm:$0xff] %vm2024, %v4158
  %4223 = vst.msk [vmem:[#allocation3 + $0x108] sm:$0xff] %vm2024, %v4159
  %4224 = vst.msk [vmem:[#allocation3 + $0x110] sm:$0xff] %vm2024, %v4160
  %4225 = vst.msk [vmem:[#allocation3 + $0x118] sm:$0xff] %vm2024, %v4161
  %4226 = vst.msk [vmem:[#allocation3 + $0x120] sm:$0xff] %vm2024, %v4162
  %4227 = vst.msk [vmem:[#allocation3 + $0x128] sm:$0xff] %vm2024, %v4163
  %4228 = vst.msk [vmem:[#allocation3 + $0x130] sm:$0xff] %vm2024, %v4164
  %4229 = vst.msk [vmem:[#allocation3 + $0x138] sm:$0xff] %vm2024, %v4165
  %4230 = vst.msk [vmem:[#allocation3 + $0x140] sm:$0xff] %vm2024, %v4166
  %4231 = vst.msk [vmem:[#allocation3 + $0x148] sm:$0xff] %vm2024, %v4167
  %4232 = vst.msk [vmem:[#allocation3 + $0x150] sm:$0xff] %vm2024, %v4168
  %4233 = vst.msk [vmem:[#allocation3 + $0x158] sm:$0xff] %vm2024, %v4169
  %4234 = vst.msk [vmem:[#allocation3 + $0x160] sm:$0xff] %vm2024, %v4170
  %4235 = vst.msk [vmem:[#allocation3 + $0x168] sm:$0xff] %vm2024, %v4171
  %4236 = vst.msk [vmem:[#allocation3 + $0x170] sm:$0xff] %vm2024, %v4172
  %4237 = vst.msk [vmem:[#allocation3 + $0x178] sm:$0xff] %vm2024, %v4173
  %4238 = vst.msk [vmem:[#allocation3 + $0x180] sm:$0xff] %vm2024, %v4174
  %4239 = vst.msk [vmem:[#allocation3 + $0x188] sm:$0xff] %vm2024, %v4175
  %4240 = vst.msk [vmem:[#allocation3 + $0x190] sm:$0xff] %vm2024, %v4176
  %4241 = vst.msk [vmem:[#allocation3 + $0x198] sm:$0xff] %vm2024, %v4177
  %4242 = vst.msk [vmem:[#allocation3 + $0x1a0] sm:$0xff] %vm2024, %v4178
  %4243 = vst.msk [vmem:[#allocation3 + $0x1a8] sm:$0xff] %vm2024, %v4179
  %4244 = vst.msk [vmem:[#allocation3 + $0x1b0] sm:$0xff] %vm2024, %v4180
  %4245 = vst.msk [vmem:[#allocation3 + $0x1b8] sm:$0xff] %vm2024, %v4181
  %4246 = vst.msk [vmem:[#allocation3 + $0x1c0] sm:$0xff] %vm2024, %v4182
  %4247 = vst.msk [vmem:[#allocation3 + $0x1c8] sm:$0xff] %vm2024, %v4183
  %4248 = vst.msk [vmem:[#allocation3 + $0x1d0] sm:$0xff] %vm2024, %v4184
  %4249 = vst.msk [vmem:[#allocation3 + $0x1d8] sm:$0xff] %vm2024, %v4185
  %4250 = vst.msk [vmem:[#allocation3 + $0x1e0] sm:$0xff] %vm2024, %v4186
  %4251 = vst.msk [vmem:[#allocation3 + $0x1e8] sm:$0xff] %vm2024, %v4187
  %4252 = vst.msk [vmem:[#allocation3 + $0x1f0] sm:$0xff] %vm2024, %v4188
  %4253 = vst.msk [vmem:[#allocation3 + $0x1f8] sm:$0xff] %vm2024, %v4189
  %s4254 = scalar_lea.vmem [#allocation2], 24
  %v4255 = vld [vmem:[%s4254] sm:$0xf]
  %v4256 = vld [vmem:[%s4254 + $0x4] sm:$0xf]
  %v4257 = vld [vmem:[%s4254 + $0x8] sm:$0x1]
  %v4258 = vld [vmem:[%s4254 + $0xc] sm:$0xf]
  %v4259 = vld [vmem:[%s4254 + $0x10] sm:$0xf]
  %v4260 = vld [vmem:[%s4254 + $0x14] sm:$0x1]
  %v4261 = vld [vmem:[%s4254 + $0x18] sm:$0xf]
  %v4262 = vld [vmem:[%s4254 + $0x1c] sm:$0xf]
  %v4263 = vld [vmem:[%s4254 + $0x20] sm:$0x1]
  %v4264 = vld [vmem:[%s4254 + $0x24] sm:$0xf]
  %v4265 = vld [vmem:[%s4254 + $0x28] sm:$0xf]
  %v4266 = vld [vmem:[%s4254 + $0x2c] sm:$0x1]
  %v4267 = vld [vmem:[%s4254 + $0x30] sm:$0xf]
  %v4268 = vld [vmem:[%s4254 + $0x34] sm:$0xf]
  %v4269 = vld [vmem:[%s4254 + $0x38] sm:$0x1]
  %v4270 = vld [vmem:[%s4254 + $0x3c] sm:$0xf]
  %v4271 = vld [vmem:[%s4254 + $0x40] sm:$0xf]
  %v4272 = vld [vmem:[%s4254 + $0x44] sm:$0x1]
  %v4273 = vld [vmem:[%s4254 + $0x48] sm:$0xf]
  %v4274 = vld [vmem:[%s4254 + $0x4c] sm:$0xf]
  %v4275 = vld [vmem:[%s4254 + $0x50] sm:$0x1]
  %v4276 = vld [vmem:[%s4254 + $0x54] sm:$0xf]
  %v4277 = vld [vmem:[%s4254 + $0x58] sm:$0xf]
  %v4278 = vld [vmem:[%s4254 + $0x5c] sm:$0x1]
  %v4279 = vld [vmem:[%s4254 + $0x60] sm:$0xf]
  %v4280 = vld [vmem:[%s4254 + $0x64] sm:$0xf]
  %v4281 = vld [vmem:[%s4254 + $0x68] sm:$0x1]
  %v4282 = vld [vmem:[%s4254 + $0x6c] sm:$0xf]
  %v4283 = vld [vmem:[%s4254 + $0x70] sm:$0xf]
  %v4284 = vld [vmem:[%s4254 + $0x74] sm:$0x1]
  %v4285 = vld [vmem:[%s4254 + $0x78] sm:$0xf]
  %v4286 = vld [vmem:[%s4254 + $0x7c] sm:$0xf]
  %v4287 = vld [vmem:[%s4254 + $0x80] sm:$0x1]
  %v4288 = vld [vmem:[%s4254 + $0x84] sm:$0xf]
  %v4289 = vld [vmem:[%s4254 + $0x88] sm:$0xf]
  %v4290 = vld [vmem:[%s4254 + $0x8c] sm:$0x1]
  %v4291 = vld [vmem:[%s4254 + $0x90] sm:$0xf]
  %v4292 = vld [vmem:[%s4254 + $0x94] sm:$0xf]
  %v4293 = vld [vmem:[%s4254 + $0x98] sm:$0x1]
  %v4294 = vld [vmem:[%s4254 + $0x9c] sm:$0xf]
  %v4295 = vld [vmem:[%s4254 + $0xa0] sm:$0xf]
  %v4296 = vld [vmem:[%s4254 + $0xa4] sm:$0x1]
  %v4297 = vld [vmem:[%s4254 + $0xa8] sm:$0xf]
  %v4298 = vld [vmem:[%s4254 + $0xac] sm:$0xf]
  %v4299 = vld [vmem:[%s4254 + $0xb0] sm:$0x1]
  %v4300 = vld [vmem:[%s4254 + $0xb4] sm:$0xf]
  %v4301 = vld [vmem:[%s4254 + $0xb8] sm:$0xf]
  %v4302 = vld [vmem:[%s4254 + $0xbc] sm:$0x1]
  %v4303 = vld [vmem:[%s4254 + $0xd8] sm:$0xf]
  %v4304 = vld [vmem:[%s4254 + $0xdc] sm:$0xf]
  %v4305 = vld [vmem:[%s4254 + $0xe0] sm:$0x1]
  %v4306 = vld [vmem:[%s4254 + $0xe4] sm:$0xf]
  %v4307 = vld [vmem:[%s4254 + $0xe8] sm:$0xf]
  %v4308 = vld [vmem:[%s4254 + $0xec] sm:$0x1]
  %v4309 = vld [vmem:[%s4254 + $0xf0] sm:$0xf]
  %v4310 = vld [vmem:[%s4254 + $0xf4] sm:$0xf]
  %v4311 = vld [vmem:[%s4254 + $0xf8] sm:$0x1]
  %v4312 = vld [vmem:[%s4254 + $0xfc] sm:$0xf]
  %v4313 = vld [vmem:[%s4254 + $0x100] sm:$0xf]
  %v4314 = vld [vmem:[%s4254 + $0x104] sm:$0x1]
  %v4315 = vld [vmem:[%s4254 + $0x108] sm:$0xf]
  %v4316 = vld [vmem:[%s4254 + $0x10c] sm:$0xf]
  %v4317 = vld [vmem:[%s4254 + $0x110] sm:$0x1]
  %v4318 = vld [vmem:[%s4254 + $0x114] sm:$0xf]
  %v4319 = vld [vmem:[%s4254 + $0x118] sm:$0xf]
  %v4320 = vld [vmem:[%s4254 + $0x11c] sm:$0x1]
  %v4321 = vld [vmem:[%s4254 + $0x120] sm:$0xf]
  %v4322 = vld [vmem:[%s4254 + $0x124] sm:$0xf]
  %v4323 = vld [vmem:[%s4254 + $0x128] sm:$0x1]
  %v4324 = vld [vmem:[%s4254 + $0x12c] sm:$0xf]
  %v4325 = vld [vmem:[%s4254 + $0x130] sm:$0xf]
  %v4326 = vld [vmem:[%s4254 + $0x134] sm:$0x1]
  %v4327 = vld [vmem:[%s4254 + $0x138] sm:$0xf]
  %v4328 = vld [vmem:[%s4254 + $0x13c] sm:$0xf]
  %v4329 = vld [vmem:[%s4254 + $0x140] sm:$0x1]
  %v4330 = vld [vmem:[%s4254 + $0x144] sm:$0xf]
  %v4331 = vld [vmem:[%s4254 + $0x148] sm:$0xf]
  %v4332 = vld [vmem:[%s4254 + $0x14c] sm:$0x1]
  %v4333 = vld [vmem:[%s4254 + $0x150] sm:$0xf]
  %v4334 = vld [vmem:[%s4254 + $0x154] sm:$0xf]
  %v4335 = vld [vmem:[%s4254 + $0x158] sm:$0x1]
  %v4336 = vld [vmem:[%s4254 + $0x15c] sm:$0xf]
  %v4337 = vld [vmem:[%s4254 + $0x160] sm:$0xf]
  %v4338 = vld [vmem:[%s4254 + $0x164] sm:$0x1]
  %v4339 = vld [vmem:[%s4254 + $0x168] sm:$0xf]
  %v4340 = vld [vmem:[%s4254 + $0x16c] sm:$0xf]
  %v4341 = vld [vmem:[%s4254 + $0x170] sm:$0x1]
  %v4342 = vld [vmem:[%s4254 + $0x174] sm:$0xf]
  %v4343 = vld [vmem:[%s4254 + $0x178] sm:$0xf]
  %v4344 = vld [vmem:[%s4254 + $0x17c] sm:$0x1]
  %v4345 = vld [vmem:[%s4254 + $0x180] sm:$0xf]
  %v4346 = vld [vmem:[%s4254 + $0x184] sm:$0xf]
  %v4347 = vld [vmem:[%s4254 + $0x188] sm:$0x1]
  %v4348 = vld [vmem:[%s4254 + $0x18c] sm:$0xf]
  %v4349 = vld [vmem:[%s4254 + $0x190] sm:$0xf]
  %v4350 = vld [vmem:[%s4254 + $0x194] sm:$0x1]
  %v4415 = vunpack.c.l.b16 %v4255
  %v4416 = vunpack.c.l.b16 %v4256
  %v4417 = vunpack.c.l.b16 %v4258
  %v4418 = vunpack.c.l.b16 %v4259
  %v4419 = vunpack.c.l.b16 %v4261
  %v4420 = vunpack.c.l.b16 %v4262
  %v4421 = vunpack.c.l.b16 %v4264
  %v4422 = vunpack.c.l.b16 %v4265
  %v4423 = vunpack.c.l.b16 %v4267
  %v4424 = vunpack.c.l.b16 %v4268
  %v4425 = vunpack.c.l.b16 %v4270
  %v4426 = vunpack.c.l.b16 %v4271
  %v4427 = vunpack.c.l.b16 %v4273
  %v4428 = vunpack.c.l.b16 %v4274
  %v4429 = vunpack.c.l.b16 %v4276
  %v4430 = vunpack.c.l.b16 %v4277
  %v4431 = vunpack.c.l.b16 %v4279
  %v4432 = vunpack.c.l.b16 %v4280
  %v4433 = vunpack.c.l.b16 %v4282
  %v4434 = vunpack.c.l.b16 %v4283
  %v4435 = vunpack.c.l.b16 %v4285
  %v4436 = vunpack.c.l.b16 %v4286
  %v4437 = vunpack.c.l.b16 %v4288
  %v4438 = vunpack.c.l.b16 %v4289
  %v4439 = vunpack.c.l.b16 %v4291
  %v4440 = vunpack.c.l.b16 %v4292
  %v4441 = vunpack.c.l.b16 %v4294
  %v4442 = vunpack.c.l.b16 %v4295
  %v4443 = vunpack.c.l.b16 %v4297
  %v4444 = vunpack.c.l.b16 %v4298
  %v4445 = vunpack.c.l.b16 %v4300
  %v4446 = vunpack.c.l.b16 %v4301
  %v4447 = vunpack.c.l.b16 %v4303
  %v4448 = vunpack.c.l.b16 %v4304
  %v4449 = vunpack.c.l.b16 %v4306
  %v4450 = vunpack.c.l.b16 %v4307
  %v4451 = vunpack.c.l.b16 %v4309
  %v4452 = vunpack.c.l.b16 %v4310
  %v4453 = vunpack.c.l.b16 %v4312
  %v4454 = vunpack.c.l.b16 %v4313
  %v4455 = vunpack.c.l.b16 %v4315
  %v4456 = vunpack.c.l.b16 %v4316
  %v4457 = vunpack.c.l.b16 %v4318
  %v4458 = vunpack.c.l.b16 %v4319
  %v4459 = vunpack.c.l.b16 %v4321
  %v4460 = vunpack.c.l.b16 %v4322
  %v4461 = vunpack.c.l.b16 %v4324
  %v4462 = vunpack.c.l.b16 %v4325
  %v4463 = vunpack.c.l.b16 %v4327
  %v4464 = vunpack.c.l.b16 %v4328
  %v4465 = vunpack.c.l.b16 %v4330
  %v4466 = vunpack.c.l.b16 %v4331
  %v4467 = vunpack.c.l.b16 %v4333
  %v4468 = vunpack.c.l.b16 %v4334
  %v4469 = vunpack.c.l.b16 %v4336
  %v4470 = vunpack.c.l.b16 %v4337
  %v4471 = vunpack.c.l.b16 %v4339
  %v4472 = vunpack.c.l.b16 %v4340
  %v4473 = vunpack.c.l.b16 %v4342
  %v4474 = vunpack.c.l.b16 %v4343
  %v4475 = vunpack.c.l.b16 %v4345
  %v4476 = vunpack.c.l.b16 %v4346
  %v4477 = vunpack.c.l.b16 %v4348
  %v4478 = vunpack.c.l.b16 %v4349
  %v4479 = vpack.c.b16 %v4416, %v4415
  %v4480 = vpack.c.b16 %v4418, %v4417
  %v4481 = vpack.c.b16 %v4420, %v4419
  %v4482 = vpack.c.b16 %v4422, %v4421
  %v4483 = vpack.c.b16 %v4424, %v4423
  %v4484 = vpack.c.b16 %v4426, %v4425
  %v4485 = vpack.c.b16 %v4428, %v4427
  %v4486 = vpack.c.b16 %v4430, %v4429
  %v4487 = vpack.c.b16 %v4432, %v4431
  %v4488 = vpack.c.b16 %v4434, %v4433
  %v4489 = vpack.c.b16 %v4436, %v4435
  %v4490 = vpack.c.b16 %v4438, %v4437
  %v4491 = vpack.c.b16 %v4440, %v4439
  %v4492 = vpack.c.b16 %v4442, %v4441
  %v4493 = vpack.c.b16 %v4444, %v4443
  %v4494 = vpack.c.b16 %v4446, %v4445
  %v4495 = vpack.c.b16 %v4448, %v4447
  %v4496 = vpack.c.b16 %v4450, %v4449
  %v4497 = vpack.c.b16 %v4452, %v4451
  %v4498 = vpack.c.b16 %v4454, %v4453
  %v4499 = vpack.c.b16 %v4456, %v4455
  %v4500 = vpack.c.b16 %v4458, %v4457
  %v4501 = vpack.c.b16 %v4460, %v4459
  %v4502 = vpack.c.b16 %v4462, %v4461
  %v4503 = vpack.c.b16 %v4464, %v4463
  %v4504 = vpack.c.b16 %v4466, %v4465
  %v4505 = vpack.c.b16 %v4468, %v4467
  %v4506 = vpack.c.b16 %v4470, %v4469
  %v4507 = vpack.c.b16 %v4472, %v4471
  %v4508 = vpack.c.b16 %v4474, %v4473
  %v4509 = vpack.c.b16 %v4476, %v4475
  %v4510 = vpack.c.b16 %v4478, %v4477
  %v4543 = vunpack.c.l.b16 %v4257
  %v4544 = vunpack.c.l.b16 %v4260
  %v4545 = vunpack.c.l.b16 %v4263
  %v4546 = vunpack.c.l.b16 %v4266
  %v4547 = vunpack.c.l.b16 %v4269
  %v4548 = vunpack.c.l.b16 %v4272
  %v4549 = vunpack.c.l.b16 %v4275
  %v4550 = vunpack.c.l.b16 %v4278
  %v4551 = vunpack.c.l.b16 %v4281
  %v4552 = vunpack.c.l.b16 %v4284
  %v4553 = vunpack.c.l.b16 %v4287
  %v4554 = vunpack.c.l.b16 %v4290
  %v4555 = vunpack.c.l.b16 %v4293
  %v4556 = vunpack.c.l.b16 %v4296
  %v4557 = vunpack.c.l.b16 %v4299
  %v4558 = vunpack.c.l.b16 %v4302
  %v4559 = vunpack.c.l.b16 %v4305
  %v4560 = vunpack.c.l.b16 %v4308
  %v4561 = vunpack.c.l.b16 %v4311
  %v4562 = vunpack.c.l.b16 %v4314
  %v4563 = vunpack.c.l.b16 %v4317
  %v4564 = vunpack.c.l.b16 %v4320
  %v4565 = vunpack.c.l.b16 %v4323
  %v4566 = vunpack.c.l.b16 %v4326
  %v4567 = vunpack.c.l.b16 %v4329
  %v4568 = vunpack.c.l.b16 %v4332
  %v4569 = vunpack.c.l.b16 %v4335
  %v4570 = vunpack.c.l.b16 %v4338
  %v4571 = vunpack.c.l.b16 %v4341
  %v4572 = vunpack.c.l.b16 %v4344
  %v4573 = vunpack.c.l.b16 %v4347
  %v4574 = vunpack.c.l.b16 %v4350
  %v4575 = vpack.c.b16 %v4543, %v4543
  %v4576 = vpack.c.b16 %v4544, %v4544
  %v4577 = vpack.c.b16 %v4545, %v4545
  %v4578 = vpack.c.b16 %v4546, %v4546
  %v4579 = vpack.c.b16 %v4547, %v4547
  %v4580 = vpack.c.b16 %v4548, %v4548
  %v4581 = vpack.c.b16 %v4549, %v4549
  %v4582 = vpack.c.b16 %v4550, %v4550
  %v4583 = vpack.c.b16 %v4551, %v4551
  %v4584 = vpack.c.b16 %v4552, %v4552
  %v4585 = vpack.c.b16 %v4553, %v4553
  %v4586 = vpack.c.b16 %v4554, %v4554
  %v4587 = vpack.c.b16 %v4555, %v4555
  %v4588 = vpack.c.b16 %v4556, %v4556
  %v4589 = vpack.c.b16 %v4557, %v4557
  %v4590 = vpack.c.b16 %v4558, %v4558
  %v4591 = vpack.c.b16 %v4559, %v4559
  %v4592 = vpack.c.b16 %v4560, %v4560
  %v4593 = vpack.c.b16 %v4561, %v4561
  %v4594 = vpack.c.b16 %v4562, %v4562
  %v4595 = vpack.c.b16 %v4563, %v4563
  %v4596 = vpack.c.b16 %v4564, %v4564
  %v4597 = vpack.c.b16 %v4565, %v4565
  %v4598 = vpack.c.b16 %v4566, %v4566
  %v4599 = vpack.c.b16 %v4567, %v4567
  %v4600 = vpack.c.b16 %v4568, %v4568
  %v4601 = vpack.c.b16 %v4569, %v4569
  %v4602 = vpack.c.b16 %v4570, %v4570
  %v4603 = vpack.c.b16 %v4571, %v4571
  %v4604 = vpack.c.b16 %v4572, %v4572
  %v4605 = vpack.c.b16 %v4573, %v4573
  %v4606 = vpack.c.b16 %v4574, %v4574
  %v4608 = vshrl.u32 %v4479, 16
  %v4610 = vshll.u32 %v4479, 16
  %v4612 = vrot.slane %v4610, 1
  %v4613 = vor.u32 %v4608, %v4612
  %v4615 = vshll.u32 %v4575, 16
  %v4617 = vrot.slane %v4615, 1
  %v4618 = vsel %vm1414, %v4613, %v4617
  %v4620 = vshrl.u32 %v4480, 16
  %v4622 = vshll.u32 %v4480, 16
  %v4624 = vrot.slane %v4622, 1
  %v4625 = vor.u32 %v4620, %v4624
  %v4627 = vshll.u32 %v4576, 16
  %v4629 = vrot.slane %v4627, 1
  %v4630 = vsel %vm1414, %v4625, %v4629
  %v4632 = vshrl.u32 %v4481, 16
  %v4634 = vshll.u32 %v4481, 16
  %v4636 = vrot.slane %v4634, 1
  %v4637 = vor.u32 %v4632, %v4636
  %v4639 = vshll.u32 %v4577, 16
  %v4641 = vrot.slane %v4639, 1
  %v4642 = vsel %vm1414, %v4637, %v4641
  %v4644 = vshrl.u32 %v4482, 16
  %v4646 = vshll.u32 %v4482, 16
  %v4648 = vrot.slane %v4646, 1
  %v4649 = vor.u32 %v4644, %v4648
  %v4651 = vshll.u32 %v4578, 16
  %v4653 = vrot.slane %v4651, 1
  %v4654 = vsel %vm1414, %v4649, %v4653
  %v4656 = vshrl.u32 %v4483, 16
  %v4658 = vshll.u32 %v4483, 16
  %v4660 = vrot.slane %v4658, 1
  %v4661 = vor.u32 %v4656, %v4660
  %v4663 = vshll.u32 %v4579, 16
  %v4665 = vrot.slane %v4663, 1
  %v4666 = vsel %vm1414, %v4661, %v4665
  %v4668 = vshrl.u32 %v4484, 16
  %v4670 = vshll.u32 %v4484, 16
  %v4672 = vrot.slane %v4670, 1
  %v4673 = vor.u32 %v4668, %v4672
  %v4675 = vshll.u32 %v4580, 16
  %v4677 = vrot.slane %v4675, 1
  %v4678 = vsel %vm1414, %v4673, %v4677
  %v4680 = vshrl.u32 %v4485, 16
  %v4682 = vshll.u32 %v4485, 16
  %v4684 = vrot.slane %v4682, 1
  %v4685 = vor.u32 %v4680, %v4684
  %v4687 = vshll.u32 %v4581, 16
  %v4689 = vrot.slane %v4687, 1
  %v4690 = vsel %vm1414, %v4685, %v4689
  %v4692 = vshrl.u32 %v4486, 16
  %v4694 = vshll.u32 %v4486, 16
  %v4696 = vrot.slane %v4694, 1
  %v4697 = vor.u32 %v4692, %v4696
  %v4699 = vshll.u32 %v4582, 16
  %v4701 = vrot.slane %v4699, 1
  %v4702 = vsel %vm1414, %v4697, %v4701
  %v4704 = vshrl.u32 %v4487, 16
  %v4706 = vshll.u32 %v4487, 16
  %v4708 = vrot.slane %v4706, 1
  %v4709 = vor.u32 %v4704, %v4708
  %v4711 = vshll.u32 %v4583, 16
  %v4713 = vrot.slane %v4711, 1
  %v4714 = vsel %vm1414, %v4709, %v4713
  %v4716 = vshrl.u32 %v4488, 16
  %v4718 = vshll.u32 %v4488, 16
  %v4720 = vrot.slane %v4718, 1
  %v4721 = vor.u32 %v4716, %v4720
  %v4723 = vshll.u32 %v4584, 16
  %v4725 = vrot.slane %v4723, 1
  %v4726 = vsel %vm1414, %v4721, %v4725
  %v4728 = vshrl.u32 %v4489, 16
  %v4730 = vshll.u32 %v4489, 16
  %v4732 = vrot.slane %v4730, 1
  %v4733 = vor.u32 %v4728, %v4732
  %v4735 = vshll.u32 %v4585, 16
  %v4737 = vrot.slane %v4735, 1
  %v4738 = vsel %vm1414, %v4733, %v4737
  %v4740 = vshrl.u32 %v4490, 16
  %v4742 = vshll.u32 %v4490, 16
  %v4744 = vrot.slane %v4742, 1
  %v4745 = vor.u32 %v4740, %v4744
  %v4747 = vshll.u32 %v4586, 16
  %v4749 = vrot.slane %v4747, 1
  %v4750 = vsel %vm1414, %v4745, %v4749
  %v4752 = vshrl.u32 %v4491, 16
  %v4754 = vshll.u32 %v4491, 16
  %v4756 = vrot.slane %v4754, 1
  %v4757 = vor.u32 %v4752, %v4756
  %v4759 = vshll.u32 %v4587, 16
  %v4761 = vrot.slane %v4759, 1
  %v4762 = vsel %vm1414, %v4757, %v4761
  %v4764 = vshrl.u32 %v4492, 16
  %v4766 = vshll.u32 %v4492, 16
  %v4768 = vrot.slane %v4766, 1
  %v4769 = vor.u32 %v4764, %v4768
  %v4771 = vshll.u32 %v4588, 16
  %v4773 = vrot.slane %v4771, 1
  %v4774 = vsel %vm1414, %v4769, %v4773
  %v4776 = vshrl.u32 %v4493, 16
  %v4778 = vshll.u32 %v4493, 16
  %v4780 = vrot.slane %v4778, 1
  %v4781 = vor.u32 %v4776, %v4780
  %v4783 = vshll.u32 %v4589, 16
  %v4785 = vrot.slane %v4783, 1
  %v4786 = vsel %vm1414, %v4781, %v4785
  %v4788 = vshrl.u32 %v4494, 16
  %v4790 = vshll.u32 %v4494, 16
  %v4792 = vrot.slane %v4790, 1
  %v4793 = vor.u32 %v4788, %v4792
  %v4795 = vshll.u32 %v4590, 16
  %v4797 = vrot.slane %v4795, 1
  %v4798 = vsel %vm1414, %v4793, %v4797
  %v4800 = vshrl.u32 %v4495, 16
  %v4802 = vshll.u32 %v4495, 16
  %v4804 = vrot.slane %v4802, 1
  %v4805 = vor.u32 %v4800, %v4804
  %v4807 = vshll.u32 %v4591, 16
  %v4809 = vrot.slane %v4807, 1
  %v4810 = vsel %vm1414, %v4805, %v4809
  %v4812 = vshrl.u32 %v4496, 16
  %v4814 = vshll.u32 %v4496, 16
  %v4816 = vrot.slane %v4814, 1
  %v4817 = vor.u32 %v4812, %v4816
  %v4819 = vshll.u32 %v4592, 16
  %v4821 = vrot.slane %v4819, 1
  %v4822 = vsel %vm1414, %v4817, %v4821
  %v4824 = vshrl.u32 %v4497, 16
  %v4826 = vshll.u32 %v4497, 16
  %v4828 = vrot.slane %v4826, 1
  %v4829 = vor.u32 %v4824, %v4828
  %v4831 = vshll.u32 %v4593, 16
  %v4833 = vrot.slane %v4831, 1
  %v4834 = vsel %vm1414, %v4829, %v4833
  %v4836 = vshrl.u32 %v4498, 16
  %v4838 = vshll.u32 %v4498, 16
  %v4840 = vrot.slane %v4838, 1
  %v4841 = vor.u32 %v4836, %v4840
  %v4843 = vshll.u32 %v4594, 16
  %v4845 = vrot.slane %v4843, 1
  %v4846 = vsel %vm1414, %v4841, %v4845
  %v4848 = vshrl.u32 %v4499, 16
  %v4850 = vshll.u32 %v4499, 16
  %v4852 = vrot.slane %v4850, 1
  %v4853 = vor.u32 %v4848, %v4852
  %v4855 = vshll.u32 %v4595, 16
  %v4857 = vrot.slane %v4855, 1
  %v4858 = vsel %vm1414, %v4853, %v4857
  %v4860 = vshrl.u32 %v4500, 16
  %v4862 = vshll.u32 %v4500, 16
  %v4864 = vrot.slane %v4862, 1
  %v4865 = vor.u32 %v4860, %v4864
  %v4867 = vshll.u32 %v4596, 16
  %v4869 = vrot.slane %v4867, 1
  %v4870 = vsel %vm1414, %v4865, %v4869
  %v4872 = vshrl.u32 %v4501, 16
  %v4874 = vshll.u32 %v4501, 16
  %v4876 = vrot.slane %v4874, 1
  %v4877 = vor.u32 %v4872, %v4876
  %v4879 = vshll.u32 %v4597, 16
  %v4881 = vrot.slane %v4879, 1
  %v4882 = vsel %vm1414, %v4877, %v4881
  %v4884 = vshrl.u32 %v4502, 16
  %v4886 = vshll.u32 %v4502, 16
  %v4888 = vrot.slane %v4886, 1
  %v4889 = vor.u32 %v4884, %v4888
  %v4891 = vshll.u32 %v4598, 16
  %v4893 = vrot.slane %v4891, 1
  %v4894 = vsel %vm1414, %v4889, %v4893
  %v4896 = vshrl.u32 %v4503, 16
  %v4898 = vshll.u32 %v4503, 16
  %v4900 = vrot.slane %v4898, 1
  %v4901 = vor.u32 %v4896, %v4900
  %v4903 = vshll.u32 %v4599, 16
  %v4905 = vrot.slane %v4903, 1
  %v4906 = vsel %vm1414, %v4901, %v4905
  %v4908 = vshrl.u32 %v4504, 16
  %v4910 = vshll.u32 %v4504, 16
  %v4912 = vrot.slane %v4910, 1
  %v4913 = vor.u32 %v4908, %v4912
  %v4915 = vshll.u32 %v4600, 16
  %v4917 = vrot.slane %v4915, 1
  %v4918 = vsel %vm1414, %v4913, %v4917
  %v4920 = vshrl.u32 %v4505, 16
  %v4922 = vshll.u32 %v4505, 16
  %v4924 = vrot.slane %v4922, 1
  %v4925 = vor.u32 %v4920, %v4924
  %v4927 = vshll.u32 %v4601, 16
  %v4929 = vrot.slane %v4927, 1
  %v4930 = vsel %vm1414, %v4925, %v4929
  %v4932 = vshrl.u32 %v4506, 16
  %v4934 = vshll.u32 %v4506, 16
  %v4936 = vrot.slane %v4934, 1
  %v4937 = vor.u32 %v4932, %v4936
  %v4939 = vshll.u32 %v4602, 16
  %v4941 = vrot.slane %v4939, 1
  %v4942 = vsel %vm1414, %v4937, %v4941
  %v4944 = vshrl.u32 %v4507, 16
  %v4946 = vshll.u32 %v4507, 16
  %v4948 = vrot.slane %v4946, 1
  %v4949 = vor.u32 %v4944, %v4948
  %v4951 = vshll.u32 %v4603, 16
  %v4953 = vrot.slane %v4951, 1
  %v4954 = vsel %vm1414, %v4949, %v4953
  %v4956 = vshrl.u32 %v4508, 16
  %v4958 = vshll.u32 %v4508, 16
  %v4960 = vrot.slane %v4958, 1
  %v4961 = vor.u32 %v4956, %v4960
  %v4963 = vshll.u32 %v4604, 16
  %v4965 = vrot.slane %v4963, 1
  %v4966 = vsel %vm1414, %v4961, %v4965
  %v4968 = vshrl.u32 %v4509, 16
  %v4970 = vshll.u32 %v4509, 16
  %v4972 = vrot.slane %v4970, 1
  %v4973 = vor.u32 %v4968, %v4972
  %v4975 = vshll.u32 %v4605, 16
  %v4977 = vrot.slane %v4975, 1
  %v4978 = vsel %vm1414, %v4973, %v4977
  %v4980 = vshrl.u32 %v4510, 16
  %v4982 = vshll.u32 %v4510, 16
  %v4984 = vrot.slane %v4982, 1
  %v4985 = vor.u32 %v4980, %v4984
  %v4987 = vshll.u32 %v4606, 16
  %v4989 = vrot.slane %v4987, 1
  %v4990 = vsel %vm1414, %v4985, %v4989
  %4991 = vrot.lane.b32.xlu0 %v4618, 16
  %v4992 = vpop.permute.xlu0 %4991
  %4993 = vrot.lane.b32.xlu0 %v4630, 16
  %v4994 = vpop.permute.xlu0 %4993
  %4995 = vrot.lane.b32.xlu0 %v4642, 16
  %v4996 = vpop.permute.xlu0 %4995
  %4997 = vrot.lane.b32.xlu0 %v4654, 16
  %v4998 = vpop.permute.xlu0 %4997
  %4999 = vrot.lane.b32.xlu0 %v4666, 16
  %v5000 = vpop.permute.xlu0 %4999
  %5001 = vrot.lane.b32.xlu0 %v4678, 16
  %v5002 = vpop.permute.xlu0 %5001
  %5003 = vrot.lane.b32.xlu0 %v4690, 16
  %v5004 = vpop.permute.xlu0 %5003
  %5005 = vrot.lane.b32.xlu0 %v4702, 16
  %v5006 = vpop.permute.xlu0 %5005
  %5007 = vrot.lane.b32.xlu0 %v4714, 16
  %v5008 = vpop.permute.xlu0 %5007
  %5009 = vrot.lane.b32.xlu0 %v4726, 16
  %v5010 = vpop.permute.xlu0 %5009
  %5011 = vrot.lane.b32.xlu0 %v4738, 16
  %v5012 = vpop.permute.xlu0 %5011
  %5013 = vrot.lane.b32.xlu0 %v4750, 16
  %v5014 = vpop.permute.xlu0 %5013
  %5015 = vrot.lane.b32.xlu0 %v4762, 16
  %v5016 = vpop.permute.xlu0 %5015
  %5017 = vrot.lane.b32.xlu0 %v4774, 16
  %v5018 = vpop.permute.xlu0 %5017
  %5019 = vrot.lane.b32.xlu0 %v4786, 16
  %v5020 = vpop.permute.xlu0 %5019
  %5021 = vrot.lane.b32.xlu0 %v4798, 16
  %v5022 = vpop.permute.xlu0 %5021
  %5023 = vrot.lane.b32.xlu0 %v4810, 16
  %v5024 = vpop.permute.xlu0 %5023
  %5025 = vrot.lane.b32.xlu0 %v4822, 16
  %v5026 = vpop.permute.xlu0 %5025
  %5027 = vrot.lane.b32.xlu0 %v4834, 16
  %v5028 = vpop.permute.xlu0 %5027
  %5029 = vrot.lane.b32.xlu0 %v4846, 16
  %v5030 = vpop.permute.xlu0 %5029
  %5031 = vrot.lane.b32.xlu0 %v4858, 16
  %v5032 = vpop.permute.xlu0 %5031
  %5033 = vrot.lane.b32.xlu0 %v4870, 16
  %v5034 = vpop.permute.xlu0 %5033
  %5035 = vrot.lane.b32.xlu0 %v4882, 16
  %v5036 = vpop.permute.xlu0 %5035
  %5037 = vrot.lane.b32.xlu0 %v4894, 16
  %v5038 = vpop.permute.xlu0 %5037
  %5039 = vrot.lane.b32.xlu0 %v4906, 16
  %v5040 = vpop.permute.xlu0 %5039
  %5041 = vrot.lane.b32.xlu0 %v4918, 16
  %v5042 = vpop.permute.xlu0 %5041
  %5043 = vrot.lane.b32.xlu0 %v4930, 16
  %v5044 = vpop.permute.xlu0 %5043
  %5045 = vrot.lane.b32.xlu0 %v4942, 16
  %v5046 = vpop.permute.xlu0 %5045
  %5047 = vrot.lane.b32.xlu0 %v4954, 16
  %v5048 = vpop.permute.xlu0 %5047
  %5049 = vrot.lane.b32.xlu0 %v4966, 16
  %v5050 = vpop.permute.xlu0 %5049
  %5051 = vrot.lane.b32.xlu0 %v4978, 16
  %v5052 = vpop.permute.xlu0 %5051
  %5053 = vrot.lane.b32.xlu0 %v4990, 16
  %v5054 = vpop.permute.xlu0 %5053
  %v5055 = vrot.slane %v4479, 1
  %v5056 = vrot.slane %v4575, 1
  %v5057 = vsel %vm1863, %v5055, %v5056
  %v5058 = vrot.slane %v4480, 1
  %v5059 = vrot.slane %v4576, 1
  %v5060 = vsel %vm1863, %v5058, %v5059
  %v5061 = vrot.slane %v4481, 1
  %v5062 = vrot.slane %v4577, 1
  %v5063 = vsel %vm1863, %v5061, %v5062
  %v5064 = vrot.slane %v4482, 1
  %v5065 = vrot.slane %v4578, 1
  %v5066 = vsel %vm1863, %v5064, %v5065
  %v5067 = vrot.slane %v4483, 1
  %v5068 = vrot.slane %v4579, 1
  %v5069 = vsel %vm1863, %v5067, %v5068
  %v5070 = vrot.slane %v4484, 1
  %v5071 = vrot.slane %v4580, 1
  %v5072 = vsel %vm1863, %v5070, %v5071
  %v5073 = vrot.slane %v4485, 1
  %v5074 = vrot.slane %v4581, 1
  %v5075 = vsel %vm1863, %v5073, %v5074
  %v5076 = vrot.slane %v4486, 1
  %v5077 = vrot.slane %v4582, 1
  %v5078 = vsel %vm1863, %v5076, %v5077
  %v5079 = vrot.slane %v4487, 1
  %v5080 = vrot.slane %v4583, 1
  %v5081 = vsel %vm1863, %v5079, %v5080
  %v5082 = vrot.slane %v4488, 1
  %v5083 = vrot.slane %v4584, 1
  %v5084 = vsel %vm1863, %v5082, %v5083
  %v5085 = vrot.slane %v4489, 1
  %v5086 = vrot.slane %v4585, 1
  %v5087 = vsel %vm1863, %v5085, %v5086
  %v5088 = vrot.slane %v4490, 1
  %v5089 = vrot.slane %v4586, 1
  %v5090 = vsel %vm1863, %v5088, %v5089
  %v5091 = vrot.slane %v4491, 1
  %v5092 = vrot.slane %v4587, 1
  %v5093 = vsel %vm1863, %v5091, %v5092
  %v5094 = vrot.slane %v4492, 1
  %v5095 = vrot.slane %v4588, 1
  %v5096 = vsel %vm1863, %v5094, %v5095
  %v5097 = vrot.slane %v4493, 1
  %v5098 = vrot.slane %v4589, 1
  %v5099 = vsel %vm1863, %v5097, %v5098
  %v5100 = vrot.slane %v4494, 1
  %v5101 = vrot.slane %v4590, 1
  %v5102 = vsel %vm1863, %v5100, %v5101
  %v5103 = vrot.slane %v4495, 1
  %v5104 = vrot.slane %v4591, 1
  %v5105 = vsel %vm1863, %v5103, %v5104
  %v5106 = vrot.slane %v4496, 1
  %v5107 = vrot.slane %v4592, 1
  %v5108 = vsel %vm1863, %v5106, %v5107
  %v5109 = vrot.slane %v4497, 1
  %v5110 = vrot.slane %v4593, 1
  %v5111 = vsel %vm1863, %v5109, %v5110
  %v5112 = vrot.slane %v4498, 1
  %v5113 = vrot.slane %v4594, 1
  %v5114 = vsel %vm1863, %v5112, %v5113
  %v5115 = vrot.slane %v4499, 1
  %v5116 = vrot.slane %v4595, 1
  %v5117 = vsel %vm1863, %v5115, %v5116
  %v5118 = vrot.slane %v4500, 1
  %v5119 = vrot.slane %v4596, 1
  %v5120 = vsel %vm1863, %v5118, %v5119
  %v5121 = vrot.slane %v4501, 1
  %v5122 = vrot.slane %v4597, 1
  %v5123 = vsel %vm1863, %v5121, %v5122
  %v5124 = vrot.slane %v4502, 1
  %v5125 = vrot.slane %v4598, 1
  %v5126 = vsel %vm1863, %v5124, %v5125
  %v5127 = vrot.slane %v4503, 1
  %v5128 = vrot.slane %v4599, 1
  %v5129 = vsel %vm1863, %v5127, %v5128
  %v5130 = vrot.slane %v4504, 1
  %v5131 = vrot.slane %v4600, 1
  %v5132 = vsel %vm1863, %v5130, %v5131
  %v5133 = vrot.slane %v4505, 1
  %v5134 = vrot.slane %v4601, 1
  %v5135 = vsel %vm1863, %v5133, %v5134
  %v5136 = vrot.slane %v4506, 1
  %v5137 = vrot.slane %v4602, 1
  %v5138 = vsel %vm1863, %v5136, %v5137
  %v5139 = vrot.slane %v4507, 1
  %v5140 = vrot.slane %v4603, 1
  %v5141 = vsel %vm1863, %v5139, %v5140
  %v5142 = vrot.slane %v4508, 1
  %v5143 = vrot.slane %v4604, 1
  %v5144 = vsel %vm1863, %v5142, %v5143
  %v5145 = vrot.slane %v4509, 1
  %v5146 = vrot.slane %v4605, 1
  %v5147 = vsel %vm1863, %v5145, %v5146
  %v5148 = vrot.slane %v4510, 1
  %v5149 = vrot.slane %v4606, 1
  %v5150 = vsel %vm1863, %v5148, %v5149
  %5151 = vrot.lane.b32.xlu0 %v5057, 32
  %v5152 = vpop.permute.xlu0 %5151
  %5153 = vrot.lane.b32.xlu0 %v5060, 32
  %v5154 = vpop.permute.xlu0 %5153
  %5155 = vrot.lane.b32.xlu0 %v5063, 32
  %v5156 = vpop.permute.xlu0 %5155
  %5157 = vrot.lane.b32.xlu0 %v5066, 32
  %v5158 = vpop.permute.xlu0 %5157
  %5159 = vrot.lane.b32.xlu0 %v5069, 32
  %v5160 = vpop.permute.xlu0 %5159
  %5161 = vrot.lane.b32.xlu0 %v5072, 32
  %v5162 = vpop.permute.xlu0 %5161
  %5163 = vrot.lane.b32.xlu0 %v5075, 32
  %v5164 = vpop.permute.xlu0 %5163
  %5165 = vrot.lane.b32.xlu0 %v5078, 32
  %v5166 = vpop.permute.xlu0 %5165
  %5167 = vrot.lane.b32.xlu0 %v5081, 32
  %v5168 = vpop.permute.xlu0 %5167
  %5169 = vrot.lane.b32.xlu0 %v5084, 32
  %v5170 = vpop.permute.xlu0 %5169
  %5171 = vrot.lane.b32.xlu0 %v5087, 32
  %v5172 = vpop.permute.xlu0 %5171
  %5173 = vrot.lane.b32.xlu0 %v5090, 32
  %v5174 = vpop.permute.xlu0 %5173
  %5175 = vrot.lane.b32.xlu0 %v5093, 32
  %v5176 = vpop.permute.xlu0 %5175
  %5177 = vrot.lane.b32.xlu0 %v5096, 32
  %v5178 = vpop.permute.xlu0 %5177
  %5179 = vrot.lane.b32.xlu0 %v5099, 32
  %v5180 = vpop.permute.xlu0 %5179
  %5181 = vrot.lane.b32.xlu0 %v5102, 32
  %v5182 = vpop.permute.xlu0 %5181
  %5183 = vrot.lane.b32.xlu0 %v5105, 32
  %v5184 = vpop.permute.xlu0 %5183
  %5185 = vrot.lane.b32.xlu0 %v5108, 32
  %v5186 = vpop.permute.xlu0 %5185
  %5187 = vrot.lane.b32.xlu0 %v5111, 32
  %v5188 = vpop.permute.xlu0 %5187
  %5189 = vrot.lane.b32.xlu0 %v5114, 32
  %v5190 = vpop.permute.xlu0 %5189
  %5191 = vrot.lane.b32.xlu0 %v5117, 32
  %v5192 = vpop.permute.xlu0 %5191
  %5193 = vrot.lane.b32.xlu0 %v5120, 32
  %v5194 = vpop.permute.xlu0 %5193
  %5195 = vrot.lane.b32.xlu0 %v5123, 32
  %v5196 = vpop.permute.xlu0 %5195
  %5197 = vrot.lane.b32.xlu0 %v5126, 32
  %v5198 = vpop.permute.xlu0 %5197
  %5199 = vrot.lane.b32.xlu0 %v5129, 32
  %v5200 = vpop.permute.xlu0 %5199
  %5201 = vrot.lane.b32.xlu0 %v5132, 32
  %v5202 = vpop.permute.xlu0 %5201
  %5203 = vrot.lane.b32.xlu0 %v5135, 32
  %v5204 = vpop.permute.xlu0 %5203
  %5205 = vrot.lane.b32.xlu0 %v5138, 32
  %v5206 = vpop.permute.xlu0 %5205
  %5207 = vrot.lane.b32.xlu0 %v5141, 32
  %v5208 = vpop.permute.xlu0 %5207
  %5209 = vrot.lane.b32.xlu0 %v5144, 32
  %v5210 = vpop.permute.xlu0 %5209
  %5211 = vrot.lane.b32.xlu0 %v5147, 32
  %v5212 = vpop.permute.xlu0 %5211
  %5213 = vrot.lane.b32.xlu0 %v5150, 32
  %v5214 = vpop.permute.xlu0 %5213
  %v5216 = vsel %vm2024, %v4479, %v4992
  %v5218 = vsel %vm2024, %v4480, %v4994
  %v5220 = vsel %vm2024, %v4481, %v4996
  %v5222 = vsel %vm2024, %v4482, %v4998
  %v5224 = vsel %vm2024, %v4483, %v5000
  %v5226 = vsel %vm2024, %v4484, %v5002
  %v5228 = vsel %vm2024, %v4485, %v5004
  %v5230 = vsel %vm2024, %v4486, %v5006
  %v5232 = vsel %vm2024, %v4487, %v5008
  %v5234 = vsel %vm2024, %v4488, %v5010
  %v5236 = vsel %vm2024, %v4489, %v5012
  %v5238 = vsel %vm2024, %v4490, %v5014
  %v5240 = vsel %vm2024, %v4491, %v5016
  %v5242 = vsel %vm2024, %v4492, %v5018
  %v5244 = vsel %vm2024, %v4493, %v5020
  %v5246 = vsel %vm2024, %v4494, %v5022
  %v5248 = vsel %vm2024, %v4495, %v5024
  %v5250 = vsel %vm2024, %v4496, %v5026
  %v5252 = vsel %vm2024, %v4497, %v5028
  %v5254 = vsel %vm2024, %v4498, %v5030
  %v5256 = vsel %vm2024, %v4499, %v5032
  %v5258 = vsel %vm2024, %v4500, %v5034
  %v5260 = vsel %vm2024, %v4501, %v5036
  %v5262 = vsel %vm2024, %v4502, %v5038
  %v5264 = vsel %vm2024, %v4503, %v5040
  %v5266 = vsel %vm2024, %v4504, %v5042
  %v5268 = vsel %vm2024, %v4505, %v5044
  %v5270 = vsel %vm2024, %v4506, %v5046
  %v5272 = vsel %vm2024, %v4507, %v5048
  %v5274 = vsel %vm2024, %v4508, %v5050
  %v5276 = vsel %vm2024, %v4509, %v5052
  %v5278 = vsel %vm2024, %v4510, %v5054
  %v5280 = vsel %vm2089, %v5216, %v5152
  %v5282 = vsel %vm2089, %v5218, %v5154
  %v5284 = vsel %vm2089, %v5220, %v5156
  %v5286 = vsel %vm2089, %v5222, %v5158
  %v5288 = vsel %vm2089, %v5224, %v5160
  %v5290 = vsel %vm2089, %v5226, %v5162
  %v5292 = vsel %vm2089, %v5228, %v5164
  %v5294 = vsel %vm2089, %v5230, %v5166
  %v5296 = vsel %vm2089, %v5232, %v5168
  %v5298 = vsel %vm2089, %v5234, %v5170
  %v5300 = vsel %vm2089, %v5236, %v5172
  %v5302 = vsel %vm2089, %v5238, %v5174
  %v5304 = vsel %vm2089, %v5240, %v5176
  %v5306 = vsel %vm2089, %v5242, %v5178
  %v5308 = vsel %vm2089, %v5244, %v5180
  %v5310 = vsel %vm2089, %v5246, %v5182
  %v5312 = vsel %vm2089, %v5248, %v5184
  %v5314 = vsel %vm2089, %v5250, %v5186
  %v5316 = vsel %vm2089, %v5252, %v5188
  %v5318 = vsel %vm2089, %v5254, %v5190
  %v5320 = vsel %vm2089, %v5256, %v5192
  %v5322 = vsel %vm2089, %v5258, %v5194
  %v5324 = vsel %vm2089, %v5260, %v5196
  %v5326 = vsel %vm2089, %v5262, %v5198
  %v5328 = vsel %vm2089, %v5264, %v5200
  %v5330 = vsel %vm2089, %v5266, %v5202
  %v5332 = vsel %vm2089, %v5268, %v5204
  %v5334 = vsel %vm2089, %v5270, %v5206
  %v5336 = vsel %vm2089, %v5272, %v5208
  %v5338 = vsel %vm2089, %v5274, %v5210
  %v5340 = vsel %vm2089, %v5276, %v5212
  %v5342 = vsel %vm2089, %v5278, %v5214
  %s5343 = scalar_lea.vmem %s1, 48
  %v5344 = vld [vmem:[%s5343] sm:$0xf]
  %v5345 = vld [vmem:[%s5343 + $0x4] sm:$0xf]
  %v5346 = vld [vmem:[%s5343 + $0x8] sm:$0xf]
  %v5347 = vld [vmem:[%s5343 + $0xc] sm:$0xf]
  %v5348 = vld [vmem:[%s5343 + $0x10] sm:$0xf]
  %v5349 = vld [vmem:[%s5343 + $0x14] sm:$0xf]
  %v5356 = vunpack.c.l.b16 %v5344
  %v5357 = vunpack.c.l.b16 %v5345
  %v5358 = vunpack.c.l.b16 %v5346
  %v5359 = vunpack.c.l.b16 %v5347
  %v5360 = vunpack.c.l.b16 %v5348
  %v5361 = vunpack.c.l.b16 %v5349
  %v5362 = vpack.c.b16 %v5357, %v5356
  %v5363 = vpack.c.b16 %v5359, %v5358
  %v5364 = vpack.c.b16 %v5361, %v5360
  %v5368 = vsel %vm2178, %v5280, 0
  %v5370 = vsel %vm2178, %v5282, 0
  %v5372 = vsel %vm2178, %v5284, 0
  %v5374 = vsel %vm2178, %v5286, 0
  %v5376 = vsel %vm2178, %v5288, 0
  %v5378 = vsel %vm2178, %v5290, 0
  %v5380 = vsel %vm2178, %v5292, 0
  %v5382 = vsel %vm2178, %v5294, 0
  %v5384 = vsel %vm2178, %v5296, 0
  %v5386 = vsel %vm2178, %v5298, 0
  %v5388 = vsel %vm2178, %v5300, 0
  %v5390 = vsel %vm2178, %v5302, 0
  %v5392 = vsel %vm2178, %v5304, 0
  %v5394 = vsel %vm2178, %v5306, 0
  %v5396 = vsel %vm2178, %v5308, 0
  %v5398 = vsel %vm2178, %v5310, 0
  %v5400 = vsel %vm2178, %v5312, 0
  %v5402 = vsel %vm2178, %v5314, 0
  %v5404 = vsel %vm2178, %v5316, 0
  %v5406 = vsel %vm2178, %v5318, 0
  %v5408 = vsel %vm2178, %v5320, 0
  %v5410 = vsel %vm2178, %v5322, 0
  %v5412 = vsel %vm2178, %v5324, 0
  %v5414 = vsel %vm2178, %v5326, 0
  %v5416 = vsel %vm2178, %v5328, 0
  %v5418 = vsel %vm2178, %v5330, 0
  %v5420 = vsel %vm2178, %v5332, 0
  %v5422 = vsel %vm2178, %v5334, 0
  %v5424 = vsel %vm2178, %v5336, 0
  %v5426 = vsel %vm2178, %v5338, 0
  %v5428 = vsel %vm2178, %v5340, 0
  %v5430 = vsel %vm2178, %v5342, 0
  %5432 = vmatprep.subr.bf16.mxu0 0
  %5433 = vmatpush1.bf16.msra.mxu0 %v5362
  %5434 = vmatprep.subr.bf16.mxu0 0
  %5435 = vmatpush1.bf16.msra.mxu0 %v5363
  %5436 = vmatprep.subr.bf16.mxu0 0
  %5437 = vmatpush1.bf16.msra.mxu0 %v5364
  %5438 = vmatprep.subr.bf16.mxu0 0
  %5439 = vmatpush1.bf16.msra.mxu0 0
  %5440 = vmatprep.subr.bf16.mxu0 0
  %5441 = vmatpush1.bf16.msra.mxu0 0
  %5442 = vmatprep.subr.bf16.mxu0 0
  %5443 = vmatpush1.bf16.msra.mxu0 0
  %5444 = vmatprep.subr.bf16.mxu0 0
  %5445 = vmatpush1.bf16.msra.mxu0 0
  %5446 = vmatprep.subr.bf16.mxu0 0
  %5447 = vmatpush1.bf16.msra.mxu0 0
  %5448 = vmatprep.subr.bf16.mxu0 0
  %5449 = vmatpush1.bf16.msra.mxu0 0
  %5450 = vmatprep.subr.bf16.mxu0 0
  %5451 = vmatpush1.bf16.msra.mxu0 0
  %5452 = vmatprep.subr.bf16.mxu0 0
  %5453 = vmatpush1.bf16.msra.mxu0 0
  %5454 = vmatprep.subr.bf16.mxu0 0
  %5455 = vmatpush1.bf16.msra.mxu0 0
  %5456 = vmatprep.subr.bf16.mxu0 0
  %5457 = vmatpush1.bf16.msra.mxu0 0
  %5458 = vmatprep.subr.bf16.mxu0 0
  %5459 = vmatpush1.bf16.msra.mxu0 0
  %5460 = vmatprep.subr.bf16.mxu0 0
  %5461 = vmatpush1.bf16.msra.mxu0 0
  %5462 = vmatprep.subr.bf16.mxu0 0
  %5463 = vmatpush1.bf16.msra.mxu0 0
  %5464 = vmatprep.mubr.bf16.mxu0 0
  %5465 = vmatmul.mubr.bf16.gmra.mrb[0].mxu0 %v5368
  %v5466 = vpop.f32.mrb[0].mxu0
  %v5467 = vadd.f32 0.0, %v5466
  %v5468 = vpop.f32.mrb[0].mxu0
  %v5469 = vpop.f32.mrb[0].mxu0
  %v5470 = vadd.f32 0.0, %v5469
  %v5471 = vpop.f32.mrb[0].mxu0
  %5472 = vmatprep.mubr.bf16.mxu0 0
  %5473 = vmatmul.mubr.bf16.gmra.mrb[0].mxu0 %v5370
  %v5474 = vpop.f32.mrb[0].mxu0
  %v5475 = vadd.f32 0.0, %v5474
  %v5476 = vpop.f32.mrb[0].mxu0
  %v5477 = vpop.f32.mrb[0].mxu0
  %v5478 = vadd.f32 0.0, %v5477
  %v5479 = vpop.f32.mrb[0].mxu0
  %5480 = vmatprep.mubr.bf16.mxu0 0
  %5481 = vmatmul.mubr.bf16.gmra.mrb[0].mxu0 %v5372
  %v5482 = vpop.f32.mrb[0].mxu0
  %v5483 = vadd.f32 0.0, %v5482
  %v5484 = vpop.f32.mrb[0].mxu0
  %v5485 = vpop.f32.mrb[0].mxu0
  %v5486 = vadd.f32 0.0, %v5485
  %v5487 = vpop.f32.mrb[0].mxu0
  %5488 = vmatprep.mubr.bf16.mxu0 0
  %5489 = vmatmul.mubr.bf16.gmra.mrb[0].mxu0 %v5374
  %v5490 = vpop.f32.mrb[0].mxu0
  %v5491 = vadd.f32 0.0, %v5490
  %v5492 = vpop.f32.mrb[0].mxu0
  %v5493 = vpop.f32.mrb[0].mxu0
  %v5494 = vadd.f32 0.0, %v5493
  %v5495 = vpop.f32.mrb[0].mxu0
  %5496 = vmatprep.mubr.bf16.mxu0 0
  %5497 = vmatmul.mubr.bf16.gmra.mrb[0].mxu0 %v5376
  %v5498 = vpop.f32.mrb[0].mxu0
  %v5499 = vadd.f32 0.0, %v5498
  %v5500 = vpop.f32.mrb[0].mxu0
  %v5501 = vpop.f32.mrb[0].mxu0
  %v5502 = vadd.f32 0.0, %v5501
  %v5503 = vpop.f32.mrb[0].mxu0
  %5504 = vmatprep.mubr.bf16.mxu0 0
  %5505 = vmatmul.mubr.bf16.gmra.mrb[0].mxu0 %v5378
  %v5506 = vpop.f32.mrb[0].mxu0
  %v5507 = vadd.f32 0.0, %v5506
  %v5508 = vpop.f32.mrb[0].mxu0
  %v5509 = vpop.f32.mrb[0].mxu0
  %v5510 = vadd.f32 0.0, %v5509
  %v5511 = vpop.f32.mrb[0].mxu0
  %5512 = vmatprep.mubr.bf16.mxu0 0
  %5513 = vmatmul.mubr.bf16.gmra.mrb[0].mxu0 %v5380
  %v5514 = vpop.f32.mrb[0].mxu0
  %v5515 = vadd.f32 0.0, %v5514
  %v5516 = vpop.f32.mrb[0].mxu0
  %v5517 = vpop.f32.mrb[0].mxu0
  %v5518 = vadd.f32 0.0, %v5517
  %v5519 = vpop.f32.mrb[0].mxu0
  %5520 = vmatprep.mubr.bf16.mxu0 0
  %5521 = vmatmul.mubr.bf16.gmra.mrb[0].mxu0 %v5382
  %v5522 = vpop.f32.mrb[0].mxu0
  %v5523 = vadd.f32 0.0, %v5522
  %v5524 = vpop.f32.mrb[0].mxu0
  %v5525 = vpop.f32.mrb[0].mxu0
  %v5526 = vadd.f32 0.0, %v5525
  %v5527 = vpop.f32.mrb[0].mxu0
  %5528 = vmatprep.mubr.bf16.mxu0 0
  %5529 = vmatmul.mubr.bf16.gmra.mrb[0].mxu0 %v5384
  %v5530 = vpop.f32.mrb[0].mxu0
  %v5531 = vadd.f32 0.0, %v5530
  %v5532 = vpop.f32.mrb[0].mxu0
  %v5533 = vpop.f32.mrb[0].mxu0
  %v5534 = vadd.f32 0.0, %v5533
  %v5535 = vpop.f32.mrb[0].mxu0
  %5536 = vmatprep.mubr.bf16.mxu0 0
  %5537 = vmatmul.mubr.bf16.gmra.mrb[0].mxu0 %v5386
  %v5538 = vpop.f32.mrb[0].mxu0
  %v5539 = vadd.f32 0.0, %v5538
  %v5540 = vpop.f32.mrb[0].mxu0
  %v5541 = vpop.f32.mrb[0].mxu0
  %v5542 = vadd.f32 0.0, %v5541
  %v5543 = vpop.f32.mrb[0].mxu0
  %5544 = vmatprep.mubr.bf16.mxu0 0
  %5545 = vmatmul.mubr.bf16.gmra.mrb[0].mxu0 %v5388
  %v5546 = vpop.f32.mrb[0].mxu0
  %v5547 = vadd.f32 0.0, %v5546
  %v5548 = vpop.f32.mrb[0].mxu0
  %v5549 = vpop.f32.mrb[0].mxu0
  %v5550 = vadd.f32 0.0, %v5549
  %v5551 = vpop.f32.mrb[0].mxu0
  %5552 = vmatprep.mubr.bf16.mxu0 0
  %5553 = vmatmul.mubr.bf16.gmra.mrb[0].mxu0 %v5390
  %v5554 = vpop.f32.mrb[0].mxu0
  %v5555 = vadd.f32 0.0, %v5554
  %v5556 = vpop.f32.mrb[0].mxu0
  %v5557 = vpop.f32.mrb[0].mxu0
  %v5558 = vadd.f32 0.0, %v5557
  %v5559 = vpop.f32.mrb[0].mxu0
  %5560 = vmatprep.mubr.bf16.mxu0 0
  %5561 = vmatmul.mubr.bf16.gmra.mrb[0].mxu0 %v5392
  %v5562 = vpop.f32.mrb[0].mxu0
  %v5563 = vadd.f32 0.0, %v5562
  %v5564 = vpop.f32.mrb[0].mxu0
  %v5565 = vpop.f32.mrb[0].mxu0
  %v5566 = vadd.f32 0.0, %v5565
  %v5567 = vpop.f32.mrb[0].mxu0
  %5568 = vmatprep.mubr.bf16.mxu0 0
  %5569 = vmatmul.mubr.bf16.gmra.mrb[0].mxu0 %v5394
  %v5570 = vpop.f32.mrb[0].mxu0
  %v5571 = vadd.f32 0.0, %v5570
  %v5572 = vpop.f32.mrb[0].mxu0
  %v5573 = vpop.f32.mrb[0].mxu0
  %v5574 = vadd.f32 0.0, %v5573
  %v5575 = vpop.f32.mrb[0].mxu0
  %5576 = vmatprep.mubr.bf16.mxu0 0
  %5577 = vmatmul.mubr.bf16.gmra.mrb[0].mxu0 %v5396
  %v5578 = vpop.f32.mrb[0].mxu0
  %v5579 = vadd.f32 0.0, %v5578
  %v5580 = vpop.f32.mrb[0].mxu0
  %v5581 = vpop.f32.mrb[0].mxu0
  %v5582 = vadd.f32 0.0, %v5581
  %v5583 = vpop.f32.mrb[0].mxu0
  %5584 = vmatprep.mubr.bf16.mxu0 0
  %5585 = vmatmul.mubr.bf16.gmra.mrb[0].mxu0 %v5398
  %v5586 = vpop.f32.mrb[0].mxu0
  %v5587 = vadd.f32 0.0, %v5586
  %v5588 = vpop.f32.mrb[0].mxu0
  %v5589 = vpop.f32.mrb[0].mxu0
  %v5590 = vadd.f32 0.0, %v5589
  %v5591 = vpop.f32.mrb[0].mxu0
  %5592 = vmatprep.mubr.bf16.mxu0 0
  %5593 = vmatmul.mubr.bf16.gmra.mrb[0].mxu0 %v5400
  %v5594 = vpop.f32.mrb[0].mxu0
  %v5595 = vadd.f32 0.0, %v5594
  %v5596 = vpop.f32.mrb[0].mxu0
  %v5597 = vpop.f32.mrb[0].mxu0
  %v5598 = vadd.f32 0.0, %v5597
  %v5599 = vpop.f32.mrb[0].mxu0
  %5600 = vmatprep.mubr.bf16.mxu0 0
  %5601 = vmatmul.mubr.bf16.gmra.mrb[0].mxu0 %v5402
  %v5602 = vpop.f32.mrb[0].mxu0
  %v5603 = vadd.f32 0.0, %v5602
  %v5604 = vpop.f32.mrb[0].mxu0
  %v5605 = vpop.f32.mrb[0].mxu0
  %v5606 = vadd.f32 0.0, %v5605
  %v5607 = vpop.f32.mrb[0].mxu0
  %5608 = vmatprep.mubr.bf16.mxu0 0
  %5609 = vmatmul.mubr.bf16.gmra.mrb[0].mxu0 %v5404
  %v5610 = vpop.f32.mrb[0].mxu0
  %v5611 = vadd.f32 0.0, %v5610
  %v5612 = vpop.f32.mrb[0].mxu0
  %v5613 = vpop.f32.mrb[0].mxu0
  %v5614 = vadd.f32 0.0, %v5613
  %v5615 = vpop.f32.mrb[0].mxu0
  %5616 = vmatprep.mubr.bf16.mxu0 0
  %5617 = vmatmul.mubr.bf16.gmra.mrb[0].mxu0 %v5406
  %v5618 = vpop.f32.mrb[0].mxu0
  %v5619 = vadd.f32 0.0, %v5618
  %v5620 = vpop.f32.mrb[0].mxu0
  %v5621 = vpop.f32.mrb[0].mxu0
  %v5622 = vadd.f32 0.0, %v5621
  %v5623 = vpop.f32.mrb[0].mxu0
  %5624 = vmatprep.mubr.bf16.mxu0 0
  %5625 = vmatmul.mubr.bf16.gmra.mrb[0].mxu0 %v5408
  %v5626 = vpop.f32.mrb[0].mxu0
  %v5627 = vadd.f32 0.0, %v5626
  %v5628 = vpop.f32.mrb[0].mxu0
  %v5629 = vpop.f32.mrb[0].mxu0
  %v5630 = vadd.f32 0.0, %v5629
  %v5631 = vpop.f32.mrb[0].mxu0
  %5632 = vmatprep.mubr.bf16.mxu0 0
  %5633 = vmatmul.mubr.bf16.gmra.mrb[0].mxu0 %v5410
  %v5634 = vpop.f32.mrb[0].mxu0
  %v5635 = vadd.f32 0.0, %v5634
  %v5636 = vpop.f32.mrb[0].mxu0
  %v5637 = vpop.f32.mrb[0].mxu0
  %v5638 = vadd.f32 0.0, %v5637
  %v5639 = vpop.f32.mrb[0].mxu0
  %5640 = vmatprep.mubr.bf16.mxu0 0
  %5641 = vmatmul.mubr.bf16.gmra.mrb[0].mxu0 %v5412
  %v5642 = vpop.f32.mrb[0].mxu0
  %v5643 = vadd.f32 0.0, %v5642
  %v5644 = vpop.f32.mrb[0].mxu0
  %v5645 = vpop.f32.mrb[0].mxu0
  %v5646 = vadd.f32 0.0, %v5645
  %v5647 = vpop.f32.mrb[0].mxu0
  %5648 = vmatprep.mubr.bf16.mxu0 0
  %5649 = vmatmul.mubr.bf16.gmra.mrb[0].mxu0 %v5414
  %v5650 = vpop.f32.mrb[0].mxu0
  %v5651 = vadd.f32 0.0, %v5650
  %v5652 = vpop.f32.mrb[0].mxu0
  %v5653 = vpop.f32.mrb[0].mxu0
  %v5654 = vadd.f32 0.0, %v5653
  %v5655 = vpop.f32.mrb[0].mxu0
  %5656 = vmatprep.mubr.bf16.mxu0 0
  %5657 = vmatmul.mubr.bf16.gmra.mrb[0].mxu0 %v5416
  %v5658 = vpop.f32.mrb[0].mxu0
  %v5659 = vadd.f32 0.0, %v5658
  %v5660 = vpop.f32.mrb[0].mxu0
  %v5661 = vpop.f32.mrb[0].mxu0
  %v5662 = vadd.f32 0.0, %v5661
  %v5663 = vpop.f32.mrb[0].mxu0
  %5664 = vmatprep.mubr.bf16.mxu0 0
  %5665 = vmatmul.mubr.bf16.gmra.mrb[0].mxu0 %v5418
  %v5666 = vpop.f32.mrb[0].mxu0
  %v5667 = vadd.f32 0.0, %v5666
  %v5668 = vpop.f32.mrb[0].mxu0
  %v5669 = vpop.f32.mrb[0].mxu0
  %v5670 = vadd.f32 0.0, %v5669
  %v5671 = vpop.f32.mrb[0].mxu0
  %5672 = vmatprep.mubr.bf16.mxu0 0
  %5673 = vmatmul.mubr.bf16.gmra.mrb[0].mxu0 %v5420
  %v5674 = vpop.f32.mrb[0].mxu0
  %v5675 = vadd.f32 0.0, %v5674
  %v5676 = vpop.f32.mrb[0].mxu0
  %v5677 = vpop.f32.mrb[0].mxu0
  %v5678 = vadd.f32 0.0, %v5677
  %v5679 = vpop.f32.mrb[0].mxu0
  %5680 = vmatprep.mubr.bf16.mxu0 0
  %5681 = vmatmul.mubr.bf16.gmra.mrb[0].mxu0 %v5422
  %v5682 = vpop.f32.mrb[0].mxu0
  %v5683 = vadd.f32 0.0, %v5682
  %v5684 = vpop.f32.mrb[0].mxu0
  %v5685 = vpop.f32.mrb[0].mxu0
  %v5686 = vadd.f32 0.0, %v5685
  %v5687 = vpop.f32.mrb[0].mxu0
  %5688 = vmatprep.mubr.bf16.mxu0 0
  %5689 = vmatmul.mubr.bf16.gmra.mrb[0].mxu0 %v5424
  %v5690 = vpop.f32.mrb[0].mxu0
  %v5691 = vadd.f32 0.0, %v5690
  %v5692 = vpop.f32.mrb[0].mxu0
  %v5693 = vpop.f32.mrb[0].mxu0
  %v5694 = vadd.f32 0.0, %v5693
  %v5695 = vpop.f32.mrb[0].mxu0
  %5696 = vmatprep.mubr.bf16.mxu0 0
  %5697 = vmatmul.mubr.bf16.gmra.mrb[0].mxu0 %v5426
  %v5698 = vpop.f32.mrb[0].mxu0
  %v5699 = vadd.f32 0.0, %v5698
  %v5700 = vpop.f32.mrb[0].mxu0
  %v5701 = vpop.f32.mrb[0].mxu0
  %v5702 = vadd.f32 0.0, %v5701
  %v5703 = vpop.f32.mrb[0].mxu0
  %5704 = vmatprep.mubr.bf16.mxu0 0
  %5705 = vmatmul.mubr.bf16.gmra.mrb[0].mxu0 %v5428
  %v5706 = vpop.f32.mrb[0].mxu0
  %v5707 = vadd.f32 0.0, %v5706
  %v5708 = vpop.f32.mrb[0].mxu0
  %v5709 = vpop.f32.mrb[0].mxu0
  %v5710 = vadd.f32 0.0, %v5709
  %v5711 = vpop.f32.mrb[0].mxu0
  %5712 = vmatprep.mubr.bf16.mxu0 0
  %5713 = vmatmul.mubr.bf16.gmra.mrb[0].mxu0 %v5430
  %v5714 = vpop.f32.mrb[0].mxu0
  %v5715 = vadd.f32 0.0, %v5714
  %v5716 = vpop.f32.mrb[0].mxu0
  %v5717 = vpop.f32.mrb[0].mxu0
  %v5718 = vadd.f32 0.0, %v5717
  %v5719 = vpop.f32.mrb[0].mxu0
  %5720 = vdwg.mxu0
  %v5721 = vld [vmem:[#allocation3] sm:$0xff]
  %v5722 = vld [vmem:[#allocation3 + $0x8] sm:$0xff]
  %v5723 = vld [vmem:[#allocation3 + $0x10] sm:$0xff]
  %v5724 = vld [vmem:[#allocation3 + $0x18] sm:$0xff]
  %v5725 = vld [vmem:[#allocation3 + $0x20] sm:$0xff]
  %v5726 = vld [vmem:[#allocation3 + $0x28] sm:$0xff]
  %v5727 = vld [vmem:[#allocation3 + $0x30] sm:$0xff]
  %v5728 = vld [vmem:[#allocation3 + $0x38] sm:$0xff]
  %v5729 = vld [vmem:[#allocation3 + $0x40] sm:$0xff]
  %v5730 = vld [vmem:[#allocation3 + $0x48] sm:$0xff]
  %v5731 = vld [vmem:[#allocation3 + $0x50] sm:$0xff]
  %v5732 = vld [vmem:[#allocation3 + $0x58] sm:$0xff]
  %v5733 = vld [vmem:[#allocation3 + $0x60] sm:$0xff]
  %v5734 = vld [vmem:[#allocation3 + $0x68] sm:$0xff]
  %v5735 = vld [vmem:[#allocation3 + $0x70] sm:$0xff]
  %v5736 = vld [vmem:[#allocation3 + $0x78] sm:$0xff]
  %v5737 = vld [vmem:[#allocation3 + $0x80] sm:$0xff]
  %v5738 = vld [vmem:[#allocation3 + $0x88] sm:$0xff]
  %v5739 = vld [vmem:[#allocation3 + $0x90] sm:$0xff]
  %v5740 = vld [vmem:[#allocation3 + $0x98] sm:$0xff]
  %v5741 = vld [vmem:[#allocation3 + $0xa0] sm:$0xff]
  %v5742 = vld [vmem:[#allocation3 + $0xa8] sm:$0xff]
  %v5743 = vld [vmem:[#allocation3 + $0xb0] sm:$0xff]
  %v5744 = vld [vmem:[#allocation3 + $0xb8] sm:$0xff]
  %v5745 = vld [vmem:[#allocation3 + $0xc0] sm:$0xff]
  %v5746 = vld [vmem:[#allocation3 + $0xc8] sm:$0xff]
  %v5747 = vld [vmem:[#allocation3 + $0xd0] sm:$0xff]
  %v5748 = vld [vmem:[#allocation3 + $0xd8] sm:$0xff]
  %v5749 = vld [vmem:[#allocation3 + $0xe0] sm:$0xff]
  %v5750 = vld [vmem:[#allocation3 + $0xe8] sm:$0xff]
  %v5751 = vld [vmem:[#allocation3 + $0xf0] sm:$0xff]
  %v5752 = vld [vmem:[#allocation3 + $0xf8] sm:$0xff]
  %v5753 = vld [vmem:[#allocation3 + $0x100] sm:$0xff]
  %v5754 = vld [vmem:[#allocation3 + $0x108] sm:$0xff]
  %v5755 = vld [vmem:[#allocation3 + $0x110] sm:$0xff]
  %v5756 = vld [vmem:[#allocation3 + $0x118] sm:$0xff]
  %v5757 = vld [vmem:[#allocation3 + $0x120] sm:$0xff]
  %v5758 = vld [vmem:[#allocation3 + $0x128] sm:$0xff]
  %v5759 = vld [vmem:[#allocation3 + $0x130] sm:$0xff]
  %v5760 = vld [vmem:[#allocation3 + $0x138] sm:$0xff]
  %v5761 = vld [vmem:[#allocation3 + $0x140] sm:$0xff]
  %v5762 = vld [vmem:[#allocation3 + $0x148] sm:$0xff]
  %v5763 = vld [vmem:[#allocation3 + $0x150] sm:$0xff]
  %v5764 = vld [vmem:[#allocation3 + $0x158] sm:$0xff]
  %v5765 = vld [vmem:[#allocation3 + $0x160] sm:$0xff]
  %v5766 = vld [vmem:[#allocation3 + $0x168] sm:$0xff]
  %v5767 = vld [vmem:[#allocation3 + $0x170] sm:$0xff]
  %v5768 = vld [vmem:[#allocation3 + $0x178] sm:$0xff]
  %v5769 = vld [vmem:[#allocation3 + $0x180] sm:$0xff]
  %v5770 = vld [vmem:[#allocation3 + $0x188] sm:$0xff]
  %v5771 = vld [vmem:[#allocation3 + $0x190] sm:$0xff]
  %v5772 = vld [vmem:[#allocation3 + $0x198] sm:$0xff]
  %v5773 = vld [vmem:[#allocation3 + $0x1a0] sm:$0xff]
  %v5774 = vld [vmem:[#allocation3 + $0x1a8] sm:$0xff]
  %v5775 = vld [vmem:[#allocation3 + $0x1b0] sm:$0xff]
  %v5776 = vld [vmem:[#allocation3 + $0x1b8] sm:$0xff]
  %v5777 = vld [vmem:[#allocation3 + $0x1c0] sm:$0xff]
  %v5778 = vld [vmem:[#allocation3 + $0x1c8] sm:$0xff]
  %v5779 = vld [vmem:[#allocation3 + $0x1d0] sm:$0xff]
  %v5780 = vld [vmem:[#allocation3 + $0x1d8] sm:$0xff]
  %v5781 = vld [vmem:[#allocation3 + $0x1e0] sm:$0xff]
  %v5782 = vld [vmem:[#allocation3 + $0x1e8] sm:$0xff]
  %v5783 = vld [vmem:[#allocation3 + $0x1f0] sm:$0xff]
  %v5784 = vld [vmem:[#allocation3 + $0x1f8] sm:$0xff]
  %v5785 = vadd.f32 %v5721, %v5467
  %v5786 = vadd.f32 %v5722, %v5470
  %v5787 = vadd.f32 %v5723, %v5475
  %v5788 = vadd.f32 %v5724, %v5478
  %v5789 = vadd.f32 %v5725, %v5483
  %v5790 = vadd.f32 %v5726, %v5486
  %v5791 = vadd.f32 %v5727, %v5491
  %v5792 = vadd.f32 %v5728, %v5494
  %v5793 = vadd.f32 %v5729, %v5499
  %v5794 = vadd.f32 %v5730, %v5502
  %v5795 = vadd.f32 %v5731, %v5507
  %v5796 = vadd.f32 %v5732, %v5510
  %v5797 = vadd.f32 %v5733, %v5515
  %v5798 = vadd.f32 %v5734, %v5518
  %v5799 = vadd.f32 %v5735, %v5523
  %v5800 = vadd.f32 %v5736, %v5526
  %v5801 = vadd.f32 %v5737, %v5531
  %v5802 = vadd.f32 %v5738, %v5534
  %v5803 = vadd.f32 %v5739, %v5539
  %v5804 = vadd.f32 %v5740, %v5542
  %v5805 = vadd.f32 %v5741, %v5547
  %v5806 = vadd.f32 %v5742, %v5550
  %v5807 = vadd.f32 %v5743, %v5555
  %v5808 = vadd.f32 %v5744, %v5558
  %v5809 = vadd.f32 %v5745, %v5563
  %v5810 = vadd.f32 %v5746, %v5566
  %v5811 = vadd.f32 %v5747, %v5571
  %v5812 = vadd.f32 %v5748, %v5574
  %v5813 = vadd.f32 %v5749, %v5579
  %v5814 = vadd.f32 %v5750, %v5582
  %v5815 = vadd.f32 %v5751, %v5587
  %v5816 = vadd.f32 %v5752, %v5590
  %v5817 = vadd.f32 %v5753, %v5595
  %v5818 = vadd.f32 %v5754, %v5598
  %v5819 = vadd.f32 %v5755, %v5603
  %v5820 = vadd.f32 %v5756, %v5606
  %v5821 = vadd.f32 %v5757, %v5611
  %v5822 = vadd.f32 %v5758, %v5614
  %v5823 = vadd.f32 %v5759, %v5619
  %v5824 = vadd.f32 %v5760, %v5622
  %v5825 = vadd.f32 %v5761, %v5627
  %v5826 = vadd.f32 %v5762, %v5630
  %v5827 = vadd.f32 %v5763, %v5635
  %v5828 = vadd.f32 %v5764, %v5638
  %v5829 = vadd.f32 %v5765, %v5643
  %v5830 = vadd.f32 %v5766, %v5646
  %v5831 = vadd.f32 %v5767, %v5651
  %v5832 = vadd.f32 %v5768, %v5654
  %v5833 = vadd.f32 %v5769, %v5659
  %v5834 = vadd.f32 %v5770, %v5662
  %v5835 = vadd.f32 %v5771, %v5667
  %v5836 = vadd.f32 %v5772, %v5670
  %v5837 = vadd.f32 %v5773, %v5675
  %v5838 = vadd.f32 %v5774, %v5678
  %v5839 = vadd.f32 %v5775, %v5683
  %v5840 = vadd.f32 %v5776, %v5686
  %v5841 = vadd.f32 %v5777, %v5691
  %v5842 = vadd.f32 %v5778, %v5694
  %v5843 = vadd.f32 %v5779, %v5699
  %v5844 = vadd.f32 %v5780, %v5702
  %v5845 = vadd.f32 %v5781, %v5707
  %v5846 = vadd.f32 %v5782, %v5710
  %v5847 = vadd.f32 %v5783, %v5715
  %v5848 = vadd.f32 %v5784, %v5718
  %5849 = vst.msk [vmem:[#allocation3] sm:$0xff] %vm2024, %v5785
  %5850 = vst.msk [vmem:[#allocation3 + $0x8] sm:$0xff] %vm2024, %v5786
  %5851 = vst.msk [vmem:[#allocation3 + $0x10] sm:$0xff] %vm2024, %v5787
  %5852 = vst.msk [vmem:[#allocation3 + $0x18] sm:$0xff] %vm2024, %v5788
  %5853 = vst.msk [vmem:[#allocation3 + $0x20] sm:$0xff] %vm2024, %v5789
  %5854 = vst.msk [vmem:[#allocation3 + $0x28] sm:$0xff] %vm2024, %v5790
  %5855 = vst.msk [vmem:[#allocation3 + $0x30] sm:$0xff] %vm2024, %v5791
  %5856 = vst.msk [vmem:[#allocation3 + $0x38] sm:$0xff] %vm2024, %v5792
  %5857 = vst.msk [vmem:[#allocation3 + $0x40] sm:$0xff] %vm2024, %v5793
  %5858 = vst.msk [vmem:[#allocation3 + $0x48] sm:$0xff] %vm2024, %v5794
  %5859 = vst.msk [vmem:[#allocation3 + $0x50] sm:$0xff] %vm2024, %v5795
  %5860 = vst.msk [vmem:[#allocation3 + $0x58] sm:$0xff] %vm2024, %v5796
  %5861 = vst.msk [vmem:[#allocation3 + $0x60] sm:$0xff] %vm2024, %v5797
  %5862 = vst.msk [vmem:[#allocation3 + $0x68] sm:$0xff] %vm2024, %v5798
  %5863 = vst.msk [vmem:[#allocation3 + $0x70] sm:$0xff] %vm2024, %v5799
  %5864 = vst.msk [vmem:[#allocation3 + $0x78] sm:$0xff] %vm2024, %v5800
  %5865 = vst.msk [vmem:[#allocation3 + $0x80] sm:$0xff] %vm2024, %v5801
  %5866 = vst.msk [vmem:[#allocation3 + $0x88] sm:$0xff] %vm2024, %v5802
  %5867 = vst.msk [vmem:[#allocation3 + $0x90] sm:$0xff] %vm2024, %v5803
  %5868 = vst.msk [vmem:[#allocation3 + $0x98] sm:$0xff] %vm2024, %v5804
  %5869 = vst.msk [vmem:[#allocation3 + $0xa0] sm:$0xff] %vm2024, %v5805
  %5870 = vst.msk [vmem:[#allocation3 + $0xa8] sm:$0xff] %vm2024, %v5806
  %5871 = vst.msk [vmem:[#allocation3 + $0xb0] sm:$0xff] %vm2024, %v5807
  %5872 = vst.msk [vmem:[#allocation3 + $0xb8] sm:$0xff] %vm2024, %v5808
  %5873 = vst.msk [vmem:[#allocation3 + $0xc0] sm:$0xff] %vm2024, %v5809
  %5874 = vst.msk [vmem:[#allocation3 + $0xc8] sm:$0xff] %vm2024, %v5810
  %5875 = vst.msk [vmem:[#allocation3 + $0xd0] sm:$0xff] %vm2024, %v5811
  %5876 = vst.msk [vmem:[#allocation3 + $0xd8] sm:$0xff] %vm2024, %v5812
  %5877 = vst.msk [vmem:[#allocation3 + $0xe0] sm:$0xff] %vm2024, %v5813
  %5878 = vst.msk [vmem:[#allocation3 + $0xe8] sm:$0xff] %vm2024, %v5814
  %5879 = vst.msk [vmem:[#allocation3 + $0xf0] sm:$0xff] %vm2024, %v5815
  %5880 = vst.msk [vmem:[#allocation3 + $0xf8] sm:$0xff] %vm2024, %v5816
  %5881 = vst.msk [vmem:[#allocation3 + $0x100] sm:$0xff] %vm2024, %v5817
  %5882 = vst.msk [vmem:[#allocation3 + $0x108] sm:$0xff] %vm2024, %v5818
  %5883 = vst.msk [vmem:[#allocation3 + $0x110] sm:$0xff] %vm2024, %v5819
  %5884 = vst.msk [vmem:[#allocation3 + $0x118] sm:$0xff] %vm2024, %v5820
  %5885 = vst.msk [vmem:[#allocation3 + $0x120] sm:$0xff] %vm2024, %v5821
  %5886 = vst.msk [vmem:[#allocation3 + $0x128] sm:$0xff] %vm2024, %v5822
  %5887 = vst.msk [vmem:[#allocation3 + $0x130] sm:$0xff] %vm2024, %v5823
  %5888 = vst.msk [vmem:[#allocation3 + $0x138] sm:$0xff] %vm2024, %v5824
  %5889 = vst.msk [vmem:[#allocation3 + $0x140] sm:$0xff] %vm2024, %v5825
  %5890 = vst.msk [vmem:[#allocation3 + $0x148] sm:$0xff] %vm2024, %v5826
  %5891 = vst.msk [vmem:[#allocation3 + $0x150] sm:$0xff] %vm2024, %v5827
  %5892 = vst.msk [vmem:[#allocation3 + $0x158] sm:$0xff] %vm2024, %v5828
  %5893 = vst.msk [vmem:[#allocation3 + $0x160] sm:$0xff] %vm2024, %v5829
  %5894 = vst.msk [vmem:[#allocation3 + $0x168] sm:$0xff] %vm2024, %v5830
  %5895 = vst.msk [vmem:[#allocation3 + $0x170] sm:$0xff] %vm2024, %v5831
  %5896 = vst.msk [vmem:[#allocation3 + $0x178] sm:$0xff] %vm2024, %v5832
  %5897 = vst.msk [vmem:[#allocation3 + $0x180] sm:$0xff] %vm2024, %v5833
  %5898 = vst.msk [vmem:[#allocation3 + $0x188] sm:$0xff] %vm2024, %v5834
  %5899 = vst.msk [vmem:[#allocation3 + $0x190] sm:$0xff] %vm2024, %v5835
  %5900 = vst.msk [vmem:[#allocation3 + $0x198] sm:$0xff] %vm2024, %v5836
  %5901 = vst.msk [vmem:[#allocation3 + $0x1a0] sm:$0xff] %vm2024, %v5837
  %5902 = vst.msk [vmem:[#allocation3 + $0x1a8] sm:$0xff] %vm2024, %v5838
  %5903 = vst.msk [vmem:[#allocation3 + $0x1b0] sm:$0xff] %vm2024, %v5839
  %5904 = vst.msk [vmem:[#allocation3 + $0x1b8] sm:$0xff] %vm2024, %v5840
  %5905 = vst.msk [vmem:[#allocation3 + $0x1c0] sm:$0xff] %vm2024, %v5841
  %5906 = vst.msk [vmem:[#allocation3 + $0x1c8] sm:$0xff] %vm2024, %v5842
  %5907 = vst.msk [vmem:[#allocation3 + $0x1d0] sm:$0xff] %vm2024, %v5843
  %5908 = vst.msk [vmem:[#allocation3 + $0x1d8] sm:$0xff] %vm2024, %v5844
  %5909 = vst.msk [vmem:[#allocation3 + $0x1e0] sm:$0xff] %vm2024, %v5845
  %5910 = vst.msk [vmem:[#allocation3 + $0x1e8] sm:$0xff] %vm2024, %v5846
  %5911 = vst.msk [vmem:[#allocation3 + $0x1f0] sm:$0xff] %vm2024, %v5847
  %5912 = vst.msk [vmem:[#allocation3 + $0x1f8] sm:$0xff] %vm2024, %v5848
  %v5913 = vld [vmem:[#allocation3] sm:$0xff]
  %v5914 = vld [vmem:[#allocation3 + $0x8] sm:$0xff]
  %v5915 = vld [vmem:[#allocation3 + $0x10] sm:$0xff]
  %v5916 = vld [vmem:[#allocation3 + $0x18] sm:$0xff]
  %v5917 = vld [vmem:[#allocation3 + $0x20] sm:$0xff]
  %v5918 = vld [vmem:[#allocation3 + $0x28] sm:$0xff]
  %v5919 = vld [vmem:[#allocation3 + $0x30] sm:$0xff]
  %v5920 = vld [vmem:[#allocation3 + $0x38] sm:$0xff]
  %v5921 = vld [vmem:[#allocation3 + $0x40] sm:$0xff]
  %v5922 = vld [vmem:[#allocation3 + $0x48] sm:$0xff]
  %v5923 = vld [vmem:[#allocation3 + $0x50] sm:$0xff]
  %v5924 = vld [vmem:[#allocation3 + $0x58] sm:$0xff]
  %v5925 = vld [vmem:[#allocation3 + $0x60] sm:$0xff]
  %v5926 = vld [vmem:[#allocation3 + $0x68] sm:$0xff]
  %v5927 = vld [vmem:[#allocation3 + $0x70] sm:$0xff]
  %v5928 = vld [vmem:[#allocation3 + $0x78] sm:$0xff]
  %v5929 = vld [vmem:[#allocation3 + $0x80] sm:$0xff]
  %v5930 = vld [vmem:[#allocation3 + $0x88] sm:$0xff]
  %v5931 = vld [vmem:[#allocation3 + $0x90] sm:$0xff]
  %v5932 = vld [vmem:[#allocation3 + $0x98] sm:$0xff]
  %v5933 = vld [vmem:[#allocation3 + $0xa0] sm:$0xff]
  %v5934 = vld [vmem:[#allocation3 + $0xa8] sm:$0xff]
  %v5935 = vld [vmem:[#allocation3 + $0xb0] sm:$0xff]
  %v5936 = vld [vmem:[#allocation3 + $0xb8] sm:$0xff]
  %v5937 = vld [vmem:[#allocation3 + $0xc0] sm:$0xff]
  %v5938 = vld [vmem:[#allocation3 + $0xc8] sm:$0xff]
  %v5939 = vld [vmem:[#allocation3 + $0xd0] sm:$0xff]
  %v5940 = vld [vmem:[#allocation3 + $0xd8] sm:$0xff]
  %v5941 = vld [vmem:[#allocation3 + $0xe0] sm:$0xff]
  %v5942 = vld [vmem:[#allocation3 + $0xe8] sm:$0xff]
  %v5943 = vld [vmem:[#allocation3 + $0xf0] sm:$0xff]
  %v5944 = vld [vmem:[#allocation3 + $0xf8] sm:$0xff]
  %v5945 = vld [vmem:[#allocation3 + $0x100] sm:$0xff]
  %v5946 = vld [vmem:[#allocation3 + $0x108] sm:$0xff]
  %v5947 = vld [vmem:[#allocation3 + $0x110] sm:$0xff]
  %v5948 = vld [vmem:[#allocation3 + $0x118] sm:$0xff]
  %v5949 = vld [vmem:[#allocation3 + $0x120] sm:$0xff]
  %v5950 = vld [vmem:[#allocation3 + $0x128] sm:$0xff]
  %v5951 = vld [vmem:[#allocation3 + $0x130] sm:$0xff]
  %v5952 = vld [vmem:[#allocation3 + $0x138] sm:$0xff]
  %v5953 = vld [vmem:[#allocation3 + $0x140] sm:$0xff]
  %v5954 = vld [vmem:[#allocation3 + $0x148] sm:$0xff]
  %v5955 = vld [vmem:[#allocation3 + $0x150] sm:$0xff]
  %v5956 = vld [vmem:[#allocation3 + $0x158] sm:$0xff]
  %v5957 = vld [vmem:[#allocation3 + $0x160] sm:$0xff]
  %v5958 = vld [vmem:[#allocation3 + $0x168] sm:$0xff]
  %v5959 = vld [vmem:[#allocation3 + $0x170] sm:$0xff]
  %v5960 = vld [vmem:[#allocation3 + $0x178] sm:$0xff]
  %v5961 = vld [vmem:[#allocation3 + $0x180] sm:$0xff]
  %v5962 = vld [vmem:[#allocation3 + $0x188] sm:$0xff]
  %v5963 = vld [vmem:[#allocation3 + $0x190] sm:$0xff]
  %v5964 = vld [vmem:[#allocation3 + $0x198] sm:$0xff]
  %v5965 = vld [vmem:[#allocation3 + $0x1a0] sm:$0xff]
  %v5966 = vld [vmem:[#allocation3 + $0x1a8] sm:$0xff]
  %v5967 = vld [vmem:[#allocation3 + $0x1b0] sm:$0xff]
  %v5968 = vld [vmem:[#allocation3 + $0x1b8] sm:$0xff]
  %v5969 = vld [vmem:[#allocation3 + $0x1c0] sm:$0xff]
  %v5970 = vld [vmem:[#allocation3 + $0x1c8] sm:$0xff]
  %v5971 = vld [vmem:[#allocation3 + $0x1d0] sm:$0xff]
  %v5972 = vld [vmem:[#allocation3 + $0x1d8] sm:$0xff]
  %v5973 = vld [vmem:[#allocation3 + $0x1e0] sm:$0xff]
  %v5974 = vld [vmem:[#allocation3 + $0x1e8] sm:$0xff]
  %v5975 = vld [vmem:[#allocation3 + $0x1f0] sm:$0xff]
  %v5976 = vld [vmem:[#allocation3 + $0x1f8] sm:$0xff]
  %v5977 = vld [vmem:[%s2] sm:$0x1]
  %v5979 = vlaneseq
  %v5980 = vshrl.u32 %v5979, 7
  %v5981 = vsub.s32 0, %v5980
  %v5982 = vrot.slane %v5977, %v5981
  %v5984 = vadd.f32 %v5913, %v5982
  %v5985 = vadd.f32 %v5914, %v5982
  %v5986 = vadd.f32 %v5915, %v5982
  %v5987 = vadd.f32 %v5916, %v5982
  %v5988 = vadd.f32 %v5917, %v5982
  %v5989 = vadd.f32 %v5918, %v5982
  %v5990 = vadd.f32 %v5919, %v5982
  %v5991 = vadd.f32 %v5920, %v5982
  %v5992 = vadd.f32 %v5921, %v5982
  %v5993 = vadd.f32 %v5922, %v5982
  %v5994 = vadd.f32 %v5923, %v5982
  %v5995 = vadd.f32 %v5924, %v5982
  %v5996 = vadd.f32 %v5925, %v5982
  %v5997 = vadd.f32 %v5926, %v5982
  %v5998 = vadd.f32 %v5927, %v5982
  %v5999 = vadd.f32 %v5928, %v5982
  %v6000 = vadd.f32 %v5929, %v5982
  %v6001 = vadd.f32 %v5930, %v5982
  %v6002 = vadd.f32 %v5931, %v5982
  %v6003 = vadd.f32 %v5932, %v5982
  %v6004 = vadd.f32 %v5933, %v5982
  %v6005 = vadd.f32 %v5934, %v5982
  %v6006 = vadd.f32 %v5935, %v5982
  %v6007 = vadd.f32 %v5936, %v5982
  %v6008 = vadd.f32 %v5937, %v5982
  %v6009 = vadd.f32 %v5938, %v5982
  %v6010 = vadd.f32 %v5939, %v5982
  %v6011 = vadd.f32 %v5940, %v5982
  %v6012 = vadd.f32 %v5941, %v5982
  %v6013 = vadd.f32 %v5942, %v5982
  %v6014 = vadd.f32 %v5943, %v5982
  %v6015 = vadd.f32 %v5944, %v5982
  %v6016 = vadd.f32 %v5945, %v5982
  %v6017 = vadd.f32 %v5946, %v5982
  %v6018 = vadd.f32 %v5947, %v5982
  %v6019 = vadd.f32 %v5948, %v5982
  %v6020 = vadd.f32 %v5949, %v5982
  %v6021 = vadd.f32 %v5950, %v5982
  %v6022 = vadd.f32 %v5951, %v5982
  %v6023 = vadd.f32 %v5952, %v5982
  %v6024 = vadd.f32 %v5953, %v5982
  %v6025 = vadd.f32 %v5954, %v5982
  %v6026 = vadd.f32 %v5955, %v5982
  %v6027 = vadd.f32 %v5956, %v5982
  %v6028 = vadd.f32 %v5957, %v5982
  %v6029 = vadd.f32 %v5958, %v5982
  %v6030 = vadd.f32 %v5959, %v5982
  %v6031 = vadd.f32 %v5960, %v5982
  %v6032 = vadd.f32 %v5961, %v5982
  %v6033 = vadd.f32 %v5962, %v5982
  %v6034 = vadd.f32 %v5963, %v5982
  %v6035 = vadd.f32 %v5964, %v5982
  %v6036 = vadd.f32 %v5965, %v5982
  %v6037 = vadd.f32 %v5966, %v5982
  %v6038 = vadd.f32 %v5967, %v5982
  %v6039 = vadd.f32 %v5968, %v5982
  %v6040 = vadd.f32 %v5969, %v5982
  %v6041 = vadd.f32 %v5970, %v5982
  %v6042 = vadd.f32 %v5971, %v5982
  %v6043 = vadd.f32 %v5972, %v5982
  %v6044 = vadd.f32 %v5973, %v5982
  %v6045 = vadd.f32 %v5974, %v5982
  %v6046 = vadd.f32 %v5975, %v5982
  %v6047 = vadd.f32 %v5976, %v5982
  %v6048 = vmax.f32 %v5984, 0.0
  %v6049 = vmax.f32 %v5985, 0.0
  %v6050 = vmax.f32 %v5986, 0.0
  %v6051 = vmax.f32 %v5987, 0.0
  %v6052 = vmax.f32 %v5988, 0.0
  %v6053 = vmax.f32 %v5989, 0.0
  %v6054 = vmax.f32 %v5990, 0.0
  %v6055 = vmax.f32 %v5991, 0.0
  %v6056 = vmax.f32 %v5992, 0.0
  %v6057 = vmax.f32 %v5993, 0.0
  %v6058 = vmax.f32 %v5994, 0.0
  %v6059 = vmax.f32 %v5995, 0.0
  %v6060 = vmax.f32 %v5996, 0.0
  %v6061 = vmax.f32 %v5997, 0.0
  %v6062 = vmax.f32 %v5998, 0.0
  %v6063 = vmax.f32 %v5999, 0.0
  %v6064 = vmax.f32 %v6000, 0.0
  %v6065 = vmax.f32 %v6001, 0.0
  %v6066 = vmax.f32 %v6002, 0.0
  %v6067 = vmax.f32 %v6003, 0.0
  %v6068 = vmax.f32 %v6004, 0.0
  %v6069 = vmax.f32 %v6005, 0.0
  %v6070 = vmax.f32 %v6006, 0.0
  %v6071 = vmax.f32 %v6007, 0.0
  %v6072 = vmax.f32 %v6008, 0.0
  %v6073 = vmax.f32 %v6009, 0.0
  %v6074 = vmax.f32 %v6010, 0.0
  %v6075 = vmax.f32 %v6011, 0.0
  %v6076 = vmax.f32 %v6012, 0.0
  %v6077 = vmax.f32 %v6013, 0.0
  %v6078 = vmax.f32 %v6014, 0.0
  %v6079 = vmax.f32 %v6015, 0.0
  %v6080 = vmax.f32 %v6016, 0.0
  %v6081 = vmax.f32 %v6017, 0.0
  %v6082 = vmax.f32 %v6018, 0.0
  %v6083 = vmax.f32 %v6019, 0.0
  %v6084 = vmax.f32 %v6020, 0.0
  %v6085 = vmax.f32 %v6021, 0.0
  %v6086 = vmax.f32 %v6022, 0.0
  %v6087 = vmax.f32 %v6023, 0.0
  %v6088 = vmax.f32 %v6024, 0.0
  %v6089 = vmax.f32 %v6025, 0.0
  %v6090 = vmax.f32 %v6026, 0.0
  %v6091 = vmax.f32 %v6027, 0.0
  %v6092 = vmax.f32 %v6028, 0.0
  %v6093 = vmax.f32 %v6029, 0.0
  %v6094 = vmax.f32 %v6030, 0.0
  %v6095 = vmax.f32 %v6031, 0.0
  %v6096 = vmax.f32 %v6032, 0.0
  %v6097 = vmax.f32 %v6033, 0.0
  %v6098 = vmax.f32 %v6034, 0.0
  %v6099 = vmax.f32 %v6035, 0.0
  %v6100 = vmax.f32 %v6036, 0.0
  %v6101 = vmax.f32 %v6037, 0.0
  %v6102 = vmax.f32 %v6038, 0.0
  %v6103 = vmax.f32 %v6039, 0.0
  %v6104 = vmax.f32 %v6040, 0.0
  %v6105 = vmax.f32 %v6041, 0.0
  %v6106 = vmax.f32 %v6042, 0.0
  %v6107 = vmax.f32 %v6043, 0.0
  %v6108 = vmax.f32 %v6044, 0.0
  %v6109 = vmax.f32 %v6045, 0.0
  %v6110 = vmax.f32 %v6046, 0.0
  %v6111 = vmax.f32 %v6047, 0.0
  %v6112 = vpack.c.bf16 %v6049, %v6048
  %v6113 = vpack.c.bf16 %v6051, %v6050
  %v6114 = vpack.c.bf16 %v6053, %v6052
  %v6115 = vpack.c.bf16 %v6055, %v6054
  %v6116 = vpack.c.bf16 %v6057, %v6056
  %v6117 = vpack.c.bf16 %v6059, %v6058
  %v6118 = vpack.c.bf16 %v6061, %v6060
  %v6119 = vpack.c.bf16 %v6063, %v6062
  %v6120 = vpack.c.bf16 %v6065, %v6064
  %v6121 = vpack.c.bf16 %v6067, %v6066
  %v6122 = vpack.c.bf16 %v6069, %v6068
  %v6123 = vpack.c.bf16 %v6071, %v6070
  %v6124 = vpack.c.bf16 %v6073, %v6072
  %v6125 = vpack.c.bf16 %v6075, %v6074
  %v6126 = vpack.c.bf16 %v6077, %v6076
  %v6127 = vpack.c.bf16 %v6079, %v6078
  %v6128 = vpack.c.bf16 %v6081, %v6080
  %v6129 = vpack.c.bf16 %v6083, %v6082
  %v6130 = vpack.c.bf16 %v6085, %v6084
  %v6131 = vpack.c.bf16 %v6087, %v6086
  %v6132 = vpack.c.bf16 %v6089, %v6088
  %v6133 = vpack.c.bf16 %v6091, %v6090
  %v6134 = vpack.c.bf16 %v6093, %v6092
  %v6135 = vpack.c.bf16 %v6095, %v6094
  %v6136 = vpack.c.bf16 %v6097, %v6096
  %v6137 = vpack.c.bf16 %v6099, %v6098
  %v6138 = vpack.c.bf16 %v6101, %v6100
  %v6139 = vpack.c.bf16 %v6103, %v6102
  %v6140 = vpack.c.bf16 %v6105, %v6104
  %v6141 = vpack.c.bf16 %v6107, %v6106
  %v6142 = vpack.c.bf16 %v6109, %v6108
  %v6143 = vpack.c.bf16 %v6111, %v6110
  %v6176 = vunpack.c.l.b16 %v6112
  %v6177 = vunpack.c.h.b16 %v6112
  %v6178 = vunpack.c.l.b16 %v6113
  %v6179 = vunpack.c.h.b16 %v6113
  %v6180 = vunpack.c.l.b16 %v6114
  %v6181 = vunpack.c.h.b16 %v6114
  %v6182 = vunpack.c.l.b16 %v6115
  %v6183 = vunpack.c.h.b16 %v6115
  %v6184 = vunpack.c.l.b16 %v6116
  %v6185 = vunpack.c.h.b16 %v6116
  %v6186 = vunpack.c.l.b16 %v6117
  %v6187 = vunpack.c.h.b16 %v6117
  %v6188 = vunpack.c.l.b16 %v6118
  %v6189 = vunpack.c.h.b16 %v6118
  %v6190 = vunpack.c.l.b16 %v6119
  %v6191 = vunpack.c.h.b16 %v6119
  %v6192 = vunpack.c.l.b16 %v6120
  %v6193 = vunpack.c.h.b16 %v6120
  %v6194 = vunpack.c.l.b16 %v6121
  %v6195 = vunpack.c.h.b16 %v6121
  %v6196 = vunpack.c.l.b16 %v6122
  %v6197 = vunpack.c.h.b16 %v6122
  %v6198 = vunpack.c.l.b16 %v6123
  %v6199 = vunpack.c.h.b16 %v6123
  %v6200 = vunpack.c.l.b16 %v6124
  %v6201 = vunpack.c.h.b16 %v6124
  %v6202 = vunpack.c.l.b16 %v6125
  %v6203 = vunpack.c.h.b16 %v6125
  %v6204 = vunpack.c.l.b16 %v6126
  %v6205 = vunpack.c.h.b16 %v6126
  %v6206 = vunpack.c.l.b16 %v6127
  %v6207 = vunpack.c.h.b16 %v6127
  %v6208 = vunpack.c.l.b16 %v6128
  %v6209 = vunpack.c.h.b16 %v6128
  %v6210 = vunpack.c.l.b16 %v6129
  %v6211 = vunpack.c.h.b16 %v6129
  %v6212 = vunpack.c.l.b16 %v6130
  %v6213 = vunpack.c.h.b16 %v6130
  %v6214 = vunpack.c.l.b16 %v6131
  %v6215 = vunpack.c.h.b16 %v6131
  %v6216 = vunpack.c.l.b16 %v6132
  %v6217 = vunpack.c.h.b16 %v6132
  %v6218 = vunpack.c.l.b16 %v6133
  %v6219 = vunpack.c.h.b16 %v6133
  %v6220 = vunpack.c.l.b16 %v6134
  %v6221 = vunpack.c.h.b16 %v6134
  %v6222 = vunpack.c.l.b16 %v6135
  %v6223 = vunpack.c.h.b16 %v6135
  %v6224 = vunpack.c.l.b16 %v6136
  %v6225 = vunpack.c.h.b16 %v6136
  %v6226 = vunpack.c.l.b16 %v6137
  %v6227 = vunpack.c.h.b16 %v6137
  %v6228 = vunpack.c.l.b16 %v6138
  %v6229 = vunpack.c.h.b16 %v6138
  %v6230 = vunpack.c.l.b16 %v6139
  %v6231 = vunpack.c.h.b16 %v6139
  %v6232 = vunpack.c.l.b16 %v6140
  %v6233 = vunpack.c.h.b16 %v6140
  %v6234 = vunpack.c.l.b16 %v6141
  %v6235 = vunpack.c.h.b16 %v6141
  %v6236 = vunpack.c.l.b16 %v6142
  %v6237 = vunpack.c.h.b16 %v6142
  %v6238 = vunpack.c.l.b16 %v6143
  %v6239 = vunpack.c.h.b16 %v6143
  %v6240 = vpack.c.b16 %v6176, %v6176
  %v6241 = vpack.c.b16 %v6177, %v6177
  %v6242 = vpack.c.b16 %v6178, %v6178
  %v6243 = vpack.c.b16 %v6179, %v6179
  %v6244 = vpack.c.b16 %v6180, %v6180
  %v6245 = vpack.c.b16 %v6181, %v6181
  %v6246 = vpack.c.b16 %v6182, %v6182
  %v6247 = vpack.c.b16 %v6183, %v6183
  %v6248 = vpack.c.b16 %v6184, %v6184
  %v6249 = vpack.c.b16 %v6185, %v6185
  %v6250 = vpack.c.b16 %v6186, %v6186
  %v6251 = vpack.c.b16 %v6187, %v6187
  %v6252 = vpack.c.b16 %v6188, %v6188
  %v6253 = vpack.c.b16 %v6189, %v6189
  %v6254 = vpack.c.b16 %v6190, %v6190
  %v6255 = vpack.c.b16 %v6191, %v6191
  %v6256 = vpack.c.b16 %v6192, %v6192
  %v6257 = vpack.c.b16 %v6193, %v6193
  %v6258 = vpack.c.b16 %v6194, %v6194
  %v6259 = vpack.c.b16 %v6195, %v6195
  %v6260 = vpack.c.b16 %v6196, %v6196
  %v6261 = vpack.c.b16 %v6197, %v6197
  %v6262 = vpack.c.b16 %v6198, %v6198
  %v6263 = vpack.c.b16 %v6199, %v6199
  %v6264 = vpack.c.b16 %v6200, %v6200
  %v6265 = vpack.c.b16 %v6201, %v6201
  %v6266 = vpack.c.b16 %v6202, %v6202
  %v6267 = vpack.c.b16 %v6203, %v6203
  %v6268 = vpack.c.b16 %v6204, %v6204
  %v6269 = vpack.c.b16 %v6205, %v6205
  %v6270 = vpack.c.b16 %v6206, %v6206
  %v6271 = vpack.c.b16 %v6207, %v6207
  %v6272 = vpack.c.b16 %v6208, %v6208
  %v6273 = vpack.c.b16 %v6209, %v6209
  %v6274 = vpack.c.b16 %v6210, %v6210
  %v6275 = vpack.c.b16 %v6211, %v6211
  %v6276 = vpack.c.b16 %v6212, %v6212
  %v6277 = vpack.c.b16 %v6213, %v6213
  %v6278 = vpack.c.b16 %v6214, %v6214
  %v6279 = vpack.c.b16 %v6215, %v6215
  %v6280 = vpack.c.b16 %v6216, %v6216
  %v6281 = vpack.c.b16 %v6217, %v6217
  %v6282 = vpack.c.b16 %v6218, %v6218
  %v6283 = vpack.c.b16 %v6219, %v6219
  %v6284 = vpack.c.b16 %v6220, %v6220
  %v6285 = vpack.c.b16 %v6221, %v6221
  %v6286 = vpack.c.b16 %v6222, %v6222
  %v6287 = vpack.c.b16 %v6223, %v6223
  %v6288 = vpack.c.b16 %v6224, %v6224
  %v6289 = vpack.c.b16 %v6225, %v6225
  %v6290 = vpack.c.b16 %v6226, %v6226
  %v6291 = vpack.c.b16 %v6227, %v6227
  %v6292 = vpack.c.b16 %v6228, %v6228
  %v6293 = vpack.c.b16 %v6229, %v6229
  %v6294 = vpack.c.b16 %v6230, %v6230
  %v6295 = vpack.c.b16 %v6231, %v6231
  %v6296 = vpack.c.b16 %v6232, %v6232
  %v6297 = vpack.c.b16 %v6233, %v6233
  %v6298 = vpack.c.b16 %v6234, %v6234
  %v6299 = vpack.c.b16 %v6235, %v6235
  %v6300 = vpack.c.b16 %v6236, %v6236
  %v6301 = vpack.c.b16 %v6237, %v6237
  %v6302 = vpack.c.b16 %v6238, %v6238
  %v6303 = vpack.c.b16 %v6239, %v6239
  %6368 = vst.msk [vmem:[%s3] sm:$0xf] %vm15, %v6240
  %6369 = vst.msk [vmem:[%s3 + $0x4] sm:$0xf] %vm15, %v6241
  %6370 = vst.msk [vmem:[%s3 + $0x8] sm:$0xf] %vm15, %v6242
  %6371 = vst.msk [vmem:[%s3 + $0xc] sm:$0xf] %vm15, %v6243
  %6372 = vst.msk [vmem:[%s3 + $0x10] sm:$0xf] %vm15, %v6244
  %6373 = vst.msk [vmem:[%s3 + $0x14] sm:$0xf] %vm15, %v6245
  %6374 = vst.msk [vmem:[%s3 + $0x18] sm:$0xf] %vm15, %v6246
  %6375 = vst.msk [vmem:[%s3 + $0x1c] sm:$0xf] %vm15, %v6247
  %6376 = vst.msk [vmem:[%s3 + $0x20] sm:$0xf] %vm15, %v6248
  %6377 = vst.msk [vmem:[%s3 + $0x24] sm:$0xf] %vm15, %v6249
  %6378 = vst.msk [vmem:[%s3 + $0x28] sm:$0xf] %vm15, %v6250
  %6379 = vst.msk [vmem:[%s3 + $0x2c] sm:$0xf] %vm15, %v6251
  %6380 = vst.msk [vmem:[%s3 + $0x30] sm:$0xf] %vm15, %v6252
  %6381 = vst.msk [vmem:[%s3 + $0x34] sm:$0xf] %vm15, %v6253
  %6382 = vst.msk [vmem:[%s3 + $0x38] sm:$0xf] %vm15, %v6254
  %6383 = vst.msk [vmem:[%s3 + $0x3c] sm:$0xf] %vm15, %v6255
  %6384 = vst.msk [vmem:[%s3 + $0x40] sm:$0xf] %vm15, %v6256
  %6385 = vst.msk [vmem:[%s3 + $0x44] sm:$0xf] %vm15, %v6257
  %6386 = vst.msk [vmem:[%s3 + $0x48] sm:$0xf] %vm15, %v6258
  %6387 = vst.msk [vmem:[%s3 + $0x4c] sm:$0xf] %vm15, %v6259
  %6388 = vst.msk [vmem:[%s3 + $0x50] sm:$0xf] %vm15, %v6260
  %6389 = vst.msk [vmem:[%s3 + $0x54] sm:$0xf] %vm15, %v6261
  %6390 = vst.msk [vmem:[%s3 + $0x58] sm:$0xf] %vm15, %v6262
  %6391 = vst.msk [vmem:[%s3 + $0x5c] sm:$0xf] %vm15, %v6263
  %6392 = vst.msk [vmem:[%s3 + $0x60] sm:$0xf] %vm15, %v6264
  %6393 = vst.msk [vmem:[%s3 + $0x64] sm:$0xf] %vm15, %v6265
  %6394 = vst.msk [vmem:[%s3 + $0x68] sm:$0xf] %vm15, %v6266
  %6395 = vst.msk [vmem:[%s3 + $0x6c] sm:$0xf] %vm15, %v6267
  %6396 = vst.msk [vmem:[%s3 + $0x70] sm:$0xf] %vm15, %v6268
  %6397 = vst.msk [vmem:[%s3 + $0x74] sm:$0xf] %vm15, %v6269
  %6398 = vst.msk [vmem:[%s3 + $0x78] sm:$0xf] %vm15, %v6270
  %6399 = vst.msk [vmem:[%s3 + $0x7c] sm:$0xf] %vm15, %v6271
  %6400 = vst.msk [vmem:[%s3 + $0x80] sm:$0xf] %vm15, %v6272
  %6401 = vst.msk [vmem:[%s3 + $0x84] sm:$0xf] %vm15, %v6273
  %6402 = vst.msk [vmem:[%s3 + $0x88] sm:$0xf] %vm15, %v6274
  %6403 = vst.msk [vmem:[%s3 + $0x8c] sm:$0xf] %vm15, %v6275
  %6404 = vst.msk [vmem:[%s3 + $0x90] sm:$0xf] %vm15, %v6276
  %6405 = vst.msk [vmem:[%s3 + $0x94] sm:$0xf] %vm15, %v6277
  %6406 = vst.msk [vmem:[%s3 + $0x98] sm:$0xf] %vm15, %v6278
  %6407 = vst.msk [vmem:[%s3 + $0x9c] sm:$0xf] %vm15, %v6279
  %6408 = vst.msk [vmem:[%s3 + $0xa0] sm:$0xf] %vm15, %v6280
  %6409 = vst.msk [vmem:[%s3 + $0xa4] sm:$0xf] %vm15, %v6281
  %6410 = vst.msk [vmem:[%s3 + $0xa8] sm:$0xf] %vm15, %v6282
  %6411 = vst.msk [vmem:[%s3 + $0xac] sm:$0xf] %vm15, %v6283
  %6412 = vst.msk [vmem:[%s3 + $0xb0] sm:$0xf] %vm15, %v6284
  %6413 = vst.msk [vmem:[%s3 + $0xb4] sm:$0xf] %vm15, %v6285
  %6414 = vst.msk [vmem:[%s3 + $0xb8] sm:$0xf] %vm15, %v6286
  %6415 = vst.msk [vmem:[%s3 + $0xbc] sm:$0xf] %vm15, %v6287
  %6416 = vst.msk [vmem:[%s3 + $0xc0] sm:$0xf] %vm15, %v6288
  %6417 = vst.msk [vmem:[%s3 + $0xc4] sm:$0xf] %vm15, %v6289
  %6418 = vst.msk [vmem:[%s3 + $0xc8] sm:$0xf] %vm15, %v6290
  %6419 = vst.msk [vmem:[%s3 + $0xcc] sm:$0xf] %vm15, %v6291
  %6420 = vst.msk [vmem:[%s3 + $0xd0] sm:$0xf] %vm15, %v6292
  %6421 = vst.msk [vmem:[%s3 + $0xd4] sm:$0xf] %vm15, %v6293
  %6422 = vst.msk [vmem:[%s3 + $0xd8] sm:$0xf] %vm15, %v6294
  %6423 = vst.msk [vmem:[%s3 + $0xdc] sm:$0xf] %vm15, %v6295
  %6424 = vst.msk [vmem:[%s3 + $0xe0] sm:$0xf] %vm15, %v6296
  %6425 = vst.msk [vmem:[%s3 + $0xe4] sm:$0xf] %vm15, %v6297
  %6426 = vst.msk [vmem:[%s3 + $0xe8] sm:$0xf] %vm15, %v6298
  %6427 = vst.msk [vmem:[%s3 + $0xec] sm:$0xf] %vm15, %v6299
  %6428 = vst.msk [vmem:[%s3 + $0xf0] sm:$0xf] %vm15, %v6300
  %6429 = vst.msk [vmem:[%s3 + $0xf4] sm:$0xf] %vm15, %v6301
  %6430 = vst.msk [vmem:[%s3 + $0xf8] sm:$0xf] %vm15, %v6302
  %6431 = vst.msk [vmem:[%s3 + $0xfc] sm:$0xf] %vm15, %v6303
  // Predicated region
  $region14: #{_lambda_.5} parent=0 // pred_check
    _
  $region15: #{_lambda_.5} parent=0 // pred_check_branch
    %6433 = sbr.rel (0) target = $region17
  $region16: #{_lambda_.5} parent=0 // pred_region
    _
  $region17: #{_lambda_.5} parent=0 // pred_fallthru
    _
  // Predicated region
  $region18: #{_lambda_.5} parent=0 // pred_check
    _
  $region19: #{_lambda_.5} parent=0 // pred_check_branch
    %6435 = sbr.rel (0) target = $region21
  $region20: #{_lambda_.5} parent=0 // pred_region
    _
  $region21: #{_lambda_.5} parent=0 // pred_fallthru
    _

// kernel: _lambda_.4
$region0: #{_lambda_.4}
  #allocation0 [shape = 'u32[]', space=smem, size = 0x4, offset = 0x4, fixed_abs, tag = 'smem constant byte address 0x4 - core index']
  #allocation1 [shape = 'u32[144,128]{1,0:T(1,128)}', space=vmem, size = 0x12000, scoped, tag = 'internal scratch']
  #allocation2 [shape = 'bf16[2,18,18,4]{3,2,1,0:T(8,128)(2,1)}', space=vmem, size = 0x36000, scoped, tag = 'scratch operand']
  #allocation3 [shape = 'f32[512,16]{1,0:T(8,128)}', space=vmem, size = 0x40000, scoped, tag = 'scratch operand']
  %s0 = inlined_call_operand.vmem [shape: bf16[2,16,16,4], index: 0, kind: input, shape index: {}]
  %s1 = inlined_call_operand.vmem [shape: bf16[3,12,16], index: 1, kind: input, shape index: {}]
  %s2 = inlined_call_operand.vmem [shape: f32[1,16], index: 2, kind: input, shape index: {}]
  %s3 = inlined_call_operand.vmem [shape: bf16[2,16,16,16], index: 3, kind: output, shape index: {}]
  %s4 = sld [smem:[#allocation0]]
  $region22: #{_lambda_.4} parent=0
    _
  %s6 = ssub.s32 1, %s4
  %s7 = scalar_select 0, %s6, %s4
  // Predicated region
  $region2: #{_lambda_.4} parent=0 // pred_check
    _
  $region3: #{_lambda_.4} parent=0 // pred_check_branch
    %9 = sbr.rel (0) target = $region5
  $region4: #{_lambda_.4} parent=0 // pred_region
    _
  $region5: #{_lambda_.4} parent=0 // pred_fallthru
    _
  // Predicated region
  $region6: #{_lambda_.4} parent=0 // pred_check
    _
  $region7: #{_lambda_.4} parent=0 // pred_check_branch
    %11 = sbr.rel (0) target = $region9
  $region8: #{_lambda_.4} parent=0 // pred_region
    _
  $region9: #{_lambda_.4} parent=0 // pred_fallthru
    _
  // Predicated region
  $region10: #{_lambda_.4} parent=0 // pred_check
    _
  $region11: #{_lambda_.4} parent=0 // pred_check_branch
    %13 = sbr.rel (0) target = $region13
  $region12: #{_lambda_.4} parent=0 // pred_region
    _
  $region13: #{_lambda_.4} parent=0 // pred_fallthru
    _
  %vm15 = vcmask 27648
  %16 = vst.msk [vmem:[#allocation2] sm:$0xf] %vm15, 0
  %17 = vst.msk [vmem:[#allocation2 + $0x4] sm:$0xf] %vm15, 0
  %vm18 = vcmask 24576
  %19 = vst.msk [vmem:[#allocation2 + $0x8] sm:$0x1] %vm18, 0
  %20 = vst.msk [vmem:[#allocation2 + $0xc] sm:$0xf] %vm15, 0
  %21 = vst.msk [vmem:[#allocation2 + $0x10] sm:$0xf] %vm15, 0
  %22 = vst.msk [vmem:[#allocation2 + $0x14] sm:$0x1] %vm18, 0
  %23 = vst.msk [vmem:[#allocation2 + $0x18] sm:$0xf] %vm15, 0
  %24 = vst.msk [vmem:[#allocation2 + $0x1c] sm:$0xf] %vm15, 0
  %25 = vst.msk [vmem:[#allocation2 + $0x20] sm:$0x1] %vm18, 0
  %26 = vst.msk [vmem:[#allocation2 + $0x24] sm:$0xf] %vm15, 0
  %27 = vst.msk [vmem:[#allocation2 + $0x28] sm:$0xf] %vm15, 0
  %28 = vst.msk [vmem:[#allocation2 + $0x2c] sm:$0x1] %vm18, 0
  %29 = vst.msk [vmem:[#allocation2 + $0x30] sm:$0xf] %vm15, 0
  %30 = vst.msk [vmem:[#allocation2 + $0x34] sm:$0xf] %vm15, 0
  %31 = vst.msk [vmem:[#allocation2 + $0x38] sm:$0x1] %vm18, 0
  %32 = vst.msk [vmem:[#allocation2 + $0x3c] sm:$0xf] %vm15, 0
  %33 = vst.msk [vmem:[#allocation2 + $0x40] sm:$0xf] %vm15, 0
  %34 = vst.msk [vmem:[#allocation2 + $0x44] sm:$0x1] %vm18, 0
  %35 = vst.msk [vmem:[#allocation2 + $0x48] sm:$0xf] %vm15, 0
  %36 = vst.msk [vmem:[#allocation2 + $0x4c] sm:$0xf] %vm15, 0
  %37 = vst.msk [vmem:[#allocation2 + $0x50] sm:$0x1] %vm18, 0
  %38 = vst.msk [vmem:[#allocation2 + $0x54] sm:$0xf] %vm15, 0
  %39 = vst.msk [vmem:[#allocation2 + $0x58] sm:$0xf] %vm15, 0
  %40 = vst.msk [vmem:[#allocation2 + $0x5c] sm:$0x1] %vm18, 0
  %41 = vst.msk [vmem:[#allocation2 + $0x60] sm:$0xf] %vm15, 0
  %42 = vst.msk [vmem:[#allocation2 + $0x64] sm:$0xf] %vm15, 0
  %43 = vst.msk [vmem:[#allocation2 + $0x68] sm:$0x1] %vm18, 0
  %44 = vst.msk [vmem:[#allocation2 + $0x6c] sm:$0xf] %vm15, 0
  %45 = vst.msk [vmem:[#allocation2 + $0x70] sm:$0xf] %vm15, 0
  %46 = vst.msk [vmem:[#allocation2 + $0x74] sm:$0x1] %vm18, 0
  %47 = vst.msk [vmem:[#allocation2 + $0x78] sm:$0xf] %vm15, 0
  %48 = vst.msk [vmem:[#allocation2 + $0x7c] sm:$0xf] %vm15, 0
  %49 = vst.msk [vmem:[#allocation2 + $0x80] sm:$0x1] %vm18, 0
  %50 = vst.msk [vmem:[#allocation2 + $0x84] sm:$0xf] %vm15, 0
  %51 = vst.msk [vmem:[#allocation2 + $0x88] sm:$0xf] %vm15, 0
  %52 = vst.msk [vmem:[#allocation2 + $0x8c] sm:$0x1] %vm18, 0
  %53 = vst.msk [vmem:[#allocation2 + $0x90] sm:$0xf] %vm15, 0
  %54 = vst.msk [vmem:[#allocation2 + $0x94] sm:$0xf] %vm15, 0
  %55 = vst.msk [vmem:[#allocation2 + $0x98] sm:$0x1] %vm18, 0
  %56 = vst.msk [vmem:[#allocation2 + $0x9c] sm:$0xf] %vm15, 0
  %57 = vst.msk [vmem:[#allocation2 + $0xa0] sm:$0xf] %vm15, 0
  %58 = vst.msk [vmem:[#allocation2 + $0xa4] sm:$0x1] %vm18, 0
  %59 = vst.msk [vmem:[#allocation2 + $0xa8] sm:$0xf] %vm15, 0
  %60 = vst.msk [vmem:[#allocation2 + $0xac] sm:$0xf] %vm15, 0
  %61 = vst.msk [vmem:[#allocation2 + $0xb0] sm:$0x1] %vm18, 0
  %62 = vst.msk [vmem:[#allocation2 + $0xb4] sm:$0xf] %vm15, 0
  %63 = vst.msk [vmem:[#allocation2 + $0xb8] sm:$0xf] %vm15, 0
  %64 = vst.msk [vmem:[#allocation2 + $0xbc] sm:$0x1] %vm18, 0
  %65 = vst.msk [vmem:[#allocation2 + $0xc0] sm:$0xf] %vm15, 0
  %66 = vst.msk [vmem:[#allocation2 + $0xc4] sm:$0xf] %vm15, 0
  %67 = vst.msk [vmem:[#allocation2 + $0xc8] sm:$0x1] %vm18, 0
  %68 = vst.msk [vmem:[#allocation2 + $0xcc] sm:$0xf] %vm15, 0
  %69 = vst.msk [vmem:[#allocation2 + $0xd0] sm:$0xf] %vm15, 0
  %70 = vst.msk [vmem:[#allocation2 + $0xd4] sm:$0x1] %vm18, 0
  %71 = vst.msk [vmem:[#allocation2 + $0xd8] sm:$0xf] %vm15, 0
  %72 = vst.msk [vmem:[#allocation2 + $0xdc] sm:$0xf] %vm15, 0
  %73 = vst.msk [vmem:[#allocation2 + $0xe0] sm:$0x1] %vm18, 0
  %74 = vst.msk [vmem:[#allocation2 + $0xe4] sm:$0xf] %vm15, 0
  %75 = vst.msk [vmem:[#allocation2 + $0xe8] sm:$0xf] %vm15, 0
  %76 = vst.msk [vmem:[#allocation2 + $0xec] sm:$0x1] %vm18, 0
  %77 = vst.msk [vmem:[#allocation2 + $0xf0] sm:$0xf] %vm15, 0
  %78 = vst.msk [vmem:[#allocation2 + $0xf4] sm:$0xf] %vm15, 0
  %79 = vst.msk [vmem:[#allocation2 + $0xf8] sm:$0x1] %vm18, 0
  %80 = vst.msk [vmem:[#allocation2 + $0xfc] sm:$0xf] %vm15, 0
  %81 = vst.msk [vmem:[#allocation2 + $0x100] sm:$0xf] %vm15, 0
  %82 = vst.msk [vmem:[#allocation2 + $0x104] sm:$0x1] %vm18, 0
  %83 = vst.msk [vmem:[#allocation2 + $0x108] sm:$0xf] %vm15, 0
  %84 = vst.msk [vmem:[#allocation2 + $0x10c] sm:$0xf] %vm15, 0
  %85 = vst.msk [vmem:[#allocation2 + $0x110] sm:$0x1] %vm18, 0
  %86 = vst.msk [vmem:[#allocation2 + $0x114] sm:$0xf] %vm15, 0
  %87 = vst.msk [vmem:[#allocation2 + $0x118] sm:$0xf] %vm15, 0
  %88 = vst.msk [vmem:[#allocation2 + $0x11c] sm:$0x1] %vm18, 0
  %89 = vst.msk [vmem:[#allocation2 + $0x120] sm:$0xf] %vm15, 0
  %90 = vst.msk [vmem:[#allocation2 + $0x124] sm:$0xf] %vm15, 0
  %91 = vst.msk [vmem:[#allocation2 + $0x128] sm:$0x1] %vm18, 0
  %92 = vst.msk [vmem:[#allocation2 + $0x12c] sm:$0xf] %vm15, 0
  %93 = vst.msk [vmem:[#allocation2 + $0x130] sm:$0xf] %vm15, 0
  %94 = vst.msk [vmem:[#allocation2 + $0x134] sm:$0x1] %vm18, 0
  %95 = vst.msk [vmem:[#allocation2 + $0x138] sm:$0xf] %vm15, 0
  %96 = vst.msk [vmem:[#allocation2 + $0x13c] sm:$0xf] %vm15, 0
  %97 = vst.msk [vmem:[#allocation2 + $0x140] sm:$0x1] %vm18, 0
  %98 = vst.msk [vmem:[#allocation2 + $0x144] sm:$0xf] %vm15, 0
  %99 = vst.msk [vmem:[#allocation2 + $0x148] sm:$0xf] %vm15, 0
  %100 = vst.msk [vmem:[#allocation2 + $0x14c] sm:$0x1] %vm18, 0
  %101 = vst.msk [vmem:[#allocation2 + $0x150] sm:$0xf] %vm15, 0
  %102 = vst.msk [vmem:[#allocation2 + $0x154] sm:$0xf] %vm15, 0
  %103 = vst.msk [vmem:[#allocation2 + $0x158] sm:$0x1] %vm18, 0
  %104 = vst.msk [vmem:[#allocation2 + $0x15c] sm:$0xf] %vm15, 0
  %105 = vst.msk [vmem:[#allocation2 + $0x160] sm:$0xf] %vm15, 0
  %106 = vst.msk [vmem:[#allocation2 + $0x164] sm:$0x1] %vm18, 0
  %107 = vst.msk [vmem:[#allocation2 + $0x168] sm:$0xf] %vm15, 0
  %108 = vst.msk [vmem:[#allocation2 + $0x16c] sm:$0xf] %vm15, 0
  %109 = vst.msk [vmem:[#allocation2 + $0x170] sm:$0x1] %vm18, 0
  %110 = vst.msk [vmem:[#allocation2 + $0x174] sm:$0xf] %vm15, 0
  %111 = vst.msk [vmem:[#allocation2 + $0x178] sm:$0xf] %vm15, 0
  %112 = vst.msk [vmem:[#allocation2 + $0x17c] sm:$0x1] %vm18, 0
  %113 = vst.msk [vmem:[#allocation2 + $0x180] sm:$0xf] %vm15, 0
  %114 = vst.msk [vmem:[#allocation2 + $0x184] sm:$0xf] %vm15, 0
  %115 = vst.msk [vmem:[#allocation2 + $0x188] sm:$0x1] %vm18, 0
  %116 = vst.msk [vmem:[#allocation2 + $0x18c] sm:$0xf] %vm15, 0
  %117 = vst.msk [vmem:[#allocation2 + $0x190] sm:$0xf] %vm15, 0
  %118 = vst.msk [vmem:[#allocation2 + $0x194] sm:$0x1] %vm18, 0
  %119 = vst.msk [vmem:[#allocation2 + $0x198] sm:$0xf] %vm15, 0
  %120 = vst.msk [vmem:[#allocation2 + $0x19c] sm:$0xf] %vm15, 0
  %121 = vst.msk [vmem:[#allocation2 + $0x1a0] sm:$0x1] %vm18, 0
  %122 = vst.msk [vmem:[#allocation2 + $0x1a4] sm:$0xf] %vm15, 0
  %123 = vst.msk [vmem:[#allocation2 + $0x1a8] sm:$0xf] %vm15, 0
  %124 = vst.msk [vmem:[#allocation2 + $0x1ac] sm:$0x1] %vm18, 0
  %v125 = vld [vmem:[%s0] sm:$0xf]
  %v126 = vld [vmem:[%s0 + $0x4] sm:$0xf]
  %v127 = vld [vmem:[%s0 + $0x8] sm:$0xf]
  %v128 = vld [vmem:[%s0 + $0xc] sm:$0xf]
  %v129 = vld [vmem:[%s0 + $0x10] sm:$0xf]
  %v130 = vld [vmem:[%s0 + $0x14] sm:$0xf]
  %v131 = vld [vmem:[%s0 + $0x18] sm:$0xf]
  %v132 = vld [vmem:[%s0 + $0x1c] sm:$0xf]
  %v133 = vld [vmem:[%s0 + $0x20] sm:$0xf]
  %v134 = vld [vmem:[%s0 + $0x24] sm:$0xf]
  %v135 = vld [vmem:[%s0 + $0x28] sm:$0xf]
  %v136 = vld [vmem:[%s0 + $0x2c] sm:$0xf]
  %v137 = vld [vmem:[%s0 + $0x30] sm:$0xf]
  %v138 = vld [vmem:[%s0 + $0x34] sm:$0xf]
  %v139 = vld [vmem:[%s0 + $0x38] sm:$0xf]
  %v140 = vld [vmem:[%s0 + $0x3c] sm:$0xf]
  %v141 = vld [vmem:[%s0 + $0x40] sm:$0xf]
  %v142 = vld [vmem:[%s0 + $0x44] sm:$0xf]
  %v143 = vld [vmem:[%s0 + $0x48] sm:$0xf]
  %v144 = vld [vmem:[%s0 + $0x4c] sm:$0xf]
  %v145 = vld [vmem:[%s0 + $0x50] sm:$0xf]
  %v146 = vld [vmem:[%s0 + $0x54] sm:$0xf]
  %v147 = vld [vmem:[%s0 + $0x58] sm:$0xf]
  %v148 = vld [vmem:[%s0 + $0x5c] sm:$0xf]
  %v149 = vld [vmem:[%s0 + $0x60] sm:$0xf]
  %v150 = vld [vmem:[%s0 + $0x64] sm:$0xf]
  %v151 = vld [vmem:[%s0 + $0x68] sm:$0xf]
  %v152 = vld [vmem:[%s0 + $0x6c] sm:$0xf]
  %v153 = vld [vmem:[%s0 + $0x70] sm:$0xf]
  %v154 = vld [vmem:[%s0 + $0x74] sm:$0xf]
  %v155 = vld [vmem:[%s0 + $0x78] sm:$0xf]
  %v156 = vld [vmem:[%s0 + $0x7c] sm:$0xf]
  %v157 = vld [vmem:[%s0 + $0x80] sm:$0xf]
  %v158 = vld [vmem:[%s0 + $0x84] sm:$0xf]
  %v159 = vld [vmem:[%s0 + $0x88] sm:$0xf]
  %v160 = vld [vmem:[%s0 + $0x8c] sm:$0xf]
  %v161 = vld [vmem:[%s0 + $0x90] sm:$0xf]
  %v162 = vld [vmem:[%s0 + $0x94] sm:$0xf]
  %v163 = vld [vmem:[%s0 + $0x98] sm:$0xf]
  %v164 = vld [vmem:[%s0 + $0x9c] sm:$0xf]
  %v165 = vld [vmem:[%s0 + $0xa0] sm:$0xf]
  %v166 = vld [vmem:[%s0 + $0xa4] sm:$0xf]
  %v167 = vld [vmem:[%s0 + $0xa8] sm:$0xf]
  %v168 = vld [vmem:[%s0 + $0xac] sm:$0xf]
  %v169 = vld [vmem:[%s0 + $0xb0] sm:$0xf]
  %v170 = vld [vmem:[%s0 + $0xb4] sm:$0xf]
  %v171 = vld [vmem:[%s0 + $0xb8] sm:$0xf]
  %v172 = vld [vmem:[%s0 + $0xbc] sm:$0xf]
  %v173 = vld [vmem:[%s0 + $0xc0] sm:$0xf]
  %v174 = vld [vmem:[%s0 + $0xc4] sm:$0xf]
  %v175 = vld [vmem:[%s0 + $0xc8] sm:$0xf]
  %v176 = vld [vmem:[%s0 + $0xcc] sm:$0xf]
  %v177 = vld [vmem:[%s0 + $0xd0] sm:$0xf]
  %v178 = vld [vmem:[%s0 + $0xd4] sm:$0xf]
  %v179 = vld [vmem:[%s0 + $0xd8] sm:$0xf]
  %v180 = vld [vmem:[%s0 + $0xdc] sm:$0xf]
  %v181 = vld [vmem:[%s0 + $0xe0] sm:$0xf]
  %v182 = vld [vmem:[%s0 + $0xe4] sm:$0xf]
  %v183 = vld [vmem:[%s0 + $0xe8] sm:$0xf]
  %v184 = vld [vmem:[%s0 + $0xec] sm:$0xf]
  %v185 = vld [vmem:[%s0 + $0xf0] sm:$0xf]
  %v186 = vld [vmem:[%s0 + $0xf4] sm:$0xf]
  %v187 = vld [vmem:[%s0 + $0xf8] sm:$0xf]
  %v188 = vld [vmem:[%s0 + $0xfc] sm:$0xf]
  %vm189 = vsmask.f32 256
  %vm190 = vsmask.f32 4368
  %vm191 = vmor %vm189, %vm190
  %v193 = vshrl.u32 %v125, 16
  %v195 = vrot.slane %v193, 7
  %v196 = vshll.u32 %v125, 16
  %v198 = vor.u32 %v195, %v196
  %v199 = vrot.slane %v195, 4
  %v201 = vshrl.u32 %v126, 16
  %v203 = vrot.slane %v201, 7
  %v204 = vshll.u32 %v126, 16
  %v206 = vor.u32 %v203, %v204
  %v207 = vsel %vm191, %v199, %v206
  %v208 = vrot.slane %v203, 4
  %v210 = vshrl.u32 %v127, 16
  %v212 = vrot.slane %v210, 7
  %v213 = vshll.u32 %v127, 16
  %v215 = vor.u32 %v212, %v213
  %v216 = vrot.slane %v212, 4
  %v218 = vshrl.u32 %v128, 16
  %v220 = vrot.slane %v218, 7
  %v221 = vshll.u32 %v128, 16
  %v223 = vor.u32 %v220, %v221
  %v224 = vsel %vm191, %v216, %v223
  %v225 = vrot.slane %v220, 4
  %v227 = vshrl.u32 %v129, 16
  %v229 = vrot.slane %v227, 7
  %v230 = vshll.u32 %v129, 16
  %v232 = vor.u32 %v229, %v230
  %v233 = vrot.slane %v229, 4
  %v235 = vshrl.u32 %v130, 16
  %v237 = vrot.slane %v235, 7
  %v238 = vshll.u32 %v130, 16
  %v240 = vor.u32 %v237, %v238
  %v241 = vsel %vm191, %v233, %v240
  %v242 = vrot.slane %v237, 4
  %v244 = vshrl.u32 %v131, 16
  %v246 = vrot.slane %v244, 7
  %v247 = vshll.u32 %v131, 16
  %v249 = vor.u32 %v246, %v247
  %v250 = vrot.slane %v246, 4
  %v252 = vshrl.u32 %v132, 16
  %v254 = vrot.slane %v252, 7
  %v255 = vshll.u32 %v132, 16
  %v257 = vor.u32 %v254, %v255
  %v258 = vsel %vm191, %v250, %v257
  %v259 = vrot.slane %v254, 4
  %v261 = vshrl.u32 %v133, 16
  %v263 = vrot.slane %v261, 7
  %v264 = vshll.u32 %v133, 16
  %v266 = vor.u32 %v263, %v264
  %v267 = vrot.slane %v263, 4
  %v269 = vshrl.u32 %v134, 16
  %v271 = vrot.slane %v269, 7
  %v272 = vshll.u32 %v134, 16
  %v274 = vor.u32 %v271, %v272
  %v275 = vsel %vm191, %v267, %v274
  %v276 = vrot.slane %v271, 4
  %v278 = vshrl.u32 %v135, 16
  %v280 = vrot.slane %v278, 7
  %v281 = vshll.u32 %v135, 16
  %v283 = vor.u32 %v280, %v281
  %v284 = vrot.slane %v280, 4
  %v286 = vshrl.u32 %v136, 16
  %v288 = vrot.slane %v286, 7
  %v289 = vshll.u32 %v136, 16
  %v291 = vor.u32 %v288, %v289
  %v292 = vsel %vm191, %v284, %v291
  %v293 = vrot.slane %v288, 4
  %v295 = vshrl.u32 %v137, 16
  %v297 = vrot.slane %v295, 7
  %v298 = vshll.u32 %v137, 16
  %v300 = vor.u32 %v297, %v298
  %v301 = vrot.slane %v297, 4
  %v303 = vshrl.u32 %v138, 16
  %v305 = vrot.slane %v303, 7
  %v306 = vshll.u32 %v138, 16
  %v308 = vor.u32 %v305, %v306
  %v309 = vsel %vm191, %v301, %v308
  %v310 = vrot.slane %v305, 4
  %v312 = vshrl.u32 %v139, 16
  %v314 = vrot.slane %v312, 7
  %v315 = vshll.u32 %v139, 16
  %v317 = vor.u32 %v314, %v315
  %v318 = vrot.slane %v314, 4
  %v320 = vshrl.u32 %v140, 16
  %v322 = vrot.slane %v320, 7
  %v323 = vshll.u32 %v140, 16
  %v325 = vor.u32 %v322, %v323
  %v326 = vsel %vm191, %v318, %v325
  %v327 = vrot.slane %v322, 4
  %v329 = vshrl.u32 %v141, 16
  %v331 = vrot.slane %v329, 7
  %v332 = vshll.u32 %v141, 16
  %v334 = vor.u32 %v331, %v332
  %v335 = vrot.slane %v331, 4
  %v337 = vshrl.u32 %v142, 16
  %v339 = vrot.slane %v337, 7
  %v340 = vshll.u32 %v142, 16
  %v342 = vor.u32 %v339, %v340
  %v343 = vsel %vm191, %v335, %v342
  %v344 = vrot.slane %v339, 4
  %v346 = vshrl.u32 %v143, 16
  %v348 = vrot.slane %v346, 7
  %v349 = vshll.u32 %v143, 16
  %v351 = vor.u32 %v348, %v349
  %v352 = vrot.slane %v348, 4
  %v354 = vshrl.u32 %v144, 16
  %v356 = vrot.slane %v354, 7
  %v357 = vshll.u32 %v144, 16
  %v359 = vor.u32 %v356, %v357
  %v360 = vsel %vm191, %v352, %v359
  %v361 = vrot.slane %v356, 4
  %v363 = vshrl.u32 %v145, 16
  %v365 = vrot.slane %v363, 7
  %v366 = vshll.u32 %v145, 16
  %v368 = vor.u32 %v365, %v366
  %v369 = vrot.slane %v365, 4
  %v371 = vshrl.u32 %v146, 16
  %v373 = vrot.slane %v371, 7
  %v374 = vshll.u32 %v146, 16
  %v376 = vor.u32 %v373, %v374
  %v377 = vsel %vm191, %v369, %v376
  %v378 = vrot.slane %v373, 4
  %v380 = vshrl.u32 %v147, 16
  %v382 = vrot.slane %v380, 7
  %v383 = vshll.u32 %v147, 16
  %v385 = vor.u32 %v382, %v383
  %v386 = vrot.slane %v382, 4
  %v388 = vshrl.u32 %v148, 16
  %v390 = vrot.slane %v388, 7
  %v391 = vshll.u32 %v148, 16
  %v393 = vor.u32 %v390, %v391
  %v394 = vsel %vm191, %v386, %v393
  %v395 = vrot.slane %v390, 4
  %v397 = vshrl.u32 %v149, 16
  %v399 = vrot.slane %v397, 7
  %v400 = vshll.u32 %v149, 16
  %v402 = vor.u32 %v399, %v400
  %v403 = vrot.slane %v399, 4
  %v405 = vshrl.u32 %v150, 16
  %v407 = vrot.slane %v405, 7
  %v408 = vshll.u32 %v150, 16
  %v410 = vor.u32 %v407, %v408
  %v411 = vsel %vm191, %v403, %v410
  %v412 = vrot.slane %v407, 4
  %v414 = vshrl.u32 %v151, 16
  %v416 = vrot.slane %v414, 7
  %v417 = vshll.u32 %v151, 16
  %v419 = vor.u32 %v416, %v417
  %v420 = vrot.slane %v416, 4
  %v422 = vshrl.u32 %v152, 16
  %v424 = vrot.slane %v422, 7
  %v425 = vshll.u32 %v152, 16
  %v427 = vor.u32 %v424, %v425
  %v428 = vsel %vm191, %v420, %v427
  %v429 = vrot.slane %v424, 4
  %v431 = vshrl.u32 %v153, 16
  %v433 = vrot.slane %v431, 7
  %v434 = vshll.u32 %v153, 16
  %v436 = vor.u32 %v433, %v434
  %v437 = vrot.slane %v433, 4
  %v439 = vshrl.u32 %v154, 16
  %v441 = vrot.slane %v439, 7
  %v442 = vshll.u32 %v154, 16
  %v444 = vor.u32 %v441, %v442
  %v445 = vsel %vm191, %v437, %v444
  %v446 = vrot.slane %v441, 4
  %v448 = vshrl.u32 %v155, 16
  %v450 = vrot.slane %v448, 7
  %v451 = vshll.u32 %v155, 16
  %v453 = vor.u32 %v450, %v451
  %v454 = vrot.slane %v450, 4
  %v456 = vshrl.u32 %v156, 16
  %v458 = vrot.slane %v456, 7
  %v459 = vshll.u32 %v156, 16
  %v461 = vor.u32 %v458, %v459
  %v462 = vsel %vm191, %v454, %v461
  %v463 = vrot.slane %v458, 4
  %v465 = vshrl.u32 %v157, 16
  %v467 = vrot.slane %v465, 7
  %v468 = vshll.u32 %v157, 16
  %v470 = vor.u32 %v467, %v468
  %v471 = vrot.slane %v467, 4
  %v473 = vshrl.u32 %v158, 16
  %v475 = vrot.slane %v473, 7
  %v476 = vshll.u32 %v158, 16
  %v478 = vor.u32 %v475, %v476
  %v479 = vsel %vm191, %v471, %v478
  %v480 = vrot.slane %v475, 4
  %v482 = vshrl.u32 %v159, 16
  %v484 = vrot.slane %v482, 7
  %v485 = vshll.u32 %v159, 16
  %v487 = vor.u32 %v484, %v485
  %v488 = vrot.slane %v484, 4
  %v490 = vshrl.u32 %v160, 16
  %v492 = vrot.slane %v490, 7
  %v493 = vshll.u32 %v160, 16
  %v495 = vor.u32 %v492, %v493
  %v496 = vsel %vm191, %v488, %v495
  %v497 = vrot.slane %v492, 4
  %v499 = vshrl.u32 %v161, 16
  %v501 = vrot.slane %v499, 7
  %v502 = vshll.u32 %v161, 16
  %v504 = vor.u32 %v501, %v502
  %v505 = vrot.slane %v501, 4
  %v507 = vshrl.u32 %v162, 16
  %v509 = vrot.slane %v507, 7
  %v510 = vshll.u32 %v162, 16
  %v512 = vor.u32 %v509, %v510
  %v513 = vsel %vm191, %v505, %v512
  %v514 = vrot.slane %v509, 4
  %v516 = vshrl.u32 %v163, 16
  %v518 = vrot.slane %v516, 7
  %v519 = vshll.u32 %v163, 16
  %v521 = vor.u32 %v518, %v519
  %v522 = vrot.slane %v518, 4
  %v524 = vshrl.u32 %v164, 16
  %v526 = vrot.slane %v524, 7
  %v527 = vshll.u32 %v164, 16
  %v529 = vor.u32 %v526, %v527
  %v530 = vsel %vm191, %v522, %v529
  %v531 = vrot.slane %v526, 4
  %v533 = vshrl.u32 %v165, 16
  %v535 = vrot.slane %v533, 7
  %v536 = vshll.u32 %v165, 16
  %v538 = vor.u32 %v535, %v536
  %v539 = vrot.slane %v535, 4
  %v541 = vshrl.u32 %v166, 16
  %v543 = vrot.slane %v541, 7
  %v544 = vshll.u32 %v166, 16
  %v546 = vor.u32 %v543, %v544
  %v547 = vsel %vm191, %v539, %v546
  %v548 = vrot.slane %v543, 4
  %v550 = vshrl.u32 %v167, 16
  %v552 = vrot.slane %v550, 7
  %v553 = vshll.u32 %v167, 16
  %v555 = vor.u32 %v552, %v553
  %v556 = vrot.slane %v552, 4
  %v558 = vshrl.u32 %v168, 16
  %v560 = vrot.slane %v558, 7
  %v561 = vshll.u32 %v168, 16
  %v563 = vor.u32 %v560, %v561
  %v564 = vsel %vm191, %v556, %v563
  %v565 = vrot.slane %v560, 4
  %v567 = vshrl.u32 %v169, 16
  %v569 = vrot.slane %v567, 7
  %v570 = vshll.u32 %v169, 16
  %v572 = vor.u32 %v569, %v570
  %v573 = vrot.slane %v569, 4
  %v575 = vshrl.u32 %v170, 16
  %v577 = vrot.slane %v575, 7
  %v578 = vshll.u32 %v170, 16
  %v580 = vor.u32 %v577, %v578
  %v581 = vsel %vm191, %v573, %v580
  %v582 = vrot.slane %v577, 4
  %v584 = vshrl.u32 %v171, 16
  %v586 = vrot.slane %v584, 7
  %v587 = vshll.u32 %v171, 16
  %v589 = vor.u32 %v586, %v587
  %v590 = vrot.slane %v586, 4
  %v592 = vshrl.u32 %v172, 16
  %v594 = vrot.slane %v592, 7
  %v595 = vshll.u32 %v172, 16
  %v597 = vor.u32 %v594, %v595
  %v598 = vsel %vm191, %v590, %v597
  %v599 = vrot.slane %v594, 4
  %v601 = vshrl.u32 %v173, 16
  %v603 = vrot.slane %v601, 7
  %v604 = vshll.u32 %v173, 16
  %v606 = vor.u32 %v603, %v604
  %v607 = vrot.slane %v603, 4
  %v609 = vshrl.u32 %v174, 16
  %v611 = vrot.slane %v609, 7
  %v612 = vshll.u32 %v174, 16
  %v614 = vor.u32 %v611, %v612
  %v615 = vsel %vm191, %v607, %v614
  %v616 = vrot.slane %v611, 4
  %v618 = vshrl.u32 %v175, 16
  %v620 = vrot.slane %v618, 7
  %v621 = vshll.u32 %v175, 16
  %v623 = vor.u32 %v620, %v621
  %v624 = vrot.slane %v620, 4
  %v626 = vshrl.u32 %v176, 16
  %v628 = vrot.slane %v626, 7
  %v629 = vshll.u32 %v176, 16
  %v631 = vor.u32 %v628, %v629
  %v632 = vsel %vm191, %v624, %v631
  %v633 = vrot.slane %v628, 4
  %v635 = vshrl.u32 %v177, 16
  %v637 = vrot.slane %v635, 7
  %v638 = vshll.u32 %v177, 16
  %v640 = vor.u32 %v637, %v638
  %v641 = vrot.slane %v637, 4
  %v643 = vshrl.u32 %v178, 16
  %v645 = vrot.slane %v643, 7
  %v646 = vshll.u32 %v178, 16
  %v648 = vor.u32 %v645, %v646
  %v649 = vsel %vm191, %v641, %v648
  %v650 = vrot.slane %v645, 4
  %v652 = vshrl.u32 %v179, 16
  %v654 = vrot.slane %v652, 7
  %v655 = vshll.u32 %v179, 16
  %v657 = vor.u32 %v654, %v655
  %v658 = vrot.slane %v654, 4
  %v660 = vshrl.u32 %v180, 16
  %v662 = vrot.slane %v660, 7
  %v663 = vshll.u32 %v180, 16
  %v665 = vor.u32 %v662, %v663
  %v666 = vsel %vm191, %v658, %v665
  %v667 = vrot.slane %v662, 4
  %v669 = vshrl.u32 %v181, 16
  %v671 = vrot.slane %v669, 7
  %v672 = vshll.u32 %v181, 16
  %v674 = vor.u32 %v671, %v672
  %v675 = vrot.slane %v671, 4
  %v677 = vshrl.u32 %v182, 16
  %v679 = vrot.slane %v677, 7
  %v680 = vshll.u32 %v182, 16
  %v682 = vor.u32 %v679, %v680
  %v683 = vsel %vm191, %v675, %v682
  %v684 = vrot.slane %v679, 4
  %v686 = vshrl.u32 %v183, 16
  %v688 = vrot.slane %v686, 7
  %v689 = vshll.u32 %v183, 16
  %v691 = vor.u32 %v688, %v689
  %v692 = vrot.slane %v688, 4
  %v694 = vshrl.u32 %v184, 16
  %v696 = vrot.slane %v694, 7
  %v697 = vshll.u32 %v184, 16
  %v699 = vor.u32 %v696, %v697
  %v700 = vsel %vm191, %v692, %v699
  %v701 = vrot.slane %v696, 4
  %v703 = vshrl.u32 %v185, 16
  %v705 = vrot.slane %v703, 7
  %v706 = vshll.u32 %v185, 16
  %v708 = vor.u32 %v705, %v706
  %v709 = vrot.slane %v705, 4
  %v711 = vshrl.u32 %v186, 16
  %v713 = vrot.slane %v711, 7
  %v714 = vshll.u32 %v186, 16
  %v716 = vor.u32 %v713, %v714
  %v717 = vsel %vm191, %v709, %v716
  %v718 = vrot.slane %v713, 4
  %v720 = vshrl.u32 %v187, 16
  %v722 = vrot.slane %v720, 7
  %v723 = vshll.u32 %v187, 16
  %v725 = vor.u32 %v722, %v723
  %v726 = vrot.slane %v722, 4
  %v728 = vshrl.u32 %v188, 16
  %v730 = vrot.slane %v728, 7
  %v731 = vshll.u32 %v188, 16
  %v733 = vor.u32 %v730, %v731
  %v734 = vsel %vm191, %v726, %v733
  %v735 = vrot.slane %v730, 4
  %s832 = scalar_lea.vmem [#allocation2], 12
  %vm833 = vcmask 27648
  %vm834 = vsmask.f32 7938
  %vm835 = vmand %vm833, %vm834
  %v836 = vld [vmem:[%s832] sm:$0xf]
  %v837 = vsel %vm835, %v198, %v836
  %838 = vst [vmem:[%s832] sm:$0xf] %v837
  %839 = vst.msk [vmem:[%s832 + $0x4] sm:$0xf] %vm15, %v207
  %vm840 = vcmask 24576
  %vm841 = vmand %vm840, %vm189
  %v842 = vld [vmem:[%s832 + $0x8] sm:$0x1]
  %v843 = vsel %vm841, %v208, %v842
  %844 = vst [vmem:[%s832 + $0x8] sm:$0x1] %v843
  %v845 = vld [vmem:[%s832 + $0xc] sm:$0xf]
  %v846 = vsel %vm835, %v215, %v845
  %847 = vst [vmem:[%s832 + $0xc] sm:$0xf] %v846
  %848 = vst.msk [vmem:[%s832 + $0x10] sm:$0xf] %vm15, %v224
  %v849 = vld [vmem:[%s832 + $0x14] sm:$0x1]
  %v850 = vsel %vm841, %v225, %v849
  %851 = vst [vmem:[%s832 + $0x14] sm:$0x1] %v850
  %v852 = vld [vmem:[%s832 + $0x18] sm:$0xf]
  %v853 = vsel %vm835, %v232, %v852
  %854 = vst [vmem:[%s832 + $0x18] sm:$0xf] %v853
  %855 = vst.msk [vmem:[%s832 + $0x1c] sm:$0xf] %vm15, %v241
  %v856 = vld [vmem:[%s832 + $0x20] sm:$0x1]
  %v857 = vsel %vm841, %v242, %v856
  %858 = vst [vmem:[%s832 + $0x20] sm:$0x1] %v857
  %v859 = vld [vmem:[%s832 + $0x24] sm:$0xf]
  %v860 = vsel %vm835, %v249, %v859
  %861 = vst [vmem:[%s832 + $0x24] sm:$0xf] %v860
  %862 = vst.msk [vmem:[%s832 + $0x28] sm:$0xf] %vm15, %v258
  %v863 = vld [vmem:[%s832 + $0x2c] sm:$0x1]
  %v864 = vsel %vm841, %v259, %v863
  %865 = vst [vmem:[%s832 + $0x2c] sm:$0x1] %v864
  %v866 = vld [vmem:[%s832 + $0x30] sm:$0xf]
  %v867 = vsel %vm835, %v266, %v866
  %868 = vst [vmem:[%s832 + $0x30] sm:$0xf] %v867
  %869 = vst.msk [vmem:[%s832 + $0x34] sm:$0xf] %vm15, %v275
  %v870 = vld [vmem:[%s832 + $0x38] sm:$0x1]
  %v871 = vsel %vm841, %v276, %v870
  %872 = vst [vmem:[%s832 + $0x38] sm:$0x1] %v871
  %v873 = vld [vmem:[%s832 + $0x3c] sm:$0xf]
  %v874 = vsel %vm835, %v283, %v873
  %875 = vst [vmem:[%s832 + $0x3c] sm:$0xf] %v874
  %876 = vst.msk [vmem:[%s832 + $0x40] sm:$0xf] %vm15, %v292
  %v877 = vld [vmem:[%s832 + $0x44] sm:$0x1]
  %v878 = vsel %vm841, %v293, %v877
  %879 = vst [vmem:[%s832 + $0x44] sm:$0x1] %v878
  %v880 = vld [vmem:[%s832 + $0x48] sm:$0xf]
  %v881 = vsel %vm835, %v300, %v880
  %882 = vst [vmem:[%s832 + $0x48] sm:$0xf] %v881
  %883 = vst.msk [vmem:[%s832 + $0x4c] sm:$0xf] %vm15, %v309
  %v884 = vld [vmem:[%s832 + $0x50] sm:$0x1]
  %v885 = vsel %vm841, %v310, %v884
  %886 = vst [vmem:[%s832 + $0x50] sm:$0x1] %v885
  %v887 = vld [vmem:[%s832 + $0x54] sm:$0xf]
  %v888 = vsel %vm835, %v317, %v887
  %889 = vst [vmem:[%s832 + $0x54] sm:$0xf] %v888
  %890 = vst.msk [vmem:[%s832 + $0x58] sm:$0xf] %vm15, %v326
  %v891 = vld [vmem:[%s832 + $0x5c] sm:$0x1]
  %v892 = vsel %vm841, %v327, %v891
  %893 = vst [vmem:[%s832 + $0x5c] sm:$0x1] %v892
  %v894 = vld [vmem:[%s832 + $0x60] sm:$0xf]
  %v895 = vsel %vm835, %v334, %v894
  %896 = vst [vmem:[%s832 + $0x60] sm:$0xf] %v895
  %897 = vst.msk [vmem:[%s832 + $0x64] sm:$0xf] %vm15, %v343
  %v898 = vld [vmem:[%s832 + $0x68] sm:$0x1]
  %v899 = vsel %vm841, %v344, %v898
  %900 = vst [vmem:[%s832 + $0x68] sm:$0x1] %v899
  %v901 = vld [vmem:[%s832 + $0x6c] sm:$0xf]
  %v902 = vsel %vm835, %v351, %v901
  %903 = vst [vmem:[%s832 + $0x6c] sm:$0xf] %v902
  %904 = vst.msk [vmem:[%s832 + $0x70] sm:$0xf] %vm15, %v360
  %v905 = vld [vmem:[%s832 + $0x74] sm:$0x1]
  %v906 = vsel %vm841, %v361, %v905
  %907 = vst [vmem:[%s832 + $0x74] sm:$0x1] %v906
  %v908 = vld [vmem:[%s832 + $0x78] sm:$0xf]
  %v909 = vsel %vm835, %v368, %v908
  %910 = vst [vmem:[%s832 + $0x78] sm:$0xf] %v909
  %911 = vst.msk [vmem:[%s832 + $0x7c] sm:$0xf] %vm15, %v377
  %v912 = vld [vmem:[%s832 + $0x80] sm:$0x1]
  %v913 = vsel %vm841, %v378, %v912
  %914 = vst [vmem:[%s832 + $0x80] sm:$0x1] %v913
  %v915 = vld [vmem:[%s832 + $0x84] sm:$0xf]
  %v916 = vsel %vm835, %v385, %v915
  %917 = vst [vmem:[%s832 + $0x84] sm:$0xf] %v916
  %918 = vst.msk [vmem:[%s832 + $0x88] sm:$0xf] %vm15, %v394
  %v919 = vld [vmem:[%s832 + $0x8c] sm:$0x1]
  %v920 = vsel %vm841, %v395, %v919
  %921 = vst [vmem:[%s832 + $0x8c] sm:$0x1] %v920
  %v922 = vld [vmem:[%s832 + $0x90] sm:$0xf]
  %v923 = vsel %vm835, %v402, %v922
  %924 = vst [vmem:[%s832 + $0x90] sm:$0xf] %v923
  %925 = vst.msk [vmem:[%s832 + $0x94] sm:$0xf] %vm15, %v411
  %v926 = vld [vmem:[%s832 + $0x98] sm:$0x1]
  %v927 = vsel %vm841, %v412, %v926
  %928 = vst [vmem:[%s832 + $0x98] sm:$0x1] %v927
  %v929 = vld [vmem:[%s832 + $0x9c] sm:$0xf]
  %v930 = vsel %vm835, %v419, %v929
  %931 = vst [vmem:[%s832 + $0x9c] sm:$0xf] %v930
  %932 = vst.msk [vmem:[%s832 + $0xa0] sm:$0xf] %vm15, %v428
  %v933 = vld [vmem:[%s832 + $0xa4] sm:$0x1]
  %v934 = vsel %vm841, %v429, %v933
  %935 = vst [vmem:[%s832 + $0xa4] sm:$0x1] %v934
  %v936 = vld [vmem:[%s832 + $0xa8] sm:$0xf]
  %v937 = vsel %vm835, %v436, %v936
  %938 = vst [vmem:[%s832 + $0xa8] sm:$0xf] %v937
  %939 = vst.msk [vmem:[%s832 + $0xac] sm:$0xf] %vm15, %v445
  %v940 = vld [vmem:[%s832 + $0xb0] sm:$0x1]
  %v941 = vsel %vm841, %v446, %v940
  %942 = vst [vmem:[%s832 + $0xb0] sm:$0x1] %v941
  %v943 = vld [vmem:[%s832 + $0xb4] sm:$0xf]
  %v944 = vsel %vm835, %v453, %v943
  %945 = vst [vmem:[%s832 + $0xb4] sm:$0xf] %v944
  %946 = vst.msk [vmem:[%s832 + $0xb8] sm:$0xf] %vm15, %v462
  %v947 = vld [vmem:[%s832 + $0xbc] sm:$0x1]
  %v948 = vsel %vm841, %v463, %v947
  %949 = vst [vmem:[%s832 + $0xbc] sm:$0x1] %v948
  %v950 = vld [vmem:[%s832 + $0xd8] sm:$0xf]
  %v951 = vsel %vm835, %v470, %v950
  %952 = vst [vmem:[%s832 + $0xd8] sm:$0xf] %v951
  %953 = vst.msk [vmem:[%s832 + $0xdc] sm:$0xf] %vm15, %v479
  %v954 = vld [vmem:[%s832 + $0xe0] sm:$0x1]
  %v955 = vsel %vm841, %v480, %v954
  %956 = vst [vmem:[%s832 + $0xe0] sm:$0x1] %v955
  %v957 = vld [vmem:[%s832 + $0xe4] sm:$0xf]
  %v958 = vsel %vm835, %v487, %v957
  %959 = vst [vmem:[%s832 + $0xe4] sm:$0xf] %v958
  %960 = vst.msk [vmem:[%s832 + $0xe8] sm:$0xf] %vm15, %v496
  %v961 = vld [vmem:[%s832 + $0xec] sm:$0x1]
  %v962 = vsel %vm841, %v497, %v961
  %963 = vst [vmem:[%s832 + $0xec] sm:$0x1] %v962
  %v964 = vld [vmem:[%s832 + $0xf0] sm:$0xf]
  %v965 = vsel %vm835, %v504, %v964
  %966 = vst [vmem:[%s832 + $0xf0] sm:$0xf] %v965
  %967 = vst.msk [vmem:[%s832 + $0xf4] sm:$0xf] %vm15, %v513
  %v968 = vld [vmem:[%s832 + $0xf8] sm:$0x1]
  %v969 = vsel %vm841, %v514, %v968
  %970 = vst [vmem:[%s832 + $0xf8] sm:$0x1] %v969
  %v971 = vld [vmem:[%s832 + $0xfc] sm:$0xf]
  %v972 = vsel %vm835, %v521, %v971
  %973 = vst [vmem:[%s832 + $0xfc] sm:$0xf] %v972
  %974 = vst.msk [vmem:[%s832 + $0x100] sm:$0xf] %vm15, %v530
  %v975 = vld [vmem:[%s832 + $0x104] sm:$0x1]
  %v976 = vsel %vm841, %v531, %v975
  %977 = vst [vmem:[%s832 + $0x104] sm:$0x1] %v976
  %v978 = vld [vmem:[%s832 + $0x108] sm:$0xf]
  %v979 = vsel %vm835, %v538, %v978
  %980 = vst [vmem:[%s832 + $0x108] sm:$0xf] %v979
  %981 = vst.msk [vmem:[%s832 + $0x10c] sm:$0xf] %vm15, %v547
  %v982 = vld [vmem:[%s832 + $0x110] sm:$0x1]
  %v983 = vsel %vm841, %v548, %v982
  %984 = vst [vmem:[%s832 + $0x110] sm:$0x1] %v983
  %v985 = vld [vmem:[%s832 + $0x114] sm:$0xf]
  %v986 = vsel %vm835, %v555, %v985
  %987 = vst [vmem:[%s832 + $0x114] sm:$0xf] %v986
  %988 = vst.msk [vmem:[%s832 + $0x118] sm:$0xf] %vm15, %v564
  %v989 = vld [vmem:[%s832 + $0x11c] sm:$0x1]
  %v990 = vsel %vm841, %v565, %v989
  %991 = vst [vmem:[%s832 + $0x11c] sm:$0x1] %v990
  %v992 = vld [vmem:[%s832 + $0x120] sm:$0xf]
  %v993 = vsel %vm835, %v572, %v992
  %994 = vst [vmem:[%s832 + $0x120] sm:$0xf] %v993
  %995 = vst.msk [vmem:[%s832 + $0x124] sm:$0xf] %vm15, %v581
  %v996 = vld [vmem:[%s832 + $0x128] sm:$0x1]
  %v997 = vsel %vm841, %v582, %v996
  %998 = vst [vmem:[%s832 + $0x128] sm:$0x1] %v997
  %v999 = vld [vmem:[%s832 + $0x12c] sm:$0xf]
  %v1000 = vsel %vm835, %v589, %v999
  %1001 = vst [vmem:[%s832 + $0x12c] sm:$0xf] %v1000
  %1002 = vst.msk [vmem:[%s832 + $0x130] sm:$0xf] %vm15, %v598
  %v1003 = vld [vmem:[%s832 + $0x134] sm:$0x1]
  %v1004 = vsel %vm841, %v599, %v1003
  %1005 = vst [vmem:[%s832 + $0x134] sm:$0x1] %v1004
  %v1006 = vld [vmem:[%s832 + $0x138] sm:$0xf]
  %v1007 = vsel %vm835, %v606, %v1006
  %1008 = vst [vmem:[%s832 + $0x138] sm:$0xf] %v1007
  %1009 = vst.msk [vmem:[%s832 + $0x13c] sm:$0xf] %vm15, %v615
  %v1010 = vld [vmem:[%s832 + $0x140] sm:$0x1]
  %v1011 = vsel %vm841, %v616, %v1010
  %1012 = vst [vmem:[%s832 + $0x140] sm:$0x1] %v1011
  %v1013 = vld [vmem:[%s832 + $0x144] sm:$0xf]
  %v1014 = vsel %vm835, %v623, %v1013
  %1015 = vst [vmem:[%s832 + $0x144] sm:$0xf] %v1014
  %1016 = vst.msk [vmem:[%s832 + $0x148] sm:$0xf] %vm15, %v632
  %v1017 = vld [vmem:[%s832 + $0x14c] sm:$0x1]
  %v1018 = vsel %vm841, %v633, %v1017
  %1019 = vst [vmem:[%s832 + $0x14c] sm:$0x1] %v1018
  %v1020 = vld [vmem:[%s832 + $0x150] sm:$0xf]
  %v1021 = vsel %vm835, %v640, %v1020
  %1022 = vst [vmem:[%s832 + $0x150] sm:$0xf] %v1021
  %1023 = vst.msk [vmem:[%s832 + $0x154] sm:$0xf] %vm15, %v649
  %v1024 = vld [vmem:[%s832 + $0x158] sm:$0x1]
  %v1025 = vsel %vm841, %v650, %v1024
  %1026 = vst [vmem:[%s832 + $0x158] sm:$0x1] %v1025
  %v1027 = vld [vmem:[%s832 + $0x15c] sm:$0xf]
  %v1028 = vsel %vm835, %v657, %v1027
  %1029 = vst [vmem:[%s832 + $0x15c] sm:$0xf] %v1028
  %1030 = vst.msk [vmem:[%s832 + $0x160] sm:$0xf] %vm15, %v666
  %v1031 = vld [vmem:[%s832 + $0x164] sm:$0x1]
  %v1032 = vsel %vm841, %v667, %v1031
  %1033 = vst [vmem:[%s832 + $0x164] sm:$0x1] %v1032
  %v1034 = vld [vmem:[%s832 + $0x168] sm:$0xf]
  %v1035 = vsel %vm835, %v674, %v1034
  %1036 = vst [vmem:[%s832 + $0x168] sm:$0xf] %v1035
  %1037 = vst.msk [vmem:[%s832 + $0x16c] sm:$0xf] %vm15, %v683
  %v1038 = vld [vmem:[%s832 + $0x170] sm:$0x1]
  %v1039 = vsel %vm841, %v684, %v1038
  %1040 = vst [vmem:[%s832 + $0x170] sm:$0x1] %v1039
  %v1041 = vld [vmem:[%s832 + $0x174] sm:$0xf]
  %v1042 = vsel %vm835, %v691, %v1041
  %1043 = vst [vmem:[%s832 + $0x174] sm:$0xf] %v1042
  %1044 = vst.msk [vmem:[%s832 + $0x178] sm:$0xf] %vm15, %v700
  %v1045 = vld [vmem:[%s832 + $0x17c] sm:$0x1]
  %v1046 = vsel %vm841, %v701, %v1045
  %1047 = vst [vmem:[%s832 + $0x17c] sm:$0x1] %v1046
  %v1048 = vld [vmem:[%s832 + $0x180] sm:$0xf]
  %v1049 = vsel %vm835, %v708, %v1048
  %1050 = vst [vmem:[%s832 + $0x180] sm:$0xf] %v1049
  %1051 = vst.msk [vmem:[%s832 + $0x184] sm:$0xf] %vm15, %v717
  %v1052 = vld [vmem:[%s832 + $0x188] sm:$0x1]
  %v1053 = vsel %vm841, %v718, %v1052
  %1054 = vst [vmem:[%s832 + $0x188] sm:$0x1] %v1053
  %v1055 = vld [vmem:[%s832 + $0x18c] sm:$0xf]
  %v1056 = vsel %vm835, %v725, %v1055
  %1057 = vst [vmem:[%s832 + $0x18c] sm:$0xf] %v1056
  %1058 = vst.msk [vmem:[%s832 + $0x190] sm:$0xf] %vm15, %v734
  %v1059 = vld [vmem:[%s832 + $0x194] sm:$0x1]
  %v1060 = vsel %vm841, %v735, %v1059
  %1061 = vst [vmem:[%s832 + $0x194] sm:$0x1] %v1060
  %v1062 = vld [vmem:[#allocation2] sm:$0xf]
  %v1063 = vld [vmem:[#allocation2 + $0x4] sm:$0xf]
  %v1064 = vld [vmem:[#allocation2 + $0x8] sm:$0x1]
  %v1065 = vld [vmem:[#allocation2 + $0xc] sm:$0xf]
  %v1066 = vld [vmem:[#allocation2 + $0x10] sm:$0xf]
  %v1067 = vld [vmem:[#allocation2 + $0x14] sm:$0x1]
  %v1068 = vld [vmem:[#allocation2 + $0x18] sm:$0xf]
  %v1069 = vld [vmem:[#allocation2 + $0x1c] sm:$0xf]
  %v1070 = vld [vmem:[#allocation2 + $0x20] sm:$0x1]
  %v1071 = vld [vmem:[#allocation2 + $0x24] sm:$0xf]
  %v1072 = vld [vmem:[#allocation2 + $0x28] sm:$0xf]
  %v1073 = vld [vmem:[#allocation2 + $0x2c] sm:$0x1]
  %v1074 = vld [vmem:[#allocation2 + $0x30] sm:$0xf]
  %v1075 = vld [vmem:[#allocation2 + $0x34] sm:$0xf]
  %v1076 = vld [vmem:[#allocation2 + $0x38] sm:$0x1]
  %v1077 = vld [vmem:[#allocation2 + $0x3c] sm:$0xf]
  %v1078 = vld [vmem:[#allocation2 + $0x40] sm:$0xf]
  %v1079 = vld [vmem:[#allocation2 + $0x44] sm:$0x1]
  %v1080 = vld [vmem:[#allocation2 + $0x48] sm:$0xf]
  %v1081 = vld [vmem:[#allocation2 + $0x4c] sm:$0xf]
  %v1082 = vld [vmem:[#allocation2 + $0x50] sm:$0x1]
  %v1083 = vld [vmem:[#allocation2 + $0x54] sm:$0xf]
  %v1084 = vld [vmem:[#allocation2 + $0x58] sm:$0xf]
  %v1085 = vld [vmem:[#allocation2 + $0x5c] sm:$0x1]
  %v1086 = vld [vmem:[#allocation2 + $0x60] sm:$0xf]
  %v1087 = vld [vmem:[#allocation2 + $0x64] sm:$0xf]
  %v1088 = vld [vmem:[#allocation2 + $0x68] sm:$0x1]
  %v1089 = vld [vmem:[#allocation2 + $0x6c] sm:$0xf]
  %v1090 = vld [vmem:[#allocation2 + $0x70] sm:$0xf]
  %v1091 = vld [vmem:[#allocation2 + $0x74] sm:$0x1]
  %v1092 = vld [vmem:[#allocation2 + $0x78] sm:$0xf]
  %v1093 = vld [vmem:[#allocation2 + $0x7c] sm:$0xf]
  %v1094 = vld [vmem:[#allocation2 + $0x80] sm:$0x1]
  %v1095 = vld [vmem:[#allocation2 + $0x84] sm:$0xf]
  %v1096 = vld [vmem:[#allocation2 + $0x88] sm:$0xf]
  %v1097 = vld [vmem:[#allocation2 + $0x8c] sm:$0x1]
  %v1098 = vld [vmem:[#allocation2 + $0x90] sm:$0xf]
  %v1099 = vld [vmem:[#allocation2 + $0x94] sm:$0xf]
  %v1100 = vld [vmem:[#allocation2 + $0x98] sm:$0x1]
  %v1101 = vld [vmem:[#allocation2 + $0x9c] sm:$0xf]
  %v1102 = vld [vmem:[#allocation2 + $0xa0] sm:$0xf]
  %v1103 = vld [vmem:[#allocation2 + $0xa4] sm:$0x1]
  %v1104 = vld [vmem:[#allocation2 + $0xa8] sm:$0xf]
  %v1105 = vld [vmem:[#allocation2 + $0xac] sm:$0xf]
  %v1106 = vld [vmem:[#allocation2 + $0xb0] sm:$0x1]
  %v1107 = vld [vmem:[#allocation2 + $0xb4] sm:$0xf]
  %v1108 = vld [vmem:[#allocation2 + $0xb8] sm:$0xf]
  %v1109 = vld [vmem:[#allocation2 + $0xbc] sm:$0x1]
  %v1110 = vld [vmem:[#allocation2 + $0xd8] sm:$0xf]
  %v1111 = vld [vmem:[#allocation2 + $0xdc] sm:$0xf]
  %v1112 = vld [vmem:[#allocation2 + $0xe0] sm:$0x1]
  %v1113 = vld [vmem:[#allocation2 + $0xe4] sm:$0xf]
  %v1114 = vld [vmem:[#allocation2 + $0xe8] sm:$0xf]
  %v1115 = vld [vmem:[#allocation2 + $0xec] sm:$0x1]
  %v1116 = vld [vmem:[#allocation2 + $0xf0] sm:$0xf]
  %v1117 = vld [vmem:[#allocation2 + $0xf4] sm:$0xf]
  %v1118 = vld [vmem:[#allocation2 + $0xf8] sm:$0x1]
  %v1119 = vld [vmem:[#allocation2 + $0xfc] sm:$0xf]
  %v1120 = vld [vmem:[#allocation2 + $0x100] sm:$0xf]
  %v1121 = vld [vmem:[#allocation2 + $0x104] sm:$0x1]
  %v1122 = vld [vmem:[#allocation2 + $0x108] sm:$0xf]
  %v1123 = vld [vmem:[#allocation2 + $0x10c] sm:$0xf]
  %v1124 = vld [vmem:[#allocation2 + $0x110] sm:$0x1]
  %v1125 = vld [vmem:[#allocation2 + $0x114] sm:$0xf]
  %v1126 = vld [vmem:[#allocation2 + $0x118] sm:$0xf]
  %v1127 = vld [vmem:[#allocation2 + $0x11c] sm:$0x1]
  %v1128 = vld [vmem:[#allocation2 + $0x120] sm:$0xf]
  %v1129 = vld [vmem:[#allocation2 + $0x124] sm:$0xf]
  %v1130 = vld [vmem:[#allocation2 + $0x128] sm:$0x1]
  %v1131 = vld [vmem:[#allocation2 + $0x12c] sm:$0xf]
  %v1132 = vld [vmem:[#allocation2 + $0x130] sm:$0xf]
  %v1133 = vld [vmem:[#allocation2 + $0x134] sm:$0x1]
  %v1134 = vld [vmem:[#allocation2 + $0x138] sm:$0xf]
  %v1135 = vld [vmem:[#allocation2 + $0x13c] sm:$0xf]
  %v1136 = vld [vmem:[#allocation2 + $0x140] sm:$0x1]
  %v1137 = vld [vmem:[#allocation2 + $0x144] sm:$0xf]
  %v1138 = vld [vmem:[#allocation2 + $0x148] sm:$0xf]
  %v1139 = vld [vmem:[#allocation2 + $0x14c] sm:$0x1]
  %v1140 = vld [vmem:[#allocation2 + $0x150] sm:$0xf]
  %v1141 = vld [vmem:[#allocation2 + $0x154] sm:$0xf]
  %v1142 = vld [vmem:[#allocation2 + $0x158] sm:$0x1]
  %v1143 = vld [vmem:[#allocation2 + $0x15c] sm:$0xf]
  %v1144 = vld [vmem:[#allocation2 + $0x160] sm:$0xf]
  %v1145 = vld [vmem:[#allocation2 + $0x164] sm:$0x1]
  %v1146 = vld [vmem:[#allocation2 + $0x168] sm:$0xf]
  %v1147 = vld [vmem:[#allocation2 + $0x16c] sm:$0xf]
  %v1148 = vld [vmem:[#allocation2 + $0x170] sm:$0x1]
  %v1149 = vld [vmem:[#allocation2 + $0x174] sm:$0xf]
  %v1150 = vld [vmem:[#allocation2 + $0x178] sm:$0xf]
  %v1151 = vld [vmem:[#allocation2 + $0x17c] sm:$0x1]
  %v1152 = vld [vmem:[#allocation2 + $0x180] sm:$0xf]
  %v1153 = vld [vmem:[#allocation2 + $0x184] sm:$0xf]
  %v1154 = vld [vmem:[#allocation2 + $0x188] sm:$0x1]
  %v1155 = vld [vmem:[#allocation2 + $0x18c] sm:$0xf]
  %v1156 = vld [vmem:[#allocation2 + $0x190] sm:$0xf]
  %v1157 = vld [vmem:[#allocation2 + $0x194] sm:$0x1]
  %v1222 = vunpack.c.l.b16 %v1062
  %v1223 = vunpack.c.l.b16 %v1063
  %v1224 = vunpack.c.l.b16 %v1065
  %v1225 = vunpack.c.l.b16 %v1066
  %v1226 = vunpack.c.l.b16 %v1068
  %v1227 = vunpack.c.l.b16 %v1069
  %v1228 = vunpack.c.l.b16 %v1071
  %v1229 = vunpack.c.l.b16 %v1072
  %v1230 = vunpack.c.l.b16 %v1074
  %v1231 = vunpack.c.l.b16 %v1075
  %v1232 = vunpack.c.l.b16 %v1077
  %v1233 = vunpack.c.l.b16 %v1078
  %v1234 = vunpack.c.l.b16 %v1080
  %v1235 = vunpack.c.l.b16 %v1081
  %v1236 = vunpack.c.l.b16 %v1083
  %v1237 = vunpack.c.l.b16 %v1084
  %v1238 = vunpack.c.l.b16 %v1086
  %v1239 = vunpack.c.l.b16 %v1087
  %v1240 = vunpack.c.l.b16 %v1089
  %v1241 = vunpack.c.l.b16 %v1090
  %v1242 = vunpack.c.l.b16 %v1092
  %v1243 = vunpack.c.l.b16 %v1093
  %v1244 = vunpack.c.l.b16 %v1095
  %v1245 = vunpack.c.l.b16 %v1096
  %v1246 = vunpack.c.l.b16 %v1098
  %v1247 = vunpack.c.l.b16 %v1099
  %v1248 = vunpack.c.l.b16 %v1101
  %v1249 = vunpack.c.l.b16 %v1102
  %v1250 = vunpack.c.l.b16 %v1104
  %v1251 = vunpack.c.l.b16 %v1105
  %v1252 = vunpack.c.l.b16 %v1107
  %v1253 = vunpack.c.l.b16 %v1108
  %v1254 = vunpack.c.l.b16 %v1110
  %v1255 = vunpack.c.l.b16 %v1111
  %v1256 = vunpack.c.l.b16 %v1113
  %v1257 = vunpack.c.l.b16 %v1114
  %v1258 = vunpack.c.l.b16 %v1116
  %v1259 = vunpack.c.l.b16 %v1117
  %v1260 = vunpack.c.l.b16 %v1119
  %v1261 = vunpack.c.l.b16 %v1120
  %v1262 = vunpack.c.l.b16 %v1122
  %v1263 = vunpack.c.l.b16 %v1123
  %v1264 = vunpack.c.l.b16 %v1125
  %v1265 = vunpack.c.l.b16 %v1126
  %v1266 = vunpack.c.l.b16 %v1128
  %v1267 = vunpack.c.l.b16 %v1129
  %v1268 = vunpack.c.l.b16 %v1131
  %v1269 = vunpack.c.l.b16 %v1132
  %v1270 = vunpack.c.l.b16 %v1134
  %v1271 = vunpack.c.l.b16 %v1135
  %v1272 = vunpack.c.l.b16 %v1137
  %v1273 = vunpack.c.l.b16 %v1138
  %v1274 = vunpack.c.l.b16 %v1140
  %v1275 = vunpack.c.l.b16 %v1141
  %v1276 = vunpack.c.l.b16 %v1143
  %v1277 = vunpack.c.l.b16 %v1144
  %v1278 = vunpack.c.l.b16 %v1146
  %v1279 = vunpack.c.l.b16 %v1147
  %v1280 = vunpack.c.l.b16 %v1149
  %v1281 = vunpack.c.l.b16 %v1150
  %v1282 = vunpack.c.l.b16 %v1152
  %v1283 = vunpack.c.l.b16 %v1153
  %v1284 = vunpack.c.l.b16 %v1155
  %v1285 = vunpack.c.l.b16 %v1156
  %v1286 = vpack.c.b16 %v1223, %v1222
  %v1287 = vpack.c.b16 %v1225, %v1224
  %v1288 = vpack.c.b16 %v1227, %v1226
  %v1289 = vpack.c.b16 %v1229, %v1228
  %v1290 = vpack.c.b16 %v1231, %v1230
  %v1291 = vpack.c.b16 %v1233, %v1232
  %v1292 = vpack.c.b16 %v1235, %v1234
  %v1293 = vpack.c.b16 %v1237, %v1236
  %v1294 = vpack.c.b16 %v1239, %v1238
  %v1295 = vpack.c.b16 %v1241, %v1240
  %v1296 = vpack.c.b16 %v1243, %v1242
  %v1297 = vpack.c.b16 %v1245, %v1244
  %v1298 = vpack.c.b16 %v1247, %v1246
  %v1299 = vpack.c.b16 %v1249, %v1248
  %v1300 = vpack.c.b16 %v1251, %v1250
  %v1301 = vpack.c.b16 %v1253, %v1252
  %v1302 = vpack.c.b16 %v1255, %v1254
  %v1303 = vpack.c.b16 %v1257, %v1256
  %v1304 = vpack.c.b16 %v1259, %v1258
  %v1305 = vpack.c.b16 %v1261, %v1260
  %v1306 = vpack.c.b16 %v1263, %v1262
  %v1307 = vpack.c.b16 %v1265, %v1264
  %v1308 = vpack.c.b16 %v1267, %v1266
  %v1309 = vpack.c.b16 %v1269, %v1268
  %v1310 = vpack.c.b16 %v1271, %v1270
  %v1311 = vpack.c.b16 %v1273, %v1272
  %v1312 = vpack.c.b16 %v1275, %v1274
  %v1313 = vpack.c.b16 %v1277, %v1276
  %v1314 = vpack.c.b16 %v1279, %v1278
  %v1315 = vpack.c.b16 %v1281, %v1280
  %v1316 = vpack.c.b16 %v1283, %v1282
  %v1317 = vpack.c.b16 %v1285, %v1284
  %v1350 = vunpack.c.l.b16 %v1064
  %v1351 = vunpack.c.l.b16 %v1067
  %v1352 = vunpack.c.l.b16 %v1070
  %v1353 = vunpack.c.l.b16 %v1073
  %v1354 = vunpack.c.l.b16 %v1076
  %v1355 = vunpack.c.l.b16 %v1079
  %v1356 = vunpack.c.l.b16 %v1082
  %v1357 = vunpack.c.l.b16 %v1085
  %v1358 = vunpack.c.l.b16 %v1088
  %v1359 = vunpack.c.l.b16 %v1091
  %v1360 = vunpack.c.l.b16 %v1094
  %v1361 = vunpack.c.l.b16 %v1097
  %v1362 = vunpack.c.l.b16 %v1100
  %v1363 = vunpack.c.l.b16 %v1103
  %v1364 = vunpack.c.l.b16 %v1106
  %v1365 = vunpack.c.l.b16 %v1109
  %v1366 = vunpack.c.l.b16 %v1112
  %v1367 = vunpack.c.l.b16 %v1115
  %v1368 = vunpack.c.l.b16 %v1118
  %v1369 = vunpack.c.l.b16 %v1121
  %v1370 = vunpack.c.l.b16 %v1124
  %v1371 = vunpack.c.l.b16 %v1127
  %v1372 = vunpack.c.l.b16 %v1130
  %v1373 = vunpack.c.l.b16 %v1133
  %v1374 = vunpack.c.l.b16 %v1136
  %v1375 = vunpack.c.l.b16 %v1139
  %v1376 = vunpack.c.l.b16 %v1142
  %v1377 = vunpack.c.l.b16 %v1145
  %v1378 = vunpack.c.l.b16 %v1148
  %v1379 = vunpack.c.l.b16 %v1151
  %v1380 = vunpack.c.l.b16 %v1154
  %v1381 = vunpack.c.l.b16 %v1157
  %v1382 = vpack.c.b16 %v1350, %v1350
  %v1383 = vpack.c.b16 %v1351, %v1351
  %v1384 = vpack.c.b16 %v1352, %v1352
  %v1385 = vpack.c.b16 %v1353, %v1353
  %v1386 = vpack.c.b16 %v1354, %v1354
  %v1387 = vpack.c.b16 %v1355, %v1355
  %v1388 = vpack.c.b16 %v1356, %v1356
  %v1389 = vpack.c.b16 %v1357, %v1357
  %v1390 = vpack.c.b16 %v1358, %v1358
  %v1391 = vpack.c.b16 %v1359, %v1359
  %v1392 = vpack.c.b16 %v1360, %v1360
  %v1393 = vpack.c.b16 %v1361, %v1361
  %v1394 = vpack.c.b16 %v1362, %v1362
  %v1395 = vpack.c.b16 %v1363, %v1363
  %v1396 = vpack.c.b16 %v1364, %v1364
  %v1397 = vpack.c.b16 %v1365, %v1365
  %v1398 = vpack.c.b16 %v1366, %v1366
  %v1399 = vpack.c.b16 %v1367, %v1367
  %v1400 = vpack.c.b16 %v1368, %v1368
  %v1401 = vpack.c.b16 %v1369, %v1369
  %v1402 = vpack.c.b16 %v1370, %v1370
  %v1403 = vpack.c.b16 %v1371, %v1371
  %v1404 = vpack.c.b16 %v1372, %v1372
  %v1405 = vpack.c.b16 %v1373, %v1373
  %v1406 = vpack.c.b16 %v1374, %v1374
  %v1407 = vpack.c.b16 %v1375, %v1375
  %v1408 = vpack.c.b16 %v1376, %v1376
  %v1409 = vpack.c.b16 %v1377, %v1377
  %v1410 = vpack.c.b16 %v1378, %v1378
  %v1411 = vpack.c.b16 %v1379, %v1379
  %v1412 = vpack.c.b16 %v1380, %v1380
  %v1413 = vpack.c.b16 %v1381, %v1381
  %vm1414 = vsmask.f32 7424
  %v1416 = vshrl.u32 %v1286, 16
  %v1418 = vshll.u32 %v1286, 16
  %v1420 = vrot.slane %v1418, 1
  %v1421 = vor.u32 %v1416, %v1420
  %v1423 = vshll.u32 %v1382, 16
  %v1425 = vrot.slane %v1423, 1
  %v1426 = vsel %vm1414, %v1421, %v1425
  %v1428 = vshrl.u32 %v1287, 16
  %v1430 = vshll.u32 %v1287, 16
  %v1432 = vrot.slane %v1430, 1
  %v1433 = vor.u32 %v1428, %v1432
  %v1435 = vshll.u32 %v1383, 16
  %v1437 = vrot.slane %v1435, 1
  %v1438 = vsel %vm1414, %v1433, %v1437
  %v1440 = vshrl.u32 %v1288, 16
  %v1442 = vshll.u32 %v1288, 16
  %v1444 = vrot.slane %v1442, 1
  %v1445 = vor.u32 %v1440, %v1444
  %v1447 = vshll.u32 %v1384, 16
  %v1449 = vrot.slane %v1447, 1
  %v1450 = vsel %vm1414, %v1445, %v1449
  %v1452 = vshrl.u32 %v1289, 16
  %v1454 = vshll.u32 %v1289, 16
  %v1456 = vrot.slane %v1454, 1
  %v1457 = vor.u32 %v1452, %v1456
  %v1459 = vshll.u32 %v1385, 16
  %v1461 = vrot.slane %v1459, 1
  %v1462 = vsel %vm1414, %v1457, %v1461
  %v1464 = vshrl.u32 %v1290, 16
  %v1466 = vshll.u32 %v1290, 16
  %v1468 = vrot.slane %v1466, 1
  %v1469 = vor.u32 %v1464, %v1468
  %v1471 = vshll.u32 %v1386, 16
  %v1473 = vrot.slane %v1471, 1
  %v1474 = vsel %vm1414, %v1469, %v1473
  %v1476 = vshrl.u32 %v1291, 16
  %v1478 = vshll.u32 %v1291, 16
  %v1480 = vrot.slane %v1478, 1
  %v1481 = vor.u32 %v1476, %v1480
  %v1483 = vshll.u32 %v1387, 16
  %v1485 = vrot.slane %v1483, 1
  %v1486 = vsel %vm1414, %v1481, %v1485
  %v1488 = vshrl.u32 %v1292, 16
  %v1490 = vshll.u32 %v1292, 16
  %v1492 = vrot.slane %v1490, 1
  %v1493 = vor.u32 %v1488, %v1492
  %v1495 = vshll.u32 %v1388, 16
  %v1497 = vrot.slane %v1495, 1
  %v1498 = vsel %vm1414, %v1493, %v1497
  %v1500 = vshrl.u32 %v1293, 16
  %v1502 = vshll.u32 %v1293, 16
  %v1504 = vrot.slane %v1502, 1
  %v1505 = vor.u32 %v1500, %v1504
  %v1507 = vshll.u32 %v1389, 16
  %v1509 = vrot.slane %v1507, 1
  %v1510 = vsel %vm1414, %v1505, %v1509
  %v1512 = vshrl.u32 %v1294, 16
  %v1514 = vshll.u32 %v1294, 16
  %v1516 = vrot.slane %v1514, 1
  %v1517 = vor.u32 %v1512, %v1516
  %v1519 = vshll.u32 %v1390, 16
  %v1521 = vrot.slane %v1519, 1
  %v1522 = vsel %vm1414, %v1517, %v1521
  %v1524 = vshrl.u32 %v1295, 16
  %v1526 = vshll.u32 %v1295, 16
  %v1528 = vrot.slane %v1526, 1
  %v1529 = vor.u32 %v1524, %v1528
  %v1531 = vshll.u32 %v1391, 16
  %v1533 = vrot.slane %v1531, 1
  %v1534 = vsel %vm1414, %v1529, %v1533
  %v1536 = vshrl.u32 %v1296, 16
  %v1538 = vshll.u32 %v1296, 16
  %v1540 = vrot.slane %v1538, 1
  %v1541 = vor.u32 %v1536, %v1540
  %v1543 = vshll.u32 %v1392, 16
  %v1545 = vrot.slane %v1543, 1
  %v1546 = vsel %vm1414, %v1541, %v1545
  %v1548 = vshrl.u32 %v1297, 16
  %v1550 = vshll.u32 %v1297, 16
  %v1552 = vrot.slane %v1550, 1
  %v1553 = vor.u32 %v1548, %v1552
  %v1555 = vshll.u32 %v1393, 16
  %v1557 = vrot.slane %v1555, 1
  %v1558 = vsel %vm1414, %v1553, %v1557
  %v1560 = vshrl.u32 %v1298, 16
  %v1562 = vshll.u32 %v1298, 16
  %v1564 = vrot.slane %v1562, 1
  %v1565 = vor.u32 %v1560, %v1564
  %v1567 = vshll.u32 %v1394, 16
  %v1569 = vrot.slane %v1567, 1
  %v1570 = vsel %vm1414, %v1565, %v1569
  %v1572 = vshrl.u32 %v1299, 16
  %v1574 = vshll.u32 %v1299, 16
  %v1576 = vrot.slane %v1574, 1
  %v1577 = vor.u32 %v1572, %v1576
  %v1579 = vshll.u32 %v1395, 16
  %v1581 = vrot.slane %v1579, 1
  %v1582 = vsel %vm1414, %v1577, %v1581
  %v1584 = vshrl.u32 %v1300, 16
  %v1586 = vshll.u32 %v1300, 16
  %v1588 = vrot.slane %v1586, 1
  %v1589 = vor.u32 %v1584, %v1588
  %v1591 = vshll.u32 %v1396, 16
  %v1593 = vrot.slane %v1591, 1
  %v1594 = vsel %vm1414, %v1589, %v1593
  %v1596 = vshrl.u32 %v1301, 16
  %v1598 = vshll.u32 %v1301, 16
  %v1600 = vrot.slane %v1598, 1
  %v1601 = vor.u32 %v1596, %v1600
  %v1603 = vshll.u32 %v1397, 16
  %v1605 = vrot.slane %v1603, 1
  %v1606 = vsel %vm1414, %v1601, %v1605
  %v1608 = vshrl.u32 %v1302, 16
  %v1610 = vshll.u32 %v1302, 16
  %v1612 = vrot.slane %v1610, 1
  %v1613 = vor.u32 %v1608, %v1612
  %v1615 = vshll.u32 %v1398, 16
  %v1617 = vrot.slane %v1615, 1
  %v1618 = vsel %vm1414, %v1613, %v1617
  %v1620 = vshrl.u32 %v1303, 16
  %v1622 = vshll.u32 %v1303, 16
  %v1624 = vrot.slane %v1622, 1
  %v1625 = vor.u32 %v1620, %v1624
  %v1627 = vshll.u32 %v1399, 16
  %v1629 = vrot.slane %v1627, 1
  %v1630 = vsel %vm1414, %v1625, %v1629
  %v1632 = vshrl.u32 %v1304, 16
  %v1634 = vshll.u32 %v1304, 16
  %v1636 = vrot.slane %v1634, 1
  %v1637 = vor.u32 %v1632, %v1636
  %v1639 = vshll.u32 %v1400, 16
  %v1641 = vrot.slane %v1639, 1
  %v1642 = vsel %vm1414, %v1637, %v1641
  %v1644 = vshrl.u32 %v1305, 16
  %v1646 = vshll.u32 %v1305, 16
  %v1648 = vrot.slane %v1646, 1
  %v1649 = vor.u32 %v1644, %v1648
  %v1651 = vshll.u32 %v1401, 16
  %v1653 = vrot.slane %v1651, 1
  %v1654 = vsel %vm1414, %v1649, %v1653
  %v1656 = vshrl.u32 %v1306, 16
  %v1658 = vshll.u32 %v1306, 16
  %v1660 = vrot.slane %v1658, 1
  %v1661 = vor.u32 %v1656, %v1660
  %v1663 = vshll.u32 %v1402, 16
  %v1665 = vrot.slane %v1663, 1
  %v1666 = vsel %vm1414, %v1661, %v1665
  %v1668 = vshrl.u32 %v1307, 16
  %v1670 = vshll.u32 %v1307, 16
  %v1672 = vrot.slane %v1670, 1
  %v1673 = vor.u32 %v1668, %v1672
  %v1675 = vshll.u32 %v1403, 16
  %v1677 = vrot.slane %v1675, 1
  %v1678 = vsel %vm1414, %v1673, %v1677
  %v1680 = vshrl.u32 %v1308, 16
  %v1682 = vshll.u32 %v1308, 16
  %v1684 = vrot.slane %v1682, 1
  %v1685 = vor.u32 %v1680, %v1684
  %v1687 = vshll.u32 %v1404, 16
  %v1689 = vrot.slane %v1687, 1
  %v1690 = vsel %vm1414, %v1685, %v1689
  %v1692 = vshrl.u32 %v1309, 16
  %v1694 = vshll.u32 %v1309, 16
  %v1696 = vrot.slane %v1694, 1
  %v1697 = vor.u32 %v1692, %v1696
  %v1699 = vshll.u32 %v1405, 16
  %v1701 = vrot.slane %v1699, 1
  %v1702 = vsel %vm1414, %v1697, %v1701
  %v1704 = vshrl.u32 %v1310, 16
  %v1706 = vshll.u32 %v1310, 16
  %v1708 = vrot.slane %v1706, 1
  %v1709 = vor.u32 %v1704, %v1708
  %v1711 = vshll.u32 %v1406, 16
  %v1713 = vrot.slane %v1711, 1
  %v1714 = vsel %vm1414, %v1709, %v1713
  %v1716 = vshrl.u32 %v1311, 16
  %v1718 = vshll.u32 %v1311, 16
  %v1720 = vrot.slane %v1718, 1
  %v1721 = vor.u32 %v1716, %v1720
  %v1723 = vshll.u32 %v1407, 16
  %v1725 = vrot.slane %v1723, 1
  %v1726 = vsel %vm1414, %v1721, %v1725
  %v1728 = vshrl.u32 %v1312, 16
  %v1730 = vshll.u32 %v1312, 16
  %v1732 = vrot.slane %v1730, 1
  %v1733 = vor.u32 %v1728, %v1732
  %v1735 = vshll.u32 %v1408, 16
  %v1737 = vrot.slane %v1735, 1
  %v1738 = vsel %vm1414, %v1733, %v1737
  %v1740 = vshrl.u32 %v1313, 16
  %v1742 = vshll.u32 %v1313, 16
  %v1744 = vrot.slane %v1742, 1
  %v1745 = vor.u32 %v1740, %v1744
  %v1747 = vshll.u32 %v1409, 16
  %v1749 = vrot.slane %v1747, 1
  %v1750 = vsel %vm1414, %v1745, %v1749
  %v1752 = vshrl.u32 %v1314, 16
  %v1754 = vshll.u32 %v1314, 16
  %v1756 = vrot.slane %v1754, 1
  %v1757 = vor.u32 %v1752, %v1756
  %v1759 = vshll.u32 %v1410, 16
  %v1761 = vrot.slane %v1759, 1
  %v1762 = vsel %vm1414, %v1757, %v1761
  %v1764 = vshrl.u32 %v1315, 16
  %v1766 = vshll.u32 %v1315, 16
  %v1768 = vrot.slane %v1766, 1
  %v1769 = vor.u32 %v1764, %v1768
  %v1771 = vshll.u32 %v1411, 16
  %v1773 = vrot.slane %v1771, 1
  %v1774 = vsel %vm1414, %v1769, %v1773
  %v1776 = vshrl.u32 %v1316, 16
  %v1778 = vshll.u32 %v1316, 16
  %v1780 = vrot.slane %v1778, 1
  %v1781 = vor.u32 %v1776, %v1780
  %v1783 = vshll.u32 %v1412, 16
  %v1785 = vrot.slane %v1783, 1
  %v1786 = vsel %vm1414, %v1781, %v1785
  %v1788 = vshrl.u32 %v1317, 16
  %v1790 = vshll.u32 %v1317, 16
  %v1792 = vrot.slane %v1790, 1
  %v1793 = vor.u32 %v1788, %v1792
  %v1795 = vshll.u32 %v1413, 16
  %v1797 = vrot.slane %v1795, 1
  %v1798 = vsel %vm1414, %v1793, %v1797
  %1799 = vrot.lane.b32.xlu0 %v1426, 4
  %v1800 = vpop.permute.xlu0 %1799
  %1801 = vrot.lane.b32.xlu0 %v1438, 4
  %v1802 = vpop.permute.xlu0 %1801
  %1803 = vrot.lane.b32.xlu0 %v1450, 4
  %v1804 = vpop.permute.xlu0 %1803
  %1805 = vrot.lane.b32.xlu0 %v1462, 4
  %v1806 = vpop.permute.xlu0 %1805
  %1807 = vrot.lane.b32.xlu0 %v1474, 4
  %v1808 = vpop.permute.xlu0 %1807
  %1809 = vrot.lane.b32.xlu0 %v1486, 4
  %v1810 = vpop.permute.xlu0 %1809
  %1811 = vrot.lane.b32.xlu0 %v1498, 4
  %v1812 = vpop.permute.xlu0 %1811
  %1813 = vrot.lane.b32.xlu0 %v1510, 4
  %v1814 = vpop.permute.xlu0 %1813
  %1815 = vrot.lane.b32.xlu0 %v1522, 4
  %v1816 = vpop.permute.xlu0 %1815
  %1817 = vrot.lane.b32.xlu0 %v1534, 4
  %v1818 = vpop.permute.xlu0 %1817
  %1819 = vrot.lane.b32.xlu0 %v1546, 4
  %v1820 = vpop.permute.xlu0 %1819
  %1821 = vrot.lane.b32.xlu0 %v1558, 4
  %v1822 = vpop.permute.xlu0 %1821
  %1823 = vrot.lane.b32.xlu0 %v1570, 4
  %v1824 = vpop.permute.xlu0 %1823
  %1825 = vrot.lane.b32.xlu0 %v1582, 4
  %v1826 = vpop.permute.xlu0 %1825
  %1827 = vrot.lane.b32.xlu0 %v1594, 4
  %v1828 = vpop.permute.xlu0 %1827
  %1829 = vrot.lane.b32.xlu0 %v1606, 4
  %v1830 = vpop.permute.xlu0 %1829
  %1831 = vrot.lane.b32.xlu0 %v1618, 4
  %v1832 = vpop.permute.xlu0 %1831
  %1833 = vrot.lane.b32.xlu0 %v1630, 4
  %v1834 = vpop.permute.xlu0 %1833
  %1835 = vrot.lane.b32.xlu0 %v1642, 4
  %v1836 = vpop.permute.xlu0 %1835
  %1837 = vrot.lane.b32.xlu0 %v1654, 4
  %v1838 = vpop.permute.xlu0 %1837
  %1839 = vrot.lane.b32.xlu0 %v1666, 4
  %v1840 = vpop.permute.xlu0 %1839
  %1841 = vrot.lane.b32.xlu0 %v1678, 4
  %v1842 = vpop.permute.xlu0 %1841
  %1843 = vrot.lane.b32.xlu0 %v1690, 4
  %v1844 = vpop.permute.xlu0 %1843
  %1845 = vrot.lane.b32.xlu0 %v1702, 4
  %v1846 = vpop.permute.xlu0 %1845
  %1847 = vrot.lane.b32.xlu0 %v1714, 4
  %v1848 = vpop.permute.xlu0 %1847
  %1849 = vrot.lane.b32.xlu0 %v1726, 4
  %v1850 = vpop.permute.xlu0 %1849
  %1851 = vrot.lane.b32.xlu0 %v1738, 4
  %v1852 = vpop.permute.xlu0 %1851
  %1853 = vrot.lane.b32.xlu0 %v1750, 4
  %v1854 = vpop.permute.xlu0 %1853
  %1855 = vrot.lane.b32.xlu0 %v1762, 4
  %v1856 = vpop.permute.xlu0 %1855
  %1857 = vrot.lane.b32.xlu0 %v1774, 4
  %v1858 = vpop.permute.xlu0 %1857
  %1859 = vrot.lane.b32.xlu0 %v1786, 4
  %v1860 = vpop.permute.xlu0 %1859
  %1861 = vrot.lane.b32.xlu0 %v1798, 4
  %v1862 = vpop.permute.xlu0 %1861
  %vm1863 = vcmask 1046528
  %v1864 = vrot.slane %v1286, 1
  %v1865 = vrot.slane %v1382, 1
  %v1866 = vsel %vm1863, %v1864, %v1865
  %v1867 = vrot.slane %v1287, 1
  %v1868 = vrot.slane %v1383, 1
  %v1869 = vsel %vm1863, %v1867, %v1868
  %v1870 = vrot.slane %v1288, 1
  %v1871 = vrot.slane %v1384, 1
  %v1872 = vsel %vm1863, %v1870, %v1871
  %v1873 = vrot.slane %v1289, 1
  %v1874 = vrot.slane %v1385, 1
  %v1875 = vsel %vm1863, %v1873, %v1874
  %v1876 = vrot.slane %v1290, 1
  %v1877 = vrot.slane %v1386, 1
  %v1878 = vsel %vm1863, %v1876, %v1877
  %v1879 = vrot.slane %v1291, 1
  %v1880 = vrot.slane %v1387, 1
  %v1881 = vsel %vm1863, %v1879, %v1880
  %v1882 = vrot.slane %v1292, 1
  %v1883 = vrot.slane %v1388, 1
  %v1884 = vsel %vm1863, %v1882, %v1883
  %v1885 = vrot.slane %v1293, 1
  %v1886 = vrot.slane %v1389, 1
  %v1887 = vsel %vm1863, %v1885, %v1886
  %v1888 = vrot.slane %v1294, 1
  %v1889 = vrot.slane %v1390, 1
  %v1890 = vsel %vm1863, %v1888, %v1889
  %v1891 = vrot.slane %v1295, 1
  %v1892 = vrot.slane %v1391, 1
  %v1893 = vsel %vm1863, %v1891, %v1892
  %v1894 = vrot.slane %v1296, 1
  %v1895 = vrot.slane %v1392, 1
  %v1896 = vsel %vm1863, %v1894, %v1895
  %v1897 = vrot.slane %v1297, 1
  %v1898 = vrot.slane %v1393, 1
  %v1899 = vsel %vm1863, %v1897, %v1898
  %v1900 = vrot.slane %v1298, 1
  %v1901 = vrot.slane %v1394, 1
  %v1902 = vsel %vm1863, %v1900, %v1901
  %v1903 = vrot.slane %v1299, 1
  %v1904 = vrot.slane %v1395, 1
  %v1905 = vsel %vm1863, %v1903, %v1904
  %v1906 = vrot.slane %v1300, 1
  %v1907 = vrot.slane %v1396, 1
  %v1908 = vsel %vm1863, %v1906, %v1907
  %v1909 = vrot.slane %v1301, 1
  %v1910 = vrot.slane %v1397, 1
  %v1911 = vsel %vm1863, %v1909, %v1910
  %v1912 = vrot.slane %v1302, 1
  %v1913 = vrot.slane %v1398, 1
  %v1914 = vsel %vm1863, %v1912, %v1913
  %v1915 = vrot.slane %v1303, 1
  %v1916 = vrot.slane %v1399, 1
  %v1917 = vsel %vm1863, %v1915, %v1916
  %v1918 = vrot.slane %v1304, 1
  %v1919 = vrot.slane %v1400, 1
  %v1920 = vsel %vm1863, %v1918, %v1919
  %v1921 = vrot.slane %v1305, 1
  %v1922 = vrot.slane %v1401, 1
  %v1923 = vsel %vm1863, %v1921, %v1922
  %v1924 = vrot.slane %v1306, 1
  %v1925 = vrot.slane %v1402, 1
  %v1926 = vsel %vm1863, %v1924, %v1925
  %v1927 = vrot.slane %v1307, 1
  %v1928 = vrot.slane %v1403, 1
  %v1929 = vsel %vm1863, %v1927, %v1928
  %v1930 = vrot.slane %v1308, 1
  %v1931 = vrot.slane %v1404, 1
  %v1932 = vsel %vm1863, %v1930, %v1931
  %v1933 = vrot.slane %v1309, 1
  %v1934 = vrot.slane %v1405, 1
  %v1935 = vsel %vm1863, %v1933, %v1934
  %v1936 = vrot.slane %v1310, 1
  %v1937 = vrot.slane %v1406, 1
  %v1938 = vsel %vm1863, %v1936, %v1937
  %v1939 = vrot.slane %v1311, 1
  %v1940 = vrot.slane %v1407, 1
  %v1941 = vsel %vm1863, %v1939, %v1940
  %v1942 = vrot.slane %v1312, 1
  %v1943 = vrot.slane %v1408, 1
  %v1944 = vsel %vm1863, %v1942, %v1943
  %v1945 = vrot.slane %v1313, 1
  %v1946 = vrot.slane %v1409, 1
  %v1947 = vsel %vm1863, %v1945, %v1946
  %v1948 = vrot.slane %v1314, 1
  %v1949 = vrot.slane %v1410, 1
  %v1950 = vsel %vm1863, %v1948, %v1949
  %v1951 = vrot.slane %v1315, 1
  %v1952 = vrot.slane %v1411, 1
  %v1953 = vsel %vm1863, %v1951, %v1952
  %v1954 = vrot.slane %v1316, 1
  %v1955 = vrot.slane %v1412, 1
  %v1956 = vsel %vm1863, %v1954, %v1955
  %v1957 = vrot.slane %v1317, 1
  %v1958 = vrot.slane %v1413, 1
  %v1959 = vsel %vm1863, %v1957, %v1958
  %1960 = vrot.lane.b32.xlu0 %v1866, 8
  %v1961 = vpop.permute.xlu0 %1960
  %1962 = vrot.lane.b32.xlu0 %v1869, 8
  %v1963 = vpop.permute.xlu0 %1962
  %1964 = vrot.lane.b32.xlu0 %v1872, 8
  %v1965 = vpop.permute.xlu0 %1964
  %1966 = vrot.lane.b32.xlu0 %v1875, 8
  %v1967 = vpop.permute.xlu0 %1966
  %1968 = vrot.lane.b32.xlu0 %v1878, 8
  %v1969 = vpop.permute.xlu0 %1968
  %1970 = vrot.lane.b32.xlu0 %v1881, 8
  %v1971 = vpop.permute.xlu0 %1970
  %1972 = vrot.lane.b32.xlu0 %v1884, 8
  %v1973 = vpop.permute.xlu0 %1972
  %1974 = vrot.lane.b32.xlu0 %v1887, 8
  %v1975 = vpop.permute.xlu0 %1974
  %1976 = vrot.lane.b32.xlu0 %v1890, 8
  %v1977 = vpop.permute.xlu0 %1976
  %1978 = vrot.lane.b32.xlu0 %v1893, 8
  %v1979 = vpop.permute.xlu0 %1978
  %1980 = vrot.lane.b32.xlu0 %v1896, 8
  %v1981 = vpop.permute.xlu0 %1980
  %1982 = vrot.lane.b32.xlu0 %v1899, 8
  %v1983 = vpop.permute.xlu0 %1982
  %1984 = vrot.lane.b32.xlu0 %v1902, 8
  %v1985 = vpop.permute.xlu0 %1984
  %1986 = vrot.lane.b32.xlu0 %v1905, 8
  %v1987 = vpop.permute.xlu0 %1986
  %1988 = vrot.lane.b32.xlu0 %v1908, 8
  %v1989 = vpop.permute.xlu0 %1988
  %1990 = vrot.lane.b32.xlu0 %v1911, 8
  %v1991 = vpop.permute.xlu0 %1990
  %1992 = vrot.lane.b32.xlu0 %v1914, 8
  %v1993 = vpop.permute.xlu0 %1992
  %1994 = vrot.lane.b32.xlu0 %v1917, 8
  %v1995 = vpop.permute.xlu0 %1994
  %1996 = vrot.lane.b32.xlu0 %v1920, 8
  %v1997 = vpop.permute.xlu0 %1996
  %1998 = vrot.lane.b32.xlu0 %v1923, 8
  %v1999 = vpop.permute.xlu0 %1998
  %2000 = vrot.lane.b32.xlu0 %v1926, 8
  %v2001 = vpop.permute.xlu0 %2000
  %2002 = vrot.lane.b32.xlu0 %v1929, 8
  %v2003 = vpop.permute.xlu0 %2002
  %2004 = vrot.lane.b32.xlu0 %v1932, 8
  %v2005 = vpop.permute.xlu0 %2004
  %2006 = vrot.lane.b32.xlu0 %v1935, 8
  %v2007 = vpop.permute.xlu0 %2006
  %2008 = vrot.lane.b32.xlu0 %v1938, 8
  %v2009 = vpop.permute.xlu0 %2008
  %2010 = vrot.lane.b32.xlu0 %v1941, 8
  %v2011 = vpop.permute.xlu0 %2010
  %2012 = vrot.lane.b32.xlu0 %v1944, 8
  %v2013 = vpop.permute.xlu0 %2012
  %2014 = vrot.lane.b32.xlu0 %v1947, 8
  %v2015 = vpop.permute.xlu0 %2014
  %2016 = vrot.lane.b32.xlu0 %v1950, 8
  %v2017 = vpop.permute.xlu0 %2016
  %2018 = vrot.lane.b32.xlu0 %v1953, 8
  %v2019 = vpop.permute.xlu0 %2018
  %2020 = vrot.lane.b32.xlu0 %v1956, 8
  %v2021 = vpop.permute.xlu0 %2020
  %2022 = vrot.lane.b32.xlu0 %v1959, 8
  %v2023 = vpop.permute.xlu0 %2022
  %vm2024 = vcmask 31744
  %v2026 = vsel %vm2024, %v1286, %v1800
  %v2028 = vsel %vm2024, %v1287, %v1802
  %v2030 = vsel %vm2024, %v1288, %v1804
  %v2032 = vsel %vm2024, %v1289, %v1806
  %v2034 = vsel %vm2024, %v1290, %v1808
  %v2036 = vsel %vm2024, %v1291, %v1810
  %v2038 = vsel %vm2024, %v1292, %v1812
  %v2040 = vsel %vm2024, %v1293, %v1814
  %v2042 = vsel %vm2024, %v1294, %v1816
  %v2044 = vsel %vm2024, %v1295, %v1818
  %v2046 = vsel %vm2024, %v1296, %v1820
  %v2048 = vsel %vm2024, %v1297, %v1822
  %v2050 = vsel %vm2024, %v1298, %v1824
  %v2052 = vsel %vm2024, %v1299, %v1826
  %v2054 = vsel %vm2024, %v1300, %v1828
  %v2056 = vsel %vm2024, %v1301, %v1830
  %v2058 = vsel %vm2024, %v1302, %v1832
  %v2060 = vsel %vm2024, %v1303, %v1834
  %v2062 = vsel %vm2024, %v1304, %v1836
  %v2064 = vsel %vm2024, %v1305, %v1838
  %v2066 = vsel %vm2024, %v1306, %v1840
  %v2068 = vsel %vm2024, %v1307, %v1842
  %v2070 = vsel %vm2024, %v1308, %v1844
  %v2072 = vsel %vm2024, %v1309, %v1846
  %v2074 = vsel %vm2024, %v1310, %v1848
  %v2076 = vsel %vm2024, %v1311, %v1850
  %v2078 = vsel %vm2024, %v1312, %v1852
  %v2080 = vsel %vm2024, %v1313, %v1854
  %v2082 = vsel %vm2024, %v1314, %v1856
  %v2084 = vsel %vm2024, %v1315, %v1858
  %v2086 = vsel %vm2024, %v1316, %v1860
  %v2088 = vsel %vm2024, %v1317, %v1862
  %vm2089 = vcmask 64512
  %v2091 = vsel %vm2089, %v2026, %v1961
  %v2093 = vsel %vm2089, %v2028, %v1963
  %v2095 = vsel %vm2089, %v2030, %v1965
  %v2097 = vsel %vm2089, %v2032, %v1967
  %v2099 = vsel %vm2089, %v2034, %v1969
  %v2101 = vsel %vm2089, %v2036, %v1971
  %v2103 = vsel %vm2089, %v2038, %v1973
  %v2105 = vsel %vm2089, %v2040, %v1975
  %v2107 = vsel %vm2089, %v2042, %v1977
  %v2109 = vsel %vm2089, %v2044, %v1979
  %v2111 = vsel %vm2089, %v2046, %v1981
  %v2113 = vsel %vm2089, %v2048, %v1983
  %v2115 = vsel %vm2089, %v2050, %v1985
  %v2117 = vsel %vm2089, %v2052, %v1987
  %v2119 = vsel %vm2089, %v2054, %v1989
  %v2121 = vsel %vm2089, %v2056, %v1991
  %v2123 = vsel %vm2089, %v2058, %v1993
  %v2125 = vsel %vm2089, %v2060, %v1995
  %v2127 = vsel %vm2089, %v2062, %v1997
  %v2129 = vsel %vm2089, %v2064, %v1999
  %v2131 = vsel %vm2089, %v2066, %v2001
  %v2133 = vsel %vm2089, %v2068, %v2003
  %v2135 = vsel %vm2089, %v2070, %v2005
  %v2137 = vsel %vm2089, %v2072, %v2007
  %v2139 = vsel %vm2089, %v2074, %v2009
  %v2141 = vsel %vm2089, %v2076, %v2011
  %v2143 = vsel %vm2089, %v2078, %v2013
  %v2145 = vsel %vm2089, %v2080, %v2015
  %v2147 = vsel %vm2089, %v2082, %v2017
  %v2149 = vsel %vm2089, %v2084, %v2019
  %v2151 = vsel %vm2089, %v2086, %v2021
  %v2153 = vsel %vm2089, %v2088, %v2023
  %v2154 = vld [vmem:[%s1] sm:$0xf]
  %v2155 = vld [vmem:[%s1 + $0x4] sm:$0x3]
  %v2158 = vunpack.c.l.b16 %v2154
  %v2159 = vunpack.c.l.b16 %v2155
  %v2160 = vpack.c.b16 %v2159, %v2158
  %vm2161 = vcmask 97280
  %v2162 = vsel %vm2161, %v2091, 0
  %v2164 = vsel %vm2161, %v2093, 0
  %v2166 = vsel %vm2161, %v2095, 0
  %v2168 = vsel %vm2161, %v2097, 0
  %v2170 = vsel %vm2161, %v2099, 0
  %v2172 = vsel %vm2161, %v2101, 0
  %v2174 = vsel %vm2161, %v2103, 0
  %v2176 = vsel %vm2161, %v2105, 0
  %v2178 = vsel %vm2161, %v2107, 0
  %v2180 = vsel %vm2161, %v2109, 0
  %v2182 = vsel %vm2161, %v2111, 0
  %v2184 = vsel %vm2161, %v2113, 0
  %v2186 = vsel %vm2161, %v2115, 0
  %v2188 = vsel %vm2161, %v2117, 0
  %v2190 = vsel %vm2161, %v2119, 0
  %v2192 = vsel %vm2161, %v2121, 0
  %v2194 = vsel %vm2161, %v2123, 0
  %v2196 = vsel %vm2161, %v2125, 0
  %v2198 = vsel %vm2161, %v2127, 0
  %v2200 = vsel %vm2161, %v2129, 0
  %v2202 = vsel %vm2161, %v2131, 0
  %v2204 = vsel %vm2161, %v2133, 0
  %v2206 = vsel %vm2161, %v2135, 0
  %v2208 = vsel %vm2161, %v2137, 0
  %v2210 = vsel %vm2161, %v2139, 0
  %v2212 = vsel %vm2161, %v2141, 0
  %v2214 = vsel %vm2161, %v2143, 0
  %v2216 = vsel %vm2161, %v2145, 0
  %v2218 = vsel %vm2161, %v2147, 0
  %v2220 = vsel %vm2161, %v2149, 0
  %v2222 = vsel %vm2161, %v2151, 0
  %v2224 = vsel %vm2161, %v2153, 0
  %vm2226 = vcmask 1045504
  %v2228 = vsel %vm2226, %v2160, 0
  %2230 = vmatprep.subr.bf16.mxu0 0
  %2231 = vmatpush1.bf16.msra.mxu0 %v2228
  %2232 = vmatprep.subr.bf16.mxu0 0
  %2233 = vmatpush1.bf16.msra.mxu0 0
  %2234 = vmatprep.subr.bf16.mxu0 0
  %2235 = vmatpush1.bf16.msra.mxu0 0
  %2236 = vmatprep.subr.bf16.mxu0 0
  %2237 = vmatpush1.bf16.msra.mxu0 0
  %2238 = vmatprep.subr.bf16.mxu0 0
  %2239 = vmatpush1.bf16.msra.mxu0 0
  %2240 = vmatprep.subr.bf16.mxu0 0
  %2241 = vmatpush1.bf16.msra.mxu0 0
  %2242 = vmatprep.subr.bf16.mxu0 0
  %2243 = vmatpush1.bf16.msra.mxu0 0
  %2244 = vmatprep.subr.bf16.mxu0 0
  %2245 = vmatpush1.bf16.msra.mxu0 0
  %2246 = vmatprep.subr.bf16.mxu0 0
  %2247 = vmatpush1.bf16.msra.mxu0 0
  %2248 = vmatprep.subr.bf16.mxu0 0
  %2249 = vmatpush1.bf16.msra.mxu0 0
  %2250 = vmatprep.subr.bf16.mxu0 0
  %2251 = vmatpush1.bf16.msra.mxu0 0
  %2252 = vmatprep.subr.bf16.mxu0 0
  %2253 = vmatpush1.bf16.msra.mxu0 0
  %2254 = vmatprep.subr.bf16.mxu0 0
  %2255 = vmatpush1.bf16.msra.mxu0 0
  %2256 = vmatprep.subr.bf16.mxu0 0
  %2257 = vmatpush1.bf16.msra.mxu0 0
  %2258 = vmatprep.subr.bf16.mxu0 0
  %2259 = vmatpush1.bf16.msra.mxu0 0
  %2260 = vmatprep.subr.bf16.mxu0 0
  %2261 = vmatpush1.bf16.msra.mxu0 0
  %2262 = vmatprep.mubr.bf16.mxu0 0
  %2263 = vmatmul.mubr.bf16.gmra.mrb[0].mxu0 %v2162
  %v2264 = vpop.f32.mrb[0].mxu0
  %v2265 = vadd.f32 0.0, %v2264
  %v2266 = vpop.f32.mrb[0].mxu0
  %v2267 = vpop.f32.mrb[0].mxu0
  %v2268 = vadd.f32 0.0, %v2267
  %v2269 = vpop.f32.mrb[0].mxu0
  %2270 = vmatprep.mubr.bf16.mxu0 0
  %2271 = vmatmul.mubr.bf16.gmra.mrb[0].mxu0 %v2164
  %v2272 = vpop.f32.mrb[0].mxu0
  %v2273 = vadd.f32 0.0, %v2272
  %v2274 = vpop.f32.mrb[0].mxu0
  %v2275 = vpop.f32.mrb[0].mxu0
  %v2276 = vadd.f32 0.0, %v2275
  %v2277 = vpop.f32.mrb[0].mxu0
  %2278 = vmatprep.mubr.bf16.mxu0 0
  %2279 = vmatmul.mubr.bf16.gmra.mrb[0].mxu0 %v2166
  %v2280 = vpop.f32.mrb[0].mxu0
  %v2281 = vadd.f32 0.0, %v2280
  %v2282 = vpop.f32.mrb[0].mxu0
  %v2283 = vpop.f32.mrb[0].mxu0
  %v2284 = vadd.f32 0.0, %v2283
  %v2285 = vpop.f32.mrb[0].mxu0
  %2286 = vmatprep.mubr.bf16.mxu0 0
  %2287 = vmatmul.mubr.bf16.gmra.mrb[0].mxu0 %v2168
  %v2288 = vpop.f32.mrb[0].mxu0
  %v2289 = vadd.f32 0.0, %v2288
  %v2290 = vpop.f32.mrb[0].mxu0
  %v2291 = vpop.f32.mrb[0].mxu0
  %v2292 = vadd.f32 0.0, %v2291
  %v2293 = vpop.f32.mrb[0].mxu0
  %2294 = vmatprep.mubr.bf16.mxu0 0
  %2295 = vmatmul.mubr.bf16.gmra.mrb[0].mxu0 %v2170
  %v2296 = vpop.f32.mrb[0].mxu0
  %v2297 = vadd.f32 0.0, %v2296
  %v2298 = vpop.f32.mrb[0].mxu0
  %v2299 = vpop.f32.mrb[0].mxu0
  %v2300 = vadd.f32 0.0, %v2299
  %v2301 = vpop.f32.mrb[0].mxu0
  %2302 = vmatprep.mubr.bf16.mxu0 0
  %2303 = vmatmul.mubr.bf16.gmra.mrb[0].mxu0 %v2172
  %v2304 = vpop.f32.mrb[0].mxu0
  %v2305 = vadd.f32 0.0, %v2304
  %v2306 = vpop.f32.mrb[0].mxu0
  %v2307 = vpop.f32.mrb[0].mxu0
  %v2308 = vadd.f32 0.0, %v2307
  %v2309 = vpop.f32.mrb[0].mxu0
  %2310 = vmatprep.mubr.bf16.mxu0 0
  %2311 = vmatmul.mubr.bf16.gmra.mrb[0].mxu0 %v2174
  %v2312 = vpop.f32.mrb[0].mxu0
  %v2313 = vadd.f32 0.0, %v2312
  %v2314 = vpop.f32.mrb[0].mxu0
  %v2315 = vpop.f32.mrb[0].mxu0
  %v2316 = vadd.f32 0.0, %v2315
  %v2317 = vpop.f32.mrb[0].mxu0
  %2318 = vmatprep.mubr.bf16.mxu0 0
  %2319 = vmatmul.mubr.bf16.gmra.mrb[0].mxu0 %v2176
  %v2320 = vpop.f32.mrb[0].mxu0
  %v2321 = vadd.f32 0.0, %v2320
  %v2322 = vpop.f32.mrb[0].mxu0
  %v2323 = vpop.f32.mrb[0].mxu0
  %v2324 = vadd.f32 0.0, %v2323
  %v2325 = vpop.f32.mrb[0].mxu0
  %2326 = vmatprep.mubr.bf16.mxu0 0
  %2327 = vmatmul.mubr.bf16.gmra.mrb[0].mxu0 %v2178
  %v2328 = vpop.f32.mrb[0].mxu0
  %v2329 = vadd.f32 0.0, %v2328
  %v2330 = vpop.f32.mrb[0].mxu0
  %v2331 = vpop.f32.mrb[0].mxu0
  %v2332 = vadd.f32 0.0, %v2331
  %v2333 = vpop.f32.mrb[0].mxu0
  %2334 = vmatprep.mubr.bf16.mxu0 0
  %2335 = vmatmul.mubr.bf16.gmra.mrb[0].mxu0 %v2180
  %v2336 = vpop.f32.mrb[0].mxu0
  %v2337 = vadd.f32 0.0, %v2336
  %v2338 = vpop.f32.mrb[0].mxu0
  %v2339 = vpop.f32.mrb[0].mxu0
  %v2340 = vadd.f32 0.0, %v2339
  %v2341 = vpop.f32.mrb[0].mxu0
  %2342 = vmatprep.mubr.bf16.mxu0 0
  %2343 = vmatmul.mubr.bf16.gmra.mrb[0].mxu0 %v2182
  %v2344 = vpop.f32.mrb[0].mxu0
  %v2345 = vadd.f32 0.0, %v2344
  %v2346 = vpop.f32.mrb[0].mxu0
  %v2347 = vpop.f32.mrb[0].mxu0
  %v2348 = vadd.f32 0.0, %v2347
  %v2349 = vpop.f32.mrb[0].mxu0
  %2350 = vmatprep.mubr.bf16.mxu0 0
  %2351 = vmatmul.mubr.bf16.gmra.mrb[0].mxu0 %v2184
  %v2352 = vpop.f32.mrb[0].mxu0
  %v2353 = vadd.f32 0.0, %v2352
  %v2354 = vpop.f32.mrb[0].mxu0
  %v2355 = vpop.f32.mrb[0].mxu0
  %v2356 = vadd.f32 0.0, %v2355
  %v2357 = vpop.f32.mrb[0].mxu0
  %2358 = vmatprep.mubr.bf16.mxu0 0
  %2359 = vmatmul.mubr.bf16.gmra.mrb[0].mxu0 %v2186
  %v2360 = vpop.f32.mrb[0].mxu0
  %v2361 = vadd.f32 0.0, %v2360
  %v2362 = vpop.f32.mrb[0].mxu0
  %v2363 = vpop.f32.mrb[0].mxu0
  %v2364 = vadd.f32 0.0, %v2363
  %v2365 = vpop.f32.mrb[0].mxu0
  %2366 = vmatprep.mubr.bf16.mxu0 0
  %2367 = vmatmul.mubr.bf16.gmra.mrb[0].mxu0 %v2188
  %v2368 = vpop.f32.mrb[0].mxu0
  %v2369 = vadd.f32 0.0, %v2368
  %v2370 = vpop.f32.mrb[0].mxu0
  %v2371 = vpop.f32.mrb[0].mxu0
  %v2372 = vadd.f32 0.0, %v2371
  %v2373 = vpop.f32.mrb[0].mxu0
  %2374 = vmatprep.mubr.bf16.mxu0 0
  %2375 = vmatmul.mubr.bf16.gmra.mrb[0].mxu0 %v2190
  %v2376 = vpop.f32.mrb[0].mxu0
  %v2377 = vadd.f32 0.0, %v2376
  %v2378 = vpop.f32.mrb[0].mxu0
  %v2379 = vpop.f32.mrb[0].mxu0
  %v2380 = vadd.f32 0.0, %v2379
  %v2381 = vpop.f32.mrb[0].mxu0
  %2382 = vmatprep.mubr.bf16.mxu0 0
  %2383 = vmatmul.mubr.bf16.gmra.mrb[0].mxu0 %v2192
  %v2384 = vpop.f32.mrb[0].mxu0
  %v2385 = vadd.f32 0.0, %v2384
  %v2386 = vpop.f32.mrb[0].mxu0
  %v2387 = vpop.f32.mrb[0].mxu0
  %v2388 = vadd.f32 0.0, %v2387
  %v2389 = vpop.f32.mrb[0].mxu0
  %2390 = vmatprep.mubr.bf16.mxu0 0
  %2391 = vmatmul.mubr.bf16.gmra.mrb[0].mxu0 %v2194
  %v2392 = vpop.f32.mrb[0].mxu0
  %v2393 = vadd.f32 0.0, %v2392
  %v2394 = vpop.f32.mrb[0].mxu0
  %v2395 = vpop.f32.mrb[0].mxu0
  %v2396 = vadd.f32 0.0, %v2395
  %v2397 = vpop.f32.mrb[0].mxu0
  %2398 = vmatprep.mubr.bf16.mxu0 0
  %2399 = vmatmul.mubr.bf16.gmra.mrb[0].mxu0 %v2196
  %v2400 = vpop.f32.mrb[0].mxu0
  %v2401 = vadd.f32 0.0, %v2400
  %v2402 = vpop.f32.mrb[0].mxu0
  %v2403 = vpop.f32.mrb[0].mxu0
  %v2404 = vadd.f32 0.0, %v2403
  %v2405 = vpop.f32.mrb[0].mxu0
  %2406 = vmatprep.mubr.bf16.mxu0 0
  %2407 = vmatmul.mubr.bf16.gmra.mrb[0].mxu0 %v2198
  %v2408 = vpop.f32.mrb[0].mxu0
  %v2409 = vadd.f32 0.0, %v2408
  %v2410 = vpop.f32.mrb[0].mxu0
  %v2411 = vpop.f32.mrb[0].mxu0
  %v2412 = vadd.f32 0.0, %v2411
  %v2413 = vpop.f32.mrb[0].mxu0
  %2414 = vmatprep.mubr.bf16.mxu0 0
  %2415 = vmatmul.mubr.bf16.gmra.mrb[0].mxu0 %v2200
  %v2416 = vpop.f32.mrb[0].mxu0
  %v2417 = vadd.f32 0.0, %v2416
  %v2418 = vpop.f32.mrb[0].mxu0
  %v2419 = vpop.f32.mrb[0].mxu0
  %v2420 = vadd.f32 0.0, %v2419
  %v2421 = vpop.f32.mrb[0].mxu0
  %2422 = vmatprep.mubr.bf16.mxu0 0
  %2423 = vmatmul.mubr.bf16.gmra.mrb[0].mxu0 %v2202
  %v2424 = vpop.f32.mrb[0].mxu0
  %v2425 = vadd.f32 0.0, %v2424
  %v2426 = vpop.f32.mrb[0].mxu0
  %v2427 = vpop.f32.mrb[0].mxu0
  %v2428 = vadd.f32 0.0, %v2427
  %v2429 = vpop.f32.mrb[0].mxu0
  %2430 = vmatprep.mubr.bf16.mxu0 0
  %2431 = vmatmul.mubr.bf16.gmra.mrb[0].mxu0 %v2204
  %v2432 = vpop.f32.mrb[0].mxu0
  %v2433 = vadd.f32 0.0, %v2432
  %v2434 = vpop.f32.mrb[0].mxu0
  %v2435 = vpop.f32.mrb[0].mxu0
  %v2436 = vadd.f32 0.0, %v2435
  %v2437 = vpop.f32.mrb[0].mxu0
  %2438 = vmatprep.mubr.bf16.mxu0 0
  %2439 = vmatmul.mubr.bf16.gmra.mrb[0].mxu0 %v2206
  %v2440 = vpop.f32.mrb[0].mxu0
  %v2441 = vadd.f32 0.0, %v2440
  %v2442 = vpop.f32.mrb[0].mxu0
  %v2443 = vpop.f32.mrb[0].mxu0
  %v2444 = vadd.f32 0.0, %v2443
  %v2445 = vpop.f32.mrb[0].mxu0
  %2446 = vmatprep.mubr.bf16.mxu0 0
  %2447 = vmatmul.mubr.bf16.gmra.mrb[0].mxu0 %v2208
  %v2448 = vpop.f32.mrb[0].mxu0
  %v2449 = vadd.f32 0.0, %v2448
  %v2450 = vpop.f32.mrb[0].mxu0
  %v2451 = vpop.f32.mrb[0].mxu0
  %v2452 = vadd.f32 0.0, %v2451
  %v2453 = vpop.f32.mrb[0].mxu0
  %2454 = vmatprep.mubr.bf16.mxu0 0
  %2455 = vmatmul.mubr.bf16.gmra.mrb[0].mxu0 %v2210
  %v2456 = vpop.f32.mrb[0].mxu0
  %v2457 = vadd.f32 0.0, %v2456
  %v2458 = vpop.f32.mrb[0].mxu0
  %v2459 = vpop.f32.mrb[0].mxu0
  %v2460 = vadd.f32 0.0, %v2459
  %v2461 = vpop.f32.mrb[0].mxu0
  %2462 = vmatprep.mubr.bf16.mxu0 0
  %2463 = vmatmul.mubr.bf16.gmra.mrb[0].mxu0 %v2212
  %v2464 = vpop.f32.mrb[0].mxu0
  %v2465 = vadd.f32 0.0, %v2464
  %v2466 = vpop.f32.mrb[0].mxu0
  %v2467 = vpop.f32.mrb[0].mxu0
  %v2468 = vadd.f32 0.0, %v2467
  %v2469 = vpop.f32.mrb[0].mxu0
  %2470 = vmatprep.mubr.bf16.mxu0 0
  %2471 = vmatmul.mubr.bf16.gmra.mrb[0].mxu0 %v2214
  %v2472 = vpop.f32.mrb[0].mxu0
  %v2473 = vadd.f32 0.0, %v2472
  %v2474 = vpop.f32.mrb[0].mxu0
  %v2475 = vpop.f32.mrb[0].mxu0
  %v2476 = vadd.f32 0.0, %v2475
  %v2477 = vpop.f32.mrb[0].mxu0
  %2478 = vmatprep.mubr.bf16.mxu0 0
  %2479 = vmatmul.mubr.bf16.gmra.mrb[0].mxu0 %v2216
  %v2480 = vpop.f32.mrb[0].mxu0
  %v2481 = vadd.f32 0.0, %v2480
  %v2482 = vpop.f32.mrb[0].mxu0
  %v2483 = vpop.f32.mrb[0].mxu0
  %v2484 = vadd.f32 0.0, %v2483
  %v2485 = vpop.f32.mrb[0].mxu0
  %2486 = vmatprep.mubr.bf16.mxu0 0
  %2487 = vmatmul.mubr.bf16.gmra.mrb[0].mxu0 %v2218
  %v2488 = vpop.f32.mrb[0].mxu0
  %v2489 = vadd.f32 0.0, %v2488
  %v2490 = vpop.f32.mrb[0].mxu0
  %v2491 = vpop.f32.mrb[0].mxu0
  %v2492 = vadd.f32 0.0, %v2491
  %v2493 = vpop.f32.mrb[0].mxu0
  %2494 = vmatprep.mubr.bf16.mxu0 0
  %2495 = vmatmul.mubr.bf16.gmra.mrb[0].mxu0 %v2220
  %v2496 = vpop.f32.mrb[0].mxu0
  %v2497 = vadd.f32 0.0, %v2496
  %v2498 = vpop.f32.mrb[0].mxu0
  %v2499 = vpop.f32.mrb[0].mxu0
  %v2500 = vadd.f32 0.0, %v2499
  %v2501 = vpop.f32.mrb[0].mxu0
  %2502 = vmatprep.mubr.bf16.mxu0 0
  %2503 = vmatmul.mubr.bf16.gmra.mrb[0].mxu0 %v2222
  %v2504 = vpop.f32.mrb[0].mxu0
  %v2505 = vadd.f32 0.0, %v2504
  %v2506 = vpop.f32.mrb[0].mxu0
  %v2507 = vpop.f32.mrb[0].mxu0
  %v2508 = vadd.f32 0.0, %v2507
  %v2509 = vpop.f32.mrb[0].mxu0
  %2510 = vmatprep.mubr.bf16.mxu0 0
  %2511 = vmatmul.mubr.bf16.gmra.mrb[0].mxu0 %v2224
  %v2512 = vpop.f32.mrb[0].mxu0
  %v2513 = vadd.f32 0.0, %v2512
  %v2514 = vpop.f32.mrb[0].mxu0
  %v2515 = vpop.f32.mrb[0].mxu0
  %v2516 = vadd.f32 0.0, %v2515
  %v2517 = vpop.f32.mrb[0].mxu0
  %2518 = vdwg.mxu0
  %vm2519 = vcmask 130048
  %2520 = vst.msk [vmem:[#allocation3] sm:$0xff] %vm2519, %v2265
  %2521 = vst.msk [vmem:[#allocation3 + $0x8] sm:$0xff] %vm2519, %v2268
  %2522 = vst.msk [vmem:[#allocation3 + $0x10] sm:$0xff] %vm2519, %v2273
  %2523 = vst.msk [vmem:[#allocation3 + $0x18] sm:$0xff] %vm2519, %v2276
  %2524 = vst.msk [vmem:[#allocation3 + $0x20] sm:$0xff] %vm2519, %v2281
  %2525 = vst.msk [vmem:[#allocation3 + $0x28] sm:$0xff] %vm2519, %v2284
  %2526 = vst.msk [vmem:[#allocation3 + $0x30] sm:$0xff] %vm2519, %v2289
  %2527 = vst.msk [vmem:[#allocation3 + $0x38] sm:$0xff] %vm2519, %v2292
  %2528 = vst.msk [vmem:[#allocation3 + $0x40] sm:$0xff] %vm2519, %v2297
  %2529 = vst.msk [vmem:[#allocation3 + $0x48] sm:$0xff] %vm2519, %v2300
  %2530 = vst.msk [vmem:[#allocation3 + $0x50] sm:$0xff] %vm2519, %v2305
  %2531 = vst.msk [vmem:[#allocation3 + $0x58] sm:$0xff] %vm2519, %v2308
  %2532 = vst.msk [vmem:[#allocation3 + $0x60] sm:$0xff] %vm2519, %v2313
  %2533 = vst.msk [vmem:[#allocation3 + $0x68] sm:$0xff] %vm2519, %v2316
  %2534 = vst.msk [vmem:[#allocation3 + $0x70] sm:$0xff] %vm2519, %v2321
  %2535 = vst.msk [vmem:[#allocation3 + $0x78] sm:$0xff] %vm2519, %v2324
  %2536 = vst.msk [vmem:[#allocation3 + $0x80] sm:$0xff] %vm2519, %v2329
  %2537 = vst.msk [vmem:[#allocation3 + $0x88] sm:$0xff] %vm2519, %v2332
  %2538 = vst.msk [vmem:[#allocation3 + $0x90] sm:$0xff] %vm2519, %v2337
  %2539 = vst.msk [vmem:[#allocation3 + $0x98] sm:$0xff] %vm2519, %v2340
  %2540 = vst.msk [vmem:[#allocation3 + $0xa0] sm:$0xff] %vm2519, %v2345
  %2541 = vst.msk [vmem:[#allocation3 + $0xa8] sm:$0xff] %vm2519, %v2348
  %2542 = vst.msk [vmem:[#allocation3 + $0xb0] sm:$0xff] %vm2519, %v2353
  %2543 = vst.msk [vmem:[#allocation3 + $0xb8] sm:$0xff] %vm2519, %v2356
  %2544 = vst.msk [vmem:[#allocation3 + $0xc0] sm:$0xff] %vm2519, %v2361
  %2545 = vst.msk [vmem:[#allocation3 + $0xc8] sm:$0xff] %vm2519, %v2364
  %2546 = vst.msk [vmem:[#allocation3 + $0xd0] sm:$0xff] %vm2519, %v2369
  %2547 = vst.msk [vmem:[#allocation3 + $0xd8] sm:$0xff] %vm2519, %v2372
  %2548 = vst.msk [vmem:[#allocation3 + $0xe0] sm:$0xff] %vm2519, %v2377
  %2549 = vst.msk [vmem:[#allocation3 + $0xe8] sm:$0xff] %vm2519, %v2380
  %2550 = vst.msk [vmem:[#allocation3 + $0xf0] sm:$0xff] %vm2519, %v2385
  %2551 = vst.msk [vmem:[#allocation3 + $0xf8] sm:$0xff] %vm2519, %v2388
  %2552 = vst.msk [vmem:[#allocation3 + $0x100] sm:$0xff] %vm2519, %v2393
  %2553 = vst.msk [vmem:[#allocation3 + $0x108] sm:$0xff] %vm2519, %v2396
  %2554 = vst.msk [vmem:[#allocation3 + $0x110] sm:$0xff] %vm2519, %v2401
  %2555 = vst.msk [vmem:[#allocation3 + $0x118] sm:$0xff] %vm2519, %v2404
  %2556 = vst.msk [vmem:[#allocation3 + $0x120] sm:$0xff] %vm2519, %v2409
  %2557 = vst.msk [vmem:[#allocation3 + $0x128] sm:$0xff] %vm2519, %v2412
  %2558 = vst.msk [vmem:[#allocation3 + $0x130] sm:$0xff] %vm2519, %v2417
  %2559 = vst.msk [vmem:[#allocation3 + $0x138] sm:$0xff] %vm2519, %v2420
  %2560 = vst.msk [vmem:[#allocation3 + $0x140] sm:$0xff] %vm2519, %v2425
  %2561 = vst.msk [vmem:[#allocation3 + $0x148] sm:$0xff] %vm2519, %v2428
  %2562 = vst.msk [vmem:[#allocation3 + $0x150] sm:$0xff] %vm2519, %v2433
  %2563 = vst.msk [vmem:[#allocation3 + $0x158] sm:$0xff] %vm2519, %v2436
  %2564 = vst.msk [vmem:[#allocation3 + $0x160] sm:$0xff] %vm2519, %v2441
  %2565 = vst.msk [vmem:[#allocation3 + $0x168] sm:$0xff] %vm2519, %v2444
  %2566 = vst.msk [vmem:[#allocation3 + $0x170] sm:$0xff] %vm2519, %v2449
  %2567 = vst.msk [vmem:[#allocation3 + $0x178] sm:$0xff] %vm2519, %v2452
  %2568 = vst.msk [vmem:[#allocation3 + $0x180] sm:$0xff] %vm2519, %v2457
  %2569 = vst.msk [vmem:[#allocation3 + $0x188] sm:$0xff] %vm2519, %v2460
  %2570 = vst.msk [vmem:[#allocation3 + $0x190] sm:$0xff] %vm2519, %v2465
  %2571 = vst.msk [vmem:[#allocation3 + $0x198] sm:$0xff] %vm2519, %v2468
  %2572 = vst.msk [vmem:[#allocation3 + $0x1a0] sm:$0xff] %vm2519, %v2473
  %2573 = vst.msk [vmem:[#allocation3 + $0x1a8] sm:$0xff] %vm2519, %v2476
  %2574 = vst.msk [vmem:[#allocation3 + $0x1b0] sm:$0xff] %vm2519, %v2481
  %2575 = vst.msk [vmem:[#allocation3 + $0x1b8] sm:$0xff] %vm2519, %v2484
  %2576 = vst.msk [vmem:[#allocation3 + $0x1c0] sm:$0xff] %vm2519, %v2489
  %2577 = vst.msk [vmem:[#allocation3 + $0x1c8] sm:$0xff] %vm2519, %v2492
  %2578 = vst.msk [vmem:[#allocation3 + $0x1d0] sm:$0xff] %vm2519, %v2497
  %2579 = vst.msk [vmem:[#allocation3 + $0x1d8] sm:$0xff] %vm2519, %v2500
  %2580 = vst.msk [vmem:[#allocation3 + $0x1e0] sm:$0xff] %vm2519, %v2505
  %2581 = vst.msk [vmem:[#allocation3 + $0x1e8] sm:$0xff] %vm2519, %v2508
  %2582 = vst.msk [vmem:[#allocation3 + $0x1f0] sm:$0xff] %vm2519, %v2513
  %2583 = vst.msk [vmem:[#allocation3 + $0x1f8] sm:$0xff] %vm2519, %v2516
  %v2584 = vld [vmem:[%s832] sm:$0xf]
  %v2585 = vld [vmem:[%s832 + $0x4] sm:$0xf]
  %v2586 = vld [vmem:[%s832 + $0x8] sm:$0x1]
  %v2587 = vld [vmem:[%s832 + $0xc] sm:$0xf]
  %v2588 = vld [vmem:[%s832 + $0x10] sm:$0xf]
  %v2589 = vld [vmem:[%s832 + $0x14] sm:$0x1]
  %v2590 = vld [vmem:[%s832 + $0x18] sm:$0xf]
  %v2591 = vld [vmem:[%s832 + $0x1c] sm:$0xf]
  %v2592 = vld [vmem:[%s832 + $0x20] sm:$0x1]
  %v2593 = vld [vmem:[%s832 + $0x24] sm:$0xf]
  %v2594 = vld [vmem:[%s832 + $0x28] sm:$0xf]
  %v2595 = vld [vmem:[%s832 + $0x2c] sm:$0x1]
  %v2596 = vld [vmem:[%s832 + $0x30] sm:$0xf]
  %v2597 = vld [vmem:[%s832 + $0x34] sm:$0xf]
  %v2598 = vld [vmem:[%s832 + $0x38] sm:$0x1]
  %v2599 = vld [vmem:[%s832 + $0x3c] sm:$0xf]
  %v2600 = vld [vmem:[%s832 + $0x40] sm:$0xf]
  %v2601 = vld [vmem:[%s832 + $0x44] sm:$0x1]
  %v2602 = vld [vmem:[%s832 + $0x48] sm:$0xf]
  %v2603 = vld [vmem:[%s832 + $0x4c] sm:$0xf]
  %v2604 = vld [vmem:[%s832 + $0x50] sm:$0x1]
  %v2605 = vld [vmem:[%s832 + $0x54] sm:$0xf]
  %v2606 = vld [vmem:[%s832 + $0x58] sm:$0xf]
  %v2607 = vld [vmem:[%s832 + $0x5c] sm:$0x1]
  %v2608 = vld [vmem:[%s832 + $0x60] sm:$0xf]
  %v2609 = vld [vmem:[%s832 + $0x64] sm:$0xf]
  %v2610 = vld [vmem:[%s832 + $0x68] sm:$0x1]
  %v2611 = vld [vmem:[%s832 + $0x6c] sm:$0xf]
  %v2612 = vld [vmem:[%s832 + $0x70] sm:$0xf]
  %v2613 = vld [vmem:[%s832 + $0x74] sm:$0x1]
  %v2614 = vld [vmem:[%s832 + $0x78] sm:$0xf]
  %v2615 = vld [vmem:[%s832 + $0x7c] sm:$0xf]
  %v2616 = vld [vmem:[%s832 + $0x80] sm:$0x1]
  %v2617 = vld [vmem:[%s832 + $0x84] sm:$0xf]
  %v2618 = vld [vmem:[%s832 + $0x88] sm:$0xf]
  %v2619 = vld [vmem:[%s832 + $0x8c] sm:$0x1]
  %v2620 = vld [vmem:[%s832 + $0x90] sm:$0xf]
  %v2621 = vld [vmem:[%s832 + $0x94] sm:$0xf]
  %v2622 = vld [vmem:[%s832 + $0x98] sm:$0x1]
  %v2623 = vld [vmem:[%s832 + $0x9c] sm:$0xf]
  %v2624 = vld [vmem:[%s832 + $0xa0] sm:$0xf]
  %v2625 = vld [vmem:[%s832 + $0xa4] sm:$0x1]
  %v2626 = vld [vmem:[%s832 + $0xa8] sm:$0xf]
  %v2627 = vld [vmem:[%s832 + $0xac] sm:$0xf]
  %v2628 = vld [vmem:[%s832 + $0xb0] sm:$0x1]
  %v2629 = vld [vmem:[%s832 + $0xb4] sm:$0xf]
  %v2630 = vld [vmem:[%s832 + $0xb8] sm:$0xf]
  %v2631 = vld [vmem:[%s832 + $0xbc] sm:$0x1]
  %v2632 = vld [vmem:[%s832 + $0xd8] sm:$0xf]
  %v2633 = vld [vmem:[%s832 + $0xdc] sm:$0xf]
  %v2634 = vld [vmem:[%s832 + $0xe0] sm:$0x1]
  %v2635 = vld [vmem:[%s832 + $0xe4] sm:$0xf]
  %v2636 = vld [vmem:[%s832 + $0xe8] sm:$0xf]
  %v2637 = vld [vmem:[%s832 + $0xec] sm:$0x1]
  %v2638 = vld [vmem:[%s832 + $0xf0] sm:$0xf]
  %v2639 = vld [vmem:[%s832 + $0xf4] sm:$0xf]
  %v2640 = vld [vmem:[%s832 + $0xf8] sm:$0x1]
  %v2641 = vld [vmem:[%s832 + $0xfc] sm:$0xf]
  %v2642 = vld [vmem:[%s832 + $0x100] sm:$0xf]
  %v2643 = vld [vmem:[%s832 + $0x104] sm:$0x1]
  %v2644 = vld [vmem:[%s832 + $0x108] sm:$0xf]
  %v2645 = vld [vmem:[%s832 + $0x10c] sm:$0xf]
  %v2646 = vld [vmem:[%s832 + $0x110] sm:$0x1]
  %v2647 = vld [vmem:[%s832 + $0x114] sm:$0xf]
  %v2648 = vld [vmem:[%s832 + $0x118] sm:$0xf]
  %v2649 = vld [vmem:[%s832 + $0x11c] sm:$0x1]
  %v2650 = vld [vmem:[%s832 + $0x120] sm:$0xf]
  %v2651 = vld [vmem:[%s832 + $0x124] sm:$0xf]
  %v2652 = vld [vmem:[%s832 + $0x128] sm:$0x1]
  %v2653 = vld [vmem:[%s832 + $0x12c] sm:$0xf]
  %v2654 = vld [vmem:[%s832 + $0x130] sm:$0xf]
  %v2655 = vld [vmem:[%s832 + $0x134] sm:$0x1]
  %v2656 = vld [vmem:[%s832 + $0x138] sm:$0xf]
  %v2657 = vld [vmem:[%s832 + $0x13c] sm:$0xf]
  %v2658 = vld [vmem:[%s832 + $0x140] sm:$0x1]
  %v2659 = vld [vmem:[%s832 + $0x144] sm:$0xf]
  %v2660 = vld [vmem:[%s832 + $0x148] sm:$0xf]
  %v2661 = vld [vmem:[%s832 + $0x14c] sm:$0x1]
  %v2662 = vld [vmem:[%s832 + $0x150] sm:$0xf]
  %v2663 = vld [vmem:[%s832 + $0x154] sm:$0xf]
  %v2664 = vld [vmem:[%s832 + $0x158] sm:$0x1]
  %v2665 = vld [vmem:[%s832 + $0x15c] sm:$0xf]
  %v2666 = vld [vmem:[%s832 + $0x160] sm:$0xf]
  %v2667 = vld [vmem:[%s832 + $0x164] sm:$0x1]
  %v2668 = vld [vmem:[%s832 + $0x168] sm:$0xf]
  %v2669 = vld [vmem:[%s832 + $0x16c] sm:$0xf]
  %v2670 = vld [vmem:[%s832 + $0x170] sm:$0x1]
  %v2671 = vld [vmem:[%s832 + $0x174] sm:$0xf]
  %v2672 = vld [vmem:[%s832 + $0x178] sm:$0xf]
  %v2673 = vld [vmem:[%s832 + $0x17c] sm:$0x1]
  %v2674 = vld [vmem:[%s832 + $0x180] sm:$0xf]
  %v2675 = vld [vmem:[%s832 + $0x184] sm:$0xf]
  %v2676 = vld [vmem:[%s832 + $0x188] sm:$0x1]
  %v2677 = vld [vmem:[%s832 + $0x18c] sm:$0xf]
  %v2678 = vld [vmem:[%s832 + $0x190] sm:$0xf]
  %v2679 = vld [vmem:[%s832 + $0x194] sm:$0x1]
  %v2744 = vunpack.c.l.b16 %v2584
  %v2745 = vunpack.c.l.b16 %v2585
  %v2746 = vunpack.c.l.b16 %v2587
  %v2747 = vunpack.c.l.b16 %v2588
  %v2748 = vunpack.c.l.b16 %v2590
  %v2749 = vunpack.c.l.b16 %v2591
  %v2750 = vunpack.c.l.b16 %v2593
  %v2751 = vunpack.c.l.b16 %v2594
  %v2752 = vunpack.c.l.b16 %v2596
  %v2753 = vunpack.c.l.b16 %v2597
  %v2754 = vunpack.c.l.b16 %v2599
  %v2755 = vunpack.c.l.b16 %v2600
  %v2756 = vunpack.c.l.b16 %v2602
  %v2757 = vunpack.c.l.b16 %v2603
  %v2758 = vunpack.c.l.b16 %v2605
  %v2759 = vunpack.c.l.b16 %v2606
  %v2760 = vunpack.c.l.b16 %v2608
  %v2761 = vunpack.c.l.b16 %v2609
  %v2762 = vunpack.c.l.b16 %v2611
  %v2763 = vunpack.c.l.b16 %v2612
  %v2764 = vunpack.c.l.b16 %v2614
  %v2765 = vunpack.c.l.b16 %v2615
  %v2766 = vunpack.c.l.b16 %v2617
  %v2767 = vunpack.c.l.b16 %v2618
  %v2768 = vunpack.c.l.b16 %v2620
  %v2769 = vunpack.c.l.b16 %v2621
  %v2770 = vunpack.c.l.b16 %v2623
  %v2771 = vunpack.c.l.b16 %v2624
  %v2772 = vunpack.c.l.b16 %v2626
  %v2773 = vunpack.c.l.b16 %v2627
  %v2774 = vunpack.c.l.b16 %v2629
  %v2775 = vunpack.c.l.b16 %v2630
  %v2776 = vunpack.c.l.b16 %v2632
  %v2777 = vunpack.c.l.b16 %v2633
  %v2778 = vunpack.c.l.b16 %v2635
  %v2779 = vunpack.c.l.b16 %v2636
  %v2780 = vunpack.c.l.b16 %v2638
  %v2781 = vunpack.c.l.b16 %v2639
  %v2782 = vunpack.c.l.b16 %v2641
  %v2783 = vunpack.c.l.b16 %v2642
  %v2784 = vunpack.c.l.b16 %v2644
  %v2785 = vunpack.c.l.b16 %v2645
  %v2786 = vunpack.c.l.b16 %v2647
  %v2787 = vunpack.c.l.b16 %v2648
  %v2788 = vunpack.c.l.b16 %v2650
  %v2789 = vunpack.c.l.b16 %v2651
  %v2790 = vunpack.c.l.b16 %v2653
  %v2791 = vunpack.c.l.b16 %v2654
  %v2792 = vunpack.c.l.b16 %v2656
  %v2793 = vunpack.c.l.b16 %v2657
  %v2794 = vunpack.c.l.b16 %v2659
  %v2795 = vunpack.c.l.b16 %v2660
  %v2796 = vunpack.c.l.b16 %v2662
  %v2797 = vunpack.c.l.b16 %v2663
  %v2798 = vunpack.c.l.b16 %v2665
  %v2799 = vunpack.c.l.b16 %v2666
  %v2800 = vunpack.c.l.b16 %v2668
  %v2801 = vunpack.c.l.b16 %v2669
  %v2802 = vunpack.c.l.b16 %v2671
  %v2803 = vunpack.c.l.b16 %v2672
  %v2804 = vunpack.c.l.b16 %v2674
  %v2805 = vunpack.c.l.b16 %v2675
  %v2806 = vunpack.c.l.b16 %v2677
  %v2807 = vunpack.c.l.b16 %v2678
  %v2808 = vpack.c.b16 %v2745, %v2744
  %v2809 = vpack.c.b16 %v2747, %v2746
  %v2810 = vpack.c.b16 %v2749, %v2748
  %v2811 = vpack.c.b16 %v2751, %v2750
  %v2812 = vpack.c.b16 %v2753, %v2752
  %v2813 = vpack.c.b16 %v2755, %v2754
  %v2814 = vpack.c.b16 %v2757, %v2756
  %v2815 = vpack.c.b16 %v2759, %v2758
  %v2816 = vpack.c.b16 %v2761, %v2760
  %v2817 = vpack.c.b16 %v2763, %v2762
  %v2818 = vpack.c.b16 %v2765, %v2764
  %v2819 = vpack.c.b16 %v2767, %v2766
  %v2820 = vpack.c.b16 %v2769, %v2768
  %v2821 = vpack.c.b16 %v2771, %v2770
  %v2822 = vpack.c.b16 %v2773, %v2772
  %v2823 = vpack.c.b16 %v2775, %v2774
  %v2824 = vpack.c.b16 %v2777, %v2776
  %v2825 = vpack.c.b16 %v2779, %v2778
  %v2826 = vpack.c.b16 %v2781, %v2780
  %v2827 = vpack.c.b16 %v2783, %v2782
  %v2828 = vpack.c.b16 %v2785, %v2784
  %v2829 = vpack.c.b16 %v2787, %v2786
  %v2830 = vpack.c.b16 %v2789, %v2788
  %v2831 = vpack.c.b16 %v2791, %v2790
  %v2832 = vpack.c.b16 %v2793, %v2792
  %v2833 = vpack.c.b16 %v2795, %v2794
  %v2834 = vpack.c.b16 %v2797, %v2796
  %v2835 = vpack.c.b16 %v2799, %v2798
  %v2836 = vpack.c.b16 %v2801, %v2800
  %v2837 = vpack.c.b16 %v2803, %v2802
  %v2838 = vpack.c.b16 %v2805, %v2804
  %v2839 = vpack.c.b16 %v2807, %v2806
  %v2872 = vunpack.c.l.b16 %v2586
  %v2873 = vunpack.c.l.b16 %v2589
  %v2874 = vunpack.c.l.b16 %v2592
  %v2875 = vunpack.c.l.b16 %v2595
  %v2876 = vunpack.c.l.b16 %v2598
  %v2877 = vunpack.c.l.b16 %v2601
  %v2878 = vunpack.c.l.b16 %v2604
  %v2879 = vunpack.c.l.b16 %v2607
  %v2880 = vunpack.c.l.b16 %v2610
  %v2881 = vunpack.c.l.b16 %v2613
  %v2882 = vunpack.c.l.b16 %v2616
  %v2883 = vunpack.c.l.b16 %v2619
  %v2884 = vunpack.c.l.b16 %v2622
  %v2885 = vunpack.c.l.b16 %v2625
  %v2886 = vunpack.c.l.b16 %v2628
  %v2887 = vunpack.c.l.b16 %v2631
  %v2888 = vunpack.c.l.b16 %v2634
  %v2889 = vunpack.c.l.b16 %v2637
  %v2890 = vunpack.c.l.b16 %v2640
  %v2891 = vunpack.c.l.b16 %v2643
  %v2892 = vunpack.c.l.b16 %v2646
  %v2893 = vunpack.c.l.b16 %v2649
  %v2894 = vunpack.c.l.b16 %v2652
  %v2895 = vunpack.c.l.b16 %v2655
  %v2896 = vunpack.c.l.b16 %v2658
  %v2897 = vunpack.c.l.b16 %v2661
  %v2898 = vunpack.c.l.b16 %v2664
  %v2899 = vunpack.c.l.b16 %v2667
  %v2900 = vunpack.c.l.b16 %v2670
  %v2901 = vunpack.c.l.b16 %v2673
  %v2902 = vunpack.c.l.b16 %v2676
  %v2903 = vunpack.c.l.b16 %v2679
  %v2904 = vpack.c.b16 %v2872, %v2872
  %v2905 = vpack.c.b16 %v2873, %v2873
  %v2906 = vpack.c.b16 %v2874, %v2874
  %v2907 = vpack.c.b16 %v2875, %v2875
  %v2908 = vpack.c.b16 %v2876, %v2876
  %v2909 = vpack.c.b16 %v2877, %v2877
  %v2910 = vpack.c.b16 %v2878, %v2878
  %v2911 = vpack.c.b16 %v2879, %v2879
  %v2912 = vpack.c.b16 %v2880, %v2880
  %v2913 = vpack.c.b16 %v2881, %v2881
  %v2914 = vpack.c.b16 %v2882, %v2882
  %v2915 = vpack.c.b16 %v2883, %v2883
  %v2916 = vpack.c.b16 %v2884, %v2884
  %v2917 = vpack.c.b16 %v2885, %v2885
  %v2918 = vpack.c.b16 %v2886, %v2886
  %v2919 = vpack.c.b16 %v2887, %v2887
  %v2920 = vpack.c.b16 %v2888, %v2888
  %v2921 = vpack.c.b16 %v2889, %v2889
  %v2922 = vpack.c.b16 %v2890, %v2890
  %v2923 = vpack.c.b16 %v2891, %v2891
  %v2924 = vpack.c.b16 %v2892, %v2892
  %v2925 = vpack.c.b16 %v2893, %v2893
  %v2926 = vpack.c.b16 %v2894, %v2894
  %v2927 = vpack.c.b16 %v2895, %v2895
  %v2928 = vpack.c.b16 %v2896, %v2896
  %v2929 = vpack.c.b16 %v2897, %v2897
  %v2930 = vpack.c.b16 %v2898, %v2898
  %v2931 = vpack.c.b16 %v2899, %v2899
  %v2932 = vpack.c.b16 %v2900, %v2900
  %v2933 = vpack.c.b16 %v2901, %v2901
  %v2934 = vpack.c.b16 %v2902, %v2902
  %v2935 = vpack.c.b16 %v2903, %v2903
  %v2937 = vshrl.u32 %v2808, 16
  %v2939 = vshll.u32 %v2808, 16
  %v2941 = vrot.slane %v2939, 1
  %v2942 = vor.u32 %v2937, %v2941
  %v2944 = vshll.u32 %v2904, 16
  %v2946 = vrot.slane %v2944, 1
  %v2947 = vsel %vm1414, %v2942, %v2946
  %v2949 = vshrl.u32 %v2809, 16
  %v2951 = vshll.u32 %v2809, 16
  %v2953 = vrot.slane %v2951, 1
  %v2954 = vor.u32 %v2949, %v2953
  %v2956 = vshll.u32 %v2905, 16
  %v2958 = vrot.slane %v2956, 1
  %v2959 = vsel %vm1414, %v2954, %v2958
  %v2961 = vshrl.u32 %v2810, 16
  %v2963 = vshll.u32 %v2810, 16
  %v2965 = vrot.slane %v2963, 1
  %v2966 = vor.u32 %v2961, %v2965
  %v2968 = vshll.u32 %v2906, 16
  %v2970 = vrot.slane %v2968, 1
  %v2971 = vsel %vm1414, %v2966, %v2970
  %v2973 = vshrl.u32 %v2811, 16
  %v2975 = vshll.u32 %v2811, 16
  %v2977 = vrot.slane %v2975, 1
  %v2978 = vor.u32 %v2973, %v2977
  %v2980 = vshll.u32 %v2907, 16
  %v2982 = vrot.slane %v2980, 1
  %v2983 = vsel %vm1414, %v2978, %v2982
  %v2985 = vshrl.u32 %v2812, 16
  %v2987 = vshll.u32 %v2812, 16
  %v2989 = vrot.slane %v2987, 1
  %v2990 = vor.u32 %v2985, %v2989
  %v2992 = vshll.u32 %v2908, 16
  %v2994 = vrot.slane %v2992, 1
  %v2995 = vsel %vm1414, %v2990, %v2994
  %v2997 = vshrl.u32 %v2813, 16
  %v2999 = vshll.u32 %v2813, 16
  %v3001 = vrot.slane %v2999, 1
  %v3002 = vor.u32 %v2997, %v3001
  %v3004 = vshll.u32 %v2909, 16
  %v3006 = vrot.slane %v3004, 1
  %v3007 = vsel %vm1414, %v3002, %v3006
  %v3009 = vshrl.u32 %v2814, 16
  %v3011 = vshll.u32 %v2814, 16
  %v3013 = vrot.slane %v3011, 1
  %v3014 = vor.u32 %v3009, %v3013
  %v3016 = vshll.u32 %v2910, 16
  %v3018 = vrot.slane %v3016, 1
  %v3019 = vsel %vm1414, %v3014, %v3018
  %v3021 = vshrl.u32 %v2815, 16
  %v3023 = vshll.u32 %v2815, 16
  %v3025 = vrot.slane %v3023, 1
  %v3026 = vor.u32 %v3021, %v3025
  %v3028 = vshll.u32 %v2911, 16
  %v3030 = vrot.slane %v3028, 1
  %v3031 = vsel %vm1414, %v3026, %v3030
  %v3033 = vshrl.u32 %v2816, 16
  %v3035 = vshll.u32 %v2816, 16
  %v3037 = vrot.slane %v3035, 1
  %v3038 = vor.u32 %v3033, %v3037
  %v3040 = vshll.u32 %v2912, 16
  %v3042 = vrot.slane %v3040, 1
  %v3043 = vsel %vm1414, %v3038, %v3042
  %v3045 = vshrl.u32 %v2817, 16
  %v3047 = vshll.u32 %v2817, 16
  %v3049 = vrot.slane %v3047, 1
  %v3050 = vor.u32 %v3045, %v3049
  %v3052 = vshll.u32 %v2913, 16
  %v3054 = vrot.slane %v3052, 1
  %v3055 = vsel %vm1414, %v3050, %v3054
  %v3057 = vshrl.u32 %v2818, 16
  %v3059 = vshll.u32 %v2818, 16
  %v3061 = vrot.slane %v3059, 1
  %v3062 = vor.u32 %v3057, %v3061
  %v3064 = vshll.u32 %v2914, 16
  %v3066 = vrot.slane %v3064, 1
  %v3067 = vsel %vm1414, %v3062, %v3066
  %v3069 = vshrl.u32 %v2819, 16
  %v3071 = vshll.u32 %v2819, 16
  %v3073 = vrot.slane %v3071, 1
  %v3074 = vor.u32 %v3069, %v3073
  %v3076 = vshll.u32 %v2915, 16
  %v3078 = vrot.slane %v3076, 1
  %v3079 = vsel %vm1414, %v3074, %v3078
  %v3081 = vshrl.u32 %v2820, 16
  %v3083 = vshll.u32 %v2820, 16
  %v3085 = vrot.slane %v3083, 1
  %v3086 = vor.u32 %v3081, %v3085
  %v3088 = vshll.u32 %v2916, 16
  %v3090 = vrot.slane %v3088, 1
  %v3091 = vsel %vm1414, %v3086, %v3090
  %v3093 = vshrl.u32 %v2821, 16
  %v3095 = vshll.u32 %v2821, 16
  %v3097 = vrot.slane %v3095, 1
  %v3098 = vor.u32 %v3093, %v3097
  %v3100 = vshll.u32 %v2917, 16
  %v3102 = vrot.slane %v3100, 1
  %v3103 = vsel %vm1414, %v3098, %v3102
  %v3105 = vshrl.u32 %v2822, 16
  %v3107 = vshll.u32 %v2822, 16
  %v3109 = vrot.slane %v3107, 1
  %v3110 = vor.u32 %v3105, %v3109
  %v3112 = vshll.u32 %v2918, 16
  %v3114 = vrot.slane %v3112, 1
  %v3115 = vsel %vm1414, %v3110, %v3114
  %v3117 = vshrl.u32 %v2823, 16
  %v3119 = vshll.u32 %v2823, 16
  %v3121 = vrot.slane %v3119, 1
  %v3122 = vor.u32 %v3117, %v3121
  %v3124 = vshll.u32 %v2919, 16
  %v3126 = vrot.slane %v3124, 1
  %v3127 = vsel %vm1414, %v3122, %v3126
  %v3129 = vshrl.u32 %v2824, 16
  %v3131 = vshll.u32 %v2824, 16
  %v3133 = vrot.slane %v3131, 1
  %v3134 = vor.u32 %v3129, %v3133
  %v3136 = vshll.u32 %v2920, 16
  %v3138 = vrot.slane %v3136, 1
  %v3139 = vsel %vm1414, %v3134, %v3138
  %v3141 = vshrl.u32 %v2825, 16
  %v3143 = vshll.u32 %v2825, 16
  %v3145 = vrot.slane %v3143, 1
  %v3146 = vor.u32 %v3141, %v3145
  %v3148 = vshll.u32 %v2921, 16
  %v3150 = vrot.slane %v3148, 1
  %v3151 = vsel %vm1414, %v3146, %v3150
  %v3153 = vshrl.u32 %v2826, 16
  %v3155 = vshll.u32 %v2826, 16
  %v3157 = vrot.slane %v3155, 1
  %v3158 = vor.u32 %v3153, %v3157
  %v3160 = vshll.u32 %v2922, 16
  %v3162 = vrot.slane %v3160, 1
  %v3163 = vsel %vm1414, %v3158, %v3162
  %v3165 = vshrl.u32 %v2827, 16
  %v3167 = vshll.u32 %v2827, 16
  %v3169 = vrot.slane %v3167, 1
  %v3170 = vor.u32 %v3165, %v3169
  %v3172 = vshll.u32 %v2923, 16
  %v3174 = vrot.slane %v3172, 1
  %v3175 = vsel %vm1414, %v3170, %v3174
  %v3177 = vshrl.u32 %v2828, 16
  %v3179 = vshll.u32 %v2828, 16
  %v3181 = vrot.slane %v3179, 1
  %v3182 = vor.u32 %v3177, %v3181
  %v3184 = vshll.u32 %v2924, 16
  %v3186 = vrot.slane %v3184, 1
  %v3187 = vsel %vm1414, %v3182, %v3186
  %v3189 = vshrl.u32 %v2829, 16
  %v3191 = vshll.u32 %v2829, 16
  %v3193 = vrot.slane %v3191, 1
  %v3194 = vor.u32 %v3189, %v3193
  %v3196 = vshll.u32 %v2925, 16
  %v3198 = vrot.slane %v3196, 1
  %v3199 = vsel %vm1414, %v3194, %v3198
  %v3201 = vshrl.u32 %v2830, 16
  %v3203 = vshll.u32 %v2830, 16
  %v3205 = vrot.slane %v3203, 1
  %v3206 = vor.u32 %v3201, %v3205
  %v3208 = vshll.u32 %v2926, 16
  %v3210 = vrot.slane %v3208, 1
  %v3211 = vsel %vm1414, %v3206, %v3210
  %v3213 = vshrl.u32 %v2831, 16
  %v3215 = vshll.u32 %v2831, 16
  %v3217 = vrot.slane %v3215, 1
  %v3218 = vor.u32 %v3213, %v3217
  %v3220 = vshll.u32 %v2927, 16
  %v3222 = vrot.slane %v3220, 1
  %v3223 = vsel %vm1414, %v3218, %v3222
  %v3225 = vshrl.u32 %v2832, 16
  %v3227 = vshll.u32 %v2832, 16
  %v3229 = vrot.slane %v3227, 1
  %v3230 = vor.u32 %v3225, %v3229
  %v3232 = vshll.u32 %v2928, 16
  %v3234 = vrot.slane %v3232, 1
  %v3235 = vsel %vm1414, %v3230, %v3234
  %v3237 = vshrl.u32 %v2833, 16
  %v3239 = vshll.u32 %v2833, 16
  %v3241 = vrot.slane %v3239, 1
  %v3242 = vor.u32 %v3237, %v3241
  %v3244 = vshll.u32 %v2929, 16
  %v3246 = vrot.slane %v3244, 1
  %v3247 = vsel %vm1414, %v3242, %v3246
  %v3249 = vshrl.u32 %v2834, 16
  %v3251 = vshll.u32 %v2834, 16
  %v3253 = vrot.slane %v3251, 1
  %v3254 = vor.u32 %v3249, %v3253
  %v3256 = vshll.u32 %v2930, 16
  %v3258 = vrot.slane %v3256, 1
  %v3259 = vsel %vm1414, %v3254, %v3258
  %v3261 = vshrl.u32 %v2835, 16
  %v3263 = vshll.u32 %v2835, 16
  %v3265 = vrot.slane %v3263, 1
  %v3266 = vor.u32 %v3261, %v3265
  %v3268 = vshll.u32 %v2931, 16
  %v3270 = vrot.slane %v3268, 1
  %v3271 = vsel %vm1414, %v3266, %v3270
  %v3273 = vshrl.u32 %v2836, 16
  %v3275 = vshll.u32 %v2836, 16
  %v3277 = vrot.slane %v3275, 1
  %v3278 = vor.u32 %v3273, %v3277
  %v3280 = vshll.u32 %v2932, 16
  %v3282 = vrot.slane %v3280, 1
  %v3283 = vsel %vm1414, %v3278, %v3282
  %v3285 = vshrl.u32 %v2837, 16
  %v3287 = vshll.u32 %v2837, 16
  %v3289 = vrot.slane %v3287, 1
  %v3290 = vor.u32 %v3285, %v3289
  %v3292 = vshll.u32 %v2933, 16
  %v3294 = vrot.slane %v3292, 1
  %v3295 = vsel %vm1414, %v3290, %v3294
  %v3297 = vshrl.u32 %v2838, 16
  %v3299 = vshll.u32 %v2838, 16
  %v3301 = vrot.slane %v3299, 1
  %v3302 = vor.u32 %v3297, %v3301
  %v3304 = vshll.u32 %v2934, 16
  %v3306 = vrot.slane %v3304, 1
  %v3307 = vsel %vm1414, %v3302, %v3306
  %v3309 = vshrl.u32 %v2839, 16
  %v3311 = vshll.u32 %v2839, 16
  %v3313 = vrot.slane %v3311, 1
  %v3314 = vor.u32 %v3309, %v3313
  %v3316 = vshll.u32 %v2935, 16
  %v3318 = vrot.slane %v3316, 1
  %v3319 = vsel %vm1414, %v3314, %v3318
  %3320 = vrot.lane.b32.xlu0 %v2947, 4
  %v3321 = vpop.permute.xlu0 %3320
  %3322 = vrot.lane.b32.xlu0 %v2959, 4
  %v3323 = vpop.permute.xlu0 %3322
  %3324 = vrot.lane.b32.xlu0 %v2971, 4
  %v3325 = vpop.permute.xlu0 %3324
  %3326 = vrot.lane.b32.xlu0 %v2983, 4
  %v3327 = vpop.permute.xlu0 %3326
  %3328 = vrot.lane.b32.xlu0 %v2995, 4
  %v3329 = vpop.permute.xlu0 %3328
  %3330 = vrot.lane.b32.xlu0 %v3007, 4
  %v3331 = vpop.permute.xlu0 %3330
  %3332 = vrot.lane.b32.xlu0 %v3019, 4
  %v3333 = vpop.permute.xlu0 %3332
  %3334 = vrot.lane.b32.xlu0 %v3031, 4
  %v3335 = vpop.permute.xlu0 %3334
  %3336 = vrot.lane.b32.xlu0 %v3043, 4
  %v3337 = vpop.permute.xlu0 %3336
  %3338 = vrot.lane.b32.xlu0 %v3055, 4
  %v3339 = vpop.permute.xlu0 %3338
  %3340 = vrot.lane.b32.xlu0 %v3067, 4
  %v3341 = vpop.permute.xlu0 %3340
  %3342 = vrot.lane.b32.xlu0 %v3079, 4
  %v3343 = vpop.permute.xlu0 %3342
  %3344 = vrot.lane.b32.xlu0 %v3091, 4
  %v3345 = vpop.permute.xlu0 %3344
  %3346 = vrot.lane.b32.xlu0 %v3103, 4
  %v3347 = vpop.permute.xlu0 %3346
  %3348 = vrot.lane.b32.xlu0 %v3115, 4
  %v3349 = vpop.permute.xlu0 %3348
  %3350 = vrot.lane.b32.xlu0 %v3127, 4
  %v3351 = vpop.permute.xlu0 %3350
  %3352 = vrot.lane.b32.xlu0 %v3139, 4
  %v3353 = vpop.permute.xlu0 %3352
  %3354 = vrot.lane.b32.xlu0 %v3151, 4
  %v3355 = vpop.permute.xlu0 %3354
  %3356 = vrot.lane.b32.xlu0 %v3163, 4
  %v3357 = vpop.permute.xlu0 %3356
  %3358 = vrot.lane.b32.xlu0 %v3175, 4
  %v3359 = vpop.permute.xlu0 %3358
  %3360 = vrot.lane.b32.xlu0 %v3187, 4
  %v3361 = vpop.permute.xlu0 %3360
  %3362 = vrot.lane.b32.xlu0 %v3199, 4
  %v3363 = vpop.permute.xlu0 %3362
  %3364 = vrot.lane.b32.xlu0 %v3211, 4
  %v3365 = vpop.permute.xlu0 %3364
  %3366 = vrot.lane.b32.xlu0 %v3223, 4
  %v3367 = vpop.permute.xlu0 %3366
  %3368 = vrot.lane.b32.xlu0 %v3235, 4
  %v3369 = vpop.permute.xlu0 %3368
  %3370 = vrot.lane.b32.xlu0 %v3247, 4
  %v3371 = vpop.permute.xlu0 %3370
  %3372 = vrot.lane.b32.xlu0 %v3259, 4
  %v3373 = vpop.permute.xlu0 %3372
  %3374 = vrot.lane.b32.xlu0 %v3271, 4
  %v3375 = vpop.permute.xlu0 %3374
  %3376 = vrot.lane.b32.xlu0 %v3283, 4
  %v3377 = vpop.permute.xlu0 %3376
  %3378 = vrot.lane.b32.xlu0 %v3295, 4
  %v3379 = vpop.permute.xlu0 %3378
  %3380 = vrot.lane.b32.xlu0 %v3307, 4
  %v3381 = vpop.permute.xlu0 %3380
  %3382 = vrot.lane.b32.xlu0 %v3319, 4
  %v3383 = vpop.permute.xlu0 %3382
  %v3384 = vrot.slane %v2808, 1
  %v3385 = vrot.slane %v2904, 1
  %v3386 = vsel %vm1863, %v3384, %v3385
  %v3387 = vrot.slane %v2809, 1
  %v3388 = vrot.slane %v2905, 1
  %v3389 = vsel %vm1863, %v3387, %v3388
  %v3390 = vrot.slane %v2810, 1
  %v3391 = vrot.slane %v2906, 1
  %v3392 = vsel %vm1863, %v3390, %v3391
  %v3393 = vrot.slane %v2811, 1
  %v3394 = vrot.slane %v2907, 1
  %v3395 = vsel %vm1863, %v3393, %v3394
  %v3396 = vrot.slane %v2812, 1
  %v3397 = vrot.slane %v2908, 1
  %v3398 = vsel %vm1863, %v3396, %v3397
  %v3399 = vrot.slane %v2813, 1
  %v3400 = vrot.slane %v2909, 1
  %v3401 = vsel %vm1863, %v3399, %v3400
  %v3402 = vrot.slane %v2814, 1
  %v3403 = vrot.slane %v2910, 1
  %v3404 = vsel %vm1863, %v3402, %v3403
  %v3405 = vrot.slane %v2815, 1
  %v3406 = vrot.slane %v2911, 1
  %v3407 = vsel %vm1863, %v3405, %v3406
  %v3408 = vrot.slane %v2816, 1
  %v3409 = vrot.slane %v2912, 1
  %v3410 = vsel %vm1863, %v3408, %v3409
  %v3411 = vrot.slane %v2817, 1
  %v3412 = vrot.slane %v2913, 1
  %v3413 = vsel %vm1863, %v3411, %v3412
  %v3414 = vrot.slane %v2818, 1
  %v3415 = vrot.slane %v2914, 1
  %v3416 = vsel %vm1863, %v3414, %v3415
  %v3417 = vrot.slane %v2819, 1
  %v3418 = vrot.slane %v2915, 1
  %v3419 = vsel %vm1863, %v3417, %v3418
  %v3420 = vrot.slane %v2820, 1
  %v3421 = vrot.slane %v2916, 1
  %v3422 = vsel %vm1863, %v3420, %v3421
  %v3423 = vrot.slane %v2821, 1
  %v3424 = vrot.slane %v2917, 1
  %v3425 = vsel %vm1863, %v3423, %v3424
  %v3426 = vrot.slane %v2822, 1
  %v3427 = vrot.slane %v2918, 1
  %v3428 = vsel %vm1863, %v3426, %v3427
  %v3429 = vrot.slane %v2823, 1
  %v3430 = vrot.slane %v2919, 1
  %v3431 = vsel %vm1863, %v3429, %v3430
  %v3432 = vrot.slane %v2824, 1
  %v3433 = vrot.slane %v2920, 1
  %v3434 = vsel %vm1863, %v3432, %v3433
  %v3435 = vrot.slane %v2825, 1
  %v3436 = vrot.slane %v2921, 1
  %v3437 = vsel %vm1863, %v3435, %v3436
  %v3438 = vrot.slane %v2826, 1
  %v3439 = vrot.slane %v2922, 1
  %v3440 = vsel %vm1863, %v3438, %v3439
  %v3441 = vrot.slane %v2827, 1
  %v3442 = vrot.slane %v2923, 1
  %v3443 = vsel %vm1863, %v3441, %v3442
  %v3444 = vrot.slane %v2828, 1
  %v3445 = vrot.slane %v2924, 1
  %v3446 = vsel %vm1863, %v3444, %v3445
  %v3447 = vrot.slane %v2829, 1
  %v3448 = vrot.slane %v2925, 1
  %v3449 = vsel %vm1863, %v3447, %v3448
  %v3450 = vrot.slane %v2830, 1
  %v3451 = vrot.slane %v2926, 1
  %v3452 = vsel %vm1863, %v3450, %v3451
  %v3453 = vrot.slane %v2831, 1
  %v3454 = vrot.slane %v2927, 1
  %v3455 = vsel %vm1863, %v3453, %v3454
  %v3456 = vrot.slane %v2832, 1
  %v3457 = vrot.slane %v2928, 1
  %v3458 = vsel %vm1863, %v3456, %v3457
  %v3459 = vrot.slane %v2833, 1
  %v3460 = vrot.slane %v2929, 1
  %v3461 = vsel %vm1863, %v3459, %v3460
  %v3462 = vrot.slane %v2834, 1
  %v3463 = vrot.slane %v2930, 1
  %v3464 = vsel %vm1863, %v3462, %v3463
  %v3465 = vrot.slane %v2835, 1
  %v3466 = vrot.slane %v2931, 1
  %v3467 = vsel %vm1863, %v3465, %v3466
  %v3468 = vrot.slane %v2836, 1
  %v3469 = vrot.slane %v2932, 1
  %v3470 = vsel %vm1863, %v3468, %v3469
  %v3471 = vrot.slane %v2837, 1
  %v3472 = vrot.slane %v2933, 1
  %v3473 = vsel %vm1863, %v3471, %v3472
  %v3474 = vrot.slane %v2838, 1
  %v3475 = vrot.slane %v2934, 1
  %v3476 = vsel %vm1863, %v3474, %v3475
  %v3477 = vrot.slane %v2839, 1
  %v3478 = vrot.slane %v2935, 1
  %v3479 = vsel %vm1863, %v3477, %v3478
  %3480 = vrot.lane.b32.xlu0 %v3386, 8
  %v3481 = vpop.permute.xlu0 %3480
  %3482 = vrot.lane.b32.xlu0 %v3389, 8
  %v3483 = vpop.permute.xlu0 %3482
  %3484 = vrot.lane.b32.xlu0 %v3392, 8
  %v3485 = vpop.permute.xlu0 %3484
  %3486 = vrot.lane.b32.xlu0 %v3395, 8
  %v3487 = vpop.permute.xlu0 %3486
  %3488 = vrot.lane.b32.xlu0 %v3398, 8
  %v3489 = vpop.permute.xlu0 %3488
  %3490 = vrot.lane.b32.xlu0 %v3401, 8
  %v3491 = vpop.permute.xlu0 %3490
  %3492 = vrot.lane.b32.xlu0 %v3404, 8
  %v3493 = vpop.permute.xlu0 %3492
  %3494 = vrot.lane.b32.xlu0 %v3407, 8
  %v3495 = vpop.permute.xlu0 %3494
  %3496 = vrot.lane.b32.xlu0 %v3410, 8
  %v3497 = vpop.permute.xlu0 %3496
  %3498 = vrot.lane.b32.xlu0 %v3413, 8
  %v3499 = vpop.permute.xlu0 %3498
  %3500 = vrot.lane.b32.xlu0 %v3416, 8
  %v3501 = vpop.permute.xlu0 %3500
  %3502 = vrot.lane.b32.xlu0 %v3419, 8
  %v3503 = vpop.permute.xlu0 %3502
  %3504 = vrot.lane.b32.xlu0 %v3422, 8
  %v3505 = vpop.permute.xlu0 %3504
  %3506 = vrot.lane.b32.xlu0 %v3425, 8
  %v3507 = vpop.permute.xlu0 %3506
  %3508 = vrot.lane.b32.xlu0 %v3428, 8
  %v3509 = vpop.permute.xlu0 %3508
  %3510 = vrot.lane.b32.xlu0 %v3431, 8
  %v3511 = vpop.permute.xlu0 %3510
  %3512 = vrot.lane.b32.xlu0 %v3434, 8
  %v3513 = vpop.permute.xlu0 %3512
  %3514 = vrot.lane.b32.xlu0 %v3437, 8
  %v3515 = vpop.permute.xlu0 %3514
  %3516 = vrot.lane.b32.xlu0 %v3440, 8
  %v3517 = vpop.permute.xlu0 %3516
  %3518 = vrot.lane.b32.xlu0 %v3443, 8
  %v3519 = vpop.permute.xlu0 %3518
  %3520 = vrot.lane.b32.xlu0 %v3446, 8
  %v3521 = vpop.permute.xlu0 %3520
  %3522 = vrot.lane.b32.xlu0 %v3449, 8
  %v3523 = vpop.permute.xlu0 %3522
  %3524 = vrot.lane.b32.xlu0 %v3452, 8
  %v3525 = vpop.permute.xlu0 %3524
  %3526 = vrot.lane.b32.xlu0 %v3455, 8
  %v3527 = vpop.permute.xlu0 %3526
  %3528 = vrot.lane.b32.xlu0 %v3458, 8
  %v3529 = vpop.permute.xlu0 %3528
  %3530 = vrot.lane.b32.xlu0 %v3461, 8
  %v3531 = vpop.permute.xlu0 %3530
  %3532 = vrot.lane.b32.xlu0 %v3464, 8
  %v3533 = vpop.permute.xlu0 %3532
  %3534 = vrot.lane.b32.xlu0 %v3467, 8
  %v3535 = vpop.permute.xlu0 %3534
  %3536 = vrot.lane.b32.xlu0 %v3470, 8
  %v3537 = vpop.permute.xlu0 %3536
  %3538 = vrot.lane.b32.xlu0 %v3473, 8
  %v3539 = vpop.permute.xlu0 %3538
  %3540 = vrot.lane.b32.xlu0 %v3476, 8
  %v3541 = vpop.permute.xlu0 %3540
  %3542 = vrot.lane.b32.xlu0 %v3479, 8
  %v3543 = vpop.permute.xlu0 %3542
  %v3545 = vsel %vm2024, %v2808, %v3321
  %v3547 = vsel %vm2024, %v2809, %v3323
  %v3549 = vsel %vm2024, %v2810, %v3325
  %v3551 = vsel %vm2024, %v2811, %v3327
  %v3553 = vsel %vm2024, %v2812, %v3329
  %v3555 = vsel %vm2024, %v2813, %v3331
  %v3557 = vsel %vm2024, %v2814, %v3333
  %v3559 = vsel %vm2024, %v2815, %v3335
  %v3561 = vsel %vm2024, %v2816, %v3337
  %v3563 = vsel %vm2024, %v2817, %v3339
  %v3565 = vsel %vm2024, %v2818, %v3341
  %v3567 = vsel %vm2024, %v2819, %v3343
  %v3569 = vsel %vm2024, %v2820, %v3345
  %v3571 = vsel %vm2024, %v2821, %v3347
  %v3573 = vsel %vm2024, %v2822, %v3349
  %v3575 = vsel %vm2024, %v2823, %v3351
  %v3577 = vsel %vm2024, %v2824, %v3353
  %v3579 = vsel %vm2024, %v2825, %v3355
  %v3581 = vsel %vm2024, %v2826, %v3357
  %v3583 = vsel %vm2024, %v2827, %v3359
  %v3585 = vsel %vm2024, %v2828, %v3361
  %v3587 = vsel %vm2024, %v2829, %v3363
  %v3589 = vsel %vm2024, %v2830, %v3365
  %v3591 = vsel %vm2024, %v2831, %v3367
  %v3593 = vsel %vm2024, %v2832, %v3369
  %v3595 = vsel %vm2024, %v2833, %v3371
  %v3597 = vsel %vm2024, %v2834, %v3373
  %v3599 = vsel %vm2024, %v2835, %v3375
  %v3601 = vsel %vm2024, %v2836, %v3377
  %v3603 = vsel %vm2024, %v2837, %v3379
  %v3605 = vsel %vm2024, %v2838, %v3381
  %v3607 = vsel %vm2024, %v2839, %v3383
  %v3609 = vsel %vm2089, %v3545, %v3481
  %v3611 = vsel %vm2089, %v3547, %v3483
  %v3613 = vsel %vm2089, %v3549, %v3485
  %v3615 = vsel %vm2089, %v3551, %v3487
  %v3617 = vsel %vm2089, %v3553, %v3489
  %v3619 = vsel %vm2089, %v3555, %v3491
  %v3621 = vsel %vm2089, %v3557, %v3493
  %v3623 = vsel %vm2089, %v3559, %v3495
  %v3625 = vsel %vm2089, %v3561, %v3497
  %v3627 = vsel %vm2089, %v3563, %v3499
  %v3629 = vsel %vm2089, %v3565, %v3501
  %v3631 = vsel %vm2089, %v3567, %v3503
  %v3633 = vsel %vm2089, %v3569, %v3505
  %v3635 = vsel %vm2089, %v3571, %v3507
  %v3637 = vsel %vm2089, %v3573, %v3509
  %v3639 = vsel %vm2089, %v3575, %v3511
  %v3641 = vsel %vm2089, %v3577, %v3513
  %v3643 = vsel %vm2089, %v3579, %v3515
  %v3645 = vsel %vm2089, %v3581, %v3517
  %v3647 = vsel %vm2089, %v3583, %v3519
  %v3649 = vsel %vm2089, %v3585, %v3521
  %v3651 = vsel %vm2089, %v3587, %v3523
  %v3653 = vsel %vm2089, %v3589, %v3525
  %v3655 = vsel %vm2089, %v3591, %v3527
  %v3657 = vsel %vm2089, %v3593, %v3529
  %v3659 = vsel %vm2089, %v3595, %v3531
  %v3661 = vsel %vm2089, %v3597, %v3533
  %v3663 = vsel %vm2089, %v3599, %v3535
  %v3665 = vsel %vm2089, %v3601, %v3537
  %v3667 = vsel %vm2089, %v3603, %v3539
  %v3669 = vsel %vm2089, %v3605, %v3541
  %v3671 = vsel %vm2089, %v3607, %v3543
  %s3672 = scalar_lea.vmem %s1, 8
  %v3673 = vld [vmem:[%s3672] sm:$0xf]
  %v3674 = vld [vmem:[%s3672 + $0x4] sm:$0x3]
  %v3677 = vunpack.c.l.b16 %v3673
  %v3678 = vunpack.c.l.b16 %v3674
  %v3679 = vpack.c.b16 %v3678, %v3677
  %v3680 = vsel %vm2161, %v3609, 0
  %v3682 = vsel %vm2161, %v3611, 0
  %v3684 = vsel %vm2161, %v3613, 0
  %v3686 = vsel %vm2161, %v3615, 0
  %v3688 = vsel %vm2161, %v3617, 0
  %v3690 = vsel %vm2161, %v3619, 0
  %v3692 = vsel %vm2161, %v3621, 0
  %v3694 = vsel %vm2161, %v3623, 0
  %v3696 = vsel %vm2161, %v3625, 0
  %v3698 = vsel %vm2161, %v3627, 0
  %v3700 = vsel %vm2161, %v3629, 0
  %v3702 = vsel %vm2161, %v3631, 0
  %v3704 = vsel %vm2161, %v3633, 0
  %v3706 = vsel %vm2161, %v3635, 0
  %v3708 = vsel %vm2161, %v3637, 0
  %v3710 = vsel %vm2161, %v3639, 0
  %v3712 = vsel %vm2161, %v3641, 0
  %v3714 = vsel %vm2161, %v3643, 0
  %v3716 = vsel %vm2161, %v3645, 0
  %v3718 = vsel %vm2161, %v3647, 0
  %v3720 = vsel %vm2161, %v3649, 0
  %v3722 = vsel %vm2161, %v3651, 0
  %v3724 = vsel %vm2161, %v3653, 0
  %v3726 = vsel %vm2161, %v3655, 0
  %v3728 = vsel %vm2161, %v3657, 0
  %v3730 = vsel %vm2161, %v3659, 0
  %v3732 = vsel %vm2161, %v3661, 0
  %v3734 = vsel %vm2161, %v3663, 0
  %v3736 = vsel %vm2161, %v3665, 0
  %v3738 = vsel %vm2161, %v3667, 0
  %v3740 = vsel %vm2161, %v3669, 0
  %v3742 = vsel %vm2161, %v3671, 0
  %v3745 = vsel %vm2226, %v3679, 0
  %3747 = vmatprep.subr.bf16.mxu0 0
  %3748 = vmatpush1.bf16.msra.mxu0 %v3745
  %3749 = vmatprep.subr.bf16.mxu0 0
  %3750 = vmatpush1.bf16.msra.mxu0 0
  %3751 = vmatprep.subr.bf16.mxu0 0
  %3752 = vmatpush1.bf16.msra.mxu0 0
  %3753 = vmatprep.subr.bf16.mxu0 0
  %3754 = vmatpush1.bf16.msra.mxu0 0
  %3755 = vmatprep.subr.bf16.mxu0 0
  %3756 = vmatpush1.bf16.msra.mxu0 0
  %3757 = vmatprep.subr.bf16.mxu0 0
  %3758 = vmatpush1.bf16.msra.mxu0 0
  %3759 = vmatprep.subr.bf16.mxu0 0
  %3760 = vmatpush1.bf16.msra.mxu0 0
  %3761 = vmatprep.subr.bf16.mxu0 0
  %3762 = vmatpush1.bf16.msra.mxu0 0
  %3763 = vmatprep.subr.bf16.mxu0 0
  %3764 = vmatpush1.bf16.msra.mxu0 0
  %3765 = vmatprep.subr.bf16.mxu0 0
  %3766 = vmatpush1.bf16.msra.mxu0 0
  %3767 = vmatprep.subr.bf16.mxu0 0
  %3768 = vmatpush1.bf16.msra.mxu0 0
  %3769 = vmatprep.subr.bf16.mxu0 0
  %3770 = vmatpush1.bf16.msra.mxu0 0
  %3771 = vmatprep.subr.bf16.mxu0 0
  %3772 = vmatpush1.bf16.msra.mxu0 0
  %3773 = vmatprep.subr.bf16.mxu0 0
  %3774 = vmatpush1.bf16.msra.mxu0 0
  %3775 = vmatprep.subr.bf16.mxu0 0
  %3776 = vmatpush1.bf16.msra.mxu0 0
  %3777 = vmatprep.subr.bf16.mxu0 0
  %3778 = vmatpush1.bf16.msra.mxu0 0
  %3779 = vmatprep.mubr.bf16.mxu0 0
  %3780 = vmatmul.mubr.bf16.gmra.mrb[0].mxu0 %v3680
  %v3781 = vpop.f32.mrb[0].mxu0
  %v3782 = vadd.f32 0.0, %v3781
  %v3783 = vpop.f32.mrb[0].mxu0
  %v3784 = vpop.f32.mrb[0].mxu0
  %v3785 = vadd.f32 0.0, %v3784
  %v3786 = vpop.f32.mrb[0].mxu0
  %3787 = vmatprep.mubr.bf16.mxu0 0
  %3788 = vmatmul.mubr.bf16.gmra.mrb[0].mxu0 %v3682
  %v3789 = vpop.f32.mrb[0].mxu0
  %v3790 = vadd.f32 0.0, %v3789
  %v3791 = vpop.f32.mrb[0].mxu0
  %v3792 = vpop.f32.mrb[0].mxu0
  %v3793 = vadd.f32 0.0, %v3792
  %v3794 = vpop.f32.mrb[0].mxu0
  %3795 = vmatprep.mubr.bf16.mxu0 0
  %3796 = vmatmul.mubr.bf16.gmra.mrb[0].mxu0 %v3684
  %v3797 = vpop.f32.mrb[0].mxu0
  %v3798 = vadd.f32 0.0, %v3797
  %v3799 = vpop.f32.mrb[0].mxu0
  %v3800 = vpop.f32.mrb[0].mxu0
  %v3801 = vadd.f32 0.0, %v3800
  %v3802 = vpop.f32.mrb[0].mxu0
  %3803 = vmatprep.mubr.bf16.mxu0 0
  %3804 = vmatmul.mubr.bf16.gmra.mrb[0].mxu0 %v3686
  %v3805 = vpop.f32.mrb[0].mxu0
  %v3806 = vadd.f32 0.0, %v3805
  %v3807 = vpop.f32.mrb[0].mxu0
  %v3808 = vpop.f32.mrb[0].mxu0
  %v3809 = vadd.f32 0.0, %v3808
  %v3810 = vpop.f32.mrb[0].mxu0
  %3811 = vmatprep.mubr.bf16.mxu0 0
  %3812 = vmatmul.mubr.bf16.gmra.mrb[0].mxu0 %v3688
  %v3813 = vpop.f32.mrb[0].mxu0
  %v3814 = vadd.f32 0.0, %v3813
  %v3815 = vpop.f32.mrb[0].mxu0
  %v3816 = vpop.f32.mrb[0].mxu0
  %v3817 = vadd.f32 0.0, %v3816
  %v3818 = vpop.f32.mrb[0].mxu0
  %3819 = vmatprep.mubr.bf16.mxu0 0
  %3820 = vmatmul.mubr.bf16.gmra.mrb[0].mxu0 %v3690
  %v3821 = vpop.f32.mrb[0].mxu0
  %v3822 = vadd.f32 0.0, %v3821
  %v3823 = vpop.f32.mrb[0].mxu0
  %v3824 = vpop.f32.mrb[0].mxu0
  %v3825 = vadd.f32 0.0, %v3824
  %v3826 = vpop.f32.mrb[0].mxu0
  %3827 = vmatprep.mubr.bf16.mxu0 0
  %3828 = vmatmul.mubr.bf16.gmra.mrb[0].mxu0 %v3692
  %v3829 = vpop.f32.mrb[0].mxu0
  %v3830 = vadd.f32 0.0, %v3829
  %v3831 = vpop.f32.mrb[0].mxu0
  %v3832 = vpop.f32.mrb[0].mxu0
  %v3833 = vadd.f32 0.0, %v3832
  %v3834 = vpop.f32.mrb[0].mxu0
  %3835 = vmatprep.mubr.bf16.mxu0 0
  %3836 = vmatmul.mubr.bf16.gmra.mrb[0].mxu0 %v3694
  %v3837 = vpop.f32.mrb[0].mxu0
  %v3838 = vadd.f32 0.0, %v3837
  %v3839 = vpop.f32.mrb[0].mxu0
  %v3840 = vpop.f32.mrb[0].mxu0
  %v3841 = vadd.f32 0.0, %v3840
  %v3842 = vpop.f32.mrb[0].mxu0
  %3843 = vmatprep.mubr.bf16.mxu0 0
  %3844 = vmatmul.mubr.bf16.gmra.mrb[0].mxu0 %v3696
  %v3845 = vpop.f32.mrb[0].mxu0
  %v3846 = vadd.f32 0.0, %v3845
  %v3847 = vpop.f32.mrb[0].mxu0
  %v3848 = vpop.f32.mrb[0].mxu0
  %v3849 = vadd.f32 0.0, %v3848
  %v3850 = vpop.f32.mrb[0].mxu0
  %3851 = vmatprep.mubr.bf16.mxu0 0
  %3852 = vmatmul.mubr.bf16.gmra.mrb[0].mxu0 %v3698
  %v3853 = vpop.f32.mrb[0].mxu0
  %v3854 = vadd.f32 0.0, %v3853
  %v3855 = vpop.f32.mrb[0].mxu0
  %v3856 = vpop.f32.mrb[0].mxu0
  %v3857 = vadd.f32 0.0, %v3856
  %v3858 = vpop.f32.mrb[0].mxu0
  %3859 = vmatprep.mubr.bf16.mxu0 0
  %3860 = vmatmul.mubr.bf16.gmra.mrb[0].mxu0 %v3700
  %v3861 = vpop.f32.mrb[0].mxu0
  %v3862 = vadd.f32 0.0, %v3861
  %v3863 = vpop.f32.mrb[0].mxu0
  %v3864 = vpop.f32.mrb[0].mxu0
  %v3865 = vadd.f32 0.0, %v3864
  %v3866 = vpop.f32.mrb[0].mxu0
  %3867 = vmatprep.mubr.bf16.mxu0 0
  %3868 = vmatmul.mubr.bf16.gmra.mrb[0].mxu0 %v3702
  %v3869 = vpop.f32.mrb[0].mxu0
  %v3870 = vadd.f32 0.0, %v3869
  %v3871 = vpop.f32.mrb[0].mxu0
  %v3872 = vpop.f32.mrb[0].mxu0
  %v3873 = vadd.f32 0.0, %v3872
  %v3874 = vpop.f32.mrb[0].mxu0
  %3875 = vmatprep.mubr.bf16.mxu0 0
  %3876 = vmatmul.mubr.bf16.gmra.mrb[0].mxu0 %v3704
  %v3877 = vpop.f32.mrb[0].mxu0
  %v3878 = vadd.f32 0.0, %v3877
  %v3879 = vpop.f32.mrb[0].mxu0
  %v3880 = vpop.f32.mrb[0].mxu0
  %v3881 = vadd.f32 0.0, %v3880
  %v3882 = vpop.f32.mrb[0].mxu0
  %3883 = vmatprep.mubr.bf16.mxu0 0
  %3884 = vmatmul.mubr.bf16.gmra.mrb[0].mxu0 %v3706
  %v3885 = vpop.f32.mrb[0].mxu0
  %v3886 = vadd.f32 0.0, %v3885
  %v3887 = vpop.f32.mrb[0].mxu0
  %v3888 = vpop.f32.mrb[0].mxu0
  %v3889 = vadd.f32 0.0, %v3888
  %v3890 = vpop.f32.mrb[0].mxu0
  %3891 = vmatprep.mubr.bf16.mxu0 0
  %3892 = vmatmul.mubr.bf16.gmra.mrb[0].mxu0 %v3708
  %v3893 = vpop.f32.mrb[0].mxu0
  %v3894 = vadd.f32 0.0, %v3893
  %v3895 = vpop.f32.mrb[0].mxu0
  %v3896 = vpop.f32.mrb[0].mxu0
  %v3897 = vadd.f32 0.0, %v3896
  %v3898 = vpop.f32.mrb[0].mxu0
  %3899 = vmatprep.mubr.bf16.mxu0 0
  %3900 = vmatmul.mubr.bf16.gmra.mrb[0].mxu0 %v3710
  %v3901 = vpop.f32.mrb[0].mxu0
  %v3902 = vadd.f32 0.0, %v3901
  %v3903 = vpop.f32.mrb[0].mxu0
  %v3904 = vpop.f32.mrb[0].mxu0
  %v3905 = vadd.f32 0.0, %v3904
  %v3906 = vpop.f32.mrb[0].mxu0
  %3907 = vmatprep.mubr.bf16.mxu0 0
  %3908 = vmatmul.mubr.bf16.gmra.mrb[0].mxu0 %v3712
  %v3909 = vpop.f32.mrb[0].mxu0
  %v3910 = vadd.f32 0.0, %v3909
  %v3911 = vpop.f32.mrb[0].mxu0
  %v3912 = vpop.f32.mrb[0].mxu0
  %v3913 = vadd.f32 0.0, %v3912
  %v3914 = vpop.f32.mrb[0].mxu0
  %3915 = vmatprep.mubr.bf16.mxu0 0
  %3916 = vmatmul.mubr.bf16.gmra.mrb[0].mxu0 %v3714
  %v3917 = vpop.f32.mrb[0].mxu0
  %v3918 = vadd.f32 0.0, %v3917
  %v3919 = vpop.f32.mrb[0].mxu0
  %v3920 = vpop.f32.mrb[0].mxu0
  %v3921 = vadd.f32 0.0, %v3920
  %v3922 = vpop.f32.mrb[0].mxu0
  %3923 = vmatprep.mubr.bf16.mxu0 0
  %3924 = vmatmul.mubr.bf16.gmra.mrb[0].mxu0 %v3716
  %v3925 = vpop.f32.mrb[0].mxu0
  %v3926 = vadd.f32 0.0, %v3925
  %v3927 = vpop.f32.mrb[0].mxu0
  %v3928 = vpop.f32.mrb[0].mxu0
  %v3929 = vadd.f32 0.0, %v3928
  %v3930 = vpop.f32.mrb[0].mxu0
  %3931 = vmatprep.mubr.bf16.mxu0 0
  %3932 = vmatmul.mubr.bf16.gmra.mrb[0].mxu0 %v3718
  %v3933 = vpop.f32.mrb[0].mxu0
  %v3934 = vadd.f32 0.0, %v3933
  %v3935 = vpop.f32.mrb[0].mxu0
  %v3936 = vpop.f32.mrb[0].mxu0
  %v3937 = vadd.f32 0.0, %v3936
  %v3938 = vpop.f32.mrb[0].mxu0
  %3939 = vmatprep.mubr.bf16.mxu0 0
  %3940 = vmatmul.mubr.bf16.gmra.mrb[0].mxu0 %v3720
  %v3941 = vpop.f32.mrb[0].mxu0
  %v3942 = vadd.f32 0.0, %v3941
  %v3943 = vpop.f32.mrb[0].mxu0
  %v3944 = vpop.f32.mrb[0].mxu0
  %v3945 = vadd.f32 0.0, %v3944
  %v3946 = vpop.f32.mrb[0].mxu0
  %3947 = vmatprep.mubr.bf16.mxu0 0
  %3948 = vmatmul.mubr.bf16.gmra.mrb[0].mxu0 %v3722
  %v3949 = vpop.f32.mrb[0].mxu0
  %v3950 = vadd.f32 0.0, %v3949
  %v3951 = vpop.f32.mrb[0].mxu0
  %v3952 = vpop.f32.mrb[0].mxu0
  %v3953 = vadd.f32 0.0, %v3952
  %v3954 = vpop.f32.mrb[0].mxu0
  %3955 = vmatprep.mubr.bf16.mxu0 0
  %3956 = vmatmul.mubr.bf16.gmra.mrb[0].mxu0 %v3724
  %v3957 = vpop.f32.mrb[0].mxu0
  %v3958 = vadd.f32 0.0, %v3957
  %v3959 = vpop.f32.mrb[0].mxu0
  %v3960 = vpop.f32.mrb[0].mxu0
  %v3961 = vadd.f32 0.0, %v3960
  %v3962 = vpop.f32.mrb[0].mxu0
  %3963 = vmatprep.mubr.bf16.mxu0 0
  %3964 = vmatmul.mubr.bf16.gmra.mrb[0].mxu0 %v3726
  %v3965 = vpop.f32.mrb[0].mxu0
  %v3966 = vadd.f32 0.0, %v3965
  %v3967 = vpop.f32.mrb[0].mxu0
  %v3968 = vpop.f32.mrb[0].mxu0
  %v3969 = vadd.f32 0.0, %v3968
  %v3970 = vpop.f32.mrb[0].mxu0
  %3971 = vmatprep.mubr.bf16.mxu0 0
  %3972 = vmatmul.mubr.bf16.gmra.mrb[0].mxu0 %v3728
  %v3973 = vpop.f32.mrb[0].mxu0
  %v3974 = vadd.f32 0.0, %v3973
  %v3975 = vpop.f32.mrb[0].mxu0
  %v3976 = vpop.f32.mrb[0].mxu0
  %v3977 = vadd.f32 0.0, %v3976
  %v3978 = vpop.f32.mrb[0].mxu0
  %3979 = vmatprep.mubr.bf16.mxu0 0
  %3980 = vmatmul.mubr.bf16.gmra.mrb[0].mxu0 %v3730
  %v3981 = vpop.f32.mrb[0].mxu0
  %v3982 = vadd.f32 0.0, %v3981
  %v3983 = vpop.f32.mrb[0].mxu0
  %v3984 = vpop.f32.mrb[0].mxu0
  %v3985 = vadd.f32 0.0, %v3984
  %v3986 = vpop.f32.mrb[0].mxu0
  %3987 = vmatprep.mubr.bf16.mxu0 0
  %3988 = vmatmul.mubr.bf16.gmra.mrb[0].mxu0 %v3732
  %v3989 = vpop.f32.mrb[0].mxu0
  %v3990 = vadd.f32 0.0, %v3989
  %v3991 = vpop.f32.mrb[0].mxu0
  %v3992 = vpop.f32.mrb[0].mxu0
  %v3993 = vadd.f32 0.0, %v3992
  %v3994 = vpop.f32.mrb[0].mxu0
  %3995 = vmatprep.mubr.bf16.mxu0 0
  %3996 = vmatmul.mubr.bf16.gmra.mrb[0].mxu0 %v3734
  %v3997 = vpop.f32.mrb[0].mxu0
  %v3998 = vadd.f32 0.0, %v3997
  %v3999 = vpop.f32.mrb[0].mxu0
  %v4000 = vpop.f32.mrb[0].mxu0
  %v4001 = vadd.f32 0.0, %v4000
  %v4002 = vpop.f32.mrb[0].mxu0
  %4003 = vmatprep.mubr.bf16.mxu0 0
  %4004 = vmatmul.mubr.bf16.gmra.mrb[0].mxu0 %v3736
  %v4005 = vpop.f32.mrb[0].mxu0
  %v4006 = vadd.f32 0.0, %v4005
  %v4007 = vpop.f32.mrb[0].mxu0
  %v4008 = vpop.f32.mrb[0].mxu0
  %v4009 = vadd.f32 0.0, %v4008
  %v4010 = vpop.f32.mrb[0].mxu0
  %4011 = vmatprep.mubr.bf16.mxu0 0
  %4012 = vmatmul.mubr.bf16.gmra.mrb[0].mxu0 %v3738
  %v4013 = vpop.f32.mrb[0].mxu0
  %v4014 = vadd.f32 0.0, %v4013
  %v4015 = vpop.f32.mrb[0].mxu0
  %v4016 = vpop.f32.mrb[0].mxu0
  %v4017 = vadd.f32 0.0, %v4016
  %v4018 = vpop.f32.mrb[0].mxu0
  %4019 = vmatprep.mubr.bf16.mxu0 0
  %4020 = vmatmul.mubr.bf16.gmra.mrb[0].mxu0 %v3740
  %v4021 = vpop.f32.mrb[0].mxu0
  %v4022 = vadd.f32 0.0, %v4021
  %v4023 = vpop.f32.mrb[0].mxu0
  %v4024 = vpop.f32.mrb[0].mxu0
  %v4025 = vadd.f32 0.0, %v4024
  %v4026 = vpop.f32.mrb[0].mxu0
  %4027 = vmatprep.mubr.bf16.mxu0 0
  %4028 = vmatmul.mubr.bf16.gmra.mrb[0].mxu0 %v3742
  %v4029 = vpop.f32.mrb[0].mxu0
  %v4030 = vadd.f32 0.0, %v4029
  %v4031 = vpop.f32.mrb[0].mxu0
  %v4032 = vpop.f32.mrb[0].mxu0
  %v4033 = vadd.f32 0.0, %v4032
  %v4034 = vpop.f32.mrb[0].mxu0
  %4035 = vdwg.mxu0
  %v4036 = vld [vmem:[#allocation3] sm:$0xff]
  %v4037 = vld [vmem:[#allocation3 + $0x8] sm:$0xff]
  %v4038 = vld [vmem:[#allocation3 + $0x10] sm:$0xff]
  %v4039 = vld [vmem:[#allocation3 + $0x18] sm:$0xff]
  %v4040 = vld [vmem:[#allocation3 + $0x20] sm:$0xff]
  %v4041 = vld [vmem:[#allocation3 + $0x28] sm:$0xff]
  %v4042 = vld [vmem:[#allocation3 + $0x30] sm:$0xff]
  %v4043 = vld [vmem:[#allocation3 + $0x38] sm:$0xff]
  %v4044 = vld [vmem:[#allocation3 + $0x40] sm:$0xff]
  %v4045 = vld [vmem:[#allocation3 + $0x48] sm:$0xff]
  %v4046 = vld [vmem:[#allocation3 + $0x50] sm:$0xff]
  %v4047 = vld [vmem:[#allocation3 + $0x58] sm:$0xff]
  %v4048 = vld [vmem:[#allocation3 + $0x60] sm:$0xff]
  %v4049 = vld [vmem:[#allocation3 + $0x68] sm:$0xff]
  %v4050 = vld [vmem:[#allocation3 + $0x70] sm:$0xff]
  %v4051 = vld [vmem:[#allocation3 + $0x78] sm:$0xff]
  %v4052 = vld [vmem:[#allocation3 + $0x80] sm:$0xff]
  %v4053 = vld [vmem:[#allocation3 + $0x88] sm:$0xff]
  %v4054 = vld [vmem:[#allocation3 + $0x90] sm:$0xff]
  %v4055 = vld [vmem:[#allocation3 + $0x98] sm:$0xff]
  %v4056 = vld [vmem:[#allocation3 + $0xa0] sm:$0xff]
  %v4057 = vld [vmem:[#allocation3 + $0xa8] sm:$0xff]
  %v4058 = vld [vmem:[#allocation3 + $0xb0] sm:$0xff]
  %v4059 = vld [vmem:[#allocation3 + $0xb8] sm:$0xff]
  %v4060 = vld [vmem:[#allocation3 + $0xc0] sm:$0xff]
  %v4061 = vld [vmem:[#allocation3 + $0xc8] sm:$0xff]
  %v4062 = vld [vmem:[#allocation3 + $0xd0] sm:$0xff]
  %v4063 = vld [vmem:[#allocation3 + $0xd8] sm:$0xff]
  %v4064 = vld [vmem:[#allocation3 + $0xe0] sm:$0xff]
  %v4065 = vld [vmem:[#allocation3 + $0xe8] sm:$0xff]
  %v4066 = vld [vmem:[#allocation3 + $0xf0] sm:$0xff]
  %v4067 = vld [vmem:[#allocation3 + $0xf8] sm:$0xff]
  %v4068 = vld [vmem:[#allocation3 + $0x100] sm:$0xff]
  %v4069 = vld [vmem:[#allocation3 + $0x108] sm:$0xff]
  %v4070 = vld [vmem:[#allocation3 + $0x110] sm:$0xff]
  %v4071 = vld [vmem:[#allocation3 + $0x118] sm:$0xff]
  %v4072 = vld [vmem:[#allocation3 + $0x120] sm:$0xff]
  %v4073 = vld [vmem:[#allocation3 + $0x128] sm:$0xff]
  %v4074 = vld [vmem:[#allocation3 + $0x130] sm:$0xff]
  %v4075 = vld [vmem:[#allocation3 + $0x138] sm:$0xff]
  %v4076 = vld [vmem:[#allocation3 + $0x140] sm:$0xff]
  %v4077 = vld [vmem:[#allocation3 + $0x148] sm:$0xff]
  %v4078 = vld [vmem:[#allocation3 + $0x150] sm:$0xff]
  %v4079 = vld [vmem:[#allocation3 + $0x158] sm:$0xff]
  %v4080 = vld [vmem:[#allocation3 + $0x160] sm:$0xff]
  %v4081 = vld [vmem:[#allocation3 + $0x168] sm:$0xff]
  %v4082 = vld [vmem:[#allocation3 + $0x170] sm:$0xff]
  %v4083 = vld [vmem:[#allocation3 + $0x178] sm:$0xff]
  %v4084 = vld [vmem:[#allocation3 + $0x180] sm:$0xff]
  %v4085 = vld [vmem:[#allocation3 + $0x188] sm:$0xff]
  %v4086 = vld [vmem:[#allocation3 + $0x190] sm:$0xff]
  %v4087 = vld [vmem:[#allocation3 + $0x198] sm:$0xff]
  %v4088 = vld [vmem:[#allocation3 + $0x1a0] sm:$0xff]
  %v4089 = vld [vmem:[#allocation3 + $0x1a8] sm:$0xff]
  %v4090 = vld [vmem:[#allocation3 + $0x1b0] sm:$0xff]
  %v4091 = vld [vmem:[#allocation3 + $0x1b8] sm:$0xff]
  %v4092 = vld [vmem:[#allocation3 + $0x1c0] sm:$0xff]
  %v4093 = vld [vmem:[#allocation3 + $0x1c8] sm:$0xff]
  %v4094 = vld [vmem:[#allocation3 + $0x1d0] sm:$0xff]
  %v4095 = vld [vmem:[#allocation3 + $0x1d8] sm:$0xff]
  %v4096 = vld [vmem:[#allocation3 + $0x1e0] sm:$0xff]
  %v4097 = vld [vmem:[#allocation3 + $0x1e8] sm:$0xff]
  %v4098 = vld [vmem:[#allocation3 + $0x1f0] sm:$0xff]
  %v4099 = vld [vmem:[#allocation3 + $0x1f8] sm:$0xff]
  %v4100 = vadd.f32 %v4036, %v3782
  %v4101 = vadd.f32 %v4037, %v3785
  %v4102 = vadd.f32 %v4038, %v3790
  %v4103 = vadd.f32 %v4039, %v3793
  %v4104 = vadd.f32 %v4040, %v3798
  %v4105 = vadd.f32 %v4041, %v3801
  %v4106 = vadd.f32 %v4042, %v3806
  %v4107 = vadd.f32 %v4043, %v3809
  %v4108 = vadd.f32 %v4044, %v3814
  %v4109 = vadd.f32 %v4045, %v3817
  %v4110 = vadd.f32 %v4046, %v3822
  %v4111 = vadd.f32 %v4047, %v3825
  %v4112 = vadd.f32 %v4048, %v3830
  %v4113 = vadd.f32 %v4049, %v3833
  %v4114 = vadd.f32 %v4050, %v3838
  %v4115 = vadd.f32 %v4051, %v3841
  %v4116 = vadd.f32 %v4052, %v3846
  %v4117 = vadd.f32 %v4053, %v3849
  %v4118 = vadd.f32 %v4054, %v3854
  %v4119 = vadd.f32 %v4055, %v3857
  %v4120 = vadd.f32 %v4056, %v3862
  %v4121 = vadd.f32 %v4057, %v3865
  %v4122 = vadd.f32 %v4058, %v3870
  %v4123 = vadd.f32 %v4059, %v3873
  %v4124 = vadd.f32 %v4060, %v3878
  %v4125 = vadd.f32 %v4061, %v3881
  %v4126 = vadd.f32 %v4062, %v3886
  %v4127 = vadd.f32 %v4063, %v3889
  %v4128 = vadd.f32 %v4064, %v3894
  %v4129 = vadd.f32 %v4065, %v3897
  %v4130 = vadd.f32 %v4066, %v3902
  %v4131 = vadd.f32 %v4067, %v3905
  %v4132 = vadd.f32 %v4068, %v3910
  %v4133 = vadd.f32 %v4069, %v3913
  %v4134 = vadd.f32 %v4070, %v3918
  %v4135 = vadd.f32 %v4071, %v3921
  %v4136 = vadd.f32 %v4072, %v3926
  %v4137 = vadd.f32 %v4073, %v3929
  %v4138 = vadd.f32 %v4074, %v3934
  %v4139 = vadd.f32 %v4075, %v3937
  %v4140 = vadd.f32 %v4076, %v3942
  %v4141 = vadd.f32 %v4077, %v3945
  %v4142 = vadd.f32 %v4078, %v3950
  %v4143 = vadd.f32 %v4079, %v3953
  %v4144 = vadd.f32 %v4080, %v3958
  %v4145 = vadd.f32 %v4081, %v3961
  %v4146 = vadd.f32 %v4082, %v3966
  %v4147 = vadd.f32 %v4083, %v3969
  %v4148 = vadd.f32 %v4084, %v3974
  %v4149 = vadd.f32 %v4085, %v3977
  %v4150 = vadd.f32 %v4086, %v3982
  %v4151 = vadd.f32 %v4087, %v3985
  %v4152 = vadd.f32 %v4088, %v3990
  %v4153 = vadd.f32 %v4089, %v3993
  %v4154 = vadd.f32 %v4090, %v3998
  %v4155 = vadd.f32 %v4091, %v4001
  %v4156 = vadd.f32 %v4092, %v4006
  %v4157 = vadd.f32 %v4093, %v4009
  %v4158 = vadd.f32 %v4094, %v4014
  %v4159 = vadd.f32 %v4095, %v4017
  %v4160 = vadd.f32 %v4096, %v4022
  %v4161 = vadd.f32 %v4097, %v4025
  %v4162 = vadd.f32 %v4098, %v4030
  %v4163 = vadd.f32 %v4099, %v4033
  %4164 = vst.msk [vmem:[#allocation3] sm:$0xff] %vm2519, %v4100
  %4165 = vst.msk [vmem:[#allocation3 + $0x8] sm:$0xff] %vm2519, %v4101
  %4166 = vst.msk [vmem:[#allocation3 + $0x10] sm:$0xff] %vm2519, %v4102
  %4167 = vst.msk [vmem:[#allocation3 + $0x18] sm:$0xff] %vm2519, %v4103
  %4168 = vst.msk [vmem:[#allocation3 + $0x20] sm:$0xff] %vm2519, %v4104
  %4169 = vst.msk [vmem:[#allocation3 + $0x28] sm:$0xff] %vm2519, %v4105
  %4170 = vst.msk [vmem:[#allocation3 + $0x30] sm:$0xff] %vm2519, %v4106
  %4171 = vst.msk [vmem:[#allocation3 + $0x38] sm:$0xff] %vm2519, %v4107
  %4172 = vst.msk [vmem:[#allocation3 + $0x40] sm:$0xff] %vm2519, %v4108
  %4173 = vst.msk [vmem:[#allocation3 + $0x48] sm:$0xff] %vm2519, %v4109
  %4174 = vst.msk [vmem:[#allocation3 + $0x50] sm:$0xff] %vm2519, %v4110
  %4175 = vst.msk [vmem:[#allocation3 + $0x58] sm:$0xff] %vm2519, %v4111
  %4176 = vst.msk [vmem:[#allocation3 + $0x60] sm:$0xff] %vm2519, %v4112
  %4177 = vst.msk [vmem:[#allocation3 + $0x68] sm:$0xff] %vm2519, %v4113
  %4178 = vst.msk [vmem:[#allocation3 + $0x70] sm:$0xff] %vm2519, %v4114
  %4179 = vst.msk [vmem:[#allocation3 + $0x78] sm:$0xff] %vm2519, %v4115
  %4180 = vst.msk [vmem:[#allocation3 + $0x80] sm:$0xff] %vm2519, %v4116
  %4181 = vst.msk [vmem:[#allocation3 + $0x88] sm:$0xff] %vm2519, %v4117
  %4182 = vst.msk [vmem:[#allocation3 + $0x90] sm:$0xff] %vm2519, %v4118
  %4183 = vst.msk [vmem:[#allocation3 + $0x98] sm:$0xff] %vm2519, %v4119
  %4184 = vst.msk [vmem:[#allocation3 + $0xa0] sm:$0xff] %vm2519, %v4120
  %4185 = vst.msk [vmem:[#allocation3 + $0xa8] sm:$0xff] %vm2519, %v4121
  %4186 = vst.msk [vmem:[#allocation3 + $0xb0] sm:$0xff] %vm2519, %v4122
  %4187 = vst.msk [vmem:[#allocation3 + $0xb8] sm:$0xff] %vm2519, %v4123
  %4188 = vst.msk [vmem:[#allocation3 + $0xc0] sm:$0xff] %vm2519, %v4124
  %4189 = vst.msk [vmem:[#allocation3 + $0xc8] sm:$0xff] %vm2519, %v4125
  %4190 = vst.msk [vmem:[#allocation3 + $0xd0] sm:$0xff] %vm2519, %v4126
  %4191 = vst.msk [vmem:[#allocation3 + $0xd8] sm:$0xff] %vm2519, %v4127
  %4192 = vst.msk [vmem:[#allocation3 + $0xe0] sm:$0xff] %vm2519, %v4128
  %4193 = vst.msk [vmem:[#allocation3 + $0xe8] sm:$0xff] %vm2519, %v4129
  %4194 = vst.msk [vmem:[#allocation3 + $0xf0] sm:$0xff] %vm2519, %v4130
  %4195 = vst.msk [vmem:[#allocation3 + $0xf8] sm:$0xff] %vm2519, %v4131
  %4196 = vst.msk [vmem:[#allocation3 + $0x100] sm:$0xff] %vm2519, %v4132
  %4197 = vst.msk [vmem:[#allocation3 + $0x108] sm:$0xff] %vm2519, %v4133
  %4198 = vst.msk [vmem:[#allocation3 + $0x110] sm:$0xff] %vm2519, %v4134
  %4199 = vst.msk [vmem:[#allocation3 + $0x118] sm:$0xff] %vm2519, %v4135
  %4200 = vst.msk [vmem:[#allocation3 + $0x120] sm:$0xff] %vm2519, %v4136
  %4201 = vst.msk [vmem:[#allocation3 + $0x128] sm:$0xff] %vm2519, %v4137
  %4202 = vst.msk [vmem:[#allocation3 + $0x130] sm:$0xff] %vm2519, %v4138
  %4203 = vst.msk [vmem:[#allocation3 + $0x138] sm:$0xff] %vm2519, %v4139
  %4204 = vst.msk [vmem:[#allocation3 + $0x140] sm:$0xff] %vm2519, %v4140
  %4205 = vst.msk [vmem:[#allocation3 + $0x148] sm:$0xff] %vm2519, %v4141
  %4206 = vst.msk [vmem:[#allocation3 + $0x150] sm:$0xff] %vm2519, %v4142
  %4207 = vst.msk [vmem:[#allocation3 + $0x158] sm:$0xff] %vm2519, %v4143
  %4208 = vst.msk [vmem:[#allocation3 + $0x160] sm:$0xff] %vm2519, %v4144
  %4209 = vst.msk [vmem:[#allocation3 + $0x168] sm:$0xff] %vm2519, %v4145
  %4210 = vst.msk [vmem:[#allocation3 + $0x170] sm:$0xff] %vm2519, %v4146
  %4211 = vst.msk [vmem:[#allocation3 + $0x178] sm:$0xff] %vm2519, %v4147
  %4212 = vst.msk [vmem:[#allocation3 + $0x180] sm:$0xff] %vm2519, %v4148
  %4213 = vst.msk [vmem:[#allocation3 + $0x188] sm:$0xff] %vm2519, %v4149
  %4214 = vst.msk [vmem:[#allocation3 + $0x190] sm:$0xff] %vm2519, %v4150
  %4215 = vst.msk [vmem:[#allocation3 + $0x198] sm:$0xff] %vm2519, %v4151
  %4216 = vst.msk [vmem:[#allocation3 + $0x1a0] sm:$0xff] %vm2519, %v4152
  %4217 = vst.msk [vmem:[#allocation3 + $0x1a8] sm:$0xff] %vm2519, %v4153
  %4218 = vst.msk [vmem:[#allocation3 + $0x1b0] sm:$0xff] %vm2519, %v4154
  %4219 = vst.msk [vmem:[#allocation3 + $0x1b8] sm:$0xff] %vm2519, %v4155
  %4220 = vst.msk [vmem:[#allocation3 + $0x1c0] sm:$0xff] %vm2519, %v4156
  %4221 = vst.msk [vmem:[#allocation3 + $0x1c8] sm:$0xff] %vm2519, %v4157
  %4222 = vst.msk [vmem:[#allocation3 + $0x1d0] sm:$0xff] %vm2519, %v4158
  %4223 = vst.msk [vmem:[#allocation3 + $0x1d8] sm:$0xff] %vm2519, %v4159
  %4224 = vst.msk [vmem:[#allocation3 + $0x1e0] sm:$0xff] %vm2519, %v4160
  %4225 = vst.msk [vmem:[#allocation3 + $0x1e8] sm:$0xff] %vm2519, %v4161
  %4226 = vst.msk [vmem:[#allocation3 + $0x1f0] sm:$0xff] %vm2519, %v4162
  %4227 = vst.msk [vmem:[#allocation3 + $0x1f8] sm:$0xff] %vm2519, %v4163
  %s4228 = scalar_lea.vmem [#allocation2], 24
  %v4229 = vld [vmem:[%s4228] sm:$0xf]
  %v4230 = vld [vmem:[%s4228 + $0x4] sm:$0xf]
  %v4231 = vld [vmem:[%s4228 + $0x8] sm:$0x1]
  %v4232 = vld [vmem:[%s4228 + $0xc] sm:$0xf]
  %v4233 = vld [vmem:[%s4228 + $0x10] sm:$0xf]
  %v4234 = vld [vmem:[%s4228 + $0x14] sm:$0x1]
  %v4235 = vld [vmem:[%s4228 + $0x18] sm:$0xf]
  %v4236 = vld [vmem:[%s4228 + $0x1c] sm:$0xf]
  %v4237 = vld [vmem:[%s4228 + $0x20] sm:$0x1]
  %v4238 = vld [vmem:[%s4228 + $0x24] sm:$0xf]
  %v4239 = vld [vmem:[%s4228 + $0x28] sm:$0xf]
  %v4240 = vld [vmem:[%s4228 + $0x2c] sm:$0x1]
  %v4241 = vld [vmem:[%s4228 + $0x30] sm:$0xf]
  %v4242 = vld [vmem:[%s4228 + $0x34] sm:$0xf]
  %v4243 = vld [vmem:[%s4228 + $0x38] sm:$0x1]
  %v4244 = vld [vmem:[%s4228 + $0x3c] sm:$0xf]
  %v4245 = vld [vmem:[%s4228 + $0x40] sm:$0xf]
  %v4246 = vld [vmem:[%s4228 + $0x44] sm:$0x1]
  %v4247 = vld [vmem:[%s4228 + $0x48] sm:$0xf]
  %v4248 = vld [vmem:[%s4228 + $0x4c] sm:$0xf]
  %v4249 = vld [vmem:[%s4228 + $0x50] sm:$0x1]
  %v4250 = vld [vmem:[%s4228 + $0x54] sm:$0xf]
  %v4251 = vld [vmem:[%s4228 + $0x58] sm:$0xf]
  %v4252 = vld [vmem:[%s4228 + $0x5c] sm:$0x1]
  %v4253 = vld [vmem:[%s4228 + $0x60] sm:$0xf]
  %v4254 = vld [vmem:[%s4228 + $0x64] sm:$0xf]
  %v4255 = vld [vmem:[%s4228 + $0x68] sm:$0x1]
  %v4256 = vld [vmem:[%s4228 + $0x6c] sm:$0xf]
  %v4257 = vld [vmem:[%s4228 + $0x70] sm:$0xf]
  %v4258 = vld [vmem:[%s4228 + $0x74] sm:$0x1]
  %v4259 = vld [vmem:[%s4228 + $0x78] sm:$0xf]
  %v4260 = vld [vmem:[%s4228 + $0x7c] sm:$0xf]
  %v4261 = vld [vmem:[%s4228 + $0x80] sm:$0x1]
  %v4262 = vld [vmem:[%s4228 + $0x84] sm:$0xf]
  %v4263 = vld [vmem:[%s4228 + $0x88] sm:$0xf]
  %v4264 = vld [vmem:[%s4228 + $0x8c] sm:$0x1]
  %v4265 = vld [vmem:[%s4228 + $0x90] sm:$0xf]
  %v4266 = vld [vmem:[%s4228 + $0x94] sm:$0xf]
  %v4267 = vld [vmem:[%s4228 + $0x98] sm:$0x1]
  %v4268 = vld [vmem:[%s4228 + $0x9c] sm:$0xf]
  %v4269 = vld [vmem:[%s4228 + $0xa0] sm:$0xf]
  %v4270 = vld [vmem:[%s4228 + $0xa4] sm:$0x1]
  %v4271 = vld [vmem:[%s4228 + $0xa8] sm:$0xf]
  %v4272 = vld [vmem:[%s4228 + $0xac] sm:$0xf]
  %v4273 = vld [vmem:[%s4228 + $0xb0] sm:$0x1]
  %v4274 = vld [vmem:[%s4228 + $0xb4] sm:$0xf]
  %v4275 = vld [vmem:[%s4228 + $0xb8] sm:$0xf]
  %v4276 = vld [vmem:[%s4228 + $0xbc] sm:$0x1]
  %v4277 = vld [vmem:[%s4228 + $0xd8] sm:$0xf]
  %v4278 = vld [vmem:[%s4228 + $0xdc] sm:$0xf]
  %v4279 = vld [vmem:[%s4228 + $0xe0] sm:$0x1]
  %v4280 = vld [vmem:[%s4228 + $0xe4] sm:$0xf]
  %v4281 = vld [vmem:[%s4228 + $0xe8] sm:$0xf]
  %v4282 = vld [vmem:[%s4228 + $0xec] sm:$0x1]
  %v4283 = vld [vmem:[%s4228 + $0xf0] sm:$0xf]
  %v4284 = vld [vmem:[%s4228 + $0xf4] sm:$0xf]
  %v4285 = vld [vmem:[%s4228 + $0xf8] sm:$0x1]
  %v4286 = vld [vmem:[%s4228 + $0xfc] sm:$0xf]
  %v4287 = vld [vmem:[%s4228 + $0x100] sm:$0xf]
  %v4288 = vld [vmem:[%s4228 + $0x104] sm:$0x1]
  %v4289 = vld [vmem:[%s4228 + $0x108] sm:$0xf]
  %v4290 = vld [vmem:[%s4228 + $0x10c] sm:$0xf]
  %v4291 = vld [vmem:[%s4228 + $0x110] sm:$0x1]
  %v4292 = vld [vmem:[%s4228 + $0x114] sm:$0xf]
  %v4293 = vld [vmem:[%s4228 + $0x118] sm:$0xf]
  %v4294 = vld [vmem:[%s4228 + $0x11c] sm:$0x1]
  %v4295 = vld [vmem:[%s4228 + $0x120] sm:$0xf]
  %v4296 = vld [vmem:[%s4228 + $0x124] sm:$0xf]
  %v4297 = vld [vmem:[%s4228 + $0x128] sm:$0x1]
  %v4298 = vld [vmem:[%s4228 + $0x12c] sm:$0xf]
  %v4299 = vld [vmem:[%s4228 + $0x130] sm:$0xf]
  %v4300 = vld [vmem:[%s4228 + $0x134] sm:$0x1]
  %v4301 = vld [vmem:[%s4228 + $0x138] sm:$0xf]
  %v4302 = vld [vmem:[%s4228 + $0x13c] sm:$0xf]
  %v4303 = vld [vmem:[%s4228 + $0x140] sm:$0x1]
  %v4304 = vld [vmem:[%s4228 + $0x144] sm:$0xf]
  %v4305 = vld [vmem:[%s4228 + $0x148] sm:$0xf]
  %v4306 = vld [vmem:[%s4228 + $0x14c] sm:$0x1]
  %v4307 = vld [vmem:[%s4228 + $0x150] sm:$0xf]
  %v4308 = vld [vmem:[%s4228 + $0x154] sm:$0xf]
  %v4309 = vld [vmem:[%s4228 + $0x158] sm:$0x1]
  %v4310 = vld [vmem:[%s4228 + $0x15c] sm:$0xf]
  %v4311 = vld [vmem:[%s4228 + $0x160] sm:$0xf]
  %v4312 = vld [vmem:[%s4228 + $0x164] sm:$0x1]
  %v4313 = vld [vmem:[%s4228 + $0x168] sm:$0xf]
  %v4314 = vld [vmem:[%s4228 + $0x16c] sm:$0xf]
  %v4315 = vld [vmem:[%s4228 + $0x170] sm:$0x1]
  %v4316 = vld [vmem:[%s4228 + $0x174] sm:$0xf]
  %v4317 = vld [vmem:[%s4228 + $0x178] sm:$0xf]
  %v4318 = vld [vmem:[%s4228 + $0x17c] sm:$0x1]
  %v4319 = vld [vmem:[%s4228 + $0x180] sm:$0xf]
  %v4320 = vld [vmem:[%s4228 + $0x184] sm:$0xf]
  %v4321 = vld [vmem:[%s4228 + $0x188] sm:$0x1]
  %v4322 = vld [vmem:[%s4228 + $0x18c] sm:$0xf]
  %v4323 = vld [vmem:[%s4228 + $0x190] sm:$0xf]
  %v4324 = vld [vmem:[%s4228 + $0x194] sm:$0x1]
  %v4389 = vunpack.c.l.b16 %v4229
  %v4390 = vunpack.c.l.b16 %v4230
  %v4391 = vunpack.c.l.b16 %v4232
  %v4392 = vunpack.c.l.b16 %v4233
  %v4393 = vunpack.c.l.b16 %v4235
  %v4394 = vunpack.c.l.b16 %v4236
  %v4395 = vunpack.c.l.b16 %v4238
  %v4396 = vunpack.c.l.b16 %v4239
  %v4397 = vunpack.c.l.b16 %v4241
  %v4398 = vunpack.c.l.b16 %v4242
  %v4399 = vunpack.c.l.b16 %v4244
  %v4400 = vunpack.c.l.b16 %v4245
  %v4401 = vunpack.c.l.b16 %v4247
  %v4402 = vunpack.c.l.b16 %v4248
  %v4403 = vunpack.c.l.b16 %v4250
  %v4404 = vunpack.c.l.b16 %v4251
  %v4405 = vunpack.c.l.b16 %v4253
  %v4406 = vunpack.c.l.b16 %v4254
  %v4407 = vunpack.c.l.b16 %v4256
  %v4408 = vunpack.c.l.b16 %v4257
  %v4409 = vunpack.c.l.b16 %v4259
  %v4410 = vunpack.c.l.b16 %v4260
  %v4411 = vunpack.c.l.b16 %v4262
  %v4412 = vunpack.c.l.b16 %v4263
  %v4413 = vunpack.c.l.b16 %v4265
  %v4414 = vunpack.c.l.b16 %v4266
  %v4415 = vunpack.c.l.b16 %v4268
  %v4416 = vunpack.c.l.b16 %v4269
  %v4417 = vunpack.c.l.b16 %v4271
  %v4418 = vunpack.c.l.b16 %v4272
  %v4419 = vunpack.c.l.b16 %v4274
  %v4420 = vunpack.c.l.b16 %v4275
  %v4421 = vunpack.c.l.b16 %v4277
  %v4422 = vunpack.c.l.b16 %v4278
  %v4423 = vunpack.c.l.b16 %v4280
  %v4424 = vunpack.c.l.b16 %v4281
  %v4425 = vunpack.c.l.b16 %v4283
  %v4426 = vunpack.c.l.b16 %v4284
  %v4427 = vunpack.c.l.b16 %v4286
  %v4428 = vunpack.c.l.b16 %v4287
  %v4429 = vunpack.c.l.b16 %v4289
  %v4430 = vunpack.c.l.b16 %v4290
  %v4431 = vunpack.c.l.b16 %v4292
  %v4432 = vunpack.c.l.b16 %v4293
  %v4433 = vunpack.c.l.b16 %v4295
  %v4434 = vunpack.c.l.b16 %v4296
  %v4435 = vunpack.c.l.b16 %v4298
  %v4436 = vunpack.c.l.b16 %v4299
  %v4437 = vunpack.c.l.b16 %v4301
  %v4438 = vunpack.c.l.b16 %v4302
  %v4439 = vunpack.c.l.b16 %v4304
  %v4440 = vunpack.c.l.b16 %v4305
  %v4441 = vunpack.c.l.b16 %v4307
  %v4442 = vunpack.c.l.b16 %v4308
  %v4443 = vunpack.c.l.b16 %v4310
  %v4444 = vunpack.c.l.b16 %v4311
  %v4445 = vunpack.c.l.b16 %v4313
  %v4446 = vunpack.c.l.b16 %v4314
  %v4447 = vunpack.c.l.b16 %v4316
  %v4448 = vunpack.c.l.b16 %v4317
  %v4449 = vunpack.c.l.b16 %v4319
  %v4450 = vunpack.c.l.b16 %v4320
  %v4451 = vunpack.c.l.b16 %v4322
  %v4452 = vunpack.c.l.b16 %v4323
  %v4453 = vpack.c.b16 %v4390, %v4389
  %v4454 = vpack.c.b16 %v4392, %v4391
  %v4455 = vpack.c.b16 %v4394, %v4393
  %v4456 = vpack.c.b16 %v4396, %v4395
  %v4457 = vpack.c.b16 %v4398, %v4397
  %v4458 = vpack.c.b16 %v4400, %v4399
  %v4459 = vpack.c.b16 %v4402, %v4401
  %v4460 = vpack.c.b16 %v4404, %v4403
  %v4461 = vpack.c.b16 %v4406, %v4405
  %v4462 = vpack.c.b16 %v4408, %v4407
  %v4463 = vpack.c.b16 %v4410, %v4409
  %v4464 = vpack.c.b16 %v4412, %v4411
  %v4465 = vpack.c.b16 %v4414, %v4413
  %v4466 = vpack.c.b16 %v4416, %v4415
  %v4467 = vpack.c.b16 %v4418, %v4417
  %v4468 = vpack.c.b16 %v4420, %v4419
  %v4469 = vpack.c.b16 %v4422, %v4421
  %v4470 = vpack.c.b16 %v4424, %v4423
  %v4471 = vpack.c.b16 %v4426, %v4425
  %v4472 = vpack.c.b16 %v4428, %v4427
  %v4473 = vpack.c.b16 %v4430, %v4429
  %v4474 = vpack.c.b16 %v4432, %v4431
  %v4475 = vpack.c.b16 %v4434, %v4433
  %v4476 = vpack.c.b16 %v4436, %v4435
  %v4477 = vpack.c.b16 %v4438, %v4437
  %v4478 = vpack.c.b16 %v4440, %v4439
  %v4479 = vpack.c.b16 %v4442, %v4441
  %v4480 = vpack.c.b16 %v4444, %v4443
  %v4481 = vpack.c.b16 %v4446, %v4445
  %v4482 = vpack.c.b16 %v4448, %v4447
  %v4483 = vpack.c.b16 %v4450, %v4449
  %v4484 = vpack.c.b16 %v4452, %v4451
  %v4517 = vunpack.c.l.b16 %v4231
  %v4518 = vunpack.c.l.b16 %v4234
  %v4519 = vunpack.c.l.b16 %v4237
  %v4520 = vunpack.c.l.b16 %v4240
  %v4521 = vunpack.c.l.b16 %v4243
  %v4522 = vunpack.c.l.b16 %v4246
  %v4523 = vunpack.c.l.b16 %v4249
  %v4524 = vunpack.c.l.b16 %v4252
  %v4525 = vunpack.c.l.b16 %v4255
  %v4526 = vunpack.c.l.b16 %v4258
  %v4527 = vunpack.c.l.b16 %v4261
  %v4528 = vunpack.c.l.b16 %v4264
  %v4529 = vunpack.c.l.b16 %v4267
  %v4530 = vunpack.c.l.b16 %v4270
  %v4531 = vunpack.c.l.b16 %v4273
  %v4532 = vunpack.c.l.b16 %v4276
  %v4533 = vunpack.c.l.b16 %v4279
  %v4534 = vunpack.c.l.b16 %v4282
  %v4535 = vunpack.c.l.b16 %v4285
  %v4536 = vunpack.c.l.b16 %v4288
  %v4537 = vunpack.c.l.b16 %v4291
  %v4538 = vunpack.c.l.b16 %v4294
  %v4539 = vunpack.c.l.b16 %v4297
  %v4540 = vunpack.c.l.b16 %v4300
  %v4541 = vunpack.c.l.b16 %v4303
  %v4542 = vunpack.c.l.b16 %v4306
  %v4543 = vunpack.c.l.b16 %v4309
  %v4544 = vunpack.c.l.b16 %v4312
  %v4545 = vunpack.c.l.b16 %v4315
  %v4546 = vunpack.c.l.b16 %v4318
  %v4547 = vunpack.c.l.b16 %v4321
  %v4548 = vunpack.c.l.b16 %v4324
  %v4549 = vpack.c.b16 %v4517, %v4517
  %v4550 = vpack.c.b16 %v4518, %v4518
  %v4551 = vpack.c.b16 %v4519, %v4519
  %v4552 = vpack.c.b16 %v4520, %v4520
  %v4553 = vpack.c.b16 %v4521, %v4521
  %v4554 = vpack.c.b16 %v4522, %v4522
  %v4555 = vpack.c.b16 %v4523, %v4523
  %v4556 = vpack.c.b16 %v4524, %v4524
  %v4557 = vpack.c.b16 %v4525, %v4525
  %v4558 = vpack.c.b16 %v4526, %v4526
  %v4559 = vpack.c.b16 %v4527, %v4527
  %v4560 = vpack.c.b16 %v4528, %v4528
  %v4561 = vpack.c.b16 %v4529, %v4529
  %v4562 = vpack.c.b16 %v4530, %v4530
  %v4563 = vpack.c.b16 %v4531, %v4531
  %v4564 = vpack.c.b16 %v4532, %v4532
  %v4565 = vpack.c.b16 %v4533, %v4533
  %v4566 = vpack.c.b16 %v4534, %v4534
  %v4567 = vpack.c.b16 %v4535, %v4535
  %v4568 = vpack.c.b16 %v4536, %v4536
  %v4569 = vpack.c.b16 %v4537, %v4537
  %v4570 = vpack.c.b16 %v4538, %v4538
  %v4571 = vpack.c.b16 %v4539, %v4539
  %v4572 = vpack.c.b16 %v4540, %v4540
  %v4573 = vpack.c.b16 %v4541, %v4541
  %v4574 = vpack.c.b16 %v4542, %v4542
  %v4575 = vpack.c.b16 %v4543, %v4543
  %v4576 = vpack.c.b16 %v4544, %v4544
  %v4577 = vpack.c.b16 %v4545, %v4545
  %v4578 = vpack.c.b16 %v4546, %v4546
  %v4579 = vpack.c.b16 %v4547, %v4547
  %v4580 = vpack.c.b16 %v4548, %v4548
  %v4582 = vshrl.u32 %v4453, 16
  %v4584 = vshll.u32 %v4453, 16
  %v4586 = vrot.slane %v4584, 1
  %v4587 = vor.u32 %v4582, %v4586
  %v4589 = vshll.u32 %v4549, 16
  %v4591 = vrot.slane %v4589, 1
  %v4592 = vsel %vm1414, %v4587, %v4591
  %v4594 = vshrl.u32 %v4454, 16
  %v4596 = vshll.u32 %v4454, 16
  %v4598 = vrot.slane %v4596, 1
  %v4599 = vor.u32 %v4594, %v4598
  %v4601 = vshll.u32 %v4550, 16
  %v4603 = vrot.slane %v4601, 1
  %v4604 = vsel %vm1414, %v4599, %v4603
  %v4606 = vshrl.u32 %v4455, 16
  %v4608 = vshll.u32 %v4455, 16
  %v4610 = vrot.slane %v4608, 1
  %v4611 = vor.u32 %v4606, %v4610
  %v4613 = vshll.u32 %v4551, 16
  %v4615 = vrot.slane %v4613, 1
  %v4616 = vsel %vm1414, %v4611, %v4615
  %v4618 = vshrl.u32 %v4456, 16
  %v4620 = vshll.u32 %v4456, 16
  %v4622 = vrot.slane %v4620, 1
  %v4623 = vor.u32 %v4618, %v4622
  %v4625 = vshll.u32 %v4552, 16
  %v4627 = vrot.slane %v4625, 1
  %v4628 = vsel %vm1414, %v4623, %v4627
  %v4630 = vshrl.u32 %v4457, 16
  %v4632 = vshll.u32 %v4457, 16
  %v4634 = vrot.slane %v4632, 1
  %v4635 = vor.u32 %v4630, %v4634
  %v4637 = vshll.u32 %v4553, 16
  %v4639 = vrot.slane %v4637, 1
  %v4640 = vsel %vm1414, %v4635, %v4639
  %v4642 = vshrl.u32 %v4458, 16
  %v4644 = vshll.u32 %v4458, 16
  %v4646 = vrot.slane %v4644, 1
  %v4647 = vor.u32 %v4642, %v4646
  %v4649 = vshll.u32 %v4554, 16
  %v4651 = vrot.slane %v4649, 1
  %v4652 = vsel %vm1414, %v4647, %v4651
  %v4654 = vshrl.u32 %v4459, 16
  %v4656 = vshll.u32 %v4459, 16
  %v4658 = vrot.slane %v4656, 1
  %v4659 = vor.u32 %v4654, %v4658
  %v4661 = vshll.u32 %v4555, 16
  %v4663 = vrot.slane %v4661, 1
  %v4664 = vsel %vm1414, %v4659, %v4663
  %v4666 = vshrl.u32 %v4460, 16
  %v4668 = vshll.u32 %v4460, 16
  %v4670 = vrot.slane %v4668, 1
  %v4671 = vor.u32 %v4666, %v4670
  %v4673 = vshll.u32 %v4556, 16
  %v4675 = vrot.slane %v4673, 1
  %v4676 = vsel %vm1414, %v4671, %v4675
  %v4678 = vshrl.u32 %v4461, 16
  %v4680 = vshll.u32 %v4461, 16
  %v4682 = vrot.slane %v4680, 1
  %v4683 = vor.u32 %v4678, %v4682
  %v4685 = vshll.u32 %v4557, 16
  %v4687 = vrot.slane %v4685, 1
  %v4688 = vsel %vm1414, %v4683, %v4687
  %v4690 = vshrl.u32 %v4462, 16
  %v4692 = vshll.u32 %v4462, 16
  %v4694 = vrot.slane %v4692, 1
  %v4695 = vor.u32 %v4690, %v4694
  %v4697 = vshll.u32 %v4558, 16
  %v4699 = vrot.slane %v4697, 1
  %v4700 = vsel %vm1414, %v4695, %v4699
  %v4702 = vshrl.u32 %v4463, 16
  %v4704 = vshll.u32 %v4463, 16
  %v4706 = vrot.slane %v4704, 1
  %v4707 = vor.u32 %v4702, %v4706
  %v4709 = vshll.u32 %v4559, 16
  %v4711 = vrot.slane %v4709, 1
  %v4712 = vsel %vm1414, %v4707, %v4711
  %v4714 = vshrl.u32 %v4464, 16
  %v4716 = vshll.u32 %v4464, 16
  %v4718 = vrot.slane %v4716, 1
  %v4719 = vor.u32 %v4714, %v4718
  %v4721 = vshll.u32 %v4560, 16
  %v4723 = vrot.slane %v4721, 1
  %v4724 = vsel %vm1414, %v4719, %v4723
  %v4726 = vshrl.u32 %v4465, 16
  %v4728 = vshll.u32 %v4465, 16
  %v4730 = vrot.slane %v4728, 1
  %v4731 = vor.u32 %v4726, %v4730
  %v4733 = vshll.u32 %v4561, 16
  %v4735 = vrot.slane %v4733, 1
  %v4736 = vsel %vm1414, %v4731, %v4735
  %v4738 = vshrl.u32 %v4466, 16
  %v4740 = vshll.u32 %v4466, 16
  %v4742 = vrot.slane %v4740, 1
  %v4743 = vor.u32 %v4738, %v4742
  %v4745 = vshll.u32 %v4562, 16
  %v4747 = vrot.slane %v4745, 1
  %v4748 = vsel %vm1414, %v4743, %v4747
  %v4750 = vshrl.u32 %v4467, 16
  %v4752 = vshll.u32 %v4467, 16
  %v4754 = vrot.slane %v4752, 1
  %v4755 = vor.u32 %v4750, %v4754
  %v4757 = vshll.u32 %v4563, 16
  %v4759 = vrot.slane %v4757, 1
  %v4760 = vsel %vm1414, %v4755, %v4759
  %v4762 = vshrl.u32 %v4468, 16
  %v4764 = vshll.u32 %v4468, 16
  %v4766 = vrot.slane %v4764, 1
  %v4767 = vor.u32 %v4762, %v4766
  %v4769 = vshll.u32 %v4564, 16
  %v4771 = vrot.slane %v4769, 1
  %v4772 = vsel %vm1414, %v4767, %v4771
  %v4774 = vshrl.u32 %v4469, 16
  %v4776 = vshll.u32 %v4469, 16
  %v4778 = vrot.slane %v4776, 1
  %v4779 = vor.u32 %v4774, %v4778
  %v4781 = vshll.u32 %v4565, 16
  %v4783 = vrot.slane %v4781, 1
  %v4784 = vsel %vm1414, %v4779, %v4783
  %v4786 = vshrl.u32 %v4470, 16
  %v4788 = vshll.u32 %v4470, 16
  %v4790 = vrot.slane %v4788, 1
  %v4791 = vor.u32 %v4786, %v4790
  %v4793 = vshll.u32 %v4566, 16
  %v4795 = vrot.slane %v4793, 1
  %v4796 = vsel %vm1414, %v4791, %v4795
  %v4798 = vshrl.u32 %v4471, 16
  %v4800 = vshll.u32 %v4471, 16
  %v4802 = vrot.slane %v4800, 1
  %v4803 = vor.u32 %v4798, %v4802
  %v4805 = vshll.u32 %v4567, 16
  %v4807 = vrot.slane %v4805, 1
  %v4808 = vsel %vm1414, %v4803, %v4807
  %v4810 = vshrl.u32 %v4472, 16
  %v4812 = vshll.u32 %v4472, 16
  %v4814 = vrot.slane %v4812, 1
  %v4815 = vor.u32 %v4810, %v4814
  %v4817 = vshll.u32 %v4568, 16
  %v4819 = vrot.slane %v4817, 1
  %v4820 = vsel %vm1414, %v4815, %v4819
  %v4822 = vshrl.u32 %v4473, 16
  %v4824 = vshll.u32 %v4473, 16
  %v4826 = vrot.slane %v4824, 1
  %v4827 = vor.u32 %v4822, %v4826
  %v4829 = vshll.u32 %v4569, 16
  %v4831 = vrot.slane %v4829, 1
  %v4832 = vsel %vm1414, %v4827, %v4831
  %v4834 = vshrl.u32 %v4474, 16
  %v4836 = vshll.u32 %v4474, 16
  %v4838 = vrot.slane %v4836, 1
  %v4839 = vor.u32 %v4834, %v4838
  %v4841 = vshll.u32 %v4570, 16
  %v4843 = vrot.slane %v4841, 1
  %v4844 = vsel %vm1414, %v4839, %v4843
  %v4846 = vshrl.u32 %v4475, 16
  %v4848 = vshll.u32 %v4475, 16
  %v4850 = vrot.slane %v4848, 1
  %v4851 = vor.u32 %v4846, %v4850
  %v4853 = vshll.u32 %v4571, 16
  %v4855 = vrot.slane %v4853, 1
  %v4856 = vsel %vm1414, %v4851, %v4855
  %v4858 = vshrl.u32 %v4476, 16
  %v4860 = vshll.u32 %v4476, 16
  %v4862 = vrot.slane %v4860, 1
  %v4863 = vor.u32 %v4858, %v4862
  %v4865 = vshll.u32 %v4572, 16
  %v4867 = vrot.slane %v4865, 1
  %v4868 = vsel %vm1414, %v4863, %v4867
  %v4870 = vshrl.u32 %v4477, 16
  %v4872 = vshll.u32 %v4477, 16
  %v4874 = vrot.slane %v4872, 1
  %v4875 = vor.u32 %v4870, %v4874
  %v4877 = vshll.u32 %v4573, 16
  %v4879 = vrot.slane %v4877, 1
  %v4880 = vsel %vm1414, %v4875, %v4879
  %v4882 = vshrl.u32 %v4478, 16
  %v4884 = vshll.u32 %v4478, 16
  %v4886 = vrot.slane %v4884, 1
  %v4887 = vor.u32 %v4882, %v4886
  %v4889 = vshll.u32 %v4574, 16
  %v4891 = vrot.slane %v4889, 1
  %v4892 = vsel %vm1414, %v4887, %v4891
  %v4894 = vshrl.u32 %v4479, 16
  %v4896 = vshll.u32 %v4479, 16
  %v4898 = vrot.slane %v4896, 1
  %v4899 = vor.u32 %v4894, %v4898
  %v4901 = vshll.u32 %v4575, 16
  %v4903 = vrot.slane %v4901, 1
  %v4904 = vsel %vm1414, %v4899, %v4903
  %v4906 = vshrl.u32 %v4480, 16
  %v4908 = vshll.u32 %v4480, 16
  %v4910 = vrot.slane %v4908, 1
  %v4911 = vor.u32 %v4906, %v4910
  %v4913 = vshll.u32 %v4576, 16
  %v4915 = vrot.slane %v4913, 1
  %v4916 = vsel %vm1414, %v4911, %v4915
  %v4918 = vshrl.u32 %v4481, 16
  %v4920 = vshll.u32 %v4481, 16
  %v4922 = vrot.slane %v4920, 1
  %v4923 = vor.u32 %v4918, %v4922
  %v4925 = vshll.u32 %v4577, 16
  %v4927 = vrot.slane %v4925, 1
  %v4928 = vsel %vm1414, %v4923, %v4927
  %v4930 = vshrl.u32 %v4482, 16
  %v4932 = vshll.u32 %v4482, 16
  %v4934 = vrot.slane %v4932, 1
  %v4935 = vor.u32 %v4930, %v4934
  %v4937 = vshll.u32 %v4578, 16
  %v4939 = vrot.slane %v4937, 1
  %v4940 = vsel %vm1414, %v4935, %v4939
  %v4942 = vshrl.u32 %v4483, 16
  %v4944 = vshll.u32 %v4483, 16
  %v4946 = vrot.slane %v4944, 1
  %v4947 = vor.u32 %v4942, %v4946
  %v4949 = vshll.u32 %v4579, 16
  %v4951 = vrot.slane %v4949, 1
  %v4952 = vsel %vm1414, %v4947, %v4951
  %v4954 = vshrl.u32 %v4484, 16
  %v4956 = vshll.u32 %v4484, 16
  %v4958 = vrot.slane %v4956, 1
  %v4959 = vor.u32 %v4954, %v4958
  %v4961 = vshll.u32 %v4580, 16
  %v4963 = vrot.slane %v4961, 1
  %v4964 = vsel %vm1414, %v4959, %v4963
  %4965 = vrot.lane.b32.xlu0 %v4592, 4
  %v4966 = vpop.permute.xlu0 %4965
  %4967 = vrot.lane.b32.xlu0 %v4604, 4
  %v4968 = vpop.permute.xlu0 %4967
  %4969 = vrot.lane.b32.xlu0 %v4616, 4
  %v4970 = vpop.permute.xlu0 %4969
  %4971 = vrot.lane.b32.xlu0 %v4628, 4
  %v4972 = vpop.permute.xlu0 %4971
  %4973 = vrot.lane.b32.xlu0 %v4640, 4
  %v4974 = vpop.permute.xlu0 %4973
  %4975 = vrot.lane.b32.xlu0 %v4652, 4
  %v4976 = vpop.permute.xlu0 %4975
  %4977 = vrot.lane.b32.xlu0 %v4664, 4
  %v4978 = vpop.permute.xlu0 %4977
  %4979 = vrot.lane.b32.xlu0 %v4676, 4
  %v4980 = vpop.permute.xlu0 %4979
  %4981 = vrot.lane.b32.xlu0 %v4688, 4
  %v4982 = vpop.permute.xlu0 %4981
  %4983 = vrot.lane.b32.xlu0 %v4700, 4
  %v4984 = vpop.permute.xlu0 %4983
  %4985 = vrot.lane.b32.xlu0 %v4712, 4
  %v4986 = vpop.permute.xlu0 %4985
  %4987 = vrot.lane.b32.xlu0 %v4724, 4
  %v4988 = vpop.permute.xlu0 %4987
  %4989 = vrot.lane.b32.xlu0 %v4736, 4
  %v4990 = vpop.permute.xlu0 %4989
  %4991 = vrot.lane.b32.xlu0 %v4748, 4
  %v4992 = vpop.permute.xlu0 %4991
  %4993 = vrot.lane.b32.xlu0 %v4760, 4
  %v4994 = vpop.permute.xlu0 %4993
  %4995 = vrot.lane.b32.xlu0 %v4772, 4
  %v4996 = vpop.permute.xlu0 %4995
  %4997 = vrot.lane.b32.xlu0 %v4784, 4
  %v4998 = vpop.permute.xlu0 %4997
  %4999 = vrot.lane.b32.xlu0 %v4796, 4
  %v5000 = vpop.permute.xlu0 %4999
  %5001 = vrot.lane.b32.xlu0 %v4808, 4
  %v5002 = vpop.permute.xlu0 %5001
  %5003 = vrot.lane.b32.xlu0 %v4820, 4
  %v5004 = vpop.permute.xlu0 %5003
  %5005 = vrot.lane.b32.xlu0 %v4832, 4
  %v5006 = vpop.permute.xlu0 %5005
  %5007 = vrot.lane.b32.xlu0 %v4844, 4
  %v5008 = vpop.permute.xlu0 %5007
  %5009 = vrot.lane.b32.xlu0 %v4856, 4
  %v5010 = vpop.permute.xlu0 %5009
  %5011 = vrot.lane.b32.xlu0 %v4868, 4
  %v5012 = vpop.permute.xlu0 %5011
  %5013 = vrot.lane.b32.xlu0 %v4880, 4
  %v5014 = vpop.permute.xlu0 %5013
  %5015 = vrot.lane.b32.xlu0 %v4892, 4
  %v5016 = vpop.permute.xlu0 %5015
  %5017 = vrot.lane.b32.xlu0 %v4904, 4
  %v5018 = vpop.permute.xlu0 %5017
  %5019 = vrot.lane.b32.xlu0 %v4916, 4
  %v5020 = vpop.permute.xlu0 %5019
  %5021 = vrot.lane.b32.xlu0 %v4928, 4
  %v5022 = vpop.permute.xlu0 %5021
  %5023 = vrot.lane.b32.xlu0 %v4940, 4
  %v5024 = vpop.permute.xlu0 %5023
  %5025 = vrot.lane.b32.xlu0 %v4952, 4
  %v5026 = vpop.permute.xlu0 %5025
  %5027 = vrot.lane.b32.xlu0 %v4964, 4
  %v5028 = vpop.permute.xlu0 %5027
  %v5029 = vrot.slane %v4453, 1
  %v5030 = vrot.slane %v4549, 1
  %v5031 = vsel %vm1863, %v5029, %v5030
  %v5032 = vrot.slane %v4454, 1
  %v5033 = vrot.slane %v4550, 1
  %v5034 = vsel %vm1863, %v5032, %v5033
  %v5035 = vrot.slane %v4455, 1
  %v5036 = vrot.slane %v4551, 1
  %v5037 = vsel %vm1863, %v5035, %v5036
  %v5038 = vrot.slane %v4456, 1
  %v5039 = vrot.slane %v4552, 1
  %v5040 = vsel %vm1863, %v5038, %v5039
  %v5041 = vrot.slane %v4457, 1
  %v5042 = vrot.slane %v4553, 1
  %v5043 = vsel %vm1863, %v5041, %v5042
  %v5044 = vrot.slane %v4458, 1
  %v5045 = vrot.slane %v4554, 1
  %v5046 = vsel %vm1863, %v5044, %v5045
  %v5047 = vrot.slane %v4459, 1
  %v5048 = vrot.slane %v4555, 1
  %v5049 = vsel %vm1863, %v5047, %v5048
  %v5050 = vrot.slane %v4460, 1
  %v5051 = vrot.slane %v4556, 1
  %v5052 = vsel %vm1863, %v5050, %v5051
  %v5053 = vrot.slane %v4461, 1
  %v5054 = vrot.slane %v4557, 1
  %v5055 = vsel %vm1863, %v5053, %v5054
  %v5056 = vrot.slane %v4462, 1
  %v5057 = vrot.slane %v4558, 1
  %v5058 = vsel %vm1863, %v5056, %v5057
  %v5059 = vrot.slane %v4463, 1
  %v5060 = vrot.slane %v4559, 1
  %v5061 = vsel %vm1863, %v5059, %v5060
  %v5062 = vrot.slane %v4464, 1
  %v5063 = vrot.slane %v4560, 1
  %v5064 = vsel %vm1863, %v5062, %v5063
  %v5065 = vrot.slane %v4465, 1
  %v5066 = vrot.slane %v4561, 1
  %v5067 = vsel %vm1863, %v5065, %v5066
  %v5068 = vrot.slane %v4466, 1
  %v5069 = vrot.slane %v4562, 1
  %v5070 = vsel %vm1863, %v5068, %v5069
  %v5071 = vrot.slane %v4467, 1
  %v5072 = vrot.slane %v4563, 1
  %v5073 = vsel %vm1863, %v5071, %v5072
  %v5074 = vrot.slane %v4468, 1
  %v5075 = vrot.slane %v4564, 1
  %v5076 = vsel %vm1863, %v5074, %v5075
  %v5077 = vrot.slane %v4469, 1
  %v5078 = vrot.slane %v4565, 1
  %v5079 = vsel %vm1863, %v5077, %v5078
  %v5080 = vrot.slane %v4470, 1
  %v5081 = vrot.slane %v4566, 1
  %v5082 = vsel %vm1863, %v5080, %v5081
  %v5083 = vrot.slane %v4471, 1
  %v5084 = vrot.slane %v4567, 1
  %v5085 = vsel %vm1863, %v5083, %v5084
  %v5086 = vrot.slane %v4472, 1
  %v5087 = vrot.slane %v4568, 1
  %v5088 = vsel %vm1863, %v5086, %v5087
  %v5089 = vrot.slane %v4473, 1
  %v5090 = vrot.slane %v4569, 1
  %v5091 = vsel %vm1863, %v5089, %v5090
  %v5092 = vrot.slane %v4474, 1
  %v5093 = vrot.slane %v4570, 1
  %v5094 = vsel %vm1863, %v5092, %v5093
  %v5095 = vrot.slane %v4475, 1
  %v5096 = vrot.slane %v4571, 1
  %v5097 = vsel %vm1863, %v5095, %v5096
  %v5098 = vrot.slane %v4476, 1
  %v5099 = vrot.slane %v4572, 1
  %v5100 = vsel %vm1863, %v5098, %v5099
  %v5101 = vrot.slane %v4477, 1
  %v5102 = vrot.slane %v4573, 1
  %v5103 = vsel %vm1863, %v5101, %v5102
  %v5104 = vrot.slane %v4478, 1
  %v5105 = vrot.slane %v4574, 1
  %v5106 = vsel %vm1863, %v5104, %v5105
  %v5107 = vrot.slane %v4479, 1
  %v5108 = vrot.slane %v4575, 1
  %v5109 = vsel %vm1863, %v5107, %v5108
  %v5110 = vrot.slane %v4480, 1
  %v5111 = vrot.slane %v4576, 1
  %v5112 = vsel %vm1863, %v5110, %v5111
  %v5113 = vrot.slane %v4481, 1
  %v5114 = vrot.slane %v4577, 1
  %v5115 = vsel %vm1863, %v5113, %v5114
  %v5116 = vrot.slane %v4482, 1
  %v5117 = vrot.slane %v4578, 1
  %v5118 = vsel %vm1863, %v5116, %v5117
  %v5119 = vrot.slane %v4483, 1
  %v5120 = vrot.slane %v4579, 1
  %v5121 = vsel %vm1863, %v5119, %v5120
  %v5122 = vrot.slane %v4484, 1
  %v5123 = vrot.slane %v4580, 1
  %v5124 = vsel %vm1863, %v5122, %v5123
  %5125 = vrot.lane.b32.xlu0 %v5031, 8
  %v5126 = vpop.permute.xlu0 %5125
  %5127 = vrot.lane.b32.xlu0 %v5034, 8
  %v5128 = vpop.permute.xlu0 %5127
  %5129 = vrot.lane.b32.xlu0 %v5037, 8
  %v5130 = vpop.permute.xlu0 %5129
  %5131 = vrot.lane.b32.xlu0 %v5040, 8
  %v5132 = vpop.permute.xlu0 %5131
  %5133 = vrot.lane.b32.xlu0 %v5043, 8
  %v5134 = vpop.permute.xlu0 %5133
  %5135 = vrot.lane.b32.xlu0 %v5046, 8
  %v5136 = vpop.permute.xlu0 %5135
  %5137 = vrot.lane.b32.xlu0 %v5049, 8
  %v5138 = vpop.permute.xlu0 %5137
  %5139 = vrot.lane.b32.xlu0 %v5052, 8
  %v5140 = vpop.permute.xlu0 %5139
  %5141 = vrot.lane.b32.xlu0 %v5055, 8
  %v5142 = vpop.permute.xlu0 %5141
  %5143 = vrot.lane.b32.xlu0 %v5058, 8
  %v5144 = vpop.permute.xlu0 %5143
  %5145 = vrot.lane.b32.xlu0 %v5061, 8
  %v5146 = vpop.permute.xlu0 %5145
  %5147 = vrot.lane.b32.xlu0 %v5064, 8
  %v5148 = vpop.permute.xlu0 %5147
  %5149 = vrot.lane.b32.xlu0 %v5067, 8
  %v5150 = vpop.permute.xlu0 %5149
  %5151 = vrot.lane.b32.xlu0 %v5070, 8
  %v5152 = vpop.permute.xlu0 %5151
  %5153 = vrot.lane.b32.xlu0 %v5073, 8
  %v5154 = vpop.permute.xlu0 %5153
  %5155 = vrot.lane.b32.xlu0 %v5076, 8
  %v5156 = vpop.permute.xlu0 %5155
  %5157 = vrot.lane.b32.xlu0 %v5079, 8
  %v5158 = vpop.permute.xlu0 %5157
  %5159 = vrot.lane.b32.xlu0 %v5082, 8
  %v5160 = vpop.permute.xlu0 %5159
  %5161 = vrot.lane.b32.xlu0 %v5085, 8
  %v5162 = vpop.permute.xlu0 %5161
  %5163 = vrot.lane.b32.xlu0 %v5088, 8
  %v5164 = vpop.permute.xlu0 %5163
  %5165 = vrot.lane.b32.xlu0 %v5091, 8
  %v5166 = vpop.permute.xlu0 %5165
  %5167 = vrot.lane.b32.xlu0 %v5094, 8
  %v5168 = vpop.permute.xlu0 %5167
  %5169 = vrot.lane.b32.xlu0 %v5097, 8
  %v5170 = vpop.permute.xlu0 %5169
  %5171 = vrot.lane.b32.xlu0 %v5100, 8
  %v5172 = vpop.permute.xlu0 %5171
  %5173 = vrot.lane.b32.xlu0 %v5103, 8
  %v5174 = vpop.permute.xlu0 %5173
  %5175 = vrot.lane.b32.xlu0 %v5106, 8
  %v5176 = vpop.permute.xlu0 %5175
  %5177 = vrot.lane.b32.xlu0 %v5109, 8
  %v5178 = vpop.permute.xlu0 %5177
  %5179 = vrot.lane.b32.xlu0 %v5112, 8
  %v5180 = vpop.permute.xlu0 %5179
  %5181 = vrot.lane.b32.xlu0 %v5115, 8
  %v5182 = vpop.permute.xlu0 %5181
  %5183 = vrot.lane.b32.xlu0 %v5118, 8
  %v5184 = vpop.permute.xlu0 %5183
  %5185 = vrot.lane.b32.xlu0 %v5121, 8
  %v5186 = vpop.permute.xlu0 %5185
  %5187 = vrot.lane.b32.xlu0 %v5124, 8
  %v5188 = vpop.permute.xlu0 %5187
  %v5190 = vsel %vm2024, %v4453, %v4966
  %v5192 = vsel %vm2024, %v4454, %v4968
  %v5194 = vsel %vm2024, %v4455, %v4970
  %v5196 = vsel %vm2024, %v4456, %v4972
  %v5198 = vsel %vm2024, %v4457, %v4974
  %v5200 = vsel %vm2024, %v4458, %v4976
  %v5202 = vsel %vm2024, %v4459, %v4978
  %v5204 = vsel %vm2024, %v4460, %v4980
  %v5206 = vsel %vm2024, %v4461, %v4982
  %v5208 = vsel %vm2024, %v4462, %v4984
  %v5210 = vsel %vm2024, %v4463, %v4986
  %v5212 = vsel %vm2024, %v4464, %v4988
  %v5214 = vsel %vm2024, %v4465, %v4990
  %v5216 = vsel %vm2024, %v4466, %v4992
  %v5218 = vsel %vm2024, %v4467, %v4994
  %v5220 = vsel %vm2024, %v4468, %v4996
  %v5222 = vsel %vm2024, %v4469, %v4998
  %v5224 = vsel %vm2024, %v4470, %v5000
  %v5226 = vsel %vm2024, %v4471, %v5002
  %v5228 = vsel %vm2024, %v4472, %v5004
  %v5230 = vsel %vm2024, %v4473, %v5006
  %v5232 = vsel %vm2024, %v4474, %v5008
  %v5234 = vsel %vm2024, %v4475, %v5010
  %v5236 = vsel %vm2024, %v4476, %v5012
  %v5238 = vsel %vm2024, %v4477, %v5014
  %v5240 = vsel %vm2024, %v4478, %v5016
  %v5242 = vsel %vm2024, %v4479, %v5018
  %v5244 = vsel %vm2024, %v4480, %v5020
  %v5246 = vsel %vm2024, %v4481, %v5022
  %v5248 = vsel %vm2024, %v4482, %v5024
  %v5250 = vsel %vm2024, %v4483, %v5026
  %v5252 = vsel %vm2024, %v4484, %v5028
  %v5254 = vsel %vm2089, %v5190, %v5126
  %v5256 = vsel %vm2089, %v5192, %v5128
  %v5258 = vsel %vm2089, %v5194, %v5130
  %v5260 = vsel %vm2089, %v5196, %v5132
  %v5262 = vsel %vm2089, %v5198, %v5134
  %v5264 = vsel %vm2089, %v5200, %v5136
  %v5266 = vsel %vm2089, %v5202, %v5138
  %v5268 = vsel %vm2089, %v5204, %v5140
  %v5270 = vsel %vm2089, %v5206, %v5142
  %v5272 = vsel %vm2089, %v5208, %v5144
  %v5274 = vsel %vm2089, %v5210, %v5146
  %v5276 = vsel %vm2089, %v5212, %v5148
  %v5278 = vsel %vm2089, %v5214, %v5150
  %v5280 = vsel %vm2089, %v5216, %v5152
  %v5282 = vsel %vm2089, %v5218, %v5154
  %v5284 = vsel %vm2089, %v5220, %v5156
  %v5286 = vsel %vm2089, %v5222, %v5158
  %v5288 = vsel %vm2089, %v5224, %v5160
  %v5290 = vsel %vm2089, %v5226, %v5162
  %v5292 = vsel %vm2089, %v5228, %v5164
  %v5294 = vsel %vm2089, %v5230, %v5166
  %v5296 = vsel %vm2089, %v5232, %v5168
  %v5298 = vsel %vm2089, %v5234, %v5170
  %v5300 = vsel %vm2089, %v5236, %v5172
  %v5302 = vsel %vm2089, %v5238, %v5174
  %v5304 = vsel %vm2089, %v5240, %v5176
  %v5306 = vsel %vm2089, %v5242, %v5178
  %v5308 = vsel %vm2089, %v5244, %v5180
  %v5310 = vsel %vm2089, %v5246, %v5182
  %v5312 = vsel %vm2089, %v5248, %v5184
  %v5314 = vsel %vm2089, %v5250, %v5186
  %v5316 = vsel %vm2089, %v5252, %v5188
  %s5317 = scalar_lea.vmem %s1, 16
  %v5318 = vld [vmem:[%s5317] sm:$0xf]
  %v5319 = vld [vmem:[%s5317 + $0x4] sm:$0x3]
  %v5322 = vunpack.c.l.b16 %v5318
  %v5323 = vunpack.c.l.b16 %v5319
  %v5324 = vpack.c.b16 %v5323, %v5322
  %v5325 = vsel %vm2161, %v5254, 0
  %v5327 = vsel %vm2161, %v5256, 0
  %v5329 = vsel %vm2161, %v5258, 0
  %v5331 = vsel %vm2161, %v5260, 0
  %v5333 = vsel %vm2161, %v5262, 0
  %v5335 = vsel %vm2161, %v5264, 0
  %v5337 = vsel %vm2161, %v5266, 0
  %v5339 = vsel %vm2161, %v5268, 0
  %v5341 = vsel %vm2161, %v5270, 0
  %v5343 = vsel %vm2161, %v5272, 0
  %v5345 = vsel %vm2161, %v5274, 0
  %v5347 = vsel %vm2161, %v5276, 0
  %v5349 = vsel %vm2161, %v5278, 0
  %v5351 = vsel %vm2161, %v5280, 0
  %v5353 = vsel %vm2161, %v5282, 0
  %v5355 = vsel %vm2161, %v5284, 0
  %v5357 = vsel %vm2161, %v5286, 0
  %v5359 = vsel %vm2161, %v5288, 0
  %v5361 = vsel %vm2161, %v5290, 0
  %v5363 = vsel %vm2161, %v5292, 0
  %v5365 = vsel %vm2161, %v5294, 0
  %v5367 = vsel %vm2161, %v5296, 0
  %v5369 = vsel %vm2161, %v5298, 0
  %v5371 = vsel %vm2161, %v5300, 0
  %v5373 = vsel %vm2161, %v5302, 0
  %v5375 = vsel %vm2161, %v5304, 0
  %v5377 = vsel %vm2161, %v5306, 0
  %v5379 = vsel %vm2161, %v5308, 0
  %v5381 = vsel %vm2161, %v5310, 0
  %v5383 = vsel %vm2161, %v5312, 0
  %v5385 = vsel %vm2161, %v5314, 0
  %v5387 = vsel %vm2161, %v5316, 0
  %v5390 = vsel %vm2226, %v5324, 0
  %5392 = vmatprep.subr.bf16.mxu0 0
  %5393 = vmatpush1.bf16.msra.mxu0 %v5390
  %5394 = vmatprep.subr.bf16.mxu0 0
  %5395 = vmatpush1.bf16.msra.mxu0 0
  %5396 = vmatprep.subr.bf16.mxu0 0
  %5397 = vmatpush1.bf16.msra.mxu0 0
  %5398 = vmatprep.subr.bf16.mxu0 0
  %5399 = vmatpush1.bf16.msra.mxu0 0
  %5400 = vmatprep.subr.bf16.mxu0 0
  %5401 = vmatpush1.bf16.msra.mxu0 0
  %5402 = vmatprep.subr.bf16.mxu0 0
  %5403 = vmatpush1.bf16.msra.mxu0 0
  %5404 = vmatprep.subr.bf16.mxu0 0
  %5405 = vmatpush1.bf16.msra.mxu0 0
  %5406 = vmatprep.subr.bf16.mxu0 0
  %5407 = vmatpush1.bf16.msra.mxu0 0
  %5408 = vmatprep.subr.bf16.mxu0 0
  %5409 = vmatpush1.bf16.msra.mxu0 0
  %5410 = vmatprep.subr.bf16.mxu0 0
  %5411 = vmatpush1.bf16.msra.mxu0 0
  %5412 = vmatprep.subr.bf16.mxu0 0
  %5413 = vmatpush1.bf16.msra.mxu0 0
  %5414 = vmatprep.subr.bf16.mxu0 0
  %5415 = vmatpush1.bf16.msra.mxu0 0
  %5416 = vmatprep.subr.bf16.mxu0 0
  %5417 = vmatpush1.bf16.msra.mxu0 0
  %5418 = vmatprep.subr.bf16.mxu0 0
  %5419 = vmatpush1.bf16.msra.mxu0 0
  %5420 = vmatprep.subr.bf16.mxu0 0
  %5421 = vmatpush1.bf16.msra.mxu0 0
  %5422 = vmatprep.subr.bf16.mxu0 0
  %5423 = vmatpush1.bf16.msra.mxu0 0
  %5424 = vmatprep.mubr.bf16.mxu0 0
  %5425 = vmatmul.mubr.bf16.gmra.mrb[0].mxu0 %v5325
  %v5426 = vpop.f32.mrb[0].mxu0
  %v5427 = vadd.f32 0.0, %v5426
  %v5428 = vpop.f32.mrb[0].mxu0
  %v5429 = vpop.f32.mrb[0].mxu0
  %v5430 = vadd.f32 0.0, %v5429
  %v5431 = vpop.f32.mrb[0].mxu0
  %5432 = vmatprep.mubr.bf16.mxu0 0
  %5433 = vmatmul.mubr.bf16.gmra.mrb[0].mxu0 %v5327
  %v5434 = vpop.f32.mrb[0].mxu0
  %v5435 = vadd.f32 0.0, %v5434
  %v5436 = vpop.f32.mrb[0].mxu0
  %v5437 = vpop.f32.mrb[0].mxu0
  %v5438 = vadd.f32 0.0, %v5437
  %v5439 = vpop.f32.mrb[0].mxu0
  %5440 = vmatprep.mubr.bf16.mxu0 0
  %5441 = vmatmul.mubr.bf16.gmra.mrb[0].mxu0 %v5329
  %v5442 = vpop.f32.mrb[0].mxu0
  %v5443 = vadd.f32 0.0, %v5442
  %v5444 = vpop.f32.mrb[0].mxu0
  %v5445 = vpop.f32.mrb[0].mxu0
  %v5446 = vadd.f32 0.0, %v5445
  %v5447 = vpop.f32.mrb[0].mxu0
  %5448 = vmatprep.mubr.bf16.mxu0 0
  %5449 = vmatmul.mubr.bf16.gmra.mrb[0].mxu0 %v5331
  %v5450 = vpop.f32.mrb[0].mxu0
  %v5451 = vadd.f32 0.0, %v5450
  %v5452 = vpop.f32.mrb[0].mxu0
  %v5453 = vpop.f32.mrb[0].mxu0
  %v5454 = vadd.f32 0.0, %v5453
  %v5455 = vpop.f32.mrb[0].mxu0
  %5456 = vmatprep.mubr.bf16.mxu0 0
  %5457 = vmatmul.mubr.bf16.gmra.mrb[0].mxu0 %v5333
  %v5458 = vpop.f32.mrb[0].mxu0
  %v5459 = vadd.f32 0.0, %v5458
  %v5460 = vpop.f32.mrb[0].mxu0
  %v5461 = vpop.f32.mrb[0].mxu0
  %v5462 = vadd.f32 0.0, %v5461
  %v5463 = vpop.f32.mrb[0].mxu0
  %5464 = vmatprep.mubr.bf16.mxu0 0
  %5465 = vmatmul.mubr.bf16.gmra.mrb[0].mxu0 %v5335
  %v5466 = vpop.f32.mrb[0].mxu0
  %v5467 = vadd.f32 0.0, %v5466
  %v5468 = vpop.f32.mrb[0].mxu0
  %v5469 = vpop.f32.mrb[0].mxu0
  %v5470 = vadd.f32 0.0, %v5469
  %v5471 = vpop.f32.mrb[0].mxu0
  %5472 = vmatprep.mubr.bf16.mxu0 0
  %5473 = vmatmul.mubr.bf16.gmra.mrb[0].mxu0 %v5337
  %v5474 = vpop.f32.mrb[0].mxu0
  %v5475 = vadd.f32 0.0, %v5474
  %v5476 = vpop.f32.mrb[0].mxu0
  %v5477 = vpop.f32.mrb[0].mxu0
  %v5478 = vadd.f32 0.0, %v5477
  %v5479 = vpop.f32.mrb[0].mxu0
  %5480 = vmatprep.mubr.bf16.mxu0 0
  %5481 = vmatmul.mubr.bf16.gmra.mrb[0].mxu0 %v5339
  %v5482 = vpop.f32.mrb[0].mxu0
  %v5483 = vadd.f32 0.0, %v5482
  %v5484 = vpop.f32.mrb[0].mxu0
  %v5485 = vpop.f32.mrb[0].mxu0
  %v5486 = vadd.f32 0.0, %v5485
  %v5487 = vpop.f32.mrb[0].mxu0
  %5488 = vmatprep.mubr.bf16.mxu0 0
  %5489 = vmatmul.mubr.bf16.gmra.mrb[0].mxu0 %v5341
  %v5490 = vpop.f32.mrb[0].mxu0
  %v5491 = vadd.f32 0.0, %v5490
  %v5492 = vpop.f32.mrb[0].mxu0
  %v5493 = vpop.f32.mrb[0].mxu0
  %v5494 = vadd.f32 0.0, %v5493
  %v5495 = vpop.f32.mrb[0].mxu0
  %5496 = vmatprep.mubr.bf16.mxu0 0
  %5497 = vmatmul.mubr.bf16.gmra.mrb[0].mxu0 %v5343
  %v5498 = vpop.f32.mrb[0].mxu0
  %v5499 = vadd.f32 0.0, %v5498
  %v5500 = vpop.f32.mrb[0].mxu0
  %v5501 = vpop.f32.mrb[0].mxu0
  %v5502 = vadd.f32 0.0, %v5501
  %v5503 = vpop.f32.mrb[0].mxu0
  %5504 = vmatprep.mubr.bf16.mxu0 0
  %5505 = vmatmul.mubr.bf16.gmra.mrb[0].mxu0 %v5345
  %v5506 = vpop.f32.mrb[0].mxu0
  %v5507 = vadd.f32 0.0, %v5506
  %v5508 = vpop.f32.mrb[0].mxu0
  %v5509 = vpop.f32.mrb[0].mxu0
  %v5510 = vadd.f32 0.0, %v5509
  %v5511 = vpop.f32.mrb[0].mxu0
  %5512 = vmatprep.mubr.bf16.mxu0 0
  %5513 = vmatmul.mubr.bf16.gmra.mrb[0].mxu0 %v5347
  %v5514 = vpop.f32.mrb[0].mxu0
  %v5515 = vadd.f32 0.0, %v5514
  %v5516 = vpop.f32.mrb[0].mxu0
  %v5517 = vpop.f32.mrb[0].mxu0
  %v5518 = vadd.f32 0.0, %v5517
  %v5519 = vpop.f32.mrb[0].mxu0
  %5520 = vmatprep.mubr.bf16.mxu0 0
  %5521 = vmatmul.mubr.bf16.gmra.mrb[0].mxu0 %v5349
  %v5522 = vpop.f32.mrb[0].mxu0
  %v5523 = vadd.f32 0.0, %v5522
  %v5524 = vpop.f32.mrb[0].mxu0
  %v5525 = vpop.f32.mrb[0].mxu0
  %v5526 = vadd.f32 0.0, %v5525
  %v5527 = vpop.f32.mrb[0].mxu0
  %5528 = vmatprep.mubr.bf16.mxu0 0
  %5529 = vmatmul.mubr.bf16.gmra.mrb[0].mxu0 %v5351
  %v5530 = vpop.f32.mrb[0].mxu0
  %v5531 = vadd.f32 0.0, %v5530
  %v5532 = vpop.f32.mrb[0].mxu0
  %v5533 = vpop.f32.mrb[0].mxu0
  %v5534 = vadd.f32 0.0, %v5533
  %v5535 = vpop.f32.mrb[0].mxu0
  %5536 = vmatprep.mubr.bf16.mxu0 0
  %5537 = vmatmul.mubr.bf16.gmra.mrb[0].mxu0 %v5353
  %v5538 = vpop.f32.mrb[0].mxu0
  %v5539 = vadd.f32 0.0, %v5538
  %v5540 = vpop.f32.mrb[0].mxu0
  %v5541 = vpop.f32.mrb[0].mxu0
  %v5542 = vadd.f32 0.0, %v5541
  %v5543 = vpop.f32.mrb[0].mxu0
  %5544 = vmatprep.mubr.bf16.mxu0 0
  %5545 = vmatmul.mubr.bf16.gmra.mrb[0].mxu0 %v5355
  %v5546 = vpop.f32.mrb[0].mxu0
  %v5547 = vadd.f32 0.0, %v5546
  %v5548 = vpop.f32.mrb[0].mxu0
  %v5549 = vpop.f32.mrb[0].mxu0
  %v5550 = vadd.f32 0.0, %v5549
  %v5551 = vpop.f32.mrb[0].mxu0
  %5552 = vmatprep.mubr.bf16.mxu0 0
  %5553 = vmatmul.mubr.bf16.gmra.mrb[0].mxu0 %v5357
  %v5554 = vpop.f32.mrb[0].mxu0
  %v5555 = vadd.f32 0.0, %v5554
  %v5556 = vpop.f32.mrb[0].mxu0
  %v5557 = vpop.f32.mrb[0].mxu0
  %v5558 = vadd.f32 0.0, %v5557
  %v5559 = vpop.f32.mrb[0].mxu0
  %5560 = vmatprep.mubr.bf16.mxu0 0
  %5561 = vmatmul.mubr.bf16.gmra.mrb[0].mxu0 %v5359
  %v5562 = vpop.f32.mrb[0].mxu0
  %v5563 = vadd.f32 0.0, %v5562
  %v5564 = vpop.f32.mrb[0].mxu0
  %v5565 = vpop.f32.mrb[0].mxu0
  %v5566 = vadd.f32 0.0, %v5565
  %v5567 = vpop.f32.mrb[0].mxu0
  %5568 = vmatprep.mubr.bf16.mxu0 0
  %5569 = vmatmul.mubr.bf16.gmra.mrb[0].mxu0 %v5361
  %v5570 = vpop.f32.mrb[0].mxu0
  %v5571 = vadd.f32 0.0, %v5570
  %v5572 = vpop.f32.mrb[0].mxu0
  %v5573 = vpop.f32.mrb[0].mxu0
  %v5574 = vadd.f32 0.0, %v5573
  %v5575 = vpop.f32.mrb[0].mxu0
  %5576 = vmatprep.mubr.bf16.mxu0 0
  %5577 = vmatmul.mubr.bf16.gmra.mrb[0].mxu0 %v5363
  %v5578 = vpop.f32.mrb[0].mxu0
  %v5579 = vadd.f32 0.0, %v5578
  %v5580 = vpop.f32.mrb[0].mxu0
  %v5581 = vpop.f32.mrb[0].mxu0
  %v5582 = vadd.f32 0.0, %v5581
  %v5583 = vpop.f32.mrb[0].mxu0
  %5584 = vmatprep.mubr.bf16.mxu0 0
  %5585 = vmatmul.mubr.bf16.gmra.mrb[0].mxu0 %v5365
  %v5586 = vpop.f32.mrb[0].mxu0
  %v5587 = vadd.f32 0.0, %v5586
  %v5588 = vpop.f32.mrb[0].mxu0
  %v5589 = vpop.f32.mrb[0].mxu0
  %v5590 = vadd.f32 0.0, %v5589
  %v5591 = vpop.f32.mrb[0].mxu0
  %5592 = vmatprep.mubr.bf16.mxu0 0
  %5593 = vmatmul.mubr.bf16.gmra.mrb[0].mxu0 %v5367
  %v5594 = vpop.f32.mrb[0].mxu0
  %v5595 = vadd.f32 0.0, %v5594
  %v5596 = vpop.f32.mrb[0].mxu0
  %v5597 = vpop.f32.mrb[0].mxu0
  %v5598 = vadd.f32 0.0, %v5597
  %v5599 = vpop.f32.mrb[0].mxu0
  %5600 = vmatprep.mubr.bf16.mxu0 0
  %5601 = vmatmul.mubr.bf16.gmra.mrb[0].mxu0 %v5369
  %v5602 = vpop.f32.mrb[0].mxu0
  %v5603 = vadd.f32 0.0, %v5602
  %v5604 = vpop.f32.mrb[0].mxu0
  %v5605 = vpop.f32.mrb[0].mxu0
  %v5606 = vadd.f32 0.0, %v5605
  %v5607 = vpop.f32.mrb[0].mxu0
  %5608 = vmatprep.mubr.bf16.mxu0 0
  %5609 = vmatmul.mubr.bf16.gmra.mrb[0].mxu0 %v5371
  %v5610 = vpop.f32.mrb[0].mxu0
  %v5611 = vadd.f32 0.0, %v5610
  %v5612 = vpop.f32.mrb[0].mxu0
  %v5613 = vpop.f32.mrb[0].mxu0
  %v5614 = vadd.f32 0.0, %v5613
  %v5615 = vpop.f32.mrb[0].mxu0
  %5616 = vmatprep.mubr.bf16.mxu0 0
  %5617 = vmatmul.mubr.bf16.gmra.mrb[0].mxu0 %v5373
  %v5618 = vpop.f32.mrb[0].mxu0
  %v5619 = vadd.f32 0.0, %v5618
  %v5620 = vpop.f32.mrb[0].mxu0
  %v5621 = vpop.f32.mrb[0].mxu0
  %v5622 = vadd.f32 0.0, %v5621
  %v5623 = vpop.f32.mrb[0].mxu0
  %5624 = vmatprep.mubr.bf16.mxu0 0
  %5625 = vmatmul.mubr.bf16.gmra.mrb[0].mxu0 %v5375
  %v5626 = vpop.f32.mrb[0].mxu0
  %v5627 = vadd.f32 0.0, %v5626
  %v5628 = vpop.f32.mrb[0].mxu0
  %v5629 = vpop.f32.mrb[0].mxu0
  %v5630 = vadd.f32 0.0, %v5629
  %v5631 = vpop.f32.mrb[0].mxu0
  %5632 = vmatprep.mubr.bf16.mxu0 0
  %5633 = vmatmul.mubr.bf16.gmra.mrb[0].mxu0 %v5377
  %v5634 = vpop.f32.mrb[0].mxu0
  %v5635 = vadd.f32 0.0, %v5634
  %v5636 = vpop.f32.mrb[0].mxu0
  %v5637 = vpop.f32.mrb[0].mxu0
  %v5638 = vadd.f32 0.0, %v5637
  %v5639 = vpop.f32.mrb[0].mxu0
  %5640 = vmatprep.mubr.bf16.mxu0 0
  %5641 = vmatmul.mubr.bf16.gmra.mrb[0].mxu0 %v5379
  %v5642 = vpop.f32.mrb[0].mxu0
  %v5643 = vadd.f32 0.0, %v5642
  %v5644 = vpop.f32.mrb[0].mxu0
  %v5645 = vpop.f32.mrb[0].mxu0
  %v5646 = vadd.f32 0.0, %v5645
  %v5647 = vpop.f32.mrb[0].mxu0
  %5648 = vmatprep.mubr.bf16.mxu0 0
  %5649 = vmatmul.mubr.bf16.gmra.mrb[0].mxu0 %v5381
  %v5650 = vpop.f32.mrb[0].mxu0
  %v5651 = vadd.f32 0.0, %v5650
  %v5652 = vpop.f32.mrb[0].mxu0
  %v5653 = vpop.f32.mrb[0].mxu0
  %v5654 = vadd.f32 0.0, %v5653
  %v5655 = vpop.f32.mrb[0].mxu0
  %5656 = vmatprep.mubr.bf16.mxu0 0
  %5657 = vmatmul.mubr.bf16.gmra.mrb[0].mxu0 %v5383
  %v5658 = vpop.f32.mrb[0].mxu0
  %v5659 = vadd.f32 0.0, %v5658
  %v5660 = vpop.f32.mrb[0].mxu0
  %v5661 = vpop.f32.mrb[0].mxu0
  %v5662 = vadd.f32 0.0, %v5661
  %v5663 = vpop.f32.mrb[0].mxu0
  %5664 = vmatprep.mubr.bf16.mxu0 0
  %5665 = vmatmul.mubr.bf16.gmra.mrb[0].mxu0 %v5385
  %v5666 = vpop.f32.mrb[0].mxu0
  %v5667 = vadd.f32 0.0, %v5666
  %v5668 = vpop.f32.mrb[0].mxu0
  %v5669 = vpop.f32.mrb[0].mxu0
  %v5670 = vadd.f32 0.0, %v5669
  %v5671 = vpop.f32.mrb[0].mxu0
  %5672 = vmatprep.mubr.bf16.mxu0 0
  %5673 = vmatmul.mubr.bf16.gmra.mrb[0].mxu0 %v5387
  %v5674 = vpop.f32.mrb[0].mxu0
  %v5675 = vadd.f32 0.0, %v5674
  %v5676 = vpop.f32.mrb[0].mxu0
  %v5677 = vpop.f32.mrb[0].mxu0
  %v5678 = vadd.f32 0.0, %v5677
  %v5679 = vpop.f32.mrb[0].mxu0
  %5680 = vdwg.mxu0
  %v5681 = vld [vmem:[#allocation3] sm:$0xff]
  %v5682 = vld [vmem:[#allocation3 + $0x8] sm:$0xff]
  %v5683 = vld [vmem:[#allocation3 + $0x10] sm:$0xff]
  %v5684 = vld [vmem:[#allocation3 + $0x18] sm:$0xff]
  %v5685 = vld [vmem:[#allocation3 + $0x20] sm:$0xff]
  %v5686 = vld [vmem:[#allocation3 + $0x28] sm:$0xff]
  %v5687 = vld [vmem:[#allocation3 + $0x30] sm:$0xff]
  %v5688 = vld [vmem:[#allocation3 + $0x38] sm:$0xff]
  %v5689 = vld [vmem:[#allocation3 + $0x40] sm:$0xff]
  %v5690 = vld [vmem:[#allocation3 + $0x48] sm:$0xff]
  %v5691 = vld [vmem:[#allocation3 + $0x50] sm:$0xff]
  %v5692 = vld [vmem:[#allocation3 + $0x58] sm:$0xff]
  %v5693 = vld [vmem:[#allocation3 + $0x60] sm:$0xff]
  %v5694 = vld [vmem:[#allocation3 + $0x68] sm:$0xff]
  %v5695 = vld [vmem:[#allocation3 + $0x70] sm:$0xff]
  %v5696 = vld [vmem:[#allocation3 + $0x78] sm:$0xff]
  %v5697 = vld [vmem:[#allocation3 + $0x80] sm:$0xff]
  %v5698 = vld [vmem:[#allocation3 + $0x88] sm:$0xff]
  %v5699 = vld [vmem:[#allocation3 + $0x90] sm:$0xff]
  %v5700 = vld [vmem:[#allocation3 + $0x98] sm:$0xff]
  %v5701 = vld [vmem:[#allocation3 + $0xa0] sm:$0xff]
  %v5702 = vld [vmem:[#allocation3 + $0xa8] sm:$0xff]
  %v5703 = vld [vmem:[#allocation3 + $0xb0] sm:$0xff]
  %v5704 = vld [vmem:[#allocation3 + $0xb8] sm:$0xff]
  %v5705 = vld [vmem:[#allocation3 + $0xc0] sm:$0xff]
  %v5706 = vld [vmem:[#allocation3 + $0xc8] sm:$0xff]
  %v5707 = vld [vmem:[#allocation3 + $0xd0] sm:$0xff]
  %v5708 = vld [vmem:[#allocation3 + $0xd8] sm:$0xff]
  %v5709 = vld [vmem:[#allocation3 + $0xe0] sm:$0xff]
  %v5710 = vld [vmem:[#allocation3 + $0xe8] sm:$0xff]
  %v5711 = vld [vmem:[#allocation3 + $0xf0] sm:$0xff]
  %v5712 = vld [vmem:[#allocation3 + $0xf8] sm:$0xff]
  %v5713 = vld [vmem:[#allocation3 + $0x100] sm:$0xff]
  %v5714 = vld [vmem:[#allocation3 + $0x108] sm:$0xff]
  %v5715 = vld [vmem:[#allocation3 + $0x110] sm:$0xff]
  %v5716 = vld [vmem:[#allocation3 + $0x118] sm:$0xff]
  %v5717 = vld [vmem:[#allocation3 + $0x120] sm:$0xff]
  %v5718 = vld [vmem:[#allocation3 + $0x128] sm:$0xff]
  %v5719 = vld [vmem:[#allocation3 + $0x130] sm:$0xff]
  %v5720 = vld [vmem:[#allocation3 + $0x138] sm:$0xff]
  %v5721 = vld [vmem:[#allocation3 + $0x140] sm:$0xff]
  %v5722 = vld [vmem:[#allocation3 + $0x148] sm:$0xff]
  %v5723 = vld [vmem:[#allocation3 + $0x150] sm:$0xff]
  %v5724 = vld [vmem:[#allocation3 + $0x158] sm:$0xff]
  %v5725 = vld [vmem:[#allocation3 + $0x160] sm:$0xff]
  %v5726 = vld [vmem:[#allocation3 + $0x168] sm:$0xff]
  %v5727 = vld [vmem:[#allocation3 + $0x170] sm:$0xff]
  %v5728 = vld [vmem:[#allocation3 + $0x178] sm:$0xff]
  %v5729 = vld [vmem:[#allocation3 + $0x180] sm:$0xff]
  %v5730 = vld [vmem:[#allocation3 + $0x188] sm:$0xff]
  %v5731 = vld [vmem:[#allocation3 + $0x190] sm:$0xff]
  %v5732 = vld [vmem:[#allocation3 + $0x198] sm:$0xff]
  %v5733 = vld [vmem:[#allocation3 + $0x1a0] sm:$0xff]
  %v5734 = vld [vmem:[#allocation3 + $0x1a8] sm:$0xff]
  %v5735 = vld [vmem:[#allocation3 + $0x1b0] sm:$0xff]
  %v5736 = vld [vmem:[#allocation3 + $0x1b8] sm:$0xff]
  %v5737 = vld [vmem:[#allocation3 + $0x1c0] sm:$0xff]
  %v5738 = vld [vmem:[#allocation3 + $0x1c8] sm:$0xff]
  %v5739 = vld [vmem:[#allocation3 + $0x1d0] sm:$0xff]
  %v5740 = vld [vmem:[#allocation3 + $0x1d8] sm:$0xff]
  %v5741 = vld [vmem:[#allocation3 + $0x1e0] sm:$0xff]
  %v5742 = vld [vmem:[#allocation3 + $0x1e8] sm:$0xff]
  %v5743 = vld [vmem:[#allocation3 + $0x1f0] sm:$0xff]
  %v5744 = vld [vmem:[#allocation3 + $0x1f8] sm:$0xff]
  %v5745 = vadd.f32 %v5681, %v5427
  %v5746 = vadd.f32 %v5682, %v5430
  %v5747 = vadd.f32 %v5683, %v5435
  %v5748 = vadd.f32 %v5684, %v5438
  %v5749 = vadd.f32 %v5685, %v5443
  %v5750 = vadd.f32 %v5686, %v5446
  %v5751 = vadd.f32 %v5687, %v5451
  %v5752 = vadd.f32 %v5688, %v5454
  %v5753 = vadd.f32 %v5689, %v5459
  %v5754 = vadd.f32 %v5690, %v5462
  %v5755 = vadd.f32 %v5691, %v5467
  %v5756 = vadd.f32 %v5692, %v5470
  %v5757 = vadd.f32 %v5693, %v5475
  %v5758 = vadd.f32 %v5694, %v5478
  %v5759 = vadd.f32 %v5695, %v5483
  %v5760 = vadd.f32 %v5696, %v5486
  %v5761 = vadd.f32 %v5697, %v5491
  %v5762 = vadd.f32 %v5698, %v5494
  %v5763 = vadd.f32 %v5699, %v5499
  %v5764 = vadd.f32 %v5700, %v5502
  %v5765 = vadd.f32 %v5701, %v5507
  %v5766 = vadd.f32 %v5702, %v5510
  %v5767 = vadd.f32 %v5703, %v5515
  %v5768 = vadd.f32 %v5704, %v5518
  %v5769 = vadd.f32 %v5705, %v5523
  %v5770 = vadd.f32 %v5706, %v5526
  %v5771 = vadd.f32 %v5707, %v5531
  %v5772 = vadd.f32 %v5708, %v5534
  %v5773 = vadd.f32 %v5709, %v5539
  %v5774 = vadd.f32 %v5710, %v5542
  %v5775 = vadd.f32 %v5711, %v5547
  %v5776 = vadd.f32 %v5712, %v5550
  %v5777 = vadd.f32 %v5713, %v5555
  %v5778 = vadd.f32 %v5714, %v5558
  %v5779 = vadd.f32 %v5715, %v5563
  %v5780 = vadd.f32 %v5716, %v5566
  %v5781 = vadd.f32 %v5717, %v5571
  %v5782 = vadd.f32 %v5718, %v5574
  %v5783 = vadd.f32 %v5719, %v5579
  %v5784 = vadd.f32 %v5720, %v5582
  %v5785 = vadd.f32 %v5721, %v5587
  %v5786 = vadd.f32 %v5722, %v5590
  %v5787 = vadd.f32 %v5723, %v5595
  %v5788 = vadd.f32 %v5724, %v5598
  %v5789 = vadd.f32 %v5725, %v5603
  %v5790 = vadd.f32 %v5726, %v5606
  %v5791 = vadd.f32 %v5727, %v5611
  %v5792 = vadd.f32 %v5728, %v5614
  %v5793 = vadd.f32 %v5729, %v5619
  %v5794 = vadd.f32 %v5730, %v5622
  %v5795 = vadd.f32 %v5731, %v5627
  %v5796 = vadd.f32 %v5732, %v5630
  %v5797 = vadd.f32 %v5733, %v5635
  %v5798 = vadd.f32 %v5734, %v5638
  %v5799 = vadd.f32 %v5735, %v5643
  %v5800 = vadd.f32 %v5736, %v5646
  %v5801 = vadd.f32 %v5737, %v5651
  %v5802 = vadd.f32 %v5738, %v5654
  %v5803 = vadd.f32 %v5739, %v5659
  %v5804 = vadd.f32 %v5740, %v5662
  %v5805 = vadd.f32 %v5741, %v5667
  %v5806 = vadd.f32 %v5742, %v5670
  %v5807 = vadd.f32 %v5743, %v5675
  %v5808 = vadd.f32 %v5744, %v5678
  %5809 = vst.msk [vmem:[#allocation3] sm:$0xff] %vm2519, %v5745
  %5810 = vst.msk [vmem:[#allocation3 + $0x8] sm:$0xff] %vm2519, %v5746
  %5811 = vst.msk [vmem:[#allocation3 + $0x10] sm:$0xff] %vm2519, %v5747
  %5812 = vst.msk [vmem:[#allocation3 + $0x18] sm:$0xff] %vm2519, %v5748
  %5813 = vst.msk [vmem:[#allocation3 + $0x20] sm:$0xff] %vm2519, %v5749
  %5814 = vst.msk [vmem:[#allocation3 + $0x28] sm:$0xff] %vm2519, %v5750
  %5815 = vst.msk [vmem:[#allocation3 + $0x30] sm:$0xff] %vm2519, %v5751
  %5816 = vst.msk [vmem:[#allocation3 + $0x38] sm:$0xff] %vm2519, %v5752
  %5817 = vst.msk [vmem:[#allocation3 + $0x40] sm:$0xff] %vm2519, %v5753
  %5818 = vst.msk [vmem:[#allocation3 + $0x48] sm:$0xff] %vm2519, %v5754
  %5819 = vst.msk [vmem:[#allocation3 + $0x50] sm:$0xff] %vm2519, %v5755
  %5820 = vst.msk [vmem:[#allocation3 + $0x58] sm:$0xff] %vm2519, %v5756
  %5821 = vst.msk [vmem:[#allocation3 + $0x60] sm:$0xff] %vm2519, %v5757
  %5822 = vst.msk [vmem:[#allocation3 + $0x68] sm:$0xff] %vm2519, %v5758
  %5823 = vst.msk [vmem:[#allocation3 + $0x70] sm:$0xff] %vm2519, %v5759
  %5824 = vst.msk [vmem:[#allocation3 + $0x78] sm:$0xff] %vm2519, %v5760
  %5825 = vst.msk [vmem:[#allocation3 + $0x80] sm:$0xff] %vm2519, %v5761
  %5826 = vst.msk [vmem:[#allocation3 + $0x88] sm:$0xff] %vm2519, %v5762
  %5827 = vst.msk [vmem:[#allocation3 + $0x90] sm:$0xff] %vm2519, %v5763
  %5828 = vst.msk [vmem:[#allocation3 + $0x98] sm:$0xff] %vm2519, %v5764
  %5829 = vst.msk [vmem:[#allocation3 + $0xa0] sm:$0xff] %vm2519, %v5765
  %5830 = vst.msk [vmem:[#allocation3 + $0xa8] sm:$0xff] %vm2519, %v5766
  %5831 = vst.msk [vmem:[#allocation3 + $0xb0] sm:$0xff] %vm2519, %v5767
  %5832 = vst.msk [vmem:[#allocation3 + $0xb8] sm:$0xff] %vm2519, %v5768
  %5833 = vst.msk [vmem:[#allocation3 + $0xc0] sm:$0xff] %vm2519, %v5769
  %5834 = vst.msk [vmem:[#allocation3 + $0xc8] sm:$0xff] %vm2519, %v5770
  %5835 = vst.msk [vmem:[#allocation3 + $0xd0] sm:$0xff] %vm2519, %v5771
  %5836 = vst.msk [vmem:[#allocation3 + $0xd8] sm:$0xff] %vm2519, %v5772
  %5837 = vst.msk [vmem:[#allocation3 + $0xe0] sm:$0xff] %vm2519, %v5773
  %5838 = vst.msk [vmem:[#allocation3 + $0xe8] sm:$0xff] %vm2519, %v5774
  %5839 = vst.msk [vmem:[#allocation3 + $0xf0] sm:$0xff] %vm2519, %v5775
  %5840 = vst.msk [vmem:[#allocation3 + $0xf8] sm:$0xff] %vm2519, %v5776
  %5841 = vst.msk [vmem:[#allocation3 + $0x100] sm:$0xff] %vm2519, %v5777
  %5842 = vst.msk [vmem:[#allocation3 + $0x108] sm:$0xff] %vm2519, %v5778
  %5843 = vst.msk [vmem:[#allocation3 + $0x110] sm:$0xff] %vm2519, %v5779
  %5844 = vst.msk [vmem:[#allocation3 + $0x118] sm:$0xff] %vm2519, %v5780
  %5845 = vst.msk [vmem:[#allocation3 + $0x120] sm:$0xff] %vm2519, %v5781
  %5846 = vst.msk [vmem:[#allocation3 + $0x128] sm:$0xff] %vm2519, %v5782
  %5847 = vst.msk [vmem:[#allocation3 + $0x130] sm:$0xff] %vm2519, %v5783
  %5848 = vst.msk [vmem:[#allocation3 + $0x138] sm:$0xff] %vm2519, %v5784
  %5849 = vst.msk [vmem:[#allocation3 + $0x140] sm:$0xff] %vm2519, %v5785
  %5850 = vst.msk [vmem:[#allocation3 + $0x148] sm:$0xff] %vm2519, %v5786
  %5851 = vst.msk [vmem:[#allocation3 + $0x150] sm:$0xff] %vm2519, %v5787
  %5852 = vst.msk [vmem:[#allocation3 + $0x158] sm:$0xff] %vm2519, %v5788
  %5853 = vst.msk [vmem:[#allocation3 + $0x160] sm:$0xff] %vm2519, %v5789
  %5854 = vst.msk [vmem:[#allocation3 + $0x168] sm:$0xff] %vm2519, %v5790
  %5855 = vst.msk [vmem:[#allocation3 + $0x170] sm:$0xff] %vm2519, %v5791
  %5856 = vst.msk [vmem:[#allocation3 + $0x178] sm:$0xff] %vm2519, %v5792
  %5857 = vst.msk [vmem:[#allocation3 + $0x180] sm:$0xff] %vm2519, %v5793
  %5858 = vst.msk [vmem:[#allocation3 + $0x188] sm:$0xff] %vm2519, %v5794
  %5859 = vst.msk [vmem:[#allocation3 + $0x190] sm:$0xff] %vm2519, %v5795
  %5860 = vst.msk [vmem:[#allocation3 + $0x198] sm:$0xff] %vm2519, %v5796
  %5861 = vst.msk [vmem:[#allocation3 + $0x1a0] sm:$0xff] %vm2519, %v5797
  %5862 = vst.msk [vmem:[#allocation3 + $0x1a8] sm:$0xff] %vm2519, %v5798
  %5863 = vst.msk [vmem:[#allocation3 + $0x1b0] sm:$0xff] %vm2519, %v5799
  %5864 = vst.msk [vmem:[#allocation3 + $0x1b8] sm:$0xff] %vm2519, %v5800
  %5865 = vst.msk [vmem:[#allocation3 + $0x1c0] sm:$0xff] %vm2519, %v5801
  %5866 = vst.msk [vmem:[#allocation3 + $0x1c8] sm:$0xff] %vm2519, %v5802
  %5867 = vst.msk [vmem:[#allocation3 + $0x1d0] sm:$0xff] %vm2519, %v5803
  %5868 = vst.msk [vmem:[#allocation3 + $0x1d8] sm:$0xff] %vm2519, %v5804
  %5869 = vst.msk [vmem:[#allocation3 + $0x1e0] sm:$0xff] %vm2519, %v5805
  %5870 = vst.msk [vmem:[#allocation3 + $0x1e8] sm:$0xff] %vm2519, %v5806
  %5871 = vst.msk [vmem:[#allocation3 + $0x1f0] sm:$0xff] %vm2519, %v5807
  %5872 = vst.msk [vmem:[#allocation3 + $0x1f8] sm:$0xff] %vm2519, %v5808
  %v5873 = vld [vmem:[#allocation3] sm:$0xff]
  %v5874 = vld [vmem:[#allocation3 + $0x8] sm:$0xff]
  %v5875 = vld [vmem:[#allocation3 + $0x10] sm:$0xff]
  %v5876 = vld [vmem:[#allocation3 + $0x18] sm:$0xff]
  %v5877 = vld [vmem:[#allocation3 + $0x20] sm:$0xff]
  %v5878 = vld [vmem:[#allocation3 + $0x28] sm:$0xff]
  %v5879 = vld [vmem:[#allocation3 + $0x30] sm:$0xff]
  %v5880 = vld [vmem:[#allocation3 + $0x38] sm:$0xff]
  %v5881 = vld [vmem:[#allocation3 + $0x40] sm:$0xff]
  %v5882 = vld [vmem:[#allocation3 + $0x48] sm:$0xff]
  %v5883 = vld [vmem:[#allocation3 + $0x50] sm:$0xff]
  %v5884 = vld [vmem:[#allocation3 + $0x58] sm:$0xff]
  %v5885 = vld [vmem:[#allocation3 + $0x60] sm:$0xff]
  %v5886 = vld [vmem:[#allocation3 + $0x68] sm:$0xff]
  %v5887 = vld [vmem:[#allocation3 + $0x70] sm:$0xff]
  %v5888 = vld [vmem:[#allocation3 + $0x78] sm:$0xff]
  %v5889 = vld [vmem:[#allocation3 + $0x80] sm:$0xff]
  %v5890 = vld [vmem:[#allocation3 + $0x88] sm:$0xff]
  %v5891 = vld [vmem:[#allocation3 + $0x90] sm:$0xff]
  %v5892 = vld [vmem:[#allocation3 + $0x98] sm:$0xff]
  %v5893 = vld [vmem:[#allocation3 + $0xa0] sm:$0xff]
  %v5894 = vld [vmem:[#allocation3 + $0xa8] sm:$0xff]
  %v5895 = vld [vmem:[#allocation3 + $0xb0] sm:$0xff]
  %v5896 = vld [vmem:[#allocation3 + $0xb8] sm:$0xff]
  %v5897 = vld [vmem:[#allocation3 + $0xc0] sm:$0xff]
  %v5898 = vld [vmem:[#allocation3 + $0xc8] sm:$0xff]
  %v5899 = vld [vmem:[#allocation3 + $0xd0] sm:$0xff]
  %v5900 = vld [vmem:[#allocation3 + $0xd8] sm:$0xff]
  %v5901 = vld [vmem:[#allocation3 + $0xe0] sm:$0xff]
  %v5902 = vld [vmem:[#allocation3 + $0xe8] sm:$0xff]
  %v5903 = vld [vmem:[#allocation3 + $0xf0] sm:$0xff]
  %v5904 = vld [vmem:[#allocation3 + $0xf8] sm:$0xff]
  %v5905 = vld [vmem:[#allocation3 + $0x100] sm:$0xff]
  %v5906 = vld [vmem:[#allocation3 + $0x108] sm:$0xff]
  %v5907 = vld [vmem:[#allocation3 + $0x110] sm:$0xff]
  %v5908 = vld [vmem:[#allocation3 + $0x118] sm:$0xff]
  %v5909 = vld [vmem:[#allocation3 + $0x120] sm:$0xff]
  %v5910 = vld [vmem:[#allocation3 + $0x128] sm:$0xff]
  %v5911 = vld [vmem:[#allocation3 + $0x130] sm:$0xff]
  %v5912 = vld [vmem:[#allocation3 + $0x138] sm:$0xff]
  %v5913 = vld [vmem:[#allocation3 + $0x140] sm:$0xff]
  %v5914 = vld [vmem:[#allocation3 + $0x148] sm:$0xff]
  %v5915 = vld [vmem:[#allocation3 + $0x150] sm:$0xff]
  %v5916 = vld [vmem:[#allocation3 + $0x158] sm:$0xff]
  %v5917 = vld [vmem:[#allocation3 + $0x160] sm:$0xff]
  %v5918 = vld [vmem:[#allocation3 + $0x168] sm:$0xff]
  %v5919 = vld [vmem:[#allocation3 + $0x170] sm:$0xff]
  %v5920 = vld [vmem:[#allocation3 + $0x178] sm:$0xff]
  %v5921 = vld [vmem:[#allocation3 + $0x180] sm:$0xff]
  %v5922 = vld [vmem:[#allocation3 + $0x188] sm:$0xff]
  %v5923 = vld [vmem:[#allocation3 + $0x190] sm:$0xff]
  %v5924 = vld [vmem:[#allocation3 + $0x198] sm:$0xff]
  %v5925 = vld [vmem:[#allocation3 + $0x1a0] sm:$0xff]
  %v5926 = vld [vmem:[#allocation3 + $0x1a8] sm:$0xff]
  %v5927 = vld [vmem:[#allocation3 + $0x1b0] sm:$0xff]
  %v5928 = vld [vmem:[#allocation3 + $0x1b8] sm:$0xff]
  %v5929 = vld [vmem:[#allocation3 + $0x1c0] sm:$0xff]
  %v5930 = vld [vmem:[#allocation3 + $0x1c8] sm:$0xff]
  %v5931 = vld [vmem:[#allocation3 + $0x1d0] sm:$0xff]
  %v5932 = vld [vmem:[#allocation3 + $0x1d8] sm:$0xff]
  %v5933 = vld [vmem:[#allocation3 + $0x1e0] sm:$0xff]
  %v5934 = vld [vmem:[#allocation3 + $0x1e8] sm:$0xff]
  %v5935 = vld [vmem:[#allocation3 + $0x1f0] sm:$0xff]
  %v5936 = vld [vmem:[#allocation3 + $0x1f8] sm:$0xff]
  %v5937 = vld [vmem:[%s2] sm:$0x1]
  %v5939 = vlaneseq
  %v5940 = vshrl.u32 %v5939, 7
  %v5941 = vsub.s32 0, %v5940
  %v5942 = vrot.slane %v5937, %v5941
  %v5944 = vadd.f32 %v5873, %v5942
  %v5945 = vadd.f32 %v5874, %v5942
  %v5946 = vadd.f32 %v5875, %v5942
  %v5947 = vadd.f32 %v5876, %v5942
  %v5948 = vadd.f32 %v5877, %v5942
  %v5949 = vadd.f32 %v5878, %v5942
  %v5950 = vadd.f32 %v5879, %v5942
  %v5951 = vadd.f32 %v5880, %v5942
  %v5952 = vadd.f32 %v5881, %v5942
  %v5953 = vadd.f32 %v5882, %v5942
  %v5954 = vadd.f32 %v5883, %v5942
  %v5955 = vadd.f32 %v5884, %v5942
  %v5956 = vadd.f32 %v5885, %v5942
  %v5957 = vadd.f32 %v5886, %v5942
  %v5958 = vadd.f32 %v5887, %v5942
  %v5959 = vadd.f32 %v5888, %v5942
  %v5960 = vadd.f32 %v5889, %v5942
  %v5961 = vadd.f32 %v5890, %v5942
  %v5962 = vadd.f32 %v5891, %v5942
  %v5963 = vadd.f32 %v5892, %v5942
  %v5964 = vadd.f32 %v5893, %v5942
  %v5965 = vadd.f32 %v5894, %v5942
  %v5966 = vadd.f32 %v5895, %v5942
  %v5967 = vadd.f32 %v5896, %v5942
  %v5968 = vadd.f32 %v5897, %v5942
  %v5969 = vadd.f32 %v5898, %v5942
  %v5970 = vadd.f32 %v5899, %v5942
  %v5971 = vadd.f32 %v5900, %v5942
  %v5972 = vadd.f32 %v5901, %v5942
  %v5973 = vadd.f32 %v5902, %v5942
  %v5974 = vadd.f32 %v5903, %v5942
  %v5975 = vadd.f32 %v5904, %v5942
  %v5976 = vadd.f32 %v5905, %v5942
  %v5977 = vadd.f32 %v5906, %v5942
  %v5978 = vadd.f32 %v5907, %v5942
  %v5979 = vadd.f32 %v5908, %v5942
  %v5980 = vadd.f32 %v5909, %v5942
  %v5981 = vadd.f32 %v5910, %v5942
  %v5982 = vadd.f32 %v5911, %v5942
  %v5983 = vadd.f32 %v5912, %v5942
  %v5984 = vadd.f32 %v5913, %v5942
  %v5985 = vadd.f32 %v5914, %v5942
  %v5986 = vadd.f32 %v5915, %v5942
  %v5987 = vadd.f32 %v5916, %v5942
  %v5988 = vadd.f32 %v5917, %v5942
  %v5989 = vadd.f32 %v5918, %v5942
  %v5990 = vadd.f32 %v5919, %v5942
  %v5991 = vadd.f32 %v5920, %v5942
  %v5992 = vadd.f32 %v5921, %v5942
  %v5993 = vadd.f32 %v5922, %v5942
  %v5994 = vadd.f32 %v5923, %v5942
  %v5995 = vadd.f32 %v5924, %v5942
  %v5996 = vadd.f32 %v5925, %v5942
  %v5997 = vadd.f32 %v5926, %v5942
  %v5998 = vadd.f32 %v5927, %v5942
  %v5999 = vadd.f32 %v5928, %v5942
  %v6000 = vadd.f32 %v5929, %v5942
  %v6001 = vadd.f32 %v5930, %v5942
  %v6002 = vadd.f32 %v5931, %v5942
  %v6003 = vadd.f32 %v5932, %v5942
  %v6004 = vadd.f32 %v5933, %v5942
  %v6005 = vadd.f32 %v5934, %v5942
  %v6006 = vadd.f32 %v5935, %v5942
  %v6007 = vadd.f32 %v5936, %v5942
  %v6008 = vmax.f32 %v5944, 0.0
  %v6009 = vmax.f32 %v5945, 0.0
  %v6010 = vmax.f32 %v5946, 0.0
  %v6011 = vmax.f32 %v5947, 0.0
  %v6012 = vmax.f32 %v5948, 0.0
  %v6013 = vmax.f32 %v5949, 0.0
  %v6014 = vmax.f32 %v5950, 0.0
  %v6015 = vmax.f32 %v5951, 0.0
  %v6016 = vmax.f32 %v5952, 0.0
  %v6017 = vmax.f32 %v5953, 0.0
  %v6018 = vmax.f32 %v5954, 0.0
  %v6019 = vmax.f32 %v5955, 0.0
  %v6020 = vmax.f32 %v5956, 0.0
  %v6021 = vmax.f32 %v5957, 0.0
  %v6022 = vmax.f32 %v5958, 0.0
  %v6023 = vmax.f32 %v5959, 0.0
  %v6024 = vmax.f32 %v5960, 0.0
  %v6025 = vmax.f32 %v5961, 0.0
  %v6026 = vmax.f32 %v5962, 0.0
  %v6027 = vmax.f32 %v5963, 0.0
  %v6028 = vmax.f32 %v5964, 0.0
  %v6029 = vmax.f32 %v5965, 0.0
  %v6030 = vmax.f32 %v5966, 0.0
  %v6031 = vmax.f32 %v5967, 0.0
  %v6032 = vmax.f32 %v5968, 0.0
  %v6033 = vmax.f32 %v5969, 0.0
  %v6034 = vmax.f32 %v5970, 0.0
  %v6035 = vmax.f32 %v5971, 0.0
  %v6036 = vmax.f32 %v5972, 0.0
  %v6037 = vmax.f32 %v5973, 0.0
  %v6038 = vmax.f32 %v5974, 0.0
  %v6039 = vmax.f32 %v5975, 0.0
  %v6040 = vmax.f32 %v5976, 0.0
  %v6041 = vmax.f32 %v5977, 0.0
  %v6042 = vmax.f32 %v5978, 0.0
  %v6043 = vmax.f32 %v5979, 0.0
  %v6044 = vmax.f32 %v5980, 0.0
  %v6045 = vmax.f32 %v5981, 0.0
  %v6046 = vmax.f32 %v5982, 0.0
  %v6047 = vmax.f32 %v5983, 0.0
  %v6048 = vmax.f32 %v5984, 0.0
  %v6049 = vmax.f32 %v5985, 0.0
  %v6050 = vmax.f32 %v5986, 0.0
  %v6051 = vmax.f32 %v5987, 0.0
  %v6052 = vmax.f32 %v5988, 0.0
  %v6053 = vmax.f32 %v5989, 0.0
  %v6054 = vmax.f32 %v5990, 0.0
  %v6055 = vmax.f32 %v5991, 0.0
  %v6056 = vmax.f32 %v5992, 0.0
  %v6057 = vmax.f32 %v5993, 0.0
  %v6058 = vmax.f32 %v5994, 0.0
  %v6059 = vmax.f32 %v5995, 0.0
  %v6060 = vmax.f32 %v5996, 0.0
  %v6061 = vmax.f32 %v5997, 0.0
  %v6062 = vmax.f32 %v5998, 0.0
  %v6063 = vmax.f32 %v5999, 0.0
  %v6064 = vmax.f32 %v6000, 0.0
  %v6065 = vmax.f32 %v6001, 0.0
  %v6066 = vmax.f32 %v6002, 0.0
  %v6067 = vmax.f32 %v6003, 0.0
  %v6068 = vmax.f32 %v6004, 0.0
  %v6069 = vmax.f32 %v6005, 0.0
  %v6070 = vmax.f32 %v6006, 0.0
  %v6071 = vmax.f32 %v6007, 0.0
  %v6072 = vpack.c.bf16 %v6009, %v6008
  %v6073 = vpack.c.bf16 %v6011, %v6010
  %v6074 = vpack.c.bf16 %v6013, %v6012
  %v6075 = vpack.c.bf16 %v6015, %v6014
  %v6076 = vpack.c.bf16 %v6017, %v6016
  %v6077 = vpack.c.bf16 %v6019, %v6018
  %v6078 = vpack.c.bf16 %v6021, %v6020
  %v6079 = vpack.c.bf16 %v6023, %v6022
  %v6080 = vpack.c.bf16 %v6025, %v6024
  %v6081 = vpack.c.bf16 %v6027, %v6026
  %v6082 = vpack.c.bf16 %v6029, %v6028
  %v6083 = vpack.c.bf16 %v6031, %v6030
  %v6084 = vpack.c.bf16 %v6033, %v6032
  %v6085 = vpack.c.bf16 %v6035, %v6034
  %v6086 = vpack.c.bf16 %v6037, %v6036
  %v6087 = vpack.c.bf16 %v6039, %v6038
  %v6088 = vpack.c.bf16 %v6041, %v6040
  %v6089 = vpack.c.bf16 %v6043, %v6042
  %v6090 = vpack.c.bf16 %v6045, %v6044
  %v6091 = vpack.c.bf16 %v6047, %v6046
  %v6092 = vpack.c.bf16 %v6049, %v6048
  %v6093 = vpack.c.bf16 %v6051, %v6050
  %v6094 = vpack.c.bf16 %v6053, %v6052
  %v6095 = vpack.c.bf16 %v6055, %v6054
  %v6096 = vpack.c.bf16 %v6057, %v6056
  %v6097 = vpack.c.bf16 %v6059, %v6058
  %v6098 = vpack.c.bf16 %v6061, %v6060
  %v6099 = vpack.c.bf16 %v6063, %v6062
  %v6100 = vpack.c.bf16 %v6065, %v6064
  %v6101 = vpack.c.bf16 %v6067, %v6066
  %v6102 = vpack.c.bf16 %v6069, %v6068
  %v6103 = vpack.c.bf16 %v6071, %v6070
  %v6136 = vunpack.c.l.b16 %v6072
  %v6137 = vunpack.c.h.b16 %v6072
  %v6138 = vunpack.c.l.b16 %v6073
  %v6139 = vunpack.c.h.b16 %v6073
  %v6140 = vunpack.c.l.b16 %v6074
  %v6141 = vunpack.c.h.b16 %v6074
  %v6142 = vunpack.c.l.b16 %v6075
  %v6143 = vunpack.c.h.b16 %v6075
  %v6144 = vunpack.c.l.b16 %v6076
  %v6145 = vunpack.c.h.b16 %v6076
  %v6146 = vunpack.c.l.b16 %v6077
  %v6147 = vunpack.c.h.b16 %v6077
  %v6148 = vunpack.c.l.b16 %v6078
  %v6149 = vunpack.c.h.b16 %v6078
  %v6150 = vunpack.c.l.b16 %v6079
  %v6151 = vunpack.c.h.b16 %v6079
  %v6152 = vunpack.c.l.b16 %v6080
  %v6153 = vunpack.c.h.b16 %v6080
  %v6154 = vunpack.c.l.b16 %v6081
  %v6155 = vunpack.c.h.b16 %v6081
  %v6156 = vunpack.c.l.b16 %v6082
  %v6157 = vunpack.c.h.b16 %v6082
  %v6158 = vunpack.c.l.b16 %v6083
  %v6159 = vunpack.c.h.b16 %v6083
  %v6160 = vunpack.c.l.b16 %v6084
  %v6161 = vunpack.c.h.b16 %v6084
  %v6162 = vunpack.c.l.b16 %v6085
  %v6163 = vunpack.c.h.b16 %v6085
  %v6164 = vunpack.c.l.b16 %v6086
  %v6165 = vunpack.c.h.b16 %v6086
  %v6166 = vunpack.c.l.b16 %v6087
  %v6167 = vunpack.c.h.b16 %v6087
  %v6168 = vunpack.c.l.b16 %v6088
  %v6169 = vunpack.c.h.b16 %v6088
  %v6170 = vunpack.c.l.b16 %v6089
  %v6171 = vunpack.c.h.b16 %v6089
  %v6172 = vunpack.c.l.b16 %v6090
  %v6173 = vunpack.c.h.b16 %v6090
  %v6174 = vunpack.c.l.b16 %v6091
  %v6175 = vunpack.c.h.b16 %v6091
  %v6176 = vunpack.c.l.b16 %v6092
  %v6177 = vunpack.c.h.b16 %v6092
  %v6178 = vunpack.c.l.b16 %v6093
  %v6179 = vunpack.c.h.b16 %v6093
  %v6180 = vunpack.c.l.b16 %v6094
  %v6181 = vunpack.c.h.b16 %v6094
  %v6182 = vunpack.c.l.b16 %v6095
  %v6183 = vunpack.c.h.b16 %v6095
  %v6184 = vunpack.c.l.b16 %v6096
  %v6185 = vunpack.c.h.b16 %v6096
  %v6186 = vunpack.c.l.b16 %v6097
  %v6187 = vunpack.c.h.b16 %v6097
  %v6188 = vunpack.c.l.b16 %v6098
  %v6189 = vunpack.c.h.b16 %v6098
  %v6190 = vunpack.c.l.b16 %v6099
  %v6191 = vunpack.c.h.b16 %v6099
  %v6192 = vunpack.c.l.b16 %v6100
  %v6193 = vunpack.c.h.b16 %v6100
  %v6194 = vunpack.c.l.b16 %v6101
  %v6195 = vunpack.c.h.b16 %v6101
  %v6196 = vunpack.c.l.b16 %v6102
  %v6197 = vunpack.c.h.b16 %v6102
  %v6198 = vunpack.c.l.b16 %v6103
  %v6199 = vunpack.c.h.b16 %v6103
  %v6200 = vpack.c.b16 %v6136, %v6136
  %v6201 = vpack.c.b16 %v6137, %v6137
  %v6202 = vpack.c.b16 %v6138, %v6138
  %v6203 = vpack.c.b16 %v6139, %v6139
  %v6204 = vpack.c.b16 %v6140, %v6140
  %v6205 = vpack.c.b16 %v6141, %v6141
  %v6206 = vpack.c.b16 %v6142, %v6142
  %v6207 = vpack.c.b16 %v6143, %v6143
  %v6208 = vpack.c.b16 %v6144, %v6144
  %v6209 = vpack.c.b16 %v6145, %v6145
  %v6210 = vpack.c.b16 %v6146, %v6146
  %v6211 = vpack.c.b16 %v6147, %v6147
  %v6212 = vpack.c.b16 %v6148, %v6148
  %v6213 = vpack.c.b16 %v6149, %v6149
  %v6214 = vpack.c.b16 %v6150, %v6150
  %v6215 = vpack.c.b16 %v6151, %v6151
  %v6216 = vpack.c.b16 %v6152, %v6152
  %v6217 = vpack.c.b16 %v6153, %v6153
  %v6218 = vpack.c.b16 %v6154, %v6154
  %v6219 = vpack.c.b16 %v6155, %v6155
  %v6220 = vpack.c.b16 %v6156, %v6156
  %v6221 = vpack.c.b16 %v6157, %v6157
  %v6222 = vpack.c.b16 %v6158, %v6158
  %v6223 = vpack.c.b16 %v6159, %v6159
  %v6224 = vpack.c.b16 %v6160, %v6160
  %v6225 = vpack.c.b16 %v6161, %v6161
  %v6226 = vpack.c.b16 %v6162, %v6162
  %v6227 = vpack.c.b16 %v6163, %v6163
  %v6228 = vpack.c.b16 %v6164, %v6164
  %v6229 = vpack.c.b16 %v6165, %v6165
  %v6230 = vpack.c.b16 %v6166, %v6166
  %v6231 = vpack.c.b16 %v6167, %v6167
  %v6232 = vpack.c.b16 %v6168, %v6168
  %v6233 = vpack.c.b16 %v6169, %v6169
  %v6234 = vpack.c.b16 %v6170, %v6170
  %v6235 = vpack.c.b16 %v6171, %v6171
  %v6236 = vpack.c.b16 %v6172, %v6172
  %v6237 = vpack.c.b16 %v6173, %v6173
  %v6238 = vpack.c.b16 %v6174, %v6174
  %v6239 = vpack.c.b16 %v6175, %v6175
  %v6240 = vpack.c.b16 %v6176, %v6176
  %v6241 = vpack.c.b16 %v6177, %v6177
  %v6242 = vpack.c.b16 %v6178, %v6178
  %v6243 = vpack.c.b16 %v6179, %v6179
  %v6244 = vpack.c.b16 %v6180, %v6180
  %v6245 = vpack.c.b16 %v6181, %v6181
  %v6246 = vpack.c.b16 %v6182, %v6182
  %v6247 = vpack.c.b16 %v6183, %v6183
  %v6248 = vpack.c.b16 %v6184, %v6184
  %v6249 = vpack.c.b16 %v6185, %v6185
  %v6250 = vpack.c.b16 %v6186, %v6186
  %v6251 = vpack.c.b16 %v6187, %v6187
  %v6252 = vpack.c.b16 %v6188, %v6188
  %v6253 = vpack.c.b16 %v6189, %v6189
  %v6254 = vpack.c.b16 %v6190, %v6190
  %v6255 = vpack.c.b16 %v6191, %v6191
  %v6256 = vpack.c.b16 %v6192, %v6192
  %v6257 = vpack.c.b16 %v6193, %v6193
  %v6258 = vpack.c.b16 %v6194, %v6194
  %v6259 = vpack.c.b16 %v6195, %v6195
  %v6260 = vpack.c.b16 %v6196, %v6196
  %v6261 = vpack.c.b16 %v6197, %v6197
  %v6262 = vpack.c.b16 %v6198, %v6198
  %v6263 = vpack.c.b16 %v6199, %v6199
  %vm6328 = vcmask 125952
  %6329 = vst.msk [vmem:[%s3] sm:$0xf] %vm6328, %v6200
  %6330 = vst.msk [vmem:[%s3 + $0x4] sm:$0xf] %vm6328, %v6201
  %6331 = vst.msk [vmem:[%s3 + $0x8] sm:$0xf] %vm6328, %v6202
  %6332 = vst.msk [vmem:[%s3 + $0xc] sm:$0xf] %vm6328, %v6203
  %6333 = vst.msk [vmem:[%s3 + $0x10] sm:$0xf] %vm6328, %v6204
  %6334 = vst.msk [vmem:[%s3 + $0x14] sm:$0xf] %vm6328, %v6205
  %6335 = vst.msk [vmem:[%s3 + $0x18] sm:$0xf] %vm6328, %v6206
  %6336 = vst.msk [vmem:[%s3 + $0x1c] sm:$0xf] %vm6328, %v6207
  %6337 = vst.msk [vmem:[%s3 + $0x20] sm:$0xf] %vm6328, %v6208
  %6338 = vst.msk [vmem:[%s3 + $0x24] sm:$0xf] %vm6328, %v6209
  %6339 = vst.msk [vmem:[%s3 + $0x28] sm:$0xf] %vm6328, %v6210
  %6340 = vst.msk [vmem:[%s3 + $0x2c] sm:$0xf] %vm6328, %v6211
  %6341 = vst.msk [vmem:[%s3 + $0x30] sm:$0xf] %vm6328, %v6212
  %6342 = vst.msk [vmem:[%s3 + $0x34] sm:$0xf] %vm6328, %v6213
  %6343 = vst.msk [vmem:[%s3 + $0x38] sm:$0xf] %vm6328, %v6214
  %6344 = vst.msk [vmem:[%s3 + $0x3c] sm:$0xf] %vm6328, %v6215
  %6345 = vst.msk [vmem:[%s3 + $0x40] sm:$0xf] %vm6328, %v6216
  %6346 = vst.msk [vmem:[%s3 + $0x44] sm:$0xf] %vm6328, %v6217
  %6347 = vst.msk [vmem:[%s3 + $0x48] sm:$0xf] %vm6328, %v6218
  %6348 = vst.msk [vmem:[%s3 + $0x4c] sm:$0xf] %vm6328, %v6219
  %6349 = vst.msk [vmem:[%s3 + $0x50] sm:$0xf] %vm6328, %v6220
  %6350 = vst.msk [vmem:[%s3 + $0x54] sm:$0xf] %vm6328, %v6221
  %6351 = vst.msk [vmem:[%s3 + $0x58] sm:$0xf] %vm6328, %v6222
  %6352 = vst.msk [vmem:[%s3 + $0x5c] sm:$0xf] %vm6328, %v6223
  %6353 = vst.msk [vmem:[%s3 + $0x60] sm:$0xf] %vm6328, %v6224
  %6354 = vst.msk [vmem:[%s3 + $0x64] sm:$0xf] %vm6328, %v6225
  %6355 = vst.msk [vmem:[%s3 + $0x68] sm:$0xf] %vm6328, %v6226
  %6356 = vst.msk [vmem:[%s3 + $0x6c] sm:$0xf] %vm6328, %v6227
  %6357 = vst.msk [vmem:[%s3 + $0x70] sm:$0xf] %vm6328, %v6228
  %6358 = vst.msk [vmem:[%s3 + $0x74] sm:$0xf] %vm6328, %v6229
  %6359 = vst.msk [vmem:[%s3 + $0x78] sm:$0xf] %vm6328, %v6230
  %6360 = vst.msk [vmem:[%s3 + $0x7c] sm:$0xf] %vm6328, %v6231
  %6361 = vst.msk [vmem:[%s3 + $0x80] sm:$0xf] %vm6328, %v6232
  %6362 = vst.msk [vmem:[%s3 + $0x84] sm:$0xf] %vm6328, %v6233
  %6363 = vst.msk [vmem:[%s3 + $0x88] sm:$0xf] %vm6328, %v6234
  %6364 = vst.msk [vmem:[%s3 + $0x8c] sm:$0xf] %vm6328, %v6235
  %6365 = vst.msk [vmem:[%s3 + $0x90] sm:$0xf] %vm6328, %v6236
  %6366 = vst.msk [vmem:[%s3 + $0x94] sm:$0xf] %vm6328, %v6237
  %6367 = vst.msk [vmem:[%s3 + $0x98] sm:$0xf] %vm6328, %v6238
  %6368 = vst.msk [vmem:[%s3 + $0x9c] sm:$0xf] %vm6328, %v6239
  %6369 = vst.msk [vmem:[%s3 + $0xa0] sm:$0xf] %vm6328, %v6240
  %6370 = vst.msk [vmem:[%s3 + $0xa4] sm:$0xf] %vm6328, %v6241
  %6371 = vst.msk [vmem:[%s3 + $0xa8] sm:$0xf] %vm6328, %v6242
  %6372 = vst.msk [vmem:[%s3 + $0xac] sm:$0xf] %vm6328, %v6243
  %6373 = vst.msk [vmem:[%s3 + $0xb0] sm:$0xf] %vm6328, %v6244
  %6374 = vst.msk [vmem:[%s3 + $0xb4] sm:$0xf] %vm6328, %v6245
  %6375 = vst.msk [vmem:[%s3 + $0xb8] sm:$0xf] %vm6328, %v6246
  %6376 = vst.msk [vmem:[%s3 + $0xbc] sm:$0xf] %vm6328, %v6247
  %6377 = vst.msk [vmem:[%s3 + $0xc0] sm:$0xf] %vm6328, %v6248
  %6378 = vst.msk [vmem:[%s3 + $0xc4] sm:$0xf] %vm6328, %v6249
  %6379 = vst.msk [vmem:[%s3 + $0xc8] sm:$0xf] %vm6328, %v6250
  %6380 = vst.msk [vmem:[%s3 + $0xcc] sm:$0xf] %vm6328, %v6251
  %6381 = vst.msk [vmem:[%s3 + $0xd0] sm:$0xf] %vm6328, %v6252
  %6382 = vst.msk [vmem:[%s3 + $0xd4] sm:$0xf] %vm6328, %v6253
  %6383 = vst.msk [vmem:[%s3 + $0xd8] sm:$0xf] %vm6328, %v6254
  %6384 = vst.msk [vmem:[%s3 + $0xdc] sm:$0xf] %vm6328, %v6255
  %6385 = vst.msk [vmem:[%s3 + $0xe0] sm:$0xf] %vm6328, %v6256
  %6386 = vst.msk [vmem:[%s3 + $0xe4] sm:$0xf] %vm6328, %v6257
  %6387 = vst.msk [vmem:[%s3 + $0xe8] sm:$0xf] %vm6328, %v6258
  %6388 = vst.msk [vmem:[%s3 + $0xec] sm:$0xf] %vm6328, %v6259
  %6389 = vst.msk [vmem:[%s3 + $0xf0] sm:$0xf] %vm6328, %v6260
  %6390 = vst.msk [vmem:[%s3 + $0xf4] sm:$0xf] %vm6328, %v6261
  %6391 = vst.msk [vmem:[%s3 + $0xf8] sm:$0xf] %vm6328, %v6262
  %6392 = vst.msk [vmem:[%s3 + $0xfc] sm:$0xf] %vm6328, %v6263
  // Predicated region
  $region14: #{_lambda_.4} parent=0 // pred_check
    _
  $region15: #{_lambda_.4} parent=0 // pred_check_branch
    %6394 = sbr.rel (0) target = $region17
  $region16: #{_lambda_.4} parent=0 // pred_region
    _
  $region17: #{_lambda_.4} parent=0 // pred_fallthru
    _
  // Predicated region
  $region18: #{_lambda_.4} parent=0 // pred_check
    _
  $region19: #{_lambda_.4} parent=0 // pred_check_branch
    %6396 = sbr.rel (0) target = $region21
  $region20: #{_lambda_.4} parent=0 // pred_region
    _
  $region21: #{_lambda_.4} parent=0 // pred_fallthru
    _

</llo_original>
